<compile_context>
chip_gen: v7x
topology: tpu7x:2x2x1
jax: 0.10.0
libtpu: 0.0.40
codegen_flags: <defaults>
</compile_context>

<pallas_src>
import jax
import jax.numpy as jnp
import numpy as np
from jax import lax
from jax.experimental import pallas as pl
from jax.experimental.pallas import tpu as pltpu


# ------------------------------ fused kernel ------------------------------- #

def _cdnet_kernel(x_ref,    # (B*28, 84)      B images stacked row-wise, cols = w*3 + cin
                  m1_ref,   # (3, 84, 832)    conv1 structured weights (one per kernel row)
                  b1_ref,   # (1, 832)        conv1 bias tiled over output width
                  p1r_ref,  # (B*13, B*28-3)  pool1 row-pair gather (block-diagonal 0/1)
                  m2_ref,   # (3, 800, 176)   conv2 structured weights, pool1 col-gather folded in
                  b2_ref,   # (1, 176)
                  p2r_ref,  # (B*5, B*13-3)   pool2 row-pair gather, rows ordered (pool_row, image)
                  p2c_ref,  # (160, 80)       pool2 col-pair gather
                  f1_ref,   # (5, 80, 120)    fc1 weights per pooled row, layout-permuted
                  fb1_ref,  # (1, 120)
                  w2_ref,   # (120, 84)
                  fb2_ref,  # (1, 84)
                  w3_ref,   # (84, 128)       fc3 weights, outputs padded 2 -> 128 lanes
                  fb3_ref,  # (1, 128)
                  o_ref):   # (B, 128)
    f32 = jnp.float32
    wdt = m1_ref.dtype                       # conv matmul dtype (bf16 by default)
    B = o_ref.shape[0]                       # images per grid step

    def dot(a, b):
        return jnp.dot(a, b, preferred_element_type=f32)

    # conv1 + bias + ReLU: (B*28, 84) -> (B*28-2, 832); cols = wo*32 + cout.
    # Vertical taps are 3 row-shifted sliced loads; the horizontal window and
    # channel contraction are folded into the block-banded M1 matrices.
    n1 = B * 28 - 2
    h1 = dot(x_ref[pl.ds(0, n1), :].astype(wdt), m1_ref[0])
    h1 = h1 + dot(x_ref[pl.ds(1, n1), :].astype(wdt), m1_ref[1])
    h1 = h1 + dot(x_ref[pl.ds(2, n1), :].astype(wdt), m1_ref[2])
    h1 = jnp.maximum(h1 + b1_ref[...], 0.0)

    # pool1 (2x2 max).  Row pairs: VPU max with a one-row-shifted slice, then a
    # single block-diagonal gather matmul (boundary-straddling rows never
    # selected).  Column pairs: VPU max with a 32-lane-shifted slice; the even
    # 32-group gather is folded into M2F, so no column selector matmul at all.
    rmax1 = jnp.maximum(h1[:-1], h1[1:])                    # (B*28-3, 832)
    rp1 = dot(p1r_ref[...], rmax1)                          # (B*13,  832)
    cmax1 = jnp.maximum(rp1[:, :800], rp1[:, 32:])          # (B*13,  800)

    # conv2 + bias + ReLU: (B*13, 800) -> (B*13-2, 176); cols = wo*16 + cout.
    n2 = B * 13 - 2
    h2 = dot(cmax1[0:n2].astype(wdt), m2_ref[0])
    h2 = h2 + dot(cmax1[1:n2 + 1].astype(wdt), m2_ref[1])
    h2 = h2 + dot(cmax1[2:n2 + 2].astype(wdt), m2_ref[2])
    h2 = jnp.maximum(h2 + b2_ref[...], 0.0)

    # pool2 (2x2 max, floor mode: conv2 row/col 10 dropped by the selectors).
    rmax2 = jnp.maximum(h2[:-1], h2[1:])                    # (B*13-3, 176)
    rp2 = dot(p2r_ref[...], rmax2)                          # (B*5,    176)
    cmax2 = jnp.maximum(rp2[:, :160], rp2[:, 16:])          # (B*5,    160)
    act = dot(cmax2, p2c_ref[...])                          # (B*5,     80)

    # fc1 + ReLU: contraction over (pool_row, w, c) as 5 matmuls with M = B.
    # rp2/act rows are ordered (pool_row, image) so each slice below is one
    # pooled row for all B images (aligned, contiguous sublane slices).
    z = dot(act[0:B], f1_ref[0])
    for h in range(1, 5):
        z = z + dot(act[h * B:(h + 1) * B], f1_ref[h])
    z = jnp.maximum(z + fb1_ref[...], 0.0)                  # (B, 120)

    # fc2 + ReLU, fc3 (lane-dense padded output store).
    z = jnp.maximum(dot(z, w2_ref[...]) + fb2_ref[...], 0.0)              # (B, 84)
    o_ref[...] = (dot(z, w3_ref[...]) + fb3_ref[...]).astype(o_ref.dtype)  # (B, 128)


# ----------------------------- JAX wrapper ---------------------------------- #

_WEIGHT_ORDER = ('M1', 'b1', 'P1R', 'M2F', 'b2', 'P2R', 'P2C',
                 'F1', 'fb1', 'W2', 'fb2', 'W3', 'fb3')


def _full_spec(shape):
    return pl.BlockSpec(shape, lambda g, _n=len(shape): (0,) * _n)


def cdnet_forward(x_nchw, prep, *, b_tile=8):
    if b_tile % 8 != 0:
        raise ValueError("b_tile must be a multiple of 8")
    if prep['P1R'].shape[0] != b_tile * 13:
        raise ValueError("prep was built for a different b_tile")

    n = x_nchw.shape[0]
    n_pad = ((n + b_tile - 1) // b_tile) * b_tile
    n_steps = n_pad // b_tile

    # NCHW -> (N, 28, 84) slab (channels fastest within a row), zero-pad the
    # batch to a multiple of b_tile (padded outputs are sliced away), then stack
    # all rows so each grid step sees b_tile images as one 2-D block.
    x2d = jnp.transpose(x_nchw, (0, 2, 3, 1)).reshape(n, 28, 84).astype(jnp.float32)
    if n_pad != n:
        x2d = jnp.concatenate(
            [x2d, jnp.zeros((n_pad - n, 28, 84), jnp.float32)], axis=0)
    x_slab = x2d.reshape(n_pad * 28, 84)

    weight_args = [prep[k] for k in _WEIGHT_ORDER]
    weight_specs = [_full_spec(tuple(prep[k].shape)) for k in _WEIGHT_ORDER]

    # Advisory cost estimate: 2 * MACs across all grid steps; weight bytes are
    # fetched once, image/output blocks per step.
    macs_step = (3 * (b_tile * 28 - 2) * 84 * 832
                 + (b_tile * 13) * (b_tile * 28 - 3) * 832
                 + 3 * (b_tile * 13 - 2) * 800 * 176
                 + (b_tile * 5) * (b_tile * 13 - 3) * 176
                 + (b_tile * 5) * 160 * 80
                 + 5 * b_tile * 80 * 120
                 + b_tile * 120 * 84
                 + b_tile * 84 * 128)
    bytes_w = sum(int(a.size) * a.dtype.itemsize for a in weight_args)
    cost = pl.CostEstimate(
        flops=2 * macs_step * n_steps,
        transcendentals=0,
        bytes_accessed=bytes_w + int(x_slab.size) * 4 + n_pad * 128 * 4)

    out = pl.pallas_call(
        _cdnet_kernel,
        out_shape=jax.ShapeDtypeStruct((n_pad, 128), jnp.float32),
        grid=(n_steps,),
        in_specs=[pl.BlockSpec((b_tile * 28, 84), lambda g: (g, 0))] + weight_specs,
        out_specs=pl.BlockSpec((b_tile, 128), lambda g: (g, 0)),
        compiler_params=pltpu.CompilerParams(
            dimension_semantics=("parallel",),
            vmem_limit_bytes=32 * 1024 * 1024),
        cost_estimate=cost,
    )(x_slab, *weight_args)
    return out[:n, :2]


# --------------------- one-time host-side weight reshuffle ------------------ #

def prepare_inference_params(params, *, b_tile=8, conv_dtype=jnp.bfloat16):
    """Build the kernel's structured matrices from PyTorch-layout weights."""
    if b_tile % 8 != 0:
        raise ValueError("b_tile must be a multiple of 8")
    B = b_tile

    w1 = np.asarray(params['conv1_w'], np.float32)   # (32, 3, 3, 3)  OIHW
    b1 = np.asarray(params['conv1_b'], np.float32)
    w2 = np.asarray(params['conv2_w'], np.float32)   # (16, 32, 3, 3)
    b2 = np.asarray(params['conv2_b'], np.float32)
    fw1 = np.asarray(params['fc1_w'], np.float32)    # (120, 400)
    fb1 = np.asarray(params['fc1_b'], np.float32)
    fw2 = np.asarray(params['fc2_w'], np.float32)    # (84, 120)
    fb2 = np.asarray(params['fc2_b'], np.float32)
    fw3 = np.asarray(params['fc3_w'], np.float32)    # (2, 84)
    fb3 = np.asarray(params['fc3_b'], np.float32)

    # conv1: input cols = w_in*3 + cin ; output cols = wo*32 + cout.
    m1 = np.zeros((3, 84, 832), np.float32)
    for ki in range(3):
        for kj in range(3):
            blk = w1[:, :, ki, kj].T                 # (cin=3, cout=32)
            for wo in range(26):
                m1[ki, (wo + kj) * 3:(wo + kj) * 3 + 3, wo * 32:(wo + 1) * 32] = blk
    b1w = np.tile(b1, 26)[None, :]                   # (1, 832)

    # conv2 with the pool1 column gather folded in: the kernel's conv2 operand
    # is the 800-wide column-max slab whose valid entries live at even 32-group
    # positions 2*wp*32 + cin (wp = pool1 column index 0..12).
    m2f = np.zeros((3, 800, 176), np.float32)
    for ki in range(3):
        for kj in range(3):
            blk = w2[:, :, ki, kj].T                 # (cin=32, cout=16)
            for wo in range(11):
                wp = wo + kj
                m2f[ki, 2 * wp * 32:2 * wp * 32 + 32, wo * 16:(wo + 1) * 16] = blk
    b2w = np.tile(b2, 11)[None, :]                   # (1, 176)

    # pool row gathers (block-diagonal across the stacked batch): pick the
    # even-row entry of the pairwise row max, per image.
    p1r = np.zeros((B * 13, B * 28 - 3), np.float32)
    for b in range(B):
        for pr in range(13):
            p1r[b * 13 + pr, b * 28 + 2 * pr] = 1.0

    p2r = np.zeros((B * 5, B * 13 - 3), np.float32)  # rows ordered (pool_row, image)
    for b in range(B):
        for pr in range(5):
            p2r[pr * B + b, b * 13 + 2 * pr] = 1.0

    # pool2 column gather (even 16-groups of the 160-wide column-max slab).
    p2c = np.zeros((160, 80), np.float32)
    for w in range(5):
        for c in range(16):
            p2c[2 * w * 16 + c, w * 16 + c] = 1.0

    # fc1: PyTorch flatten order is (c, h, w) -> c*25 + h*5 + w ; the kernel's
    # activation row for pooled row h has cols = 16*w + c.
    f1 = np.zeros((5, 80, 120), np.float32)
    for h in range(5):
        for w in range(5):
            for c in range(16):
                f1[h, 16 * w + c, :] = fw1[:, c * 25 + h * 5 + w]

    # fc3: pad 2 -> 128 output lanes for a lane-dense final store.
    w3p = np.zeros((84, 128), np.float32)
    w3p[:, :2] = fw3.T
    fb3p = np.zeros((1, 128), np.float32)
    fb3p[0, :2] = fb3

    f32c = lambda a: jnp.asarray(a, jnp.float32)
    cw = lambda a: jnp.asarray(a, conv_dtype)        # conv weights (bf16 by default)
    return {
        'M1': cw(m1), 'b1': f32c(b1w), 'P1R': f32c(p1r),
        'M2F': cw(m2f), 'b2': f32c(b2w),
        'P2R': f32c(p2r), 'P2C': f32c(p2c),
        'F1': f32c(f1), 'fb1': f32c(fb1[None, :]),
        'W2': f32c(fw2.T), 'fb2': f32c(fb2[None, :]),
        'W3': f32c(w3p), 'fb3': f32c(fb3p),
    }


# --------------------------- params & reference ----------------------------- #

def init_params(key):
    """Deterministic PyTorch-style uniform init (bound = 1/sqrt(fan_in))."""
    def uinit(k, shape, fan_in):
        bound = 1.0 / float(np.sqrt(fan_in))
        return jax.random.uniform(k, shape, jnp.float32, -bound, bound)

    ks = jax.random.split(key, 10)
    return {
        'conv1_w': uinit(ks[0], (32, 3, 3, 3), 3 * 3 * 3),
        'conv1_b': uinit(ks[1], (32,), 3 * 3 * 3),
        'conv2_w': uinit(ks[2], (16, 32, 3, 3), 32 * 3 * 3),
        'conv2_b': uinit(ks[3], (16,), 32 * 3 * 3),
        'fc1_w': uinit(ks[4], (120, 400), 400),
        'fc1_b': uinit(ks[5], (120,), 400),
        'fc2_w': uinit(ks[6], (84, 120), 120),
        'fc2_b': uinit(ks[7], (84,), 120),
        'fc3_w': uinit(ks[8], (2, 84), 84),
        'fc3_b': uinit(ks[9], (2,), 84),
    }


def ref_forward(x_nchw, p):
    """Pure-JAX reference mirroring the PyTorch forward (for verification)."""
    dn = ('NCHW', 'OIHW', 'NCHW')
    y = lax.conv_general_dilated(x_nchw, p['conv1_w'], (1, 1), 'VALID',
                                 dimension_numbers=dn)
    y = jnp.maximum(y + p['conv1_b'][None, :, None, None], 0.0)
    y = lax.reduce_window(y, -jnp.inf, lax.max, (1, 1, 2, 2), (1, 1, 2, 2), 'VALID')
    y = lax.conv_general_dilated(y, p['conv2_w'], (1, 1), 'VALID',
                                 dimension_numbers=dn)
    y = jnp.maximum(y + p['conv2_b'][None, :, None, None], 0.0)
    y = lax.reduce_window(y, -jnp.inf, lax.max, (1, 1, 2, 2), (1, 1, 2, 2), 'VALID')
    flat = y.reshape(y.shape[0], -1)
    h = jnp.maximum(flat @ p['fc1_w'].T + p['fc1_b'], 0.0)
    h = jnp.maximum(h @ p['fc2_w'].T + p['fc2_b'], 0.0)
    return h @ p['fc3_w'].T + p['fc3_b']


# --------------------------------- main ------------------------------------ #

if __name__ == "__main__":
    B_TILE = 8   # images per grid step (multiple of 8); 8 works well on v5e/v6e/v7x.

    params = init_params(jax.random.PRNGKey(42))
    prep = prepare_inference_params(params, b_tile=B_TILE)

    # 28x28 RGB input is what fc1's 16*5*5 in-features imply.  Batch 10 ->
    # padded to 16 -> a 2-step grid (exercises padding and both v7x cores).
    x = jax.random.normal(jax.random.PRNGKey(0), (10, 3, 28, 28), jnp.float32)

    fwd = jax.jit(cdnet_forward, static_argnames=("b_tile",))
    out = jax.block_until_ready(fwd(x, prep, b_tile=B_TILE))

    ref = ref_forward(x, params)
    # bf16 conv weights (f32 accumulation, f32 FC head) -> slightly looser tol.
    np.testing.assert_allclose(np.asarray(out), np.asarray(ref), rtol=1e-2, atol=1e-2)
    assert out.shape == (10, 2)
    print("KERNEL_OK")
</pallas_src>

<mosaic_0001>
module attributes {stable_mosaic.version = 11 : i64} {
  func.func @_cdnet_kernel(%arg0: i32, %arg1: memref<224x84xf32, #tpu.memory_space<vmem>>, %arg2: memref<3x84x832xbf16, #tpu.memory_space<vmem>>, %arg3: memref<1x832xf32, #tpu.memory_space<vmem>>, %arg4: memref<104x221xf32, #tpu.memory_space<vmem>>, %arg5: memref<3x800x176xbf16, #tpu.memory_space<vmem>>, %arg6: memref<1x176xf32, #tpu.memory_space<vmem>>, %arg7: memref<40x101xf32, #tpu.memory_space<vmem>>, %arg8: memref<160x80xf32, #tpu.memory_space<vmem>>, %arg9: memref<5x80x120xf32, #tpu.memory_space<vmem>>, %arg10: memref<1x120xf32, #tpu.memory_space<vmem>>, %arg11: memref<120x84xf32, #tpu.memory_space<vmem>>, %arg12: memref<1x84xf32, #tpu.memory_space<vmem>>, %arg13: memref<84x128xf32, #tpu.memory_space<vmem>>, %arg14: memref<1x128xf32, #tpu.memory_space<vmem>>, %arg15: memref<8x128xf32, #tpu.memory_space<vmem>>) attributes {dimension_semantics = [#tpu.dimension_semantics<parallel>], iteration_bounds = array<i64: 2>, scalar_prefetch = 0 : i64, scratch_operands = 0 : i64, tpu.core_type = #tpu.core_type<tc>, window_params = [{transform_indices = @transform_0, window_bounds = array<i64: 224, 84>}, {pipeline_mode = #tpu.pipeline_mode<synchronous>, transform_indices = @transform_1, window_bounds = array<i64: 3, 84, 832>}, {pipeline_mode = #tpu.pipeline_mode<synchronous>, transform_indices = @transform_2, window_bounds = array<i64: 1, 832>}, {pipeline_mode = #tpu.pipeline_mode<synchronous>, transform_indices = @transform_3, window_bounds = array<i64: 104, 221>}, {pipeline_mode = #tpu.pipeline_mode<synchronous>, transform_indices = @transform_4, window_bounds = array<i64: 3, 800, 176>}, {pipeline_mode = #tpu.pipeline_mode<synchronous>, transform_indices = @transform_5, window_bounds = array<i64: 1, 176>}, {pipeline_mode = #tpu.pipeline_mode<synchronous>, transform_indices = @transform_6, window_bounds = array<i64: 40, 101>}, {pipeline_mode = #tpu.pipeline_mode<synchronous>, transform_indices = @transform_7, window_bounds = array<i64: 160, 80>}, {pipeline_mode = #tpu.pipeline_mode<synchronous>, transform_indices = @transform_8, window_bounds = array<i64: 5, 80, 120>}, {pipeline_mode = #tpu.pipeline_mode<synchronous>, transform_indices = @transform_9, window_bounds = array<i64: 1, 120>}, {pipeline_mode = #tpu.pipeline_mode<synchronous>, transform_indices = @transform_10, window_bounds = array<i64: 120, 84>}, {pipeline_mode = #tpu.pipeline_mode<synchronous>, transform_indices = @transform_11, window_bounds = array<i64: 1, 84>}, {pipeline_mode = #tpu.pipeline_mode<synchronous>, transform_indices = @transform_12, window_bounds = array<i64: 84, 128>}, {pipeline_mode = #tpu.pipeline_mode<synchronous>, transform_indices = @transform_13, window_bounds = array<i64: 1, 128>}, {transform_indices = @transform_14, window_bounds = array<i64: 8, 128>}]} {
    %c0 = arith.constant 0 : index
    %c0_0 = arith.constant 0 : index
    %0 = vector.load %arg1[%c0, %c0_0] : memref<224x84xf32, #tpu.memory_space<vmem>>, vector<222x84xf32>
    %1 = arith.truncf %0 : vector<222x84xf32> to vector<222x84xbf16>
    %c0_1 = arith.constant 0 : index
    %c0_2 = arith.constant 0 : index
    %c0_3 = arith.constant 0 : index
    %2 = vector.load %arg2[%c0_1, %c0_2, %c0_3] : memref<3x84x832xbf16, #tpu.memory_space<vmem>>, vector<1x84x832xbf16>
    %3 = vector.shape_cast %2 : vector<1x84x832xbf16> to vector<84x832xbf16>
    %cst = arith.constant dense<0.000000e+00> : vector<222x832xf32>
    %4 = tpu.matmul %1, %3, %cst {dimension_numbers = #tpu.dot_dimension_numbers<[1], [0], [0], [1], [0, 0, 1, 1], [], []>} : vector<222x84xbf16>, vector<84x832xbf16>, vector<222x832xf32> -> vector<222x832xf32>
    %c1 = arith.constant 1 : index
    %c0_4 = arith.constant 0 : index
    %5 = vector.load %arg1[%c1, %c0_4] : memref<224x84xf32, #tpu.memory_space<vmem>>, vector<222x84xf32>
    %6 = arith.truncf %5 : vector<222x84xf32> to vector<222x84xbf16>
    %c1_5 = arith.constant 1 : index
    %c0_6 = arith.constant 0 : index
    %c0_7 = arith.constant 0 : index
    %7 = vector.load %arg2[%c1_5, %c0_6, %c0_7] : memref<3x84x832xbf16, #tpu.memory_space<vmem>>, vector<1x84x832xbf16>
    %8 = vector.shape_cast %7 : vector<1x84x832xbf16> to vector<84x832xbf16>
    %cst_8 = arith.constant dense<0.000000e+00> : vector<222x832xf32>
    %9 = tpu.matmul %6, %8, %cst_8 {dimension_numbers = #tpu.dot_dimension_numbers<[1], [0], [0], [1], [0, 0, 1, 1], [], []>} : vector<222x84xbf16>, vector<84x832xbf16>, vector<222x832xf32> -> vector<222x832xf32>
    %10 = arith.addf %4, %9 : vector<222x832xf32>
    %c2 = arith.constant 2 : index
    %c0_9 = arith.constant 0 : index
    %11 = vector.load %arg1[%c2, %c0_9] : memref<224x84xf32, #tpu.memory_space<vmem>>, vector<222x84xf32>
    %12 = arith.truncf %11 : vector<222x84xf32> to vector<222x84xbf16>
    %c2_10 = arith.constant 2 : index
    %c0_11 = arith.constant 0 : index
    %c0_12 = arith.constant 0 : index
    %13 = vector.load %arg2[%c2_10, %c0_11, %c0_12] : memref<3x84x832xbf16, #tpu.memory_space<vmem>>, vector<1x84x832xbf16>
    %14 = vector.shape_cast %13 : vector<1x84x832xbf16> to vector<84x832xbf16>
    %cst_13 = arith.constant dense<0.000000e+00> : vector<222x832xf32>
    %15 = tpu.matmul %12, %14, %cst_13 {dimension_numbers = #tpu.dot_dimension_numbers<[1], [0], [0], [1], [0, 0, 1, 1], [], []>} : vector<222x84xbf16>, vector<84x832xbf16>, vector<222x832xf32> -> vector<222x832xf32>
    %16 = arith.addf %10, %15 : vector<222x832xf32>
    %c0_14 = arith.constant 0 : index
    %c0_15 = arith.constant 0 : index
    %17 = vector.load %arg3[%c0_14, %c0_15] : memref<1x832xf32, #tpu.memory_space<vmem>>, vector<1x832xf32>
    %18 = vector.broadcast %17 : vector<1x832xf32> to vector<222x832xf32>
    %19 = arith.addf %16, %18 : vector<222x832xf32>
    %cst_16 = arith.constant 0.000000e+00 : f32
    %20 = vector.broadcast %cst_16 : f32 to vector<222x832xf32>
    %21 = arith.maximumf %19, %20 : vector<222x832xf32>
    %22 = vector.extract_strided_slice %21 {offsets = [0, 0], sizes = [221, 832], strides = [1, 1]} : vector<222x832xf32> to vector<221x832xf32>
    %23 = vector.extract_strided_slice %21 {offsets = [1, 0], sizes = [221, 832], strides = [1, 1]} : vector<222x832xf32> to vector<221x832xf32>
    %24 = arith.maximumf %22, %23 : vector<221x832xf32>
    %c0_17 = arith.constant 0 : index
    %c0_18 = arith.constant 0 : index
    %25 = vector.load %arg4[%c0_17, %c0_18] : memref<104x221xf32, #tpu.memory_space<vmem>>, vector<104x221xf32>
    %cst_19 = arith.constant dense<0.000000e+00> : vector<104x832xf32>
    %26 = tpu.matmul %25, %24, %cst_19 {dimension_numbers = #tpu.dot_dimension_numbers<[1], [0], [0], [1], [0, 0, 1, 1], [], []>} : vector<104x221xf32>, vector<221x832xf32>, vector<104x832xf32> -> vector<104x832xf32>
    %27 = vector.extract_strided_slice %26 {offsets = [0, 0], sizes = [104, 800], strides = [1, 1]} : vector<104x832xf32> to vector<104x800xf32>
    %28 = vector.extract_strided_slice %26 {offsets = [0, 32], sizes = [104, 800], strides = [1, 1]} : vector<104x832xf32> to vector<104x800xf32>
    %29 = arith.maximumf %27, %28 : vector<104x800xf32>
    %30 = vector.extract_strided_slice %29 {offsets = [0, 0], sizes = [102, 800], strides = [1, 1]} : vector<104x800xf32> to vector<102x800xf32>
    %31 = arith.truncf %30 : vector<102x800xf32> to vector<102x800xbf16>
    %c0_20 = arith.constant 0 : index
    %c0_21 = arith.constant 0 : index
    %c0_22 = arith.constant 0 : index
    %32 = vector.load %arg5[%c0_20, %c0_21, %c0_22] : memref<3x800x176xbf16, #tpu.memory_space<vmem>>, vector<1x800x176xbf16>
    %33 = vector.shape_cast %32 : vector<1x800x176xbf16> to vector<800x176xbf16>
    %cst_23 = arith.constant dense<0.000000e+00> : vector<102x176xf32>
    %34 = tpu.matmul %31, %33, %cst_23 {dimension_numbers = #tpu.dot_dimension_numbers<[1], [0], [0], [1], [0, 0, 1, 1], [], []>} : vector<102x800xbf16>, vector<800x176xbf16>, vector<102x176xf32> -> vector<102x176xf32>
    %35 = vector.extract_strided_slice %29 {offsets = [1, 0], sizes = [102, 800], strides = [1, 1]} : vector<104x800xf32> to vector<102x800xf32>
    %36 = arith.truncf %35 : vector<102x800xf32> to vector<102x800xbf16>
    %c1_24 = arith.constant 1 : index
    %c0_25 = arith.constant 0 : index
    %c0_26 = arith.constant 0 : index
    %37 = vector.load %arg5[%c1_24, %c0_25, %c0_26] : memref<3x800x176xbf16, #tpu.memory_space<vmem>>, vector<1x800x176xbf16>
    %38 = vector.shape_cast %37 : vector<1x800x176xbf16> to vector<800x176xbf16>
    %cst_27 = arith.constant dense<0.000000e+00> : vector<102x176xf32>
    %39 = tpu.matmul %36, %38, %cst_27 {dimension_numbers = #tpu.dot_dimension_numbers<[1], [0], [0], [1], [0, 0, 1, 1], [], []>} : vector<102x800xbf16>, vector<800x176xbf16>, vector<102x176xf32> -> vector<102x176xf32>
    %40 = arith.addf %34, %39 : vector<102x176xf32>
    %41 = vector.extract_strided_slice %29 {offsets = [2, 0], sizes = [102, 800], strides = [1, 1]} : vector<104x800xf32> to vector<102x800xf32>
    %42 = arith.truncf %41 : vector<102x800xf32> to vector<102x800xbf16>
    %c2_28 = arith.constant 2 : index
    %c0_29 = arith.constant 0 : index
    %c0_30 = arith.constant 0 : index
    %43 = vector.load %arg5[%c2_28, %c0_29, %c0_30] : memref<3x800x176xbf16, #tpu.memory_space<vmem>>, vector<1x800x176xbf16>
    %44 = vector.shape_cast %43 : vector<1x800x176xbf16> to vector<800x176xbf16>
    %cst_31 = arith.constant dense<0.000000e+00> : vector<102x176xf32>
    %45 = tpu.matmul %42, %44, %cst_31 {dimension_numbers = #tpu.dot_dimension_numbers<[1], [0], [0], [1], [0, 0, 1, 1], [], []>} : vector<102x800xbf16>, vector<800x176xbf16>, vector<102x176xf32> -> vector<102x176xf32>
    %46 = arith.addf %40, %45 : vector<102x176xf32>
    %c0_32 = arith.constant 0 : index
    %c0_33 = arith.constant 0 : index
    %47 = vector.load %arg6[%c0_32, %c0_33] : memref<1x176xf32, #tpu.memory_space<vmem>>, vector<1x176xf32>
    %48 = vector.broadcast %47 : vector<1x176xf32> to vector<102x176xf32>
    %49 = arith.addf %46, %48 : vector<102x176xf32>
    %cst_34 = arith.constant 0.000000e+00 : f32
    %50 = vector.broadcast %cst_34 : f32 to vector<102x176xf32>
    %51 = arith.maximumf %49, %50 : vector<102x176xf32>
    %52 = vector.extract_strided_slice %51 {offsets = [0, 0], sizes = [101, 176], strides = [1, 1]} : vector<102x176xf32> to vector<101x176xf32>
    %53 = vector.extract_strided_slice %51 {offsets = [1, 0], sizes = [101, 176], strides = [1, 1]} : vector<102x176xf32> to vector<101x176xf32>
    %54 = arith.maximumf %52, %53 : vector<101x176xf32>
    %c0_35 = arith.constant 0 : index
    %c0_36 = arith.constant 0 : index
    %55 = vector.load %arg7[%c0_35, %c0_36] : memref<40x101xf32, #tpu.memory_space<vmem>>, vector<40x101xf32>
    %cst_37 = arith.constant dense<0.000000e+00> : vector<40x176xf32>
    %56 = tpu.matmul %55, %54, %cst_37 {dimension_numbers = #tpu.dot_dimension_numbers<[1], [0], [0], [1], [0, 0, 1, 1], [], []>} : vector<40x101xf32>, vector<101x176xf32>, vector<40x176xf32> -> vector<40x176xf32>
    %57 = vector.extract_strided_slice %56 {offsets = [0, 0], sizes = [40, 160], strides = [1, 1]} : vector<40x176xf32> to vector<40x160xf32>
    %58 = vector.extract_strided_slice %56 {offsets = [0, 16], sizes = [40, 160], strides = [1, 1]} : vector<40x176xf32> to vector<40x160xf32>
    %59 = arith.maximumf %57, %58 : vector<40x160xf32>
    %c0_38 = arith.constant 0 : index
    %c0_39 = arith.constant 0 : index
    %60 = vector.load %arg8[%c0_38, %c0_39] : memref<160x80xf32, #tpu.memory_space<vmem>>, vector<160x80xf32>
    %cst_40 = arith.constant dense<0.000000e+00> : vector<40x80xf32>
    %61 = tpu.matmul %59, %60, %cst_40 {dimension_numbers = #tpu.dot_dimension_numbers<[1], [0], [0], [1], [0, 0, 1, 1], [], []>} : vector<40x160xf32>, vector<160x80xf32>, vector<40x80xf32> -> vector<40x80xf32>
    %62 = vector.extract_strided_slice %61 {offsets = [0, 0], sizes = [8, 80], strides = [1, 1]} : vector<40x80xf32> to vector<8x80xf32>
    %c0_41 = arith.constant 0 : index
    %c0_42 = arith.constant 0 : index
    %c0_43 = arith.constant 0 : index
    %63 = vector.load %arg9[%c0_41, %c0_42, %c0_43] : memref<5x80x120xf32, #tpu.memory_space<vmem>>, vector<1x80x120xf32>
    %64 = vector.shape_cast %63 : vector<1x80x120xf32> to vector<80x120xf32>
    %cst_44 = arith.constant dense<0.000000e+00> : vector<8x120xf32>
    %65 = tpu.matmul %62, %64, %cst_44 {dimension_numbers = #tpu.dot_dimension_numbers<[1], [0], [0], [1], [0, 0, 1, 1], [], []>} : vector<8x80xf32>, vector<80x120xf32>, vector<8x120xf32> -> vector<8x120xf32>
    %66 = vector.extract_strided_slice %61 {offsets = [8, 0], sizes = [8, 80], strides = [1, 1]} : vector<40x80xf32> to vector<8x80xf32>
    %c1_45 = arith.constant 1 : index
    %c0_46 = arith.constant 0 : index
    %c0_47 = arith.constant 0 : index
    %67 = vector.load %arg9[%c1_45, %c0_46, %c0_47] : memref<5x80x120xf32, #tpu.memory_space<vmem>>, vector<1x80x120xf32>
    %68 = vector.shape_cast %67 : vector<1x80x120xf32> to vector<80x120xf32>
    %cst_48 = arith.constant dense<0.000000e+00> : vector<8x120xf32>
    %69 = tpu.matmul %66, %68, %cst_48 {dimension_numbers = #tpu.dot_dimension_numbers<[1], [0], [0], [1], [0, 0, 1, 1], [], []>} : vector<8x80xf32>, vector<80x120xf32>, vector<8x120xf32> -> vector<8x120xf32>
    %70 = arith.addf %65, %69 : vector<8x120xf32>
    %71 = vector.extract_strided_slice %61 {offsets = [16, 0], sizes = [8, 80], strides = [1, 1]} : vector<40x80xf32> to vector<8x80xf32>
    %c2_49 = arith.constant 2 : index
    %c0_50 = arith.constant 0 : index
    %c0_51 = arith.constant 0 : index
    %72 = vector.load %arg9[%c2_49, %c0_50, %c0_51] : memref<5x80x120xf32, #tpu.memory_space<vmem>>, vector<1x80x120xf32>
    %73 = vector.shape_cast %72 : vector<1x80x120xf32> to vector<80x120xf32>
    %cst_52 = arith.constant dense<0.000000e+00> : vector<8x120xf32>
    %74 = tpu.matmul %71, %73, %cst_52 {dimension_numbers = #tpu.dot_dimension_numbers<[1], [0], [0], [1], [0, 0, 1, 1], [], []>} : vector<8x80xf32>, vector<80x120xf32>, vector<8x120xf32> -> vector<8x120xf32>
    %75 = arith.addf %70, %74 : vector<8x120xf32>
    %76 = vector.extract_strided_slice %61 {offsets = [24, 0], sizes = [8, 80], strides = [1, 1]} : vector<40x80xf32> to vector<8x80xf32>
    %c3 = arith.constant 3 : index
    %c0_53 = arith.constant 0 : index
    %c0_54 = arith.constant 0 : index
    %77 = vector.load %arg9[%c3, %c0_53, %c0_54] : memref<5x80x120xf32, #tpu.memory_space<vmem>>, vector<1x80x120xf32>
    %78 = vector.shape_cast %77 : vector<1x80x120xf32> to vector<80x120xf32>
    %cst_55 = arith.constant dense<0.000000e+00> : vector<8x120xf32>
    %79 = tpu.matmul %76, %78, %cst_55 {dimension_numbers = #tpu.dot_dimension_numbers<[1], [0], [0], [1], [0, 0, 1, 1], [], []>} : vector<8x80xf32>, vector<80x120xf32>, vector<8x120xf32> -> vector<8x120xf32>
    %80 = arith.addf %75, %79 : vector<8x120xf32>
    %81 = vector.extract_strided_slice %61 {offsets = [32, 0], sizes = [8, 80], strides = [1, 1]} : vector<40x80xf32> to vector<8x80xf32>
    %c4 = arith.constant 4 : index
    %c0_56 = arith.constant 0 : index
    %c0_57 = arith.constant 0 : index
    %82 = vector.load %arg9[%c4, %c0_56, %c0_57] : memref<5x80x120xf32, #tpu.memory_space<vmem>>, vector<1x80x120xf32>
    %83 = vector.shape_cast %82 : vector<1x80x120xf32> to vector<80x120xf32>
    %cst_58 = arith.constant dense<0.000000e+00> : vector<8x120xf32>
    %84 = tpu.matmul %81, %83, %cst_58 {dimension_numbers = #tpu.dot_dimension_numbers<[1], [0], [0], [1], [0, 0, 1, 1], [], []>} : vector<8x80xf32>, vector<80x120xf32>, vector<8x120xf32> -> vector<8x120xf32>
    %85 = arith.addf %80, %84 : vector<8x120xf32>
    %c0_59 = arith.constant 0 : index
    %c0_60 = arith.constant 0 : index
    %86 = vector.load %arg10[%c0_59, %c0_60] : memref<1x120xf32, #tpu.memory_space<vmem>>, vector<1x120xf32>
    %87 = vector.broadcast %86 : vector<1x120xf32> to vector<8x120xf32>
    %88 = arith.addf %85, %87 : vector<8x120xf32>
    %cst_61 = arith.constant 0.000000e+00 : f32
    %89 = vector.broadcast %cst_61 : f32 to vector<8x120xf32>
    %90 = arith.maximumf %88, %89 : vector<8x120xf32>
    %c0_62 = arith.constant 0 : index
    %c0_63 = arith.constant 0 : index
    %91 = vector.load %arg11[%c0_62, %c0_63] : memref<120x84xf32, #tpu.memory_space<vmem>>, vector<120x84xf32>
    %cst_64 = arith.constant dense<0.000000e+00> : vector<8x84xf32>
    %92 = tpu.matmul %90, %91, %cst_64 {dimension_numbers = #tpu.dot_dimension_numbers<[1], [0], [0], [1], [0, 0, 1, 1], [], []>} : vector<8x120xf32>, vector<120x84xf32>, vector<8x84xf32> -> vector<8x84xf32>
    %c0_65 = arith.constant 0 : index
    %c0_66 = arith.constant 0 : index
    %93 = vector.load %arg12[%c0_65, %c0_66] : memref<1x84xf32, #tpu.memory_space<vmem>>, vector<1x84xf32>
    %94 = vector.broadcast %93 : vector<1x84xf32> to vector<8x84xf32>
    %95 = arith.addf %92, %94 : vector<8x84xf32>
    %cst_67 = arith.constant 0.000000e+00 : f32
    %96 = vector.broadcast %cst_67 : f32 to vector<8x84xf32>
    %97 = arith.maximumf %95, %96 : vector<8x84xf32>
    %c0_68 = arith.constant 0 : index
    %c0_69 = arith.constant 0 : index
    %98 = vector.load %arg13[%c0_68, %c0_69] : memref<84x128xf32, #tpu.memory_space<vmem>>, vector<84x128xf32>
    %cst_70 = arith.constant dense<0.000000e+00> : vector<8x128xf32>
    %99 = tpu.matmul %97, %98, %cst_70 {dimension_numbers = #tpu.dot_dimension_numbers<[1], [0], [0], [1], [0, 0, 1, 1], [], []>} : vector<8x84xf32>, vector<84x128xf32>, vector<8x128xf32> -> vector<8x128xf32>
    %c0_71 = arith.constant 0 : index
    %c0_72 = arith.constant 0 : index
    %100 = vector.load %arg14[%c0_71, %c0_72] : memref<1x128xf32, #tpu.memory_space<vmem>>, vector<1x128xf32>
    %101 = vector.broadcast %100 : vector<1x128xf32> to vector<8x128xf32>
    %102 = arith.addf %99, %101 : vector<8x128xf32>
    %c0_73 = arith.constant 0 : index
    %c0_74 = arith.constant 0 : index
    %103 = vector.load %arg15[%c0_73, %c0_74] : memref<8x128xf32, #tpu.memory_space<vmem>>, vector<8x128xf32>
    tpu.vector_store %arg15[%c0_73, %c0_74], %102 {strides = array<i32>} : memref<8x128xf32, #tpu.memory_space<vmem>>, vector<8x128xf32>,
    return
  }
  func.func @transform_0(%arg0: i32) -> (i32, i32) {
    %c0_i32 = arith.constant 0 : i32
    %c0_i32_0 = arith.constant 0 : i32
    return %arg0, %c0_i32 : i32, i32
  }
  func.func @transform_1(%arg0: i32) -> (i32, i32, i32) {
    %c0_i32 = arith.constant 0 : i32
    %c0_i32_0 = arith.constant 0 : i32
    %c0_i32_1 = arith.constant 0 : i32
    %c0_i32_2 = arith.constant 0 : i32
    return %c0_i32, %c0_i32_0, %c0_i32_1 : i32, i32, i32
  }
  func.func @transform_2(%arg0: i32) -> (i32, i32) {
    %c0_i32 = arith.constant 0 : i32
    %c0_i32_0 = arith.constant 0 : i32
    %c0_i32_1 = arith.constant 0 : i32
    return %c0_i32, %c0_i32_0 : i32, i32
  }
  func.func @transform_3(%arg0: i32) -> (i32, i32) {
    %c0_i32 = arith.constant 0 : i32
    %c0_i32_0 = arith.constant 0 : i32
    %c0_i32_1 = arith.constant 0 : i32
    return %c0_i32, %c0_i32_0 : i32, i32
  }
  func.func @transform_4(%arg0: i32) -> (i32, i32, i32) {
    %c0_i32 = arith.constant 0 : i32
    %c0_i32_0 = arith.constant 0 : i32
    %c0_i32_1 = arith.constant 0 : i32
    %c0_i32_2 = arith.constant 0 : i32
    return %c0_i32, %c0_i32_0, %c0_i32_1 : i32, i32, i32
  }
  func.func @transform_5(%arg0: i32) -> (i32, i32) {
    %c0_i32 = arith.constant 0 : i32
    %c0_i32_0 = arith.constant 0 : i32
    %c0_i32_1 = arith.constant 0 : i32
    return %c0_i32, %c0_i32_0 : i32, i32
  }
  func.func @transform_6(%arg0: i32) -> (i32, i32) {
    %c0_i32 = arith.constant 0 : i32
    %c0_i32_0 = arith.constant 0 : i32
    %c0_i32_1 = arith.constant 0 : i32
    return %c0_i32, %c0_i32_0 : i32, i32
  }
  func.func @transform_7(%arg0: i32) -> (i32, i32) {
    %c0_i32 = arith.constant 0 : i32
    %c0_i32_0 = arith.constant 0 : i32
    %c0_i32_1 = arith.constant 0 : i32
    return %c0_i32, %c0_i32_0 : i32, i32
  }
  func.func @transform_8(%arg0: i32) -> (i32, i32, i32) {
    %c0_i32 = arith.constant 0 : i32
    %c0_i32_0 = arith.constant 0 : i32
    %c0_i32_1 = arith.constant 0 : i32
    %c0_i32_2 = arith.constant 0 : i32
    return %c0_i32, %c0_i32_0, %c0_i32_1 : i32, i32, i32
  }
  func.func @transform_9(%arg0: i32) -> (i32, i32) {
    %c0_i32 = arith.constant 0 : i32
    %c0_i32_0 = arith.constant 0 : i32
    %c0_i32_1 = arith.constant 0 : i32
    return %c0_i32, %c0_i32_0 : i32, i32
  }
  func.func @transform_10(%arg0: i32) -> (i32, i32) {
    %c0_i32 = arith.constant 0 : i32
    %c0_i32_0 = arith.constant 0 : i32
    %c0_i32_1 = arith.constant 0 : i32
    return %c0_i32, %c0_i32_0 : i32, i32
  }
  func.func @transform_11(%arg0: i32) -> (i32, i32) {
    %c0_i32 = arith.constant 0 : i32
    %c0_i32_0 = arith.constant 0 : i32
    %c0_i32_1 = arith.constant 0 : i32
    return %c0_i32, %c0_i32_0 : i32, i32
  }
  func.func @transform_12(%arg0: i32) -> (i32, i32) {
    %c0_i32 = arith.constant 0 : i32
    %c0_i32_0 = arith.constant 0 : i32
    %c0_i32_1 = arith.constant 0 : i32
    return %c0_i32, %c0_i32_0 : i32, i32
  }
  func.func @transform_13(%arg0: i32) -> (i32, i32) {
    %c0_i32 = arith.constant 0 : i32
    %c0_i32_0 = arith.constant 0 : i32
    %c0_i32_1 = arith.constant 0 : i32
    return %c0_i32, %c0_i32_0 : i32, i32
  }
  func.func @transform_14(%arg0: i32) -> (i32, i32) {
    %c0_i32 = arith.constant 0 : i32
    %c0_i32_0 = arith.constant 0 : i32
    return %arg0, %c0_i32 : i32, i32
  }
}

</mosaic_0001>

<llo_original>
// kernel: cdnet_forward.1
$region0: #{cdnet_forward.1}
  #allocation0 [shape = 'u32[]', space=smem, size = 0x4, offset = 0x4, fixed_abs, tag = 'smem constant byte address 0x4 - core index']
  #allocation1 [shape = 'u32[144,128]{1,0:T(1,128)}', space=vmem, size = 0x12000, scoped, tag = 'internal scratch']
  %s0 = inlined_call_operand.vmem [shape: f32[448,84], index: 0, kind: input, shape index: {}]
  %s1 = inlined_call_operand.vmem [shape: bf16[3,84,832], index: 1, kind: input, shape index: {}]
  %s2 = inlined_call_operand.vmem [shape: f32[1,832], index: 2, kind: input, shape index: {}]
  %s3 = inlined_call_operand.vmem [shape: f32[104,221], index: 3, kind: input, shape index: {}]
  %s4 = inlined_call_operand.vmem [shape: bf16[3,800,176], index: 4, kind: input, shape index: {}]
  %s5 = inlined_call_operand.vmem [shape: f32[1,176], index: 5, kind: input, shape index: {}]
  %s6 = inlined_call_operand.vmem [shape: f32[40,101], index: 6, kind: input, shape index: {}]
  %s7 = inlined_call_operand.vmem [shape: f32[160,80], index: 7, kind: input, shape index: {}]
  %s8 = inlined_call_operand.vmem [shape: f32[5,80,120], index: 8, kind: input, shape index: {}]
  %s9 = inlined_call_operand.vmem [shape: f32[1,120], index: 9, kind: input, shape index: {}]
  %s10 = inlined_call_operand.vmem [shape: f32[120,84], index: 10, kind: input, shape index: {}]
  %s11 = inlined_call_operand.vmem [shape: f32[1,84], index: 11, kind: input, shape index: {}]
  %s12 = inlined_call_operand.vmem [shape: f32[84,128], index: 12, kind: input, shape index: {}]
  %s13 = inlined_call_operand.vmem [shape: f32[1,128], index: 13, kind: input, shape index: {}]
  %s14 = inlined_call_operand.vmem [shape: f32[16,128], index: 14, kind: output, shape index: {}]
  %s15 = sld [smem:[#allocation0]]
  $region89: #{cdnet_forward.1} parent=0
    _
  %s17 = ssub.s32 1, %s15
  %s18 = scalar_select 0, %s17, %s15
  loop: start=0, step=1, limit=4
  $region2: #{cdnet_forward.1} parent=0 // loop_pre_header
    _
  $region3: #{cdnet_forward.1} parent=0 // loop_header
    %s20 = sphi 0, %s24
    %p21 = scmp.ge.s32.totalorder %s20, 4
    %s30 = sphi 0, %s32
    %s33 = sphi 0, %s30
    %s34 = sphi 0, %s33
    %s50 = sphi 0, %s34
    %s54 = sphi 0, %s54
    %s56 = sphi 0, %s54
    %s57 = sphi 0, %s56
    %s71 = sphi 0, %s57
    %s75 = sphi 0, %s75
    %s77 = sphi 0, %s75
    %s78 = sphi 0, %s77
    %s92 = sphi 0, %s78
    %s96 = sphi 0, %s96
    %s98 = sphi 0, %s96
    %s99 = sphi 0, %s98
    %s113 = sphi 0, %s99
    %s117 = sphi 0, %s117
    %s119 = sphi 0, %s117
    %s120 = sphi 0, %s119
    %s134 = sphi 0, %s120
    %s138 = sphi 0, %s138
    %s140 = sphi 0, %s138
    %s141 = sphi 0, %s140
    %s155 = sphi 0, %s141
    %s159 = sphi 0, %s159
    %s161 = sphi 0, %s159
    %s162 = sphi 0, %s161
    %s176 = sphi 0, %s162
    %s180 = sphi 0, %s180
    %s182 = sphi 0, %s180
    %s183 = sphi 0, %s182
    %s197 = sphi 0, %s183
    %s201 = sphi 0, %s201
    %s203 = sphi 0, %s201
    %s204 = sphi 0, %s203
    %s218 = sphi 0, %s204
    %s222 = sphi 0, %s222
    %s224 = sphi 0, %s222
    %s225 = sphi 0, %s224
    %s239 = sphi 0, %s225
    %s243 = sphi 0, %s243
    %s245 = sphi 0, %s243
    %s246 = sphi 0, %s245
    %s260 = sphi 0, %s246
    %s264 = sphi 0, %s264
    %s266 = sphi 0, %s264
    %s267 = sphi 0, %s266
    %s281 = sphi 0, %s267
    %s285 = sphi 0, %s285
    %s287 = sphi 0, %s285
    %s288 = sphi 0, %s287
    %s302 = sphi 0, %s288
    %s306 = sphi 0, %s306
    %s308 = sphi 0, %s306
    %s309 = sphi 0, %s308
    %s323 = sphi 0, %s309
    %s329 = sphi 0, %s331
    %s332 = sphi 0, %s329
    %s333 = sphi 0, %s332
    %s349 = sphi 0, %s333
  $region4: #{cdnet_forward.1} parent=0 // loop_header_branch
    %23 = sbr.rel (%p21) target = $region8
  $region5: #{cdnet_forward.1} parent=0 // loop_body
    %s25 = ssub.s32 %s20, 1
    %s26 = ssub.s32 %s20, 2
    %s27 = sadd.s32 %s20, 1
    %s28 = ssub.s32 %s20, %s27
    %p29 = scmp.eq.s32.totalorder %s28, 0
    %s31 = sadd.s32 %s30, 1
    %s32 = scalar_select %p29, %s30, %s31
    %p35 = pneg %p29
    %p36 = scmp.eq.s32.totalorder %s20, 1
    %p37 = por %p35, %p36
    %p38 = scmp.ne.s32.totalorder %s30, %s33
    %p39 = scmp.eq.s32.totalorder %s20, 0
    %p40 = por %p38, %p39
    %p41 = scmp.ne.s32.totalorder %s30, %s33
    %p42 = scmp.eq.s32.totalorder %s25, 1
    %p43 = por %p41, %p42
    %p44 = scmp.ne.s32.totalorder %s33, %s34
    %p45 = scmp.eq.s32.totalorder %s25, 0
    %p46 = por %p44, %p45
    %p47 = scmp.ne.s32.totalorder %s33, %s34
    %p48 = scmp.eq.s32.totalorder %s26, 1
    %p49 = por %p47, %p48
    %p51 = scmp.ne.s32.totalorder %s34, %s50
    %p52 = scmp.eq.s32.totalorder %s26, 0
    %p53 = por %p51, %p52
    %s55 = sadd.s32 %s54, 1
    %p58 = scmp.eq.s32.totalorder %s20, 1
    %p59 = scmp.ne.s32.totalorder %s54, %s56
    %p60 = scmp.eq.s32.totalorder %s20, 0
    %p61 = por %p59, %p60
    %p62 = scmp.ne.s32.totalorder %s54, %s56
    %p63 = scmp.eq.s32.totalorder %s25, 1
    %p64 = por %p62, %p63
    %p65 = scmp.ne.s32.totalorder %s56, %s57
    %p66 = scmp.eq.s32.totalorder %s25, 0
    %p67 = por %p65, %p66
    %p68 = scmp.ne.s32.totalorder %s56, %s57
    %p69 = scmp.eq.s32.totalorder %s26, 1
    %p70 = por %p68, %p69
    %p72 = scmp.ne.s32.totalorder %s57, %s71
    %p73 = scmp.eq.s32.totalorder %s26, 0
    %p74 = por %p72, %p73
    %s76 = sadd.s32 %s75, 1
    %p79 = scmp.eq.s32.totalorder %s20, 1
    %p80 = scmp.ne.s32.totalorder %s75, %s77
    %p81 = scmp.eq.s32.totalorder %s20, 0
    %p82 = por %p80, %p81
    %p83 = scmp.ne.s32.totalorder %s75, %s77
    %p84 = scmp.eq.s32.totalorder %s25, 1
    %p85 = por %p83, %p84
    %p86 = scmp.ne.s32.totalorder %s77, %s78
    %p87 = scmp.eq.s32.totalorder %s25, 0
    %p88 = por %p86, %p87
    %p89 = scmp.ne.s32.totalorder %s77, %s78
    %p90 = scmp.eq.s32.totalorder %s26, 1
    %p91 = por %p89, %p90
    %p93 = scmp.ne.s32.totalorder %s78, %s92
    %p94 = scmp.eq.s32.totalorder %s26, 0
    %p95 = por %p93, %p94
    %s97 = sadd.s32 %s96, 1
    %p100 = scmp.eq.s32.totalorder %s20, 1
    %p101 = scmp.ne.s32.totalorder %s96, %s98
    %p102 = scmp.eq.s32.totalorder %s20, 0
    %p103 = por %p101, %p102
    %p104 = scmp.ne.s32.totalorder %s96, %s98
    %p105 = scmp.eq.s32.totalorder %s25, 1
    %p106 = por %p104, %p105
    %p107 = scmp.ne.s32.totalorder %s98, %s99
    %p108 = scmp.eq.s32.totalorder %s25, 0
    %p109 = por %p107, %p108
    %p110 = scmp.ne.s32.totalorder %s98, %s99
    %p111 = scmp.eq.s32.totalorder %s26, 1
    %p112 = por %p110, %p111
    %p114 = scmp.ne.s32.totalorder %s99, %s113
    %p115 = scmp.eq.s32.totalorder %s26, 0
    %p116 = por %p114, %p115
    %s118 = sadd.s32 %s117, 1
    %p121 = scmp.eq.s32.totalorder %s20, 1
    %p122 = scmp.ne.s32.totalorder %s117, %s119
    %p123 = scmp.eq.s32.totalorder %s20, 0
    %p124 = por %p122, %p123
    %p125 = scmp.ne.s32.totalorder %s117, %s119
    %p126 = scmp.eq.s32.totalorder %s25, 1
    %p127 = por %p125, %p126
    %p128 = scmp.ne.s32.totalorder %s119, %s120
    %p129 = scmp.eq.s32.totalorder %s25, 0
    %p130 = por %p128, %p129
    %p131 = scmp.ne.s32.totalorder %s119, %s120
    %p132 = scmp.eq.s32.totalorder %s26, 1
    %p133 = por %p131, %p132
    %p135 = scmp.ne.s32.totalorder %s120, %s134
    %p136 = scmp.eq.s32.totalorder %s26, 0
    %p137 = por %p135, %p136
    %s139 = sadd.s32 %s138, 1
    %p142 = scmp.eq.s32.totalorder %s20, 1
    %p143 = scmp.ne.s32.totalorder %s138, %s140
    %p144 = scmp.eq.s32.totalorder %s20, 0
    %p145 = por %p143, %p144
    %p146 = scmp.ne.s32.totalorder %s138, %s140
    %p147 = scmp.eq.s32.totalorder %s25, 1
    %p148 = por %p146, %p147
    %p149 = scmp.ne.s32.totalorder %s140, %s141
    %p150 = scmp.eq.s32.totalorder %s25, 0
    %p151 = por %p149, %p150
    %p152 = scmp.ne.s32.totalorder %s140, %s141
    %p153 = scmp.eq.s32.totalorder %s26, 1
    %p154 = por %p152, %p153
    %p156 = scmp.ne.s32.totalorder %s141, %s155
    %p157 = scmp.eq.s32.totalorder %s26, 0
    %p158 = por %p156, %p157
    %s160 = sadd.s32 %s159, 1
    %p163 = scmp.eq.s32.totalorder %s20, 1
    %p164 = scmp.ne.s32.totalorder %s159, %s161
    %p165 = scmp.eq.s32.totalorder %s20, 0
    %p166 = por %p164, %p165
    %p167 = scmp.ne.s32.totalorder %s159, %s161
    %p168 = scmp.eq.s32.totalorder %s25, 1
    %p169 = por %p167, %p168
    %p170 = scmp.ne.s32.totalorder %s161, %s162
    %p171 = scmp.eq.s32.totalorder %s25, 0
    %p172 = por %p170, %p171
    %p173 = scmp.ne.s32.totalorder %s161, %s162
    %p174 = scmp.eq.s32.totalorder %s26, 1
    %p175 = por %p173, %p174
    %p177 = scmp.ne.s32.totalorder %s162, %s176
    %p178 = scmp.eq.s32.totalorder %s26, 0
    %p179 = por %p177, %p178
    %s181 = sadd.s32 %s180, 1
    %p184 = scmp.eq.s32.totalorder %s20, 1
    %p185 = scmp.ne.s32.totalorder %s180, %s182
    %p186 = scmp.eq.s32.totalorder %s20, 0
    %p187 = por %p185, %p186
    %p188 = scmp.ne.s32.totalorder %s180, %s182
    %p189 = scmp.eq.s32.totalorder %s25, 1
    %p190 = por %p188, %p189
    %p191 = scmp.ne.s32.totalorder %s182, %s183
    %p192 = scmp.eq.s32.totalorder %s25, 0
    %p193 = por %p191, %p192
    %p194 = scmp.ne.s32.totalorder %s182, %s183
    %p195 = scmp.eq.s32.totalorder %s26, 1
    %p196 = por %p194, %p195
    %p198 = scmp.ne.s32.totalorder %s183, %s197
    %p199 = scmp.eq.s32.totalorder %s26, 0
    %p200 = por %p198, %p199
    %s202 = sadd.s32 %s201, 1
    %p205 = scmp.eq.s32.totalorder %s20, 1
    %p206 = scmp.ne.s32.totalorder %s201, %s203
    %p207 = scmp.eq.s32.totalorder %s20, 0
    %p208 = por %p206, %p207
    %p209 = scmp.ne.s32.totalorder %s201, %s203
    %p210 = scmp.eq.s32.totalorder %s25, 1
    %p211 = por %p209, %p210
    %p212 = scmp.ne.s32.totalorder %s203, %s204
    %p213 = scmp.eq.s32.totalorder %s25, 0
    %p214 = por %p212, %p213
    %p215 = scmp.ne.s32.totalorder %s203, %s204
    %p216 = scmp.eq.s32.totalorder %s26, 1
    %p217 = por %p215, %p216
    %p219 = scmp.ne.s32.totalorder %s204, %s218
    %p220 = scmp.eq.s32.totalorder %s26, 0
    %p221 = por %p219, %p220
    %s223 = sadd.s32 %s222, 1
    %p226 = scmp.eq.s32.totalorder %s20, 1
    %p227 = scmp.ne.s32.totalorder %s222, %s224
    %p228 = scmp.eq.s32.totalorder %s20, 0
    %p229 = por %p227, %p228
    %p230 = scmp.ne.s32.totalorder %s222, %s224
    %p231 = scmp.eq.s32.totalorder %s25, 1
    %p232 = por %p230, %p231
    %p233 = scmp.ne.s32.totalorder %s224, %s225
    %p234 = scmp.eq.s32.totalorder %s25, 0
    %p235 = por %p233, %p234
    %p236 = scmp.ne.s32.totalorder %s224, %s225
    %p237 = scmp.eq.s32.totalorder %s26, 1
    %p238 = por %p236, %p237
    %p240 = scmp.ne.s32.totalorder %s225, %s239
    %p241 = scmp.eq.s32.totalorder %s26, 0
    %p242 = por %p240, %p241
    %s244 = sadd.s32 %s243, 1
    %p247 = scmp.eq.s32.totalorder %s20, 1
    %p248 = scmp.ne.s32.totalorder %s243, %s245
    %p249 = scmp.eq.s32.totalorder %s20, 0
    %p250 = por %p248, %p249
    %p251 = scmp.ne.s32.totalorder %s243, %s245
    %p252 = scmp.eq.s32.totalorder %s25, 1
    %p253 = por %p251, %p252
    %p254 = scmp.ne.s32.totalorder %s245, %s246
    %p255 = scmp.eq.s32.totalorder %s25, 0
    %p256 = por %p254, %p255
    %p257 = scmp.ne.s32.totalorder %s245, %s246
    %p258 = scmp.eq.s32.totalorder %s26, 1
    %p259 = por %p257, %p258
    %p261 = scmp.ne.s32.totalorder %s246, %s260
    %p262 = scmp.eq.s32.totalorder %s26, 0
    %p263 = por %p261, %p262
    %s265 = sadd.s32 %s264, 1
    %p268 = scmp.eq.s32.totalorder %s20, 1
    %p269 = scmp.ne.s32.totalorder %s264, %s266
    %p270 = scmp.eq.s32.totalorder %s20, 0
    %p271 = por %p269, %p270
    %p272 = scmp.ne.s32.totalorder %s264, %s266
    %p273 = scmp.eq.s32.totalorder %s25, 1
    %p274 = por %p272, %p273
    %p275 = scmp.ne.s32.totalorder %s266, %s267
    %p276 = scmp.eq.s32.totalorder %s25, 0
    %p277 = por %p275, %p276
    %p278 = scmp.ne.s32.totalorder %s266, %s267
    %p279 = scmp.eq.s32.totalorder %s26, 1
    %p280 = por %p278, %p279
    %p282 = scmp.ne.s32.totalorder %s267, %s281
    %p283 = scmp.eq.s32.totalorder %s26, 0
    %p284 = por %p282, %p283
    %s286 = sadd.s32 %s285, 1
    %p289 = scmp.eq.s32.totalorder %s20, 1
    %p290 = scmp.ne.s32.totalorder %s285, %s287
    %p291 = scmp.eq.s32.totalorder %s20, 0
    %p292 = por %p290, %p291
    %p293 = scmp.ne.s32.totalorder %s285, %s287
    %p294 = scmp.eq.s32.totalorder %s25, 1
    %p295 = por %p293, %p294
    %p296 = scmp.ne.s32.totalorder %s287, %s288
    %p297 = scmp.eq.s32.totalorder %s25, 0
    %p298 = por %p296, %p297
    %p299 = scmp.ne.s32.totalorder %s287, %s288
    %p300 = scmp.eq.s32.totalorder %s26, 1
    %p301 = por %p299, %p300
    %p303 = scmp.ne.s32.totalorder %s288, %s302
    %p304 = scmp.eq.s32.totalorder %s26, 0
    %p305 = por %p303, %p304
    %s307 = sadd.s32 %s306, 1
    %p310 = scmp.eq.s32.totalorder %s20, 1
    %p311 = scmp.ne.s32.totalorder %s306, %s308
    %p312 = scmp.eq.s32.totalorder %s20, 0
    %p313 = por %p311, %p312
    %p314 = scmp.ne.s32.totalorder %s306, %s308
    %p315 = scmp.eq.s32.totalorder %s25, 1
    %p316 = por %p314, %p315
    %p317 = scmp.ne.s32.totalorder %s308, %s309
    %p318 = scmp.eq.s32.totalorder %s25, 0
    %p319 = por %p317, %p318
    %p320 = scmp.ne.s32.totalorder %s308, %s309
    %p321 = scmp.eq.s32.totalorder %s26, 1
    %p322 = por %p320, %p321
    %p324 = scmp.ne.s32.totalorder %s309, %s323
    %p325 = scmp.eq.s32.totalorder %s26, 0
    %p326 = por %p324, %p325
    %s327 = ssub.s32 %s20, %s27
    %p328 = scmp.eq.s32.totalorder %s327, 0
    %s330 = sadd.s32 %s329, 1
    %s331 = scalar_select %p328, %s329, %s330
    %p334 = pneg %p328
    %p335 = scmp.eq.s32.totalorder %s20, 1
    %p336 = por %p334, %p335
    %p337 = scmp.ne.s32.totalorder %s329, %s332
    %p338 = scmp.eq.s32.totalorder %s20, 0
    %p339 = por %p337, %p338
    %p340 = scmp.ne.s32.totalorder %s329, %s332
    %p341 = scmp.eq.s32.totalorder %s25, 1
    %p342 = por %p340, %p341
    %p343 = scmp.ne.s32.totalorder %s332, %s333
    %p344 = scmp.eq.s32.totalorder %s25, 0
    %p345 = por %p343, %p344
    %p346 = scmp.ne.s32.totalorder %s332, %s333
    %p347 = scmp.eq.s32.totalorder %s26, 1
    %p348 = por %p346, %p347
    %p350 = scmp.ne.s32.totalorder %s333, %s349
    %p351 = scmp.eq.s32.totalorder %s26, 0
    %p352 = por %p350, %p351
    %p353 = scmp.le.s32.totalorder 1, %s20
    %p354 = scmp.lt.s32.totalorder %s20, 3
    %p355 = pnand %p353, %p354
    %p356 = pneg %p355
    // Predicated region
    $region9: #{cdnet_forward.1} parent=5 // pred_check
      _
    $region10: #{cdnet_forward.1} parent=5 // pred_check_branch
      %358 = sbr.rel (%p355) target = $region12
    $region11: #{cdnet_forward.1} parent=5 // pred_region
      %s359 = ssub.s32 %s20, 1
      // Predicated region
      $region13: #{cdnet_forward.1} parent=11 // pred_check
        %p360 = pneg %p67
      $region14: #{cdnet_forward.1} parent=11 // pred_check_branch
        %362 = sbr.rel (%p360) target = $region16
      $region15: #{cdnet_forward.1} parent=11 // pred_region
        _
      $region16: #{cdnet_forward.1} parent=11 // pred_fallthru
        _
      // Predicated region
      $region17: #{cdnet_forward.1} parent=11 // pred_check
        %p363 = pneg %p88
      $region18: #{cdnet_forward.1} parent=11 // pred_check_branch
        %365 = sbr.rel (%p363) target = $region20
      $region19: #{cdnet_forward.1} parent=11 // pred_region
        _
      $region20: #{cdnet_forward.1} parent=11 // pred_fallthru
        _
      // Predicated region
      $region21: #{cdnet_forward.1} parent=11 // pred_check
        %p366 = pneg %p109
      $region22: #{cdnet_forward.1} parent=11 // pred_check_branch
        %368 = sbr.rel (%p366) target = $region24
      $region23: #{cdnet_forward.1} parent=11 // pred_region
        _
      $region24: #{cdnet_forward.1} parent=11 // pred_fallthru
        _
      // Predicated region
      $region25: #{cdnet_forward.1} parent=11 // pred_check
        %p369 = pneg %p130
      $region26: #{cdnet_forward.1} parent=11 // pred_check_branch
        %371 = sbr.rel (%p369) target = $region28
      $region27: #{cdnet_forward.1} parent=11 // pred_region
        _
      $region28: #{cdnet_forward.1} parent=11 // pred_fallthru
        _
      // Predicated region
      $region29: #{cdnet_forward.1} parent=11 // pred_check
        %p372 = pneg %p151
      $region30: #{cdnet_forward.1} parent=11 // pred_check_branch
        %374 = sbr.rel (%p372) target = $region32
      $region31: #{cdnet_forward.1} parent=11 // pred_region
        _
      $region32: #{cdnet_forward.1} parent=11 // pred_fallthru
        _
      // Predicated region
      $region33: #{cdnet_forward.1} parent=11 // pred_check
        %p375 = pneg %p172
      $region34: #{cdnet_forward.1} parent=11 // pred_check_branch
        %377 = sbr.rel (%p375) target = $region36
      $region35: #{cdnet_forward.1} parent=11 // pred_region
        _
      $region36: #{cdnet_forward.1} parent=11 // pred_fallthru
        _
      // Predicated region
      $region37: #{cdnet_forward.1} parent=11 // pred_check
        %p378 = pneg %p193
      $region38: #{cdnet_forward.1} parent=11 // pred_check_branch
        %380 = sbr.rel (%p378) target = $region40
      $region39: #{cdnet_forward.1} parent=11 // pred_region
        _
      $region40: #{cdnet_forward.1} parent=11 // pred_fallthru
        _
      // Predicated region
      $region41: #{cdnet_forward.1} parent=11 // pred_check
        %p381 = pneg %p214
      $region42: #{cdnet_forward.1} parent=11 // pred_check_branch
        %383 = sbr.rel (%p381) target = $region44
      $region43: #{cdnet_forward.1} parent=11 // pred_region
        _
      $region44: #{cdnet_forward.1} parent=11 // pred_fallthru
        _
      // Predicated region
      $region45: #{cdnet_forward.1} parent=11 // pred_check
        %p384 = pneg %p235
      $region46: #{cdnet_forward.1} parent=11 // pred_check_branch
        %386 = sbr.rel (%p384) target = $region48
      $region47: #{cdnet_forward.1} parent=11 // pred_region
        _
      $region48: #{cdnet_forward.1} parent=11 // pred_fallthru
        _
      // Predicated region
      $region49: #{cdnet_forward.1} parent=11 // pred_check
        %p387 = pneg %p256
      $region50: #{cdnet_forward.1} parent=11 // pred_check_branch
        %389 = sbr.rel (%p387) target = $region52
      $region51: #{cdnet_forward.1} parent=11 // pred_region
        _
      $region52: #{cdnet_forward.1} parent=11 // pred_fallthru
        _
      // Predicated region
      $region53: #{cdnet_forward.1} parent=11 // pred_check
        %p390 = pneg %p277
      $region54: #{cdnet_forward.1} parent=11 // pred_check_branch
        %392 = sbr.rel (%p390) target = $region56
      $region55: #{cdnet_forward.1} parent=11 // pred_region
        _
      $region56: #{cdnet_forward.1} parent=11 // pred_fallthru
        _
      // Predicated region
      $region57: #{cdnet_forward.1} parent=11 // pred_check
        %p393 = pneg %p298
      $region58: #{cdnet_forward.1} parent=11 // pred_check_branch
        %395 = sbr.rel (%p393) target = $region60
      $region59: #{cdnet_forward.1} parent=11 // pred_region
        _
      $region60: #{cdnet_forward.1} parent=11 // pred_fallthru
        _
      // Predicated region
      $region61: #{cdnet_forward.1} parent=11 // pred_check
        %p396 = pneg %p319
      $region62: #{cdnet_forward.1} parent=11 // pred_check_branch
        %398 = sbr.rel (%p396) target = $region64
      $region63: #{cdnet_forward.1} parent=11 // pred_region
        _
      $region64: #{cdnet_forward.1} parent=11 // pred_fallthru
        _
    $region12: #{cdnet_forward.1} parent=5 // pred_fallthru
      _
    %p399 = scmp.lt.s32.totalorder %s20, 2
    // Predicated region
    $region65: #{cdnet_forward.1} parent=5 // pred_check
      %p400 = pneg %p399
    $region66: #{cdnet_forward.1} parent=5 // pred_check_branch
      %402 = sbr.rel (%p400) target = $region68
    $region67: #{cdnet_forward.1} parent=5 // pred_region
      // Predicated region
      $region69: #{cdnet_forward.1} parent=67 // pred_check
        %p403 = pneg %p40
      $region70: #{cdnet_forward.1} parent=67 // pred_check_branch
        %405 = sbr.rel (%p403) target = $region72
      $region71: #{cdnet_forward.1} parent=67 // pred_region
        %s406 = smul.u32 28, %s20
        %p407 = scmp.lt.s32.totalorder %s406, 55
        %s408 = scalar_select %p407, %s406, 55
        %s409 = smul.addr %s408, 8
        %s410 = scalar_lea.vmem %s0, %s409
        %s411 = smul.u32 28, %s20
      $region72: #{cdnet_forward.1} parent=67 // pred_fallthru
        _
    $region68: #{cdnet_forward.1} parent=5 // pred_fallthru
      _
    %p412 = scmp.le.s32.totalorder 1, %s20
    %p413 = scmp.lt.s32.totalorder %s20, 3
    %p414 = pnand %p412, %p413
    %p415 = pneg %p414
    // Predicated region
    $region73: #{cdnet_forward.1} parent=5 // pred_check
      _
    $region74: #{cdnet_forward.1} parent=5 // pred_check_branch
      %417 = sbr.rel (%p414) target = $region76
    $region75: #{cdnet_forward.1} parent=5 // pred_region
      %s418 = ssub.s32 %s20, 1
      %s419 = smul.u32 28, %s25
      %p420 = scmp.lt.s32.totalorder %s419, 55
      %s421 = scalar_select %p420, %s419, 55
      %s422 = smul.addr %s421, 8
      %s423 = scalar_lea.vmem %s0, %s422
      %p424 = pneg %p46
      %p425 = pneg %p43
      %p426 = pneg %p67
      %p427 = pneg %p64
      %p428 = pneg %p88
      %p429 = pneg %p85
      %p430 = pneg %p109
      %p431 = pneg %p106
      %p432 = pneg %p130
      %p433 = pneg %p127
      %p434 = pneg %p151
      %p435 = pneg %p148
      %p436 = pneg %p172
      %p437 = pneg %p169
      %p438 = pneg %p193
      %p439 = pneg %p190
      %p440 = pneg %p214
      %p441 = pneg %p211
      %p442 = pneg %p235
      %p443 = pneg %p232
      %p444 = pneg %p256
      %p445 = pneg %p253
      %p446 = pneg %p277
      %p447 = pneg %p274
      %p448 = pneg %p298
      %p449 = pneg %p295
      %p450 = pneg %p319
      %p451 = pneg %p316
      %p452 = pneg %p345
      %p453 = pneg %p342
      %p454 = scmp.lt.s32.totalorder %s25, 1
      %s455 = scalar_select %p454, %s25, 1
      %s456 = smul.addr %s455, 8
      %s457 = scalar_lea.vmem %s14, %s456
      %s458 = smul.u32 28, %s25
      %p459 = scmp.lt.s32.totalorder %s458, 55
      %s460 = scalar_select %p459, %s458, 55
      %s461 = smul.addr %s460, 8
      %s462 = scalar_lea.vmem %s0, %s461
      %s463 = smul.u32 28, %s25
      %p464 = scmp.lt.s32.totalorder %s25, 1
      %s465 = scalar_select %p464, %s25, 1
      %s466 = smul.addr %s465, 8
      %s467 = scalar_lea.vmem %s14, %s466
      %v469 = vld [vmem:[%s462] sm:$0xff]
      %v470 = vld [vmem:[%s462 + $0x8] sm:$0xff]
      %v471 = vld [vmem:[%s462 + $0x10] sm:$0xff]
      %v472 = vld [vmem:[%s462 + $0x18] sm:$0xff]
      %v473 = vld [vmem:[%s462 + $0x20] sm:$0xff]
      %v474 = vld [vmem:[%s462 + $0x28] sm:$0xff]
      %v475 = vld [vmem:[%s462 + $0x30] sm:$0xff]
      %v476 = vld [vmem:[%s462 + $0x38] sm:$0xff]
      %v477 = vld [vmem:[%s462 + $0x40] sm:$0xff]
      %v478 = vld [vmem:[%s462 + $0x48] sm:$0xff]
      %v479 = vld [vmem:[%s462 + $0x50] sm:$0xff]
      %v480 = vld [vmem:[%s462 + $0x58] sm:$0xff]
      %v481 = vld [vmem:[%s462 + $0x60] sm:$0xff]
      %v482 = vld [vmem:[%s462 + $0x68] sm:$0xff]
      %v483 = vld [vmem:[%s462 + $0x70] sm:$0xff]
      %v484 = vld [vmem:[%s462 + $0x78] sm:$0xff]
      %v485 = vld [vmem:[%s462 + $0x80] sm:$0xff]
      %v486 = vld [vmem:[%s462 + $0x88] sm:$0xff]
      %v487 = vld [vmem:[%s462 + $0x90] sm:$0xff]
      %v488 = vld [vmem:[%s462 + $0x98] sm:$0xff]
      %v489 = vld [vmem:[%s462 + $0xa0] sm:$0xff]
      %v490 = vld [vmem:[%s462 + $0xa8] sm:$0xff]
      %v491 = vld [vmem:[%s462 + $0xb0] sm:$0xff]
      %v492 = vld [vmem:[%s462 + $0xb8] sm:$0xff]
      %v493 = vld [vmem:[%s462 + $0xc0] sm:$0xff]
      %v494 = vld [vmem:[%s462 + $0xc8] sm:$0xff]
      %v495 = vld [vmem:[%s462 + $0xd0] sm:$0xff]
      %v496 = vld [vmem:[%s462 + $0xd8] sm:$0x3f]
      %v497 = vpack.c.bf16 %v470, %v469
      %v498 = vpack.c.bf16 %v472, %v471
      %v499 = vpack.c.bf16 %v474, %v473
      %v500 = vpack.c.bf16 %v476, %v475
      %v501 = vpack.c.bf16 %v478, %v477
      %v502 = vpack.c.bf16 %v480, %v479
      %v503 = vpack.c.bf16 %v482, %v481
      %v504 = vpack.c.bf16 %v484, %v483
      %v505 = vpack.c.bf16 %v486, %v485
      %v506 = vpack.c.bf16 %v488, %v487
      %v507 = vpack.c.bf16 %v490, %v489
      %v508 = vpack.c.bf16 %v492, %v491
      %v509 = vpack.c.bf16 %v494, %v493
      %v510 = vpack.c.bf16 %v496, %v495
      %v511 = vld [vmem:[%s1] sm:$0xff]
      %v512 = vld [vmem:[%s1 + $0x8] sm:$0xff]
      %v513 = vld [vmem:[%s1 + $0x10] sm:$0xff]
      %v514 = vld [vmem:[%s1 + $0x18] sm:$0xf]
      %v515 = vld [vmem:[%s1 + $0x1c] sm:$0xff]
      %v516 = vld [vmem:[%s1 + $0x24] sm:$0xff]
      %v517 = vld [vmem:[%s1 + $0x2c] sm:$0xff]
      %v518 = vld [vmem:[%s1 + $0x34] sm:$0xf]
      %v519 = vld [vmem:[%s1 + $0x38] sm:$0xff]
      %v520 = vld [vmem:[%s1 + $0x40] sm:$0xff]
      %v521 = vld [vmem:[%s1 + $0x48] sm:$0xff]
      %v522 = vld [vmem:[%s1 + $0x50] sm:$0xf]
      %v523 = vld [vmem:[%s1 + $0x54] sm:$0xff]
      %v524 = vld [vmem:[%s1 + $0x5c] sm:$0xff]
      %v525 = vld [vmem:[%s1 + $0x64] sm:$0xff]
      %v526 = vld [vmem:[%s1 + $0x6c] sm:$0xf]
      %v527 = vld [vmem:[%s1 + $0x70] sm:$0xff]
      %v528 = vld [vmem:[%s1 + $0x78] sm:$0xff]
      %v529 = vld [vmem:[%s1 + $0x80] sm:$0xff]
      %v530 = vld [vmem:[%s1 + $0x88] sm:$0xf]
      %v531 = vld [vmem:[%s1 + $0x8c] sm:$0xff]
      %v532 = vld [vmem:[%s1 + $0x94] sm:$0xff]
      %v533 = vld [vmem:[%s1 + $0x9c] sm:$0xff]
      %v534 = vld [vmem:[%s1 + $0xa4] sm:$0xf]
      %v535 = vld [vmem:[%s1 + $0xa8] sm:$0xff]
      %v536 = vld [vmem:[%s1 + $0xb0] sm:$0xff]
      %v537 = vld [vmem:[%s1 + $0xb8] sm:$0xff]
      %v538 = vld [vmem:[%s1 + $0xc0] sm:$0xf]
      %v539 = vld [vmem:[%s1 + $0xc4] sm:$0xff]
      %v540 = vld [vmem:[%s1 + $0xcc] sm:$0xff]
      %v541 = vld [vmem:[%s1 + $0xd4] sm:$0xff]
      %v542 = vld [vmem:[%s1 + $0xdc] sm:$0xf]
      %v543 = vld [vmem:[%s1 + $0xe0] sm:$0xff]
      %v544 = vld [vmem:[%s1 + $0xe8] sm:$0xff]
      %v545 = vld [vmem:[%s1 + $0xf0] sm:$0xff]
      %v546 = vld [vmem:[%s1 + $0xf8] sm:$0xf]
      %v547 = vld [vmem:[%s1 + $0xfc] sm:$0xff]
      %v548 = vld [vmem:[%s1 + $0x104] sm:$0xff]
      %v549 = vld [vmem:[%s1 + $0x10c] sm:$0xff]
      %v550 = vld [vmem:[%s1 + $0x114] sm:$0xf]
      %v551 = vld [vmem:[%s1 + $0x118] sm:$0x33]
      %v552 = vld [vmem:[%s1 + $0x120] sm:$0x33]
      %v553 = vld [vmem:[%s1 + $0x128] sm:$0x33]
      %v554 = vld [vmem:[%s1 + $0x130] sm:$0x3]
      %v555 = vld [vmem:[%s462 + $0x1] sm:$0xff]
      %v556 = vld [vmem:[%s462 + $0x9] sm:$0xff]
      %v557 = vld [vmem:[%s462 + $0x11] sm:$0xff]
      %v558 = vld [vmem:[%s462 + $0x19] sm:$0xff]
      %v559 = vld [vmem:[%s462 + $0x21] sm:$0xff]
      %v560 = vld [vmem:[%s462 + $0x29] sm:$0xff]
      %v561 = vld [vmem:[%s462 + $0x31] sm:$0xff]
      %v562 = vld [vmem:[%s462 + $0x39] sm:$0xff]
      %v563 = vld [vmem:[%s462 + $0x41] sm:$0xff]
      %v564 = vld [vmem:[%s462 + $0x49] sm:$0xff]
      %v565 = vld [vmem:[%s462 + $0x51] sm:$0xff]
      %v566 = vld [vmem:[%s462 + $0x59] sm:$0xff]
      %v567 = vld [vmem:[%s462 + $0x61] sm:$0xff]
      %v568 = vld [vmem:[%s462 + $0x69] sm:$0xff]
      %v569 = vld [vmem:[%s462 + $0x71] sm:$0xff]
      %v570 = vld [vmem:[%s462 + $0x79] sm:$0xff]
      %v571 = vld [vmem:[%s462 + $0x81] sm:$0xff]
      %v572 = vld [vmem:[%s462 + $0x89] sm:$0xff]
      %v573 = vld [vmem:[%s462 + $0x91] sm:$0xff]
      %v574 = vld [vmem:[%s462 + $0x99] sm:$0xff]
      %v575 = vld [vmem:[%s462 + $0xa1] sm:$0xff]
      %v576 = vld [vmem:[%s462 + $0xa9] sm:$0xff]
      %v577 = vld [vmem:[%s462 + $0xb1] sm:$0xff]
      %v578 = vld [vmem:[%s462 + $0xb9] sm:$0xff]
      %v579 = vld [vmem:[%s462 + $0xc1] sm:$0xff]
      %v580 = vld [vmem:[%s462 + $0xc9] sm:$0xff]
      %v581 = vld [vmem:[%s462 + $0xd1] sm:$0xff]
      %v582 = vld [vmem:[%s462 + $0xd9] sm:$0x3f]
      %v583 = vpack.c.bf16 %v556, %v555
      %v584 = vpack.c.bf16 %v558, %v557
      %v585 = vpack.c.bf16 %v560, %v559
      %v586 = vpack.c.bf16 %v562, %v561
      %v587 = vpack.c.bf16 %v564, %v563
      %v588 = vpack.c.bf16 %v566, %v565
      %v589 = vpack.c.bf16 %v568, %v567
      %v590 = vpack.c.bf16 %v570, %v569
      %v591 = vpack.c.bf16 %v572, %v571
      %v592 = vpack.c.bf16 %v574, %v573
      %v593 = vpack.c.bf16 %v576, %v575
      %v594 = vpack.c.bf16 %v578, %v577
      %v595 = vpack.c.bf16 %v580, %v579
      %v596 = vpack.c.bf16 %v582, %v581
      %s597 = scalar_lea.vmem %s1, 308
      %v598 = vld [vmem:[%s597] sm:$0xff]
      %v599 = vld [vmem:[%s597 + $0x8] sm:$0xff]
      %v600 = vld [vmem:[%s597 + $0x10] sm:$0xff]
      %v601 = vld [vmem:[%s597 + $0x18] sm:$0xf]
      %v602 = vld [vmem:[%s597 + $0x1c] sm:$0xff]
      %v603 = vld [vmem:[%s597 + $0x24] sm:$0xff]
      %v604 = vld [vmem:[%s597 + $0x2c] sm:$0xff]
      %v605 = vld [vmem:[%s597 + $0x34] sm:$0xf]
      %v606 = vld [vmem:[%s597 + $0x38] sm:$0xff]
      %v607 = vld [vmem:[%s597 + $0x40] sm:$0xff]
      %v608 = vld [vmem:[%s597 + $0x48] sm:$0xff]
      %v609 = vld [vmem:[%s597 + $0x50] sm:$0xf]
      %v610 = vld [vmem:[%s597 + $0x54] sm:$0xff]
      %v611 = vld [vmem:[%s597 + $0x5c] sm:$0xff]
      %v612 = vld [vmem:[%s597 + $0x64] sm:$0xff]
      %v613 = vld [vmem:[%s597 + $0x6c] sm:$0xf]
      %v614 = vld [vmem:[%s597 + $0x70] sm:$0xff]
      %v615 = vld [vmem:[%s597 + $0x78] sm:$0xff]
      %v616 = vld [vmem:[%s597 + $0x80] sm:$0xff]
      %v617 = vld [vmem:[%s597 + $0x88] sm:$0xf]
      %v618 = vld [vmem:[%s597 + $0x8c] sm:$0xff]
      %v619 = vld [vmem:[%s597 + $0x94] sm:$0xff]
      %v620 = vld [vmem:[%s597 + $0x9c] sm:$0xff]
      %v621 = vld [vmem:[%s597 + $0xa4] sm:$0xf]
      %v622 = vld [vmem:[%s597 + $0xa8] sm:$0xff]
      %v623 = vld [vmem:[%s597 + $0xb0] sm:$0xff]
      %v624 = vld [vmem:[%s597 + $0xb8] sm:$0xff]
      %v625 = vld [vmem:[%s597 + $0xc0] sm:$0xf]
      %v626 = vld [vmem:[%s597 + $0xc4] sm:$0xff]
      %v627 = vld [vmem:[%s597 + $0xcc] sm:$0xff]
      %v628 = vld [vmem:[%s597 + $0xd4] sm:$0xff]
      %v629 = vld [vmem:[%s597 + $0xdc] sm:$0xf]
      %v630 = vld [vmem:[%s597 + $0xe0] sm:$0xff]
      %v631 = vld [vmem:[%s597 + $0xe8] sm:$0xff]
      %v632 = vld [vmem:[%s597 + $0xf0] sm:$0xff]
      %v633 = vld [vmem:[%s597 + $0xf8] sm:$0xf]
      %v634 = vld [vmem:[%s597 + $0xfc] sm:$0xff]
      %v635 = vld [vmem:[%s597 + $0x104] sm:$0xff]
      %v636 = vld [vmem:[%s597 + $0x10c] sm:$0xff]
      %v637 = vld [vmem:[%s597 + $0x114] sm:$0xf]
      %v638 = vld [vmem:[%s597 + $0x118] sm:$0x33]
      %v639 = vld [vmem:[%s597 + $0x120] sm:$0x33]
      %v640 = vld [vmem:[%s597 + $0x128] sm:$0x33]
      %v641 = vld [vmem:[%s597 + $0x130] sm:$0x3]
      %v686 = vunpack.c.l.b16 %v598
      %v687 = vunpack.c.h.b16 %v598
      %v688 = vunpack.c.l.b16 %v599
      %v689 = vunpack.c.h.b16 %v599
      %v690 = vunpack.c.l.b16 %v600
      %v691 = vunpack.c.h.b16 %v600
      %v692 = vunpack.c.l.b16 %v601
      %v693 = vunpack.c.l.b16 %v602
      %v694 = vunpack.c.h.b16 %v602
      %v695 = vunpack.c.l.b16 %v603
      %v696 = vunpack.c.h.b16 %v603
      %v697 = vunpack.c.l.b16 %v604
      %v698 = vunpack.c.h.b16 %v604
      %v699 = vunpack.c.l.b16 %v605
      %v700 = vunpack.c.l.b16 %v606
      %v701 = vunpack.c.h.b16 %v606
      %v702 = vunpack.c.l.b16 %v607
      %v703 = vunpack.c.h.b16 %v607
      %v704 = vunpack.c.l.b16 %v608
      %v705 = vunpack.c.h.b16 %v608
      %v706 = vunpack.c.l.b16 %v609
      %v707 = vunpack.c.l.b16 %v610
      %v708 = vunpack.c.h.b16 %v610
      %v709 = vunpack.c.l.b16 %v611
      %v710 = vunpack.c.h.b16 %v611
      %v711 = vunpack.c.l.b16 %v612
      %v712 = vunpack.c.h.b16 %v612
      %v713 = vunpack.c.l.b16 %v613
      %v714 = vunpack.c.l.b16 %v614
      %v715 = vunpack.c.h.b16 %v614
      %v716 = vunpack.c.l.b16 %v615
      %v717 = vunpack.c.h.b16 %v615
      %v718 = vunpack.c.l.b16 %v616
      %v719 = vunpack.c.h.b16 %v616
      %v720 = vunpack.c.l.b16 %v617
      %v721 = vunpack.c.l.b16 %v618
      %v722 = vunpack.c.h.b16 %v618
      %v723 = vunpack.c.l.b16 %v619
      %v724 = vunpack.c.h.b16 %v619
      %v725 = vunpack.c.l.b16 %v620
      %v726 = vunpack.c.h.b16 %v620
      %v727 = vunpack.c.l.b16 %v621
      %v728 = vunpack.c.l.b16 %v622
      %v729 = vunpack.c.h.b16 %v622
      %v730 = vunpack.c.l.b16 %v623
      %v731 = vunpack.c.h.b16 %v623
      %v732 = vunpack.c.l.b16 %v624
      %v733 = vunpack.c.h.b16 %v624
      %v734 = vunpack.c.l.b16 %v625
      %v735 = vunpack.c.l.b16 %v626
      %v736 = vunpack.c.h.b16 %v626
      %v737 = vunpack.c.l.b16 %v627
      %v738 = vunpack.c.h.b16 %v627
      %v739 = vunpack.c.l.b16 %v628
      %v740 = vunpack.c.h.b16 %v628
      %v741 = vunpack.c.l.b16 %v629
      %v742 = vunpack.c.l.b16 %v630
      %v743 = vunpack.c.h.b16 %v630
      %v744 = vunpack.c.l.b16 %v631
      %v745 = vunpack.c.h.b16 %v631
      %v746 = vunpack.c.l.b16 %v632
      %v747 = vunpack.c.h.b16 %v632
      %v748 = vunpack.c.l.b16 %v633
      %v749 = vunpack.c.l.b16 %v634
      %v750 = vunpack.c.h.b16 %v634
      %v751 = vunpack.c.l.b16 %v635
      %v752 = vunpack.c.h.b16 %v635
      %v753 = vunpack.c.l.b16 %v636
      %v754 = vunpack.c.h.b16 %v636
      %v755 = vunpack.c.l.b16 %v637
      %v756 = vunpack.c.l.b16 %v638
      %v757 = vunpack.c.h.b16 %v638
      %v758 = vunpack.c.l.b16 %v639
      %v759 = vunpack.c.h.b16 %v639
      %v760 = vunpack.c.l.b16 %v640
      %v761 = vunpack.c.h.b16 %v640
      %v762 = vunpack.c.l.b16 %v641
      %v763 = vpack.c.b16 %v693, %v686
      %v764 = vpack.c.b16 %v694, %v687
      %v765 = vpack.c.b16 %v695, %v688
      %v766 = vpack.c.b16 %v696, %v689
      %v767 = vpack.c.b16 %v697, %v690
      %v768 = vpack.c.b16 %v698, %v691
      %v769 = vpack.c.b16 %v699, %v692
      %v770 = vpack.c.b16 %v707, %v700
      %v771 = vpack.c.b16 %v708, %v701
      %v772 = vpack.c.b16 %v709, %v702
      %v773 = vpack.c.b16 %v710, %v703
      %v774 = vpack.c.b16 %v711, %v704
      %v775 = vpack.c.b16 %v712, %v705
      %v776 = vpack.c.b16 %v713, %v706
      %v777 = vpack.c.b16 %v721, %v714
      %v778 = vpack.c.b16 %v722, %v715
      %v779 = vpack.c.b16 %v723, %v716
      %v780 = vpack.c.b16 %v724, %v717
      %v781 = vpack.c.b16 %v725, %v718
      %v782 = vpack.c.b16 %v726, %v719
      %v783 = vpack.c.b16 %v727, %v720
      %v784 = vpack.c.b16 %v735, %v728
      %v785 = vpack.c.b16 %v736, %v729
      %v786 = vpack.c.b16 %v737, %v730
      %v787 = vpack.c.b16 %v738, %v731
      %v788 = vpack.c.b16 %v739, %v732
      %v789 = vpack.c.b16 %v740, %v733
      %v790 = vpack.c.b16 %v741, %v734
      %v791 = vpack.c.b16 %v749, %v742
      %v792 = vpack.c.b16 %v750, %v743
      %v793 = vpack.c.b16 %v751, %v744
      %v794 = vpack.c.b16 %v752, %v745
      %v795 = vpack.c.b16 %v753, %v746
      %v796 = vpack.c.b16 %v754, %v747
      %v797 = vpack.c.b16 %v755, %v748
      %v798 = vpack.c.b16 %v756, %v756
      %v799 = vpack.c.b16 %v757, %v757
      %v800 = vpack.c.b16 %v758, %v758
      %v801 = vpack.c.b16 %v759, %v759
      %v802 = vpack.c.b16 %v760, %v760
      %v803 = vpack.c.b16 %v761, %v761
      %v804 = vpack.c.b16 %v762, %v762
      %vm840 = vcmask 687104
      %v842 = vsel %vm840, %v583, 0
      %v845 = vsel %vm840, %v584, 0
      %v848 = vsel %vm840, %v585, 0
      %v851 = vsel %vm840, %v586, 0
      %v854 = vsel %vm840, %v587, 0
      %v857 = vsel %vm840, %v588, 0
      %v860 = vsel %vm840, %v589, 0
      %v863 = vsel %vm840, %v590, 0
      %v866 = vsel %vm840, %v591, 0
      %v869 = vsel %vm840, %v592, 0
      %v872 = vsel %vm840, %v593, 0
      %v875 = vsel %vm840, %v594, 0
      %v878 = vsel %vm840, %v595, 0
      %v881 = vsel %vm840, %v596, 0
      %vm883 = vcmask 1041408
      %v885 = vsel %vm883, %v798, 0
      %v888 = vsel %vm883, %v799, 0
      %v891 = vsel %vm883, %v800, 0
      %v894 = vsel %vm883, %v801, 0
      %v897 = vsel %vm883, %v802, 0
      %v900 = vsel %vm883, %v803, 0
      %v903 = vsel %vm883, %v804, 0
      %905 = vmatprep.subr.bf16.mxu0 %v764
      %906 = vmatpush1.bf16.msra.mxu0 %v763
      %907 = vmatprep.subr.bf16.mxu0 %v771
      %908 = vmatpush1.bf16.msra.mxu0 %v770
      %909 = vmatprep.subr.bf16.mxu0 %v778
      %910 = vmatpush1.bf16.msra.mxu0 %v777
      %911 = vmatprep.subr.bf16.mxu0 %v785
      %912 = vmatpush1.bf16.msra.mxu0 %v784
      %913 = vmatprep.subr.bf16.mxu0 %v792
      %914 = vmatpush1.bf16.msra.mxu0 %v791
      %915 = vmatprep.subr.bf16.mxu0 %v888
      %916 = vmatpush1.bf16.msra.mxu0 %v885
      %917 = vmatprep.subr.bf16.mxu0 0
      %918 = vmatpush1.bf16.msra.mxu0 0
      %919 = vmatprep.subr.bf16.mxu0 0
      %920 = vmatpush1.bf16.msra.mxu0 0
      %921 = vmatprep.subr.bf16.mxu0 0
      %922 = vmatpush1.bf16.msra.mxu0 0
      %923 = vmatprep.subr.bf16.mxu0 0
      %924 = vmatpush1.bf16.msra.mxu0 0
      %925 = vmatprep.subr.bf16.mxu0 0
      %926 = vmatpush1.bf16.msra.mxu0 0
      %927 = vmatprep.subr.bf16.mxu0 0
      %928 = vmatpush1.bf16.msra.mxu0 0
      %929 = vmatprep.subr.bf16.mxu0 0
      %930 = vmatpush1.bf16.msra.mxu0 0
      %931 = vmatprep.subr.bf16.mxu0 0
      %932 = vmatpush1.bf16.msra.mxu0 0
      %933 = vmatprep.subr.bf16.mxu0 0
      %934 = vmatpush1.bf16.msra.mxu0 0
      %935 = vmatprep.subr.bf16.mxu0 0
      %936 = vmatpush1.bf16.msra.mxu0 0
      %937 = vmatprep.mubr.bf16.mxu0 0
      %938 = vmatmul.mubr.bf16.gmra.mrb[0].mxu0 %v842
      %v939 = vpop.f32.mrb[0].mxu0
      %v940 = vadd.f32 0.0, %v939
      %v941 = vpop.f32.mrb[0].mxu0
      %v942 = vadd.f32 0.0, %v941
      %v943 = vpop.f32.mrb[0].mxu0
      %v944 = vadd.f32 0.0, %v943
      %v945 = vpop.f32.mrb[0].mxu0
      %v946 = vadd.f32 0.0, %v945
      %947 = vmatprep.mubr.bf16.mxu0 0
      %948 = vmatmul.mubr.bf16.gmra.mrb[0].mxu0 %v845
      %v949 = vpop.f32.mrb[0].mxu0
      %v950 = vadd.f32 0.0, %v949
      %v951 = vpop.f32.mrb[0].mxu0
      %v952 = vadd.f32 0.0, %v951
      %v953 = vpop.f32.mrb[0].mxu0
      %v954 = vadd.f32 0.0, %v953
      %v955 = vpop.f32.mrb[0].mxu0
      %v956 = vadd.f32 0.0, %v955
      %957 = vmatprep.mubr.bf16.mxu0 0
      %958 = vmatmul.mubr.bf16.gmra.mrb[0].mxu0 %v848
      %v959 = vpop.f32.mrb[0].mxu0
      %v960 = vadd.f32 0.0, %v959
      %v961 = vpop.f32.mrb[0].mxu0
      %v962 = vadd.f32 0.0, %v961
      %v963 = vpop.f32.mrb[0].mxu0
      %v964 = vadd.f32 0.0, %v963
      %v965 = vpop.f32.mrb[0].mxu0
      %v966 = vadd.f32 0.0, %v965
      %967 = vmatprep.mubr.bf16.mxu0 0
      %968 = vmatmul.mubr.bf16.gmra.mrb[0].mxu0 %v851
      %v969 = vpop.f32.mrb[0].mxu0
      %v970 = vadd.f32 0.0, %v969
      %v971 = vpop.f32.mrb[0].mxu0
      %v972 = vadd.f32 0.0, %v971
      %v973 = vpop.f32.mrb[0].mxu0
      %v974 = vadd.f32 0.0, %v973
      %v975 = vpop.f32.mrb[0].mxu0
      %v976 = vadd.f32 0.0, %v975
      %977 = vmatprep.mubr.bf16.mxu0 0
      %978 = vmatmul.mubr.bf16.gmra.mrb[0].mxu0 %v854
      %v979 = vpop.f32.mrb[0].mxu0
      %v980 = vadd.f32 0.0, %v979
      %v981 = vpop.f32.mrb[0].mxu0
      %v982 = vadd.f32 0.0, %v981
      %v983 = vpop.f32.mrb[0].mxu0
      %v984 = vadd.f32 0.0, %v983
      %v985 = vpop.f32.mrb[0].mxu0
      %v986 = vadd.f32 0.0, %v985
      %987 = vmatprep.mubr.bf16.mxu0 0
      %988 = vmatmul.mubr.bf16.gmra.mrb[0].mxu0 %v857
      %v989 = vpop.f32.mrb[0].mxu0
      %v990 = vadd.f32 0.0, %v989
      %v991 = vpop.f32.mrb[0].mxu0
      %v992 = vadd.f32 0.0, %v991
      %v993 = vpop.f32.mrb[0].mxu0
      %v994 = vadd.f32 0.0, %v993
      %v995 = vpop.f32.mrb[0].mxu0
      %v996 = vadd.f32 0.0, %v995
      %997 = vmatprep.mubr.bf16.mxu0 0
      %998 = vmatmul.mubr.bf16.gmra.mrb[0].mxu0 %v860
      %v999 = vpop.f32.mrb[0].mxu0
      %v1000 = vadd.f32 0.0, %v999
      %v1001 = vpop.f32.mrb[0].mxu0
      %v1002 = vadd.f32 0.0, %v1001
      %v1003 = vpop.f32.mrb[0].mxu0
      %v1004 = vadd.f32 0.0, %v1003
      %v1005 = vpop.f32.mrb[0].mxu0
      %v1006 = vadd.f32 0.0, %v1005
      %1007 = vmatprep.mubr.bf16.mxu0 0
      %1008 = vmatmul.mubr.bf16.gmra.mrb[0].mxu0 %v863
      %v1009 = vpop.f32.mrb[0].mxu0
      %v1010 = vadd.f32 0.0, %v1009
      %v1011 = vpop.f32.mrb[0].mxu0
      %v1012 = vadd.f32 0.0, %v1011
      %v1013 = vpop.f32.mrb[0].mxu0
      %v1014 = vadd.f32 0.0, %v1013
      %v1015 = vpop.f32.mrb[0].mxu0
      %v1016 = vadd.f32 0.0, %v1015
      %1017 = vmatprep.mubr.bf16.mxu0 0
      %1018 = vmatmul.mubr.bf16.gmra.mrb[0].mxu0 %v866
      %v1019 = vpop.f32.mrb[0].mxu0
      %v1020 = vadd.f32 0.0, %v1019
      %v1021 = vpop.f32.mrb[0].mxu0
      %v1022 = vadd.f32 0.0, %v1021
      %v1023 = vpop.f32.mrb[0].mxu0
      %v1024 = vadd.f32 0.0, %v1023
      %v1025 = vpop.f32.mrb[0].mxu0
      %v1026 = vadd.f32 0.0, %v1025
      %1027 = vmatprep.mubr.bf16.mxu0 0
      %1028 = vmatmul.mubr.bf16.gmra.mrb[0].mxu0 %v869
      %v1029 = vpop.f32.mrb[0].mxu0
      %v1030 = vadd.f32 0.0, %v1029
      %v1031 = vpop.f32.mrb[0].mxu0
      %v1032 = vadd.f32 0.0, %v1031
      %v1033 = vpop.f32.mrb[0].mxu0
      %v1034 = vadd.f32 0.0, %v1033
      %v1035 = vpop.f32.mrb[0].mxu0
      %v1036 = vadd.f32 0.0, %v1035
      %1037 = vmatprep.mubr.bf16.mxu0 0
      %1038 = vmatmul.mubr.bf16.gmra.mrb[0].mxu0 %v872
      %v1039 = vpop.f32.mrb[0].mxu0
      %v1040 = vadd.f32 0.0, %v1039
      %v1041 = vpop.f32.mrb[0].mxu0
      %v1042 = vadd.f32 0.0, %v1041
      %v1043 = vpop.f32.mrb[0].mxu0
      %v1044 = vadd.f32 0.0, %v1043
      %v1045 = vpop.f32.mrb[0].mxu0
      %v1046 = vadd.f32 0.0, %v1045
      %1047 = vmatprep.mubr.bf16.mxu0 0
      %1048 = vmatmul.mubr.bf16.gmra.mrb[0].mxu0 %v875
      %v1049 = vpop.f32.mrb[0].mxu0
      %v1050 = vadd.f32 0.0, %v1049
      %v1051 = vpop.f32.mrb[0].mxu0
      %v1052 = vadd.f32 0.0, %v1051
      %v1053 = vpop.f32.mrb[0].mxu0
      %v1054 = vadd.f32 0.0, %v1053
      %v1055 = vpop.f32.mrb[0].mxu0
      %v1056 = vadd.f32 0.0, %v1055
      %1057 = vmatprep.mubr.bf16.mxu0 0
      %1058 = vmatmul.mubr.bf16.gmra.mrb[0].mxu0 %v878
      %v1059 = vpop.f32.mrb[0].mxu0
      %v1060 = vadd.f32 0.0, %v1059
      %v1061 = vpop.f32.mrb[0].mxu0
      %v1062 = vadd.f32 0.0, %v1061
      %v1063 = vpop.f32.mrb[0].mxu0
      %v1064 = vadd.f32 0.0, %v1063
      %v1065 = vpop.f32.mrb[0].mxu0
      %v1066 = vadd.f32 0.0, %v1065
      %1067 = vmatprep.mubr.bf16.mxu0 0
      %1068 = vmatmul.mubr.bf16.gmra.mrb[0].mxu0 %v881
      %v1069 = vpop.f32.mrb[0].mxu0
      %v1070 = vadd.f32 0.0, %v1069
      %v1071 = vpop.f32.mrb[0].mxu0
      %v1072 = vadd.f32 0.0, %v1071
      %v1073 = vpop.f32.mrb[0].mxu0
      %v1074 = vadd.f32 0.0, %v1073
      %v1075 = vpop.f32.mrb[0].mxu0
      %v1076 = vadd.f32 0.0, %v1075
      %1077 = vdwg.mxu0
      %1078 = vmatprep.subr.bf16.mxu0 %v766
      %1079 = vmatpush1.bf16.msra.mxu0 %v765
      %1080 = vmatprep.subr.bf16.mxu0 %v773
      %1081 = vmatpush1.bf16.msra.mxu0 %v772
      %1082 = vmatprep.subr.bf16.mxu0 %v780
      %1083 = vmatpush1.bf16.msra.mxu0 %v779
      %1084 = vmatprep.subr.bf16.mxu0 %v787
      %1085 = vmatpush1.bf16.msra.mxu0 %v786
      %1086 = vmatprep.subr.bf16.mxu0 %v794
      %1087 = vmatpush1.bf16.msra.mxu0 %v793
      %1088 = vmatprep.subr.bf16.mxu0 %v894
      %1089 = vmatpush1.bf16.msra.mxu0 %v891
      %1090 = vmatprep.subr.bf16.mxu0 0
      %1091 = vmatpush1.bf16.msra.mxu0 0
      %1092 = vmatprep.subr.bf16.mxu0 0
      %1093 = vmatpush1.bf16.msra.mxu0 0
      %1094 = vmatprep.subr.bf16.mxu0 0
      %1095 = vmatpush1.bf16.msra.mxu0 0
      %1096 = vmatprep.subr.bf16.mxu0 0
      %1097 = vmatpush1.bf16.msra.mxu0 0
      %1098 = vmatprep.subr.bf16.mxu0 0
      %1099 = vmatpush1.bf16.msra.mxu0 0
      %1100 = vmatprep.subr.bf16.mxu0 0
      %1101 = vmatpush1.bf16.msra.mxu0 0
      %1102 = vmatprep.subr.bf16.mxu0 0
      %1103 = vmatpush1.bf16.msra.mxu0 0
      %1104 = vmatprep.subr.bf16.mxu0 0
      %1105 = vmatpush1.bf16.msra.mxu0 0
      %1106 = vmatprep.subr.bf16.mxu0 0
      %1107 = vmatpush1.bf16.msra.mxu0 0
      %1108 = vmatprep.subr.bf16.mxu0 0
      %1109 = vmatpush1.bf16.msra.mxu0 0
      %1110 = vmatprep.mubr.bf16.mxu0 0
      %1111 = vmatmul.mubr.bf16.gmra.mrb[0].mxu0 %v842
      %v1112 = vpop.f32.mrb[0].mxu0
      %v1113 = vadd.f32 0.0, %v1112
      %v1114 = vpop.f32.mrb[0].mxu0
      %v1115 = vadd.f32 0.0, %v1114
      %v1116 = vpop.f32.mrb[0].mxu0
      %v1117 = vadd.f32 0.0, %v1116
      %v1118 = vpop.f32.mrb[0].mxu0
      %v1119 = vadd.f32 0.0, %v1118
      %1120 = vmatprep.mubr.bf16.mxu0 0
      %1121 = vmatmul.mubr.bf16.gmra.mrb[0].mxu0 %v845
      %v1122 = vpop.f32.mrb[0].mxu0
      %v1123 = vadd.f32 0.0, %v1122
      %v1124 = vpop.f32.mrb[0].mxu0
      %v1125 = vadd.f32 0.0, %v1124
      %v1126 = vpop.f32.mrb[0].mxu0
      %v1127 = vadd.f32 0.0, %v1126
      %v1128 = vpop.f32.mrb[0].mxu0
      %v1129 = vadd.f32 0.0, %v1128
      %1130 = vmatprep.mubr.bf16.mxu0 0
      %1131 = vmatmul.mubr.bf16.gmra.mrb[0].mxu0 %v848
      %v1132 = vpop.f32.mrb[0].mxu0
      %v1133 = vadd.f32 0.0, %v1132
      %v1134 = vpop.f32.mrb[0].mxu0
      %v1135 = vadd.f32 0.0, %v1134
      %v1136 = vpop.f32.mrb[0].mxu0
      %v1137 = vadd.f32 0.0, %v1136
      %v1138 = vpop.f32.mrb[0].mxu0
      %v1139 = vadd.f32 0.0, %v1138
      %1140 = vmatprep.mubr.bf16.mxu0 0
      %1141 = vmatmul.mubr.bf16.gmra.mrb[0].mxu0 %v851
      %v1142 = vpop.f32.mrb[0].mxu0
      %v1143 = vadd.f32 0.0, %v1142
      %v1144 = vpop.f32.mrb[0].mxu0
      %v1145 = vadd.f32 0.0, %v1144
      %v1146 = vpop.f32.mrb[0].mxu0
      %v1147 = vadd.f32 0.0, %v1146
      %v1148 = vpop.f32.mrb[0].mxu0
      %v1149 = vadd.f32 0.0, %v1148
      %1150 = vmatprep.mubr.bf16.mxu0 0
      %1151 = vmatmul.mubr.bf16.gmra.mrb[0].mxu0 %v854
      %v1152 = vpop.f32.mrb[0].mxu0
      %v1153 = vadd.f32 0.0, %v1152
      %v1154 = vpop.f32.mrb[0].mxu0
      %v1155 = vadd.f32 0.0, %v1154
      %v1156 = vpop.f32.mrb[0].mxu0
      %v1157 = vadd.f32 0.0, %v1156
      %v1158 = vpop.f32.mrb[0].mxu0
      %v1159 = vadd.f32 0.0, %v1158
      %1160 = vmatprep.mubr.bf16.mxu0 0
      %1161 = vmatmul.mubr.bf16.gmra.mrb[0].mxu0 %v857
      %v1162 = vpop.f32.mrb[0].mxu0
      %v1163 = vadd.f32 0.0, %v1162
      %v1164 = vpop.f32.mrb[0].mxu0
      %v1165 = vadd.f32 0.0, %v1164
      %v1166 = vpop.f32.mrb[0].mxu0
      %v1167 = vadd.f32 0.0, %v1166
      %v1168 = vpop.f32.mrb[0].mxu0
      %v1169 = vadd.f32 0.0, %v1168
      %1170 = vmatprep.mubr.bf16.mxu0 0
      %1171 = vmatmul.mubr.bf16.gmra.mrb[0].mxu0 %v860
      %v1172 = vpop.f32.mrb[0].mxu0
      %v1173 = vadd.f32 0.0, %v1172
      %v1174 = vpop.f32.mrb[0].mxu0
      %v1175 = vadd.f32 0.0, %v1174
      %v1176 = vpop.f32.mrb[0].mxu0
      %v1177 = vadd.f32 0.0, %v1176
      %v1178 = vpop.f32.mrb[0].mxu0
      %v1179 = vadd.f32 0.0, %v1178
      %1180 = vmatprep.mubr.bf16.mxu0 0
      %1181 = vmatmul.mubr.bf16.gmra.mrb[0].mxu0 %v863
      %v1182 = vpop.f32.mrb[0].mxu0
      %v1183 = vadd.f32 0.0, %v1182
      %v1184 = vpop.f32.mrb[0].mxu0
      %v1185 = vadd.f32 0.0, %v1184
      %v1186 = vpop.f32.mrb[0].mxu0
      %v1187 = vadd.f32 0.0, %v1186
      %v1188 = vpop.f32.mrb[0].mxu0
      %v1189 = vadd.f32 0.0, %v1188
      %1190 = vmatprep.mubr.bf16.mxu0 0
      %1191 = vmatmul.mubr.bf16.gmra.mrb[0].mxu0 %v866
      %v1192 = vpop.f32.mrb[0].mxu0
      %v1193 = vadd.f32 0.0, %v1192
      %v1194 = vpop.f32.mrb[0].mxu0
      %v1195 = vadd.f32 0.0, %v1194
      %v1196 = vpop.f32.mrb[0].mxu0
      %v1197 = vadd.f32 0.0, %v1196
      %v1198 = vpop.f32.mrb[0].mxu0
      %v1199 = vadd.f32 0.0, %v1198
      %1200 = vmatprep.mubr.bf16.mxu0 0
      %1201 = vmatmul.mubr.bf16.gmra.mrb[0].mxu0 %v869
      %v1202 = vpop.f32.mrb[0].mxu0
      %v1203 = vadd.f32 0.0, %v1202
      %v1204 = vpop.f32.mrb[0].mxu0
      %v1205 = vadd.f32 0.0, %v1204
      %v1206 = vpop.f32.mrb[0].mxu0
      %v1207 = vadd.f32 0.0, %v1206
      %v1208 = vpop.f32.mrb[0].mxu0
      %v1209 = vadd.f32 0.0, %v1208
      %1210 = vmatprep.mubr.bf16.mxu0 0
      %1211 = vmatmul.mubr.bf16.gmra.mrb[0].mxu0 %v872
      %v1212 = vpop.f32.mrb[0].mxu0
      %v1213 = vadd.f32 0.0, %v1212
      %v1214 = vpop.f32.mrb[0].mxu0
      %v1215 = vadd.f32 0.0, %v1214
      %v1216 = vpop.f32.mrb[0].mxu0
      %v1217 = vadd.f32 0.0, %v1216
      %v1218 = vpop.f32.mrb[0].mxu0
      %v1219 = vadd.f32 0.0, %v1218
      %1220 = vmatprep.mubr.bf16.mxu0 0
      %1221 = vmatmul.mubr.bf16.gmra.mrb[0].mxu0 %v875
      %v1222 = vpop.f32.mrb[0].mxu0
      %v1223 = vadd.f32 0.0, %v1222
      %v1224 = vpop.f32.mrb[0].mxu0
      %v1225 = vadd.f32 0.0, %v1224
      %v1226 = vpop.f32.mrb[0].mxu0
      %v1227 = vadd.f32 0.0, %v1226
      %v1228 = vpop.f32.mrb[0].mxu0
      %v1229 = vadd.f32 0.0, %v1228
      %1230 = vmatprep.mubr.bf16.mxu0 0
      %1231 = vmatmul.mubr.bf16.gmra.mrb[0].mxu0 %v878
      %v1232 = vpop.f32.mrb[0].mxu0
      %v1233 = vadd.f32 0.0, %v1232
      %v1234 = vpop.f32.mrb[0].mxu0
      %v1235 = vadd.f32 0.0, %v1234
      %v1236 = vpop.f32.mrb[0].mxu0
      %v1237 = vadd.f32 0.0, %v1236
      %v1238 = vpop.f32.mrb[0].mxu0
      %v1239 = vadd.f32 0.0, %v1238
      %1240 = vmatprep.mubr.bf16.mxu0 0
      %1241 = vmatmul.mubr.bf16.gmra.mrb[0].mxu0 %v881
      %v1242 = vpop.f32.mrb[0].mxu0
      %v1243 = vadd.f32 0.0, %v1242
      %v1244 = vpop.f32.mrb[0].mxu0
      %v1245 = vadd.f32 0.0, %v1244
      %v1246 = vpop.f32.mrb[0].mxu0
      %v1247 = vadd.f32 0.0, %v1246
      %v1248 = vpop.f32.mrb[0].mxu0
      %v1249 = vadd.f32 0.0, %v1248
      %1250 = vdwg.mxu0
      %1251 = vmatprep.subr.bf16.mxu0 %v768
      %1252 = vmatpush1.bf16.msra.mxu0 %v767
      %1253 = vmatprep.subr.bf16.mxu0 %v775
      %1254 = vmatpush1.bf16.msra.mxu0 %v774
      %1255 = vmatprep.subr.bf16.mxu0 %v782
      %1256 = vmatpush1.bf16.msra.mxu0 %v781
      %1257 = vmatprep.subr.bf16.mxu0 %v789
      %1258 = vmatpush1.bf16.msra.mxu0 %v788
      %1259 = vmatprep.subr.bf16.mxu0 %v796
      %1260 = vmatpush1.bf16.msra.mxu0 %v795
      %1261 = vmatprep.subr.bf16.mxu0 %v900
      %1262 = vmatpush1.bf16.msra.mxu0 %v897
      %1263 = vmatprep.subr.bf16.mxu0 0
      %1264 = vmatpush1.bf16.msra.mxu0 0
      %1265 = vmatprep.subr.bf16.mxu0 0
      %1266 = vmatpush1.bf16.msra.mxu0 0
      %1267 = vmatprep.subr.bf16.mxu0 0
      %1268 = vmatpush1.bf16.msra.mxu0 0
      %1269 = vmatprep.subr.bf16.mxu0 0
      %1270 = vmatpush1.bf16.msra.mxu0 0
      %1271 = vmatprep.subr.bf16.mxu0 0
      %1272 = vmatpush1.bf16.msra.mxu0 0
      %1273 = vmatprep.subr.bf16.mxu0 0
      %1274 = vmatpush1.bf16.msra.mxu0 0
      %1275 = vmatprep.subr.bf16.mxu0 0
      %1276 = vmatpush1.bf16.msra.mxu0 0
      %1277 = vmatprep.subr.bf16.mxu0 0
      %1278 = vmatpush1.bf16.msra.mxu0 0
      %1279 = vmatprep.subr.bf16.mxu0 0
      %1280 = vmatpush1.bf16.msra.mxu0 0
      %1281 = vmatprep.subr.bf16.mxu0 0
      %1282 = vmatpush1.bf16.msra.mxu0 0
      %1283 = vmatprep.mubr.bf16.mxu0 0
      %1284 = vmatmul.mubr.bf16.gmra.mrb[0].mxu0 %v842
      %v1285 = vpop.f32.mrb[0].mxu0
      %v1286 = vadd.f32 0.0, %v1285
      %v1287 = vpop.f32.mrb[0].mxu0
      %v1288 = vadd.f32 0.0, %v1287
      %v1289 = vpop.f32.mrb[0].mxu0
      %v1290 = vadd.f32 0.0, %v1289
      %v1291 = vpop.f32.mrb[0].mxu0
      %v1292 = vadd.f32 0.0, %v1291
      %1293 = vmatprep.mubr.bf16.mxu0 0
      %1294 = vmatmul.mubr.bf16.gmra.mrb[0].mxu0 %v845
      %v1295 = vpop.f32.mrb[0].mxu0
      %v1296 = vadd.f32 0.0, %v1295
      %v1297 = vpop.f32.mrb[0].mxu0
      %v1298 = vadd.f32 0.0, %v1297
      %v1299 = vpop.f32.mrb[0].mxu0
      %v1300 = vadd.f32 0.0, %v1299
      %v1301 = vpop.f32.mrb[0].mxu0
      %v1302 = vadd.f32 0.0, %v1301
      %1303 = vmatprep.mubr.bf16.mxu0 0
      %1304 = vmatmul.mubr.bf16.gmra.mrb[0].mxu0 %v848
      %v1305 = vpop.f32.mrb[0].mxu0
      %v1306 = vadd.f32 0.0, %v1305
      %v1307 = vpop.f32.mrb[0].mxu0
      %v1308 = vadd.f32 0.0, %v1307
      %v1309 = vpop.f32.mrb[0].mxu0
      %v1310 = vadd.f32 0.0, %v1309
      %v1311 = vpop.f32.mrb[0].mxu0
      %v1312 = vadd.f32 0.0, %v1311
      %1313 = vmatprep.mubr.bf16.mxu0 0
      %1314 = vmatmul.mubr.bf16.gmra.mrb[0].mxu0 %v851
      %v1315 = vpop.f32.mrb[0].mxu0
      %v1316 = vadd.f32 0.0, %v1315
      %v1317 = vpop.f32.mrb[0].mxu0
      %v1318 = vadd.f32 0.0, %v1317
      %v1319 = vpop.f32.mrb[0].mxu0
      %v1320 = vadd.f32 0.0, %v1319
      %v1321 = vpop.f32.mrb[0].mxu0
      %v1322 = vadd.f32 0.0, %v1321
      %1323 = vmatprep.mubr.bf16.mxu0 0
      %1324 = vmatmul.mubr.bf16.gmra.mrb[0].mxu0 %v854
      %v1325 = vpop.f32.mrb[0].mxu0
      %v1326 = vadd.f32 0.0, %v1325
      %v1327 = vpop.f32.mrb[0].mxu0
      %v1328 = vadd.f32 0.0, %v1327
      %v1329 = vpop.f32.mrb[0].mxu0
      %v1330 = vadd.f32 0.0, %v1329
      %v1331 = vpop.f32.mrb[0].mxu0
      %v1332 = vadd.f32 0.0, %v1331
      %1333 = vmatprep.mubr.bf16.mxu0 0
      %1334 = vmatmul.mubr.bf16.gmra.mrb[0].mxu0 %v857
      %v1335 = vpop.f32.mrb[0].mxu0
      %v1336 = vadd.f32 0.0, %v1335
      %v1337 = vpop.f32.mrb[0].mxu0
      %v1338 = vadd.f32 0.0, %v1337
      %v1339 = vpop.f32.mrb[0].mxu0
      %v1340 = vadd.f32 0.0, %v1339
      %v1341 = vpop.f32.mrb[0].mxu0
      %v1342 = vadd.f32 0.0, %v1341
      %1343 = vmatprep.mubr.bf16.mxu0 0
      %1344 = vmatmul.mubr.bf16.gmra.mrb[0].mxu0 %v860
      %v1345 = vpop.f32.mrb[0].mxu0
      %v1346 = vadd.f32 0.0, %v1345
      %v1347 = vpop.f32.mrb[0].mxu0
      %v1348 = vadd.f32 0.0, %v1347
      %v1349 = vpop.f32.mrb[0].mxu0
      %v1350 = vadd.f32 0.0, %v1349
      %v1351 = vpop.f32.mrb[0].mxu0
      %v1352 = vadd.f32 0.0, %v1351
      %1353 = vmatprep.mubr.bf16.mxu0 0
      %1354 = vmatmul.mubr.bf16.gmra.mrb[0].mxu0 %v863
      %v1355 = vpop.f32.mrb[0].mxu0
      %v1356 = vadd.f32 0.0, %v1355
      %v1357 = vpop.f32.mrb[0].mxu0
      %v1358 = vadd.f32 0.0, %v1357
      %v1359 = vpop.f32.mrb[0].mxu0
      %v1360 = vadd.f32 0.0, %v1359
      %v1361 = vpop.f32.mrb[0].mxu0
      %v1362 = vadd.f32 0.0, %v1361
      %1363 = vmatprep.mubr.bf16.mxu0 0
      %1364 = vmatmul.mubr.bf16.gmra.mrb[0].mxu0 %v866
      %v1365 = vpop.f32.mrb[0].mxu0
      %v1366 = vadd.f32 0.0, %v1365
      %v1367 = vpop.f32.mrb[0].mxu0
      %v1368 = vadd.f32 0.0, %v1367
      %v1369 = vpop.f32.mrb[0].mxu0
      %v1370 = vadd.f32 0.0, %v1369
      %v1371 = vpop.f32.mrb[0].mxu0
      %v1372 = vadd.f32 0.0, %v1371
      %1373 = vmatprep.mubr.bf16.mxu0 0
      %1374 = vmatmul.mubr.bf16.gmra.mrb[0].mxu0 %v869
      %v1375 = vpop.f32.mrb[0].mxu0
      %v1376 = vadd.f32 0.0, %v1375
      %v1377 = vpop.f32.mrb[0].mxu0
      %v1378 = vadd.f32 0.0, %v1377
      %v1379 = vpop.f32.mrb[0].mxu0
      %v1380 = vadd.f32 0.0, %v1379
      %v1381 = vpop.f32.mrb[0].mxu0
      %v1382 = vadd.f32 0.0, %v1381
      %1383 = vmatprep.mubr.bf16.mxu0 0
      %1384 = vmatmul.mubr.bf16.gmra.mrb[0].mxu0 %v872
      %v1385 = vpop.f32.mrb[0].mxu0
      %v1386 = vadd.f32 0.0, %v1385
      %v1387 = vpop.f32.mrb[0].mxu0
      %v1388 = vadd.f32 0.0, %v1387
      %v1389 = vpop.f32.mrb[0].mxu0
      %v1390 = vadd.f32 0.0, %v1389
      %v1391 = vpop.f32.mrb[0].mxu0
      %v1392 = vadd.f32 0.0, %v1391
      %1393 = vmatprep.mubr.bf16.mxu0 0
      %1394 = vmatmul.mubr.bf16.gmra.mrb[0].mxu0 %v875
      %v1395 = vpop.f32.mrb[0].mxu0
      %v1396 = vadd.f32 0.0, %v1395
      %v1397 = vpop.f32.mrb[0].mxu0
      %v1398 = vadd.f32 0.0, %v1397
      %v1399 = vpop.f32.mrb[0].mxu0
      %v1400 = vadd.f32 0.0, %v1399
      %v1401 = vpop.f32.mrb[0].mxu0
      %v1402 = vadd.f32 0.0, %v1401
      %1403 = vmatprep.mubr.bf16.mxu0 0
      %1404 = vmatmul.mubr.bf16.gmra.mrb[0].mxu0 %v878
      %v1405 = vpop.f32.mrb[0].mxu0
      %v1406 = vadd.f32 0.0, %v1405
      %v1407 = vpop.f32.mrb[0].mxu0
      %v1408 = vadd.f32 0.0, %v1407
      %v1409 = vpop.f32.mrb[0].mxu0
      %v1410 = vadd.f32 0.0, %v1409
      %v1411 = vpop.f32.mrb[0].mxu0
      %v1412 = vadd.f32 0.0, %v1411
      %1413 = vmatprep.mubr.bf16.mxu0 0
      %1414 = vmatmul.mubr.bf16.gmra.mrb[0].mxu0 %v881
      %v1415 = vpop.f32.mrb[0].mxu0
      %v1416 = vadd.f32 0.0, %v1415
      %v1417 = vpop.f32.mrb[0].mxu0
      %v1418 = vadd.f32 0.0, %v1417
      %v1419 = vpop.f32.mrb[0].mxu0
      %v1420 = vadd.f32 0.0, %v1419
      %v1421 = vpop.f32.mrb[0].mxu0
      %v1422 = vadd.f32 0.0, %v1421
      %1423 = vdwg.mxu0
      %1424 = vmatprep.subr.bf16.mxu0 0
      %1425 = vmatpush1.bf16.msra.mxu0 %v769
      %1426 = vmatprep.subr.bf16.mxu0 0
      %1427 = vmatpush1.bf16.msra.mxu0 %v776
      %1428 = vmatprep.subr.bf16.mxu0 0
      %1429 = vmatpush1.bf16.msra.mxu0 %v783
      %1430 = vmatprep.subr.bf16.mxu0 0
      %1431 = vmatpush1.bf16.msra.mxu0 %v790
      %1432 = vmatprep.subr.bf16.mxu0 0
      %1433 = vmatpush1.bf16.msra.mxu0 %v797
      %1434 = vmatprep.subr.bf16.mxu0 0
      %1435 = vmatpush1.bf16.msra.mxu0 %v903
      %1436 = vmatprep.subr.bf16.mxu0 0
      %1437 = vmatpush1.bf16.msra.mxu0 0
      %1438 = vmatprep.subr.bf16.mxu0 0
      %1439 = vmatpush1.bf16.msra.mxu0 0
      %1440 = vmatprep.subr.bf16.mxu0 0
      %1441 = vmatpush1.bf16.msra.mxu0 0
      %1442 = vmatprep.subr.bf16.mxu0 0
      %1443 = vmatpush1.bf16.msra.mxu0 0
      %1444 = vmatprep.subr.bf16.mxu0 0
      %1445 = vmatpush1.bf16.msra.mxu0 0
      %1446 = vmatprep.subr.bf16.mxu0 0
      %1447 = vmatpush1.bf16.msra.mxu0 0
      %1448 = vmatprep.subr.bf16.mxu0 0
      %1449 = vmatpush1.bf16.msra.mxu0 0
      %1450 = vmatprep.subr.bf16.mxu0 0
      %1451 = vmatpush1.bf16.msra.mxu0 0
      %1452 = vmatprep.subr.bf16.mxu0 0
      %1453 = vmatpush1.bf16.msra.mxu0 0
      %1454 = vmatprep.subr.bf16.mxu0 0
      %1455 = vmatpush1.bf16.msra.mxu0 0
      %1456 = vmatprep.mubr.bf16.mxu0 0
      %1457 = vmatmul.mubr.bf16.gmra.mrb[0].mxu0 %v842
      %v1458 = vpop.f32.mrb[0].mxu0
      %v1459 = vadd.f32 0.0, %v1458
      %v1460 = vpop.f32.mrb[0].mxu0
      %v1461 = vpop.f32.mrb[0].mxu0
      %v1462 = vadd.f32 0.0, %v1461
      %v1463 = vpop.f32.mrb[0].mxu0
      %1464 = vmatprep.mubr.bf16.mxu0 0
      %1465 = vmatmul.mubr.bf16.gmra.mrb[0].mxu0 %v845
      %v1466 = vpop.f32.mrb[0].mxu0
      %v1467 = vadd.f32 0.0, %v1466
      %v1468 = vpop.f32.mrb[0].mxu0
      %v1469 = vpop.f32.mrb[0].mxu0
      %v1470 = vadd.f32 0.0, %v1469
      %v1471 = vpop.f32.mrb[0].mxu0
      %1472 = vmatprep.mubr.bf16.mxu0 0
      %1473 = vmatmul.mubr.bf16.gmra.mrb[0].mxu0 %v848
      %v1474 = vpop.f32.mrb[0].mxu0
      %v1475 = vadd.f32 0.0, %v1474
      %v1476 = vpop.f32.mrb[0].mxu0
      %v1477 = vpop.f32.mrb[0].mxu0
      %v1478 = vadd.f32 0.0, %v1477
      %v1479 = vpop.f32.mrb[0].mxu0
      %1480 = vmatprep.mubr.bf16.mxu0 0
      %1481 = vmatmul.mubr.bf16.gmra.mrb[0].mxu0 %v851
      %v1482 = vpop.f32.mrb[0].mxu0
      %v1483 = vadd.f32 0.0, %v1482
      %v1484 = vpop.f32.mrb[0].mxu0
      %v1485 = vpop.f32.mrb[0].mxu0
      %v1486 = vadd.f32 0.0, %v1485
      %v1487 = vpop.f32.mrb[0].mxu0
      %1488 = vmatprep.mubr.bf16.mxu0 0
      %1489 = vmatmul.mubr.bf16.gmra.mrb[0].mxu0 %v854
      %v1490 = vpop.f32.mrb[0].mxu0
      %v1491 = vadd.f32 0.0, %v1490
      %v1492 = vpop.f32.mrb[0].mxu0
      %v1493 = vpop.f32.mrb[0].mxu0
      %v1494 = vadd.f32 0.0, %v1493
      %v1495 = vpop.f32.mrb[0].mxu0
      %1496 = vmatprep.mubr.bf16.mxu0 0
      %1497 = vmatmul.mubr.bf16.gmra.mrb[0].mxu0 %v857
      %v1498 = vpop.f32.mrb[0].mxu0
      %v1499 = vadd.f32 0.0, %v1498
      %v1500 = vpop.f32.mrb[0].mxu0
      %v1501 = vpop.f32.mrb[0].mxu0
      %v1502 = vadd.f32 0.0, %v1501
      %v1503 = vpop.f32.mrb[0].mxu0
      %1504 = vmatprep.mubr.bf16.mxu0 0
      %1505 = vmatmul.mubr.bf16.gmra.mrb[0].mxu0 %v860
      %v1506 = vpop.f32.mrb[0].mxu0
      %v1507 = vadd.f32 0.0, %v1506
      %v1508 = vpop.f32.mrb[0].mxu0
      %v1509 = vpop.f32.mrb[0].mxu0
      %v1510 = vadd.f32 0.0, %v1509
      %v1511 = vpop.f32.mrb[0].mxu0
      %1512 = vmatprep.mubr.bf16.mxu0 0
      %1513 = vmatmul.mubr.bf16.gmra.mrb[0].mxu0 %v863
      %v1514 = vpop.f32.mrb[0].mxu0
      %v1515 = vadd.f32 0.0, %v1514
      %v1516 = vpop.f32.mrb[0].mxu0
      %v1517 = vpop.f32.mrb[0].mxu0
      %v1518 = vadd.f32 0.0, %v1517
      %v1519 = vpop.f32.mrb[0].mxu0
      %1520 = vmatprep.mubr.bf16.mxu0 0
      %1521 = vmatmul.mubr.bf16.gmra.mrb[0].mxu0 %v866
      %v1522 = vpop.f32.mrb[0].mxu0
      %v1523 = vadd.f32 0.0, %v1522
      %v1524 = vpop.f32.mrb[0].mxu0
      %v1525 = vpop.f32.mrb[0].mxu0
      %v1526 = vadd.f32 0.0, %v1525
      %v1527 = vpop.f32.mrb[0].mxu0
      %1528 = vmatprep.mubr.bf16.mxu0 0
      %1529 = vmatmul.mubr.bf16.gmra.mrb[0].mxu0 %v869
      %v1530 = vpop.f32.mrb[0].mxu0
      %v1531 = vadd.f32 0.0, %v1530
      %v1532 = vpop.f32.mrb[0].mxu0
      %v1533 = vpop.f32.mrb[0].mxu0
      %v1534 = vadd.f32 0.0, %v1533
      %v1535 = vpop.f32.mrb[0].mxu0
      %1536 = vmatprep.mubr.bf16.mxu0 0
      %1537 = vmatmul.mubr.bf16.gmra.mrb[0].mxu0 %v872
      %v1538 = vpop.f32.mrb[0].mxu0
      %v1539 = vadd.f32 0.0, %v1538
      %v1540 = vpop.f32.mrb[0].mxu0
      %v1541 = vpop.f32.mrb[0].mxu0
      %v1542 = vadd.f32 0.0, %v1541
      %v1543 = vpop.f32.mrb[0].mxu0
      %1544 = vmatprep.mubr.bf16.mxu0 0
      %1545 = vmatmul.mubr.bf16.gmra.mrb[0].mxu0 %v875
      %v1546 = vpop.f32.mrb[0].mxu0
      %v1547 = vadd.f32 0.0, %v1546
      %v1548 = vpop.f32.mrb[0].mxu0
      %v1549 = vpop.f32.mrb[0].mxu0
      %v1550 = vadd.f32 0.0, %v1549
      %v1551 = vpop.f32.mrb[0].mxu0
      %1552 = vmatprep.mubr.bf16.mxu0 0
      %1553 = vmatmul.mubr.bf16.gmra.mrb[0].mxu0 %v878
      %v1554 = vpop.f32.mrb[0].mxu0
      %v1555 = vadd.f32 0.0, %v1554
      %v1556 = vpop.f32.mrb[0].mxu0
      %v1557 = vpop.f32.mrb[0].mxu0
      %v1558 = vadd.f32 0.0, %v1557
      %v1559 = vpop.f32.mrb[0].mxu0
      %1560 = vmatprep.mubr.bf16.mxu0 0
      %1561 = vmatmul.mubr.bf16.gmra.mrb[0].mxu0 %v881
      %v1562 = vpop.f32.mrb[0].mxu0
      %v1563 = vadd.f32 0.0, %v1562
      %v1564 = vpop.f32.mrb[0].mxu0
      %v1565 = vpop.f32.mrb[0].mxu0
      %v1566 = vadd.f32 0.0, %v1565
      %v1567 = vpop.f32.mrb[0].mxu0
      %1568 = vdwg.mxu0
      %v1613 = vunpack.c.l.b16 %v511
      %v1614 = vunpack.c.h.b16 %v511
      %v1615 = vunpack.c.l.b16 %v512
      %v1616 = vunpack.c.h.b16 %v512
      %v1617 = vunpack.c.l.b16 %v513
      %v1618 = vunpack.c.h.b16 %v513
      %v1619 = vunpack.c.l.b16 %v514
      %v1620 = vunpack.c.l.b16 %v515
      %v1621 = vunpack.c.h.b16 %v515
      %v1622 = vunpack.c.l.b16 %v516
      %v1623 = vunpack.c.h.b16 %v516
      %v1624 = vunpack.c.l.b16 %v517
      %v1625 = vunpack.c.h.b16 %v517
      %v1626 = vunpack.c.l.b16 %v518
      %v1627 = vunpack.c.l.b16 %v519
      %v1628 = vunpack.c.h.b16 %v519
      %v1629 = vunpack.c.l.b16 %v520
      %v1630 = vunpack.c.h.b16 %v520
      %v1631 = vunpack.c.l.b16 %v521
      %v1632 = vunpack.c.h.b16 %v521
      %v1633 = vunpack.c.l.b16 %v522
      %v1634 = vunpack.c.l.b16 %v523
      %v1635 = vunpack.c.h.b16 %v523
      %v1636 = vunpack.c.l.b16 %v524
      %v1637 = vunpack.c.h.b16 %v524
      %v1638 = vunpack.c.l.b16 %v525
      %v1639 = vunpack.c.h.b16 %v525
      %v1640 = vunpack.c.l.b16 %v526
      %v1641 = vunpack.c.l.b16 %v527
      %v1642 = vunpack.c.h.b16 %v527
      %v1643 = vunpack.c.l.b16 %v528
      %v1644 = vunpack.c.h.b16 %v528
      %v1645 = vunpack.c.l.b16 %v529
      %v1646 = vunpack.c.h.b16 %v529
      %v1647 = vunpack.c.l.b16 %v530
      %v1648 = vunpack.c.l.b16 %v531
      %v1649 = vunpack.c.h.b16 %v531
      %v1650 = vunpack.c.l.b16 %v532
      %v1651 = vunpack.c.h.b16 %v532
      %v1652 = vunpack.c.l.b16 %v533
      %v1653 = vunpack.c.h.b16 %v533
      %v1654 = vunpack.c.l.b16 %v534
      %v1655 = vunpack.c.l.b16 %v535
      %v1656 = vunpack.c.h.b16 %v535
      %v1657 = vunpack.c.l.b16 %v536
      %v1658 = vunpack.c.h.b16 %v536
      %v1659 = vunpack.c.l.b16 %v537
      %v1660 = vunpack.c.h.b16 %v537
      %v1661 = vunpack.c.l.b16 %v538
      %v1662 = vunpack.c.l.b16 %v539
      %v1663 = vunpack.c.h.b16 %v539
      %v1664 = vunpack.c.l.b16 %v540
      %v1665 = vunpack.c.h.b16 %v540
      %v1666 = vunpack.c.l.b16 %v541
      %v1667 = vunpack.c.h.b16 %v541
      %v1668 = vunpack.c.l.b16 %v542
      %v1669 = vunpack.c.l.b16 %v543
      %v1670 = vunpack.c.h.b16 %v543
      %v1671 = vunpack.c.l.b16 %v544
      %v1672 = vunpack.c.h.b16 %v544
      %v1673 = vunpack.c.l.b16 %v545
      %v1674 = vunpack.c.h.b16 %v545
      %v1675 = vunpack.c.l.b16 %v546
      %v1676 = vunpack.c.l.b16 %v547
      %v1677 = vunpack.c.h.b16 %v547
      %v1678 = vunpack.c.l.b16 %v548
      %v1679 = vunpack.c.h.b16 %v548
      %v1680 = vunpack.c.l.b16 %v549
      %v1681 = vunpack.c.h.b16 %v549
      %v1682 = vunpack.c.l.b16 %v550
      %v1683 = vunpack.c.l.b16 %v551
      %v1684 = vunpack.c.h.b16 %v551
      %v1685 = vunpack.c.l.b16 %v552
      %v1686 = vunpack.c.h.b16 %v552
      %v1687 = vunpack.c.l.b16 %v553
      %v1688 = vunpack.c.h.b16 %v553
      %v1689 = vunpack.c.l.b16 %v554
      %v1690 = vpack.c.b16 %v1620, %v1613
      %v1691 = vpack.c.b16 %v1621, %v1614
      %v1692 = vpack.c.b16 %v1622, %v1615
      %v1693 = vpack.c.b16 %v1623, %v1616
      %v1694 = vpack.c.b16 %v1624, %v1617
      %v1695 = vpack.c.b16 %v1625, %v1618
      %v1696 = vpack.c.b16 %v1626, %v1619
      %v1697 = vpack.c.b16 %v1634, %v1627
      %v1698 = vpack.c.b16 %v1635, %v1628
      %v1699 = vpack.c.b16 %v1636, %v1629
      %v1700 = vpack.c.b16 %v1637, %v1630
      %v1701 = vpack.c.b16 %v1638, %v1631
      %v1702 = vpack.c.b16 %v1639, %v1632
      %v1703 = vpack.c.b16 %v1640, %v1633
      %v1704 = vpack.c.b16 %v1648, %v1641
      %v1705 = vpack.c.b16 %v1649, %v1642
      %v1706 = vpack.c.b16 %v1650, %v1643
      %v1707 = vpack.c.b16 %v1651, %v1644
      %v1708 = vpack.c.b16 %v1652, %v1645
      %v1709 = vpack.c.b16 %v1653, %v1646
      %v1710 = vpack.c.b16 %v1654, %v1647
      %v1711 = vpack.c.b16 %v1662, %v1655
      %v1712 = vpack.c.b16 %v1663, %v1656
      %v1713 = vpack.c.b16 %v1664, %v1657
      %v1714 = vpack.c.b16 %v1665, %v1658
      %v1715 = vpack.c.b16 %v1666, %v1659
      %v1716 = vpack.c.b16 %v1667, %v1660
      %v1717 = vpack.c.b16 %v1668, %v1661
      %v1718 = vpack.c.b16 %v1676, %v1669
      %v1719 = vpack.c.b16 %v1677, %v1670
      %v1720 = vpack.c.b16 %v1678, %v1671
      %v1721 = vpack.c.b16 %v1679, %v1672
      %v1722 = vpack.c.b16 %v1680, %v1673
      %v1723 = vpack.c.b16 %v1681, %v1674
      %v1724 = vpack.c.b16 %v1682, %v1675
      %v1725 = vpack.c.b16 %v1683, %v1683
      %v1726 = vpack.c.b16 %v1684, %v1684
      %v1727 = vpack.c.b16 %v1685, %v1685
      %v1728 = vpack.c.b16 %v1686, %v1686
      %v1729 = vpack.c.b16 %v1687, %v1687
      %v1730 = vpack.c.b16 %v1688, %v1688
      %v1731 = vpack.c.b16 %v1689, %v1689
      %v1768 = vsel %vm840, %v497, 0
      %v1771 = vsel %vm840, %v498, 0
      %v1774 = vsel %vm840, %v499, 0
      %v1777 = vsel %vm840, %v500, 0
      %v1780 = vsel %vm840, %v501, 0
      %v1783 = vsel %vm840, %v502, 0
      %v1786 = vsel %vm840, %v503, 0
      %v1789 = vsel %vm840, %v504, 0
      %v1792 = vsel %vm840, %v505, 0
      %v1795 = vsel %vm840, %v506, 0
      %v1798 = vsel %vm840, %v507, 0
      %v1801 = vsel %vm840, %v508, 0
      %v1804 = vsel %vm840, %v509, 0
      %v1807 = vsel %vm840, %v510, 0
      %v1810 = vsel %vm883, %v1725, 0
      %v1813 = vsel %vm883, %v1726, 0
      %v1816 = vsel %vm883, %v1727, 0
      %v1819 = vsel %vm883, %v1728, 0
      %v1822 = vsel %vm883, %v1729, 0
      %v1825 = vsel %vm883, %v1730, 0
      %v1828 = vsel %vm883, %v1731, 0
      %1830 = vmatprep.subr.bf16.mxu0 %v1691
      %1831 = vmatpush1.bf16.msra.mxu0 %v1690
      %1832 = vmatprep.subr.bf16.mxu0 %v1698
      %1833 = vmatpush1.bf16.msra.mxu0 %v1697
      %1834 = vmatprep.subr.bf16.mxu0 %v1705
      %1835 = vmatpush1.bf16.msra.mxu0 %v1704
      %1836 = vmatprep.subr.bf16.mxu0 %v1712
      %1837 = vmatpush1.bf16.msra.mxu0 %v1711
      %1838 = vmatprep.subr.bf16.mxu0 %v1719
      %1839 = vmatpush1.bf16.msra.mxu0 %v1718
      %1840 = vmatprep.subr.bf16.mxu0 %v1813
      %1841 = vmatpush1.bf16.msra.mxu0 %v1810
      %1842 = vmatprep.subr.bf16.mxu0 0
      %1843 = vmatpush1.bf16.msra.mxu0 0
      %1844 = vmatprep.subr.bf16.mxu0 0
      %1845 = vmatpush1.bf16.msra.mxu0 0
      %1846 = vmatprep.subr.bf16.mxu0 0
      %1847 = vmatpush1.bf16.msra.mxu0 0
      %1848 = vmatprep.subr.bf16.mxu0 0
      %1849 = vmatpush1.bf16.msra.mxu0 0
      %1850 = vmatprep.subr.bf16.mxu0 0
      %1851 = vmatpush1.bf16.msra.mxu0 0
      %1852 = vmatprep.subr.bf16.mxu0 0
      %1853 = vmatpush1.bf16.msra.mxu0 0
      %1854 = vmatprep.subr.bf16.mxu0 0
      %1855 = vmatpush1.bf16.msra.mxu0 0
      %1856 = vmatprep.subr.bf16.mxu0 0
      %1857 = vmatpush1.bf16.msra.mxu0 0
      %1858 = vmatprep.subr.bf16.mxu0 0
      %1859 = vmatpush1.bf16.msra.mxu0 0
      %1860 = vmatprep.subr.bf16.mxu0 0
      %1861 = vmatpush1.bf16.msra.mxu0 0
      %1862 = vmatprep.mubr.bf16.mxu0 0
      %1863 = vmatmul.mubr.bf16.gmra.mrb[0].mxu0 %v1768
      %v1864 = vpop.f32.mrb[0].mxu0
      %v1865 = vadd.f32 %v940, %v1864
      %v1866 = vpop.f32.mrb[0].mxu0
      %v1867 = vadd.f32 %v942, %v1866
      %v1868 = vpop.f32.mrb[0].mxu0
      %v1869 = vadd.f32 %v944, %v1868
      %v1870 = vpop.f32.mrb[0].mxu0
      %v1871 = vadd.f32 %v946, %v1870
      %1872 = vmatprep.mubr.bf16.mxu0 0
      %1873 = vmatmul.mubr.bf16.gmra.mrb[0].mxu0 %v1771
      %v1874 = vpop.f32.mrb[0].mxu0
      %v1875 = vadd.f32 %v950, %v1874
      %v1876 = vpop.f32.mrb[0].mxu0
      %v1877 = vadd.f32 %v952, %v1876
      %v1878 = vpop.f32.mrb[0].mxu0
      %v1879 = vadd.f32 %v954, %v1878
      %v1880 = vpop.f32.mrb[0].mxu0
      %v1881 = vadd.f32 %v956, %v1880
      %1882 = vmatprep.mubr.bf16.mxu0 0
      %1883 = vmatmul.mubr.bf16.gmra.mrb[0].mxu0 %v1774
      %v1884 = vpop.f32.mrb[0].mxu0
      %v1885 = vadd.f32 %v960, %v1884
      %v1886 = vpop.f32.mrb[0].mxu0
      %v1887 = vadd.f32 %v962, %v1886
      %v1888 = vpop.f32.mrb[0].mxu0
      %v1889 = vadd.f32 %v964, %v1888
      %v1890 = vpop.f32.mrb[0].mxu0
      %v1891 = vadd.f32 %v966, %v1890
      %1892 = vmatprep.mubr.bf16.mxu0 0
      %1893 = vmatmul.mubr.bf16.gmra.mrb[0].mxu0 %v1777
      %v1894 = vpop.f32.mrb[0].mxu0
      %v1895 = vadd.f32 %v970, %v1894
      %v1896 = vpop.f32.mrb[0].mxu0
      %v1897 = vadd.f32 %v972, %v1896
      %v1898 = vpop.f32.mrb[0].mxu0
      %v1899 = vadd.f32 %v974, %v1898
      %v1900 = vpop.f32.mrb[0].mxu0
      %v1901 = vadd.f32 %v976, %v1900
      %1902 = vmatprep.mubr.bf16.mxu0 0
      %1903 = vmatmul.mubr.bf16.gmra.mrb[0].mxu0 %v1780
      %v1904 = vpop.f32.mrb[0].mxu0
      %v1905 = vadd.f32 %v980, %v1904
      %v1906 = vpop.f32.mrb[0].mxu0
      %v1907 = vadd.f32 %v982, %v1906
      %v1908 = vpop.f32.mrb[0].mxu0
      %v1909 = vadd.f32 %v984, %v1908
      %v1910 = vpop.f32.mrb[0].mxu0
      %v1911 = vadd.f32 %v986, %v1910
      %1912 = vmatprep.mubr.bf16.mxu0 0
      %1913 = vmatmul.mubr.bf16.gmra.mrb[0].mxu0 %v1783
      %v1914 = vpop.f32.mrb[0].mxu0
      %v1915 = vadd.f32 %v990, %v1914
      %v1916 = vpop.f32.mrb[0].mxu0
      %v1917 = vadd.f32 %v992, %v1916
      %v1918 = vpop.f32.mrb[0].mxu0
      %v1919 = vadd.f32 %v994, %v1918
      %v1920 = vpop.f32.mrb[0].mxu0
      %v1921 = vadd.f32 %v996, %v1920
      %1922 = vmatprep.mubr.bf16.mxu0 0
      %1923 = vmatmul.mubr.bf16.gmra.mrb[0].mxu0 %v1786
      %v1924 = vpop.f32.mrb[0].mxu0
      %v1925 = vadd.f32 %v1000, %v1924
      %v1926 = vpop.f32.mrb[0].mxu0
      %v1927 = vadd.f32 %v1002, %v1926
      %v1928 = vpop.f32.mrb[0].mxu0
      %v1929 = vadd.f32 %v1004, %v1928
      %v1930 = vpop.f32.mrb[0].mxu0
      %v1931 = vadd.f32 %v1006, %v1930
      %1932 = vmatprep.mubr.bf16.mxu0 0
      %1933 = vmatmul.mubr.bf16.gmra.mrb[0].mxu0 %v1789
      %v1934 = vpop.f32.mrb[0].mxu0
      %v1935 = vadd.f32 %v1010, %v1934
      %v1936 = vpop.f32.mrb[0].mxu0
      %v1937 = vadd.f32 %v1012, %v1936
      %v1938 = vpop.f32.mrb[0].mxu0
      %v1939 = vadd.f32 %v1014, %v1938
      %v1940 = vpop.f32.mrb[0].mxu0
      %v1941 = vadd.f32 %v1016, %v1940
      %1942 = vmatprep.mubr.bf16.mxu0 0
      %1943 = vmatmul.mubr.bf16.gmra.mrb[0].mxu0 %v1792
      %v1944 = vpop.f32.mrb[0].mxu0
      %v1945 = vadd.f32 %v1020, %v1944
      %v1946 = vpop.f32.mrb[0].mxu0
      %v1947 = vadd.f32 %v1022, %v1946
      %v1948 = vpop.f32.mrb[0].mxu0
      %v1949 = vadd.f32 %v1024, %v1948
      %v1950 = vpop.f32.mrb[0].mxu0
      %v1951 = vadd.f32 %v1026, %v1950
      %1952 = vmatprep.mubr.bf16.mxu0 0
      %1953 = vmatmul.mubr.bf16.gmra.mrb[0].mxu0 %v1795
      %v1954 = vpop.f32.mrb[0].mxu0
      %v1955 = vadd.f32 %v1030, %v1954
      %v1956 = vpop.f32.mrb[0].mxu0
      %v1957 = vadd.f32 %v1032, %v1956
      %v1958 = vpop.f32.mrb[0].mxu0
      %v1959 = vadd.f32 %v1034, %v1958
      %v1960 = vpop.f32.mrb[0].mxu0
      %v1961 = vadd.f32 %v1036, %v1960
      %1962 = vmatprep.mubr.bf16.mxu0 0
      %1963 = vmatmul.mubr.bf16.gmra.mrb[0].mxu0 %v1798
      %v1964 = vpop.f32.mrb[0].mxu0
      %v1965 = vadd.f32 %v1040, %v1964
      %v1966 = vpop.f32.mrb[0].mxu0
      %v1967 = vadd.f32 %v1042, %v1966
      %v1968 = vpop.f32.mrb[0].mxu0
      %v1969 = vadd.f32 %v1044, %v1968
      %v1970 = vpop.f32.mrb[0].mxu0
      %v1971 = vadd.f32 %v1046, %v1970
      %1972 = vmatprep.mubr.bf16.mxu0 0
      %1973 = vmatmul.mubr.bf16.gmra.mrb[0].mxu0 %v1801
      %v1974 = vpop.f32.mrb[0].mxu0
      %v1975 = vadd.f32 %v1050, %v1974
      %v1976 = vpop.f32.mrb[0].mxu0
      %v1977 = vadd.f32 %v1052, %v1976
      %v1978 = vpop.f32.mrb[0].mxu0
      %v1979 = vadd.f32 %v1054, %v1978
      %v1980 = vpop.f32.mrb[0].mxu0
      %v1981 = vadd.f32 %v1056, %v1980
      %1982 = vmatprep.mubr.bf16.mxu0 0
      %1983 = vmatmul.mubr.bf16.gmra.mrb[0].mxu0 %v1804
      %v1984 = vpop.f32.mrb[0].mxu0
      %v1985 = vadd.f32 %v1060, %v1984
      %v1986 = vpop.f32.mrb[0].mxu0
      %v1987 = vadd.f32 %v1062, %v1986
      %v1988 = vpop.f32.mrb[0].mxu0
      %v1989 = vadd.f32 %v1064, %v1988
      %v1990 = vpop.f32.mrb[0].mxu0
      %v1991 = vadd.f32 %v1066, %v1990
      %1992 = vmatprep.mubr.bf16.mxu0 0
      %1993 = vmatmul.mubr.bf16.gmra.mrb[0].mxu0 %v1807
      %v1994 = vpop.f32.mrb[0].mxu0
      %v1995 = vadd.f32 %v1070, %v1994
      %v1996 = vpop.f32.mrb[0].mxu0
      %v1997 = vadd.f32 %v1072, %v1996
      %v1998 = vpop.f32.mrb[0].mxu0
      %v1999 = vadd.f32 %v1074, %v1998
      %v2000 = vpop.f32.mrb[0].mxu0
      %v2001 = vadd.f32 %v1076, %v2000
      %2002 = vdwg.mxu0
      %2003 = vmatprep.subr.bf16.mxu0 %v1693
      %2004 = vmatpush1.bf16.msra.mxu0 %v1692
      %2005 = vmatprep.subr.bf16.mxu0 %v1700
      %2006 = vmatpush1.bf16.msra.mxu0 %v1699
      %2007 = vmatprep.subr.bf16.mxu0 %v1707
      %2008 = vmatpush1.bf16.msra.mxu0 %v1706
      %2009 = vmatprep.subr.bf16.mxu0 %v1714
      %2010 = vmatpush1.bf16.msra.mxu0 %v1713
      %2011 = vmatprep.subr.bf16.mxu0 %v1721
      %2012 = vmatpush1.bf16.msra.mxu0 %v1720
      %2013 = vmatprep.subr.bf16.mxu0 %v1819
      %2014 = vmatpush1.bf16.msra.mxu0 %v1816
      %2015 = vmatprep.subr.bf16.mxu0 0
      %2016 = vmatpush1.bf16.msra.mxu0 0
      %2017 = vmatprep.subr.bf16.mxu0 0
      %2018 = vmatpush1.bf16.msra.mxu0 0
      %2019 = vmatprep.subr.bf16.mxu0 0
      %2020 = vmatpush1.bf16.msra.mxu0 0
      %2021 = vmatprep.subr.bf16.mxu0 0
      %2022 = vmatpush1.bf16.msra.mxu0 0
      %2023 = vmatprep.subr.bf16.mxu0 0
      %2024 = vmatpush1.bf16.msra.mxu0 0
      %2025 = vmatprep.subr.bf16.mxu0 0
      %2026 = vmatpush1.bf16.msra.mxu0 0
      %2027 = vmatprep.subr.bf16.mxu0 0
      %2028 = vmatpush1.bf16.msra.mxu0 0
      %2029 = vmatprep.subr.bf16.mxu0 0
      %2030 = vmatpush1.bf16.msra.mxu0 0
      %2031 = vmatprep.subr.bf16.mxu0 0
      %2032 = vmatpush1.bf16.msra.mxu0 0
      %2033 = vmatprep.subr.bf16.mxu0 0
      %2034 = vmatpush1.bf16.msra.mxu0 0
      %2035 = vmatprep.mubr.bf16.mxu0 0
      %2036 = vmatmul.mubr.bf16.gmra.mrb[0].mxu0 %v1768
      %v2037 = vpop.f32.mrb[0].mxu0
      %v2038 = vadd.f32 %v1113, %v2037
      %v2039 = vpop.f32.mrb[0].mxu0
      %v2040 = vadd.f32 %v1115, %v2039
      %v2041 = vpop.f32.mrb[0].mxu0
      %v2042 = vadd.f32 %v1117, %v2041
      %v2043 = vpop.f32.mrb[0].mxu0
      %v2044 = vadd.f32 %v1119, %v2043
      %2045 = vmatprep.mubr.bf16.mxu0 0
      %2046 = vmatmul.mubr.bf16.gmra.mrb[0].mxu0 %v1771
      %v2047 = vpop.f32.mrb[0].mxu0
      %v2048 = vadd.f32 %v1123, %v2047
      %v2049 = vpop.f32.mrb[0].mxu0
      %v2050 = vadd.f32 %v1125, %v2049
      %v2051 = vpop.f32.mrb[0].mxu0
      %v2052 = vadd.f32 %v1127, %v2051
      %v2053 = vpop.f32.mrb[0].mxu0
      %v2054 = vadd.f32 %v1129, %v2053
      %2055 = vmatprep.mubr.bf16.mxu0 0
      %2056 = vmatmul.mubr.bf16.gmra.mrb[0].mxu0 %v1774
      %v2057 = vpop.f32.mrb[0].mxu0
      %v2058 = vadd.f32 %v1133, %v2057
      %v2059 = vpop.f32.mrb[0].mxu0
      %v2060 = vadd.f32 %v1135, %v2059
      %v2061 = vpop.f32.mrb[0].mxu0
      %v2062 = vadd.f32 %v1137, %v2061
      %v2063 = vpop.f32.mrb[0].mxu0
      %v2064 = vadd.f32 %v1139, %v2063
      %2065 = vmatprep.mubr.bf16.mxu0 0
      %2066 = vmatmul.mubr.bf16.gmra.mrb[0].mxu0 %v1777
      %v2067 = vpop.f32.mrb[0].mxu0
      %v2068 = vadd.f32 %v1143, %v2067
      %v2069 = vpop.f32.mrb[0].mxu0
      %v2070 = vadd.f32 %v1145, %v2069
      %v2071 = vpop.f32.mrb[0].mxu0
      %v2072 = vadd.f32 %v1147, %v2071
      %v2073 = vpop.f32.mrb[0].mxu0
      %v2074 = vadd.f32 %v1149, %v2073
      %2075 = vmatprep.mubr.bf16.mxu0 0
      %2076 = vmatmul.mubr.bf16.gmra.mrb[0].mxu0 %v1780
      %v2077 = vpop.f32.mrb[0].mxu0
      %v2078 = vadd.f32 %v1153, %v2077
      %v2079 = vpop.f32.mrb[0].mxu0
      %v2080 = vadd.f32 %v1155, %v2079
      %v2081 = vpop.f32.mrb[0].mxu0
      %v2082 = vadd.f32 %v1157, %v2081
      %v2083 = vpop.f32.mrb[0].mxu0
      %v2084 = vadd.f32 %v1159, %v2083
      %2085 = vmatprep.mubr.bf16.mxu0 0
      %2086 = vmatmul.mubr.bf16.gmra.mrb[0].mxu0 %v1783
      %v2087 = vpop.f32.mrb[0].mxu0
      %v2088 = vadd.f32 %v1163, %v2087
      %v2089 = vpop.f32.mrb[0].mxu0
      %v2090 = vadd.f32 %v1165, %v2089
      %v2091 = vpop.f32.mrb[0].mxu0
      %v2092 = vadd.f32 %v1167, %v2091
      %v2093 = vpop.f32.mrb[0].mxu0
      %v2094 = vadd.f32 %v1169, %v2093
      %2095 = vmatprep.mubr.bf16.mxu0 0
      %2096 = vmatmul.mubr.bf16.gmra.mrb[0].mxu0 %v1786
      %v2097 = vpop.f32.mrb[0].mxu0
      %v2098 = vadd.f32 %v1173, %v2097
      %v2099 = vpop.f32.mrb[0].mxu0
      %v2100 = vadd.f32 %v1175, %v2099
      %v2101 = vpop.f32.mrb[0].mxu0
      %v2102 = vadd.f32 %v1177, %v2101
      %v2103 = vpop.f32.mrb[0].mxu0
      %v2104 = vadd.f32 %v1179, %v2103
      %2105 = vmatprep.mubr.bf16.mxu0 0
      %2106 = vmatmul.mubr.bf16.gmra.mrb[0].mxu0 %v1789
      %v2107 = vpop.f32.mrb[0].mxu0
      %v2108 = vadd.f32 %v1183, %v2107
      %v2109 = vpop.f32.mrb[0].mxu0
      %v2110 = vadd.f32 %v1185, %v2109
      %v2111 = vpop.f32.mrb[0].mxu0
      %v2112 = vadd.f32 %v1187, %v2111
      %v2113 = vpop.f32.mrb[0].mxu0
      %v2114 = vadd.f32 %v1189, %v2113
      %2115 = vmatprep.mubr.bf16.mxu0 0
      %2116 = vmatmul.mubr.bf16.gmra.mrb[0].mxu0 %v1792
      %v2117 = vpop.f32.mrb[0].mxu0
      %v2118 = vadd.f32 %v1193, %v2117
      %v2119 = vpop.f32.mrb[0].mxu0
      %v2120 = vadd.f32 %v1195, %v2119
      %v2121 = vpop.f32.mrb[0].mxu0
      %v2122 = vadd.f32 %v1197, %v2121
      %v2123 = vpop.f32.mrb[0].mxu0
      %v2124 = vadd.f32 %v1199, %v2123
      %2125 = vmatprep.mubr.bf16.mxu0 0
      %2126 = vmatmul.mubr.bf16.gmra.mrb[0].mxu0 %v1795
      %v2127 = vpop.f32.mrb[0].mxu0
      %v2128 = vadd.f32 %v1203, %v2127
      %v2129 = vpop.f32.mrb[0].mxu0
      %v2130 = vadd.f32 %v1205, %v2129
      %v2131 = vpop.f32.mrb[0].mxu0
      %v2132 = vadd.f32 %v1207, %v2131
      %v2133 = vpop.f32.mrb[0].mxu0
      %v2134 = vadd.f32 %v1209, %v2133
      %2135 = vmatprep.mubr.bf16.mxu0 0
      %2136 = vmatmul.mubr.bf16.gmra.mrb[0].mxu0 %v1798
      %v2137 = vpop.f32.mrb[0].mxu0
      %v2138 = vadd.f32 %v1213, %v2137
      %v2139 = vpop.f32.mrb[0].mxu0
      %v2140 = vadd.f32 %v1215, %v2139
      %v2141 = vpop.f32.mrb[0].mxu0
      %v2142 = vadd.f32 %v1217, %v2141
      %v2143 = vpop.f32.mrb[0].mxu0
      %v2144 = vadd.f32 %v1219, %v2143
      %2145 = vmatprep.mubr.bf16.mxu0 0
      %2146 = vmatmul.mubr.bf16.gmra.mrb[0].mxu0 %v1801
      %v2147 = vpop.f32.mrb[0].mxu0
      %v2148 = vadd.f32 %v1223, %v2147
      %v2149 = vpop.f32.mrb[0].mxu0
      %v2150 = vadd.f32 %v1225, %v2149
      %v2151 = vpop.f32.mrb[0].mxu0
      %v2152 = vadd.f32 %v1227, %v2151
      %v2153 = vpop.f32.mrb[0].mxu0
      %v2154 = vadd.f32 %v1229, %v2153
      %2155 = vmatprep.mubr.bf16.mxu0 0
      %2156 = vmatmul.mubr.bf16.gmra.mrb[0].mxu0 %v1804
      %v2157 = vpop.f32.mrb[0].mxu0
      %v2158 = vadd.f32 %v1233, %v2157
      %v2159 = vpop.f32.mrb[0].mxu0
      %v2160 = vadd.f32 %v1235, %v2159
      %v2161 = vpop.f32.mrb[0].mxu0
      %v2162 = vadd.f32 %v1237, %v2161
      %v2163 = vpop.f32.mrb[0].mxu0
      %v2164 = vadd.f32 %v1239, %v2163
      %2165 = vmatprep.mubr.bf16.mxu0 0
      %2166 = vmatmul.mubr.bf16.gmra.mrb[0].mxu0 %v1807
      %v2167 = vpop.f32.mrb[0].mxu0
      %v2168 = vadd.f32 %v1243, %v2167
      %v2169 = vpop.f32.mrb[0].mxu0
      %v2170 = vadd.f32 %v1245, %v2169
      %v2171 = vpop.f32.mrb[0].mxu0
      %v2172 = vadd.f32 %v1247, %v2171
      %v2173 = vpop.f32.mrb[0].mxu0
      %v2174 = vadd.f32 %v1249, %v2173
      %2175 = vdwg.mxu0
      %2176 = vmatprep.subr.bf16.mxu0 %v1695
      %2177 = vmatpush1.bf16.msra.mxu0 %v1694
      %2178 = vmatprep.subr.bf16.mxu0 %v1702
      %2179 = vmatpush1.bf16.msra.mxu0 %v1701
      %2180 = vmatprep.subr.bf16.mxu0 %v1709
      %2181 = vmatpush1.bf16.msra.mxu0 %v1708
      %2182 = vmatprep.subr.bf16.mxu0 %v1716
      %2183 = vmatpush1.bf16.msra.mxu0 %v1715
      %2184 = vmatprep.subr.bf16.mxu0 %v1723
      %2185 = vmatpush1.bf16.msra.mxu0 %v1722
      %2186 = vmatprep.subr.bf16.mxu0 %v1825
      %2187 = vmatpush1.bf16.msra.mxu0 %v1822
      %2188 = vmatprep.subr.bf16.mxu0 0
      %2189 = vmatpush1.bf16.msra.mxu0 0
      %2190 = vmatprep.subr.bf16.mxu0 0
      %2191 = vmatpush1.bf16.msra.mxu0 0
      %2192 = vmatprep.subr.bf16.mxu0 0
      %2193 = vmatpush1.bf16.msra.mxu0 0
      %2194 = vmatprep.subr.bf16.mxu0 0
      %2195 = vmatpush1.bf16.msra.mxu0 0
      %2196 = vmatprep.subr.bf16.mxu0 0
      %2197 = vmatpush1.bf16.msra.mxu0 0
      %2198 = vmatprep.subr.bf16.mxu0 0
      %2199 = vmatpush1.bf16.msra.mxu0 0
      %2200 = vmatprep.subr.bf16.mxu0 0
      %2201 = vmatpush1.bf16.msra.mxu0 0
      %2202 = vmatprep.subr.bf16.mxu0 0
      %2203 = vmatpush1.bf16.msra.mxu0 0
      %2204 = vmatprep.subr.bf16.mxu0 0
      %2205 = vmatpush1.bf16.msra.mxu0 0
      %2206 = vmatprep.subr.bf16.mxu0 0
      %2207 = vmatpush1.bf16.msra.mxu0 0
      %2208 = vmatprep.mubr.bf16.mxu0 0
      %2209 = vmatmul.mubr.bf16.gmra.mrb[0].mxu0 %v1768
      %v2210 = vpop.f32.mrb[0].mxu0
      %v2211 = vadd.f32 %v1286, %v2210
      %v2212 = vpop.f32.mrb[0].mxu0
      %v2213 = vadd.f32 %v1288, %v2212
      %v2214 = vpop.f32.mrb[0].mxu0
      %v2215 = vadd.f32 %v1290, %v2214
      %v2216 = vpop.f32.mrb[0].mxu0
      %v2217 = vadd.f32 %v1292, %v2216
      %2218 = vmatprep.mubr.bf16.mxu0 0
      %2219 = vmatmul.mubr.bf16.gmra.mrb[0].mxu0 %v1771
      %v2220 = vpop.f32.mrb[0].mxu0
      %v2221 = vadd.f32 %v1296, %v2220
      %v2222 = vpop.f32.mrb[0].mxu0
      %v2223 = vadd.f32 %v1298, %v2222
      %v2224 = vpop.f32.mrb[0].mxu0
      %v2225 = vadd.f32 %v1300, %v2224
      %v2226 = vpop.f32.mrb[0].mxu0
      %v2227 = vadd.f32 %v1302, %v2226
      %2228 = vmatprep.mubr.bf16.mxu0 0
      %2229 = vmatmul.mubr.bf16.gmra.mrb[0].mxu0 %v1774
      %v2230 = vpop.f32.mrb[0].mxu0
      %v2231 = vadd.f32 %v1306, %v2230
      %v2232 = vpop.f32.mrb[0].mxu0
      %v2233 = vadd.f32 %v1308, %v2232
      %v2234 = vpop.f32.mrb[0].mxu0
      %v2235 = vadd.f32 %v1310, %v2234
      %v2236 = vpop.f32.mrb[0].mxu0
      %v2237 = vadd.f32 %v1312, %v2236
      %2238 = vmatprep.mubr.bf16.mxu0 0
      %2239 = vmatmul.mubr.bf16.gmra.mrb[0].mxu0 %v1777
      %v2240 = vpop.f32.mrb[0].mxu0
      %v2241 = vadd.f32 %v1316, %v2240
      %v2242 = vpop.f32.mrb[0].mxu0
      %v2243 = vadd.f32 %v1318, %v2242
      %v2244 = vpop.f32.mrb[0].mxu0
      %v2245 = vadd.f32 %v1320, %v2244
      %v2246 = vpop.f32.mrb[0].mxu0
      %v2247 = vadd.f32 %v1322, %v2246
      %2248 = vmatprep.mubr.bf16.mxu0 0
      %2249 = vmatmul.mubr.bf16.gmra.mrb[0].mxu0 %v1780
      %v2250 = vpop.f32.mrb[0].mxu0
      %v2251 = vadd.f32 %v1326, %v2250
      %v2252 = vpop.f32.mrb[0].mxu0
      %v2253 = vadd.f32 %v1328, %v2252
      %v2254 = vpop.f32.mrb[0].mxu0
      %v2255 = vadd.f32 %v1330, %v2254
      %v2256 = vpop.f32.mrb[0].mxu0
      %v2257 = vadd.f32 %v1332, %v2256
      %2258 = vmatprep.mubr.bf16.mxu0 0
      %2259 = vmatmul.mubr.bf16.gmra.mrb[0].mxu0 %v1783
      %v2260 = vpop.f32.mrb[0].mxu0
      %v2261 = vadd.f32 %v1336, %v2260
      %v2262 = vpop.f32.mrb[0].mxu0
      %v2263 = vadd.f32 %v1338, %v2262
      %v2264 = vpop.f32.mrb[0].mxu0
      %v2265 = vadd.f32 %v1340, %v2264
      %v2266 = vpop.f32.mrb[0].mxu0
      %v2267 = vadd.f32 %v1342, %v2266
      %2268 = vmatprep.mubr.bf16.mxu0 0
      %2269 = vmatmul.mubr.bf16.gmra.mrb[0].mxu0 %v1786
      %v2270 = vpop.f32.mrb[0].mxu0
      %v2271 = vadd.f32 %v1346, %v2270
      %v2272 = vpop.f32.mrb[0].mxu0
      %v2273 = vadd.f32 %v1348, %v2272
      %v2274 = vpop.f32.mrb[0].mxu0
      %v2275 = vadd.f32 %v1350, %v2274
      %v2276 = vpop.f32.mrb[0].mxu0
      %v2277 = vadd.f32 %v1352, %v2276
      %2278 = vmatprep.mubr.bf16.mxu0 0
      %2279 = vmatmul.mubr.bf16.gmra.mrb[0].mxu0 %v1789
      %v2280 = vpop.f32.mrb[0].mxu0
      %v2281 = vadd.f32 %v1356, %v2280
      %v2282 = vpop.f32.mrb[0].mxu0
      %v2283 = vadd.f32 %v1358, %v2282
      %v2284 = vpop.f32.mrb[0].mxu0
      %v2285 = vadd.f32 %v1360, %v2284
      %v2286 = vpop.f32.mrb[0].mxu0
      %v2287 = vadd.f32 %v1362, %v2286
      %2288 = vmatprep.mubr.bf16.mxu0 0
      %2289 = vmatmul.mubr.bf16.gmra.mrb[0].mxu0 %v1792
      %v2290 = vpop.f32.mrb[0].mxu0
      %v2291 = vadd.f32 %v1366, %v2290
      %v2292 = vpop.f32.mrb[0].mxu0
      %v2293 = vadd.f32 %v1368, %v2292
      %v2294 = vpop.f32.mrb[0].mxu0
      %v2295 = vadd.f32 %v1370, %v2294
      %v2296 = vpop.f32.mrb[0].mxu0
      %v2297 = vadd.f32 %v1372, %v2296
      %2298 = vmatprep.mubr.bf16.mxu0 0
      %2299 = vmatmul.mubr.bf16.gmra.mrb[0].mxu0 %v1795
      %v2300 = vpop.f32.mrb[0].mxu0
      %v2301 = vadd.f32 %v1376, %v2300
      %v2302 = vpop.f32.mrb[0].mxu0
      %v2303 = vadd.f32 %v1378, %v2302
      %v2304 = vpop.f32.mrb[0].mxu0
      %v2305 = vadd.f32 %v1380, %v2304
      %v2306 = vpop.f32.mrb[0].mxu0
      %v2307 = vadd.f32 %v1382, %v2306
      %2308 = vmatprep.mubr.bf16.mxu0 0
      %2309 = vmatmul.mubr.bf16.gmra.mrb[0].mxu0 %v1798
      %v2310 = vpop.f32.mrb[0].mxu0
      %v2311 = vadd.f32 %v1386, %v2310
      %v2312 = vpop.f32.mrb[0].mxu0
      %v2313 = vadd.f32 %v1388, %v2312
      %v2314 = vpop.f32.mrb[0].mxu0
      %v2315 = vadd.f32 %v1390, %v2314
      %v2316 = vpop.f32.mrb[0].mxu0
      %v2317 = vadd.f32 %v1392, %v2316
      %2318 = vmatprep.mubr.bf16.mxu0 0
      %2319 = vmatmul.mubr.bf16.gmra.mrb[0].mxu0 %v1801
      %v2320 = vpop.f32.mrb[0].mxu0
      %v2321 = vadd.f32 %v1396, %v2320
      %v2322 = vpop.f32.mrb[0].mxu0
      %v2323 = vadd.f32 %v1398, %v2322
      %v2324 = vpop.f32.mrb[0].mxu0
      %v2325 = vadd.f32 %v1400, %v2324
      %v2326 = vpop.f32.mrb[0].mxu0
      %v2327 = vadd.f32 %v1402, %v2326
      %2328 = vmatprep.mubr.bf16.mxu0 0
      %2329 = vmatmul.mubr.bf16.gmra.mrb[0].mxu0 %v1804
      %v2330 = vpop.f32.mrb[0].mxu0
      %v2331 = vadd.f32 %v1406, %v2330
      %v2332 = vpop.f32.mrb[0].mxu0
      %v2333 = vadd.f32 %v1408, %v2332
      %v2334 = vpop.f32.mrb[0].mxu0
      %v2335 = vadd.f32 %v1410, %v2334
      %v2336 = vpop.f32.mrb[0].mxu0
      %v2337 = vadd.f32 %v1412, %v2336
      %2338 = vmatprep.mubr.bf16.mxu0 0
      %2339 = vmatmul.mubr.bf16.gmra.mrb[0].mxu0 %v1807
      %v2340 = vpop.f32.mrb[0].mxu0
      %v2341 = vadd.f32 %v1416, %v2340
      %v2342 = vpop.f32.mrb[0].mxu0
      %v2343 = vadd.f32 %v1418, %v2342
      %v2344 = vpop.f32.mrb[0].mxu0
      %v2345 = vadd.f32 %v1420, %v2344
      %v2346 = vpop.f32.mrb[0].mxu0
      %v2347 = vadd.f32 %v1422, %v2346
      %2348 = vdwg.mxu0
      %2349 = vmatprep.subr.bf16.mxu0 0
      %2350 = vmatpush1.bf16.msra.mxu0 %v1696
      %2351 = vmatprep.subr.bf16.mxu0 0
      %2352 = vmatpush1.bf16.msra.mxu0 %v1703
      %2353 = vmatprep.subr.bf16.mxu0 0
      %2354 = vmatpush1.bf16.msra.mxu0 %v1710
      %2355 = vmatprep.subr.bf16.mxu0 0
      %2356 = vmatpush1.bf16.msra.mxu0 %v1717
      %2357 = vmatprep.subr.bf16.mxu0 0
      %2358 = vmatpush1.bf16.msra.mxu0 %v1724
      %2359 = vmatprep.subr.bf16.mxu0 0
      %2360 = vmatpush1.bf16.msra.mxu0 %v1828
      %2361 = vmatprep.subr.bf16.mxu0 0
      %2362 = vmatpush1.bf16.msra.mxu0 0
      %2363 = vmatprep.subr.bf16.mxu0 0
      %2364 = vmatpush1.bf16.msra.mxu0 0
      %2365 = vmatprep.subr.bf16.mxu0 0
      %2366 = vmatpush1.bf16.msra.mxu0 0
      %2367 = vmatprep.subr.bf16.mxu0 0
      %2368 = vmatpush1.bf16.msra.mxu0 0
      %2369 = vmatprep.subr.bf16.mxu0 0
      %2370 = vmatpush1.bf16.msra.mxu0 0
      %2371 = vmatprep.subr.bf16.mxu0 0
      %2372 = vmatpush1.bf16.msra.mxu0 0
      %2373 = vmatprep.subr.bf16.mxu0 0
      %2374 = vmatpush1.bf16.msra.mxu0 0
      %2375 = vmatprep.subr.bf16.mxu0 0
      %2376 = vmatpush1.bf16.msra.mxu0 0
      %2377 = vmatprep.subr.bf16.mxu0 0
      %2378 = vmatpush1.bf16.msra.mxu0 0
      %2379 = vmatprep.subr.bf16.mxu0 0
      %2380 = vmatpush1.bf16.msra.mxu0 0
      %2381 = vmatprep.mubr.bf16.mxu0 0
      %2382 = vmatmul.mubr.bf16.gmra.mrb[0].mxu0 %v1768
      %v2383 = vpop.f32.mrb[0].mxu0
      %v2384 = vadd.f32 %v1459, %v2383
      %v2385 = vpop.f32.mrb[0].mxu0
      %v2386 = vpop.f32.mrb[0].mxu0
      %v2387 = vadd.f32 %v1462, %v2386
      %v2388 = vpop.f32.mrb[0].mxu0
      %2389 = vmatprep.mubr.bf16.mxu0 0
      %2390 = vmatmul.mubr.bf16.gmra.mrb[0].mxu0 %v1771
      %v2391 = vpop.f32.mrb[0].mxu0
      %v2392 = vadd.f32 %v1467, %v2391
      %v2393 = vpop.f32.mrb[0].mxu0
      %v2394 = vpop.f32.mrb[0].mxu0
      %v2395 = vadd.f32 %v1470, %v2394
      %v2396 = vpop.f32.mrb[0].mxu0
      %2397 = vmatprep.mubr.bf16.mxu0 0
      %2398 = vmatmul.mubr.bf16.gmra.mrb[0].mxu0 %v1774
      %v2399 = vpop.f32.mrb[0].mxu0
      %v2400 = vadd.f32 %v1475, %v2399
      %v2401 = vpop.f32.mrb[0].mxu0
      %v2402 = vpop.f32.mrb[0].mxu0
      %v2403 = vadd.f32 %v1478, %v2402
      %v2404 = vpop.f32.mrb[0].mxu0
      %2405 = vmatprep.mubr.bf16.mxu0 0
      %2406 = vmatmul.mubr.bf16.gmra.mrb[0].mxu0 %v1777
      %v2407 = vpop.f32.mrb[0].mxu0
      %v2408 = vadd.f32 %v1483, %v2407
      %v2409 = vpop.f32.mrb[0].mxu0
      %v2410 = vpop.f32.mrb[0].mxu0
      %v2411 = vadd.f32 %v1486, %v2410
      %v2412 = vpop.f32.mrb[0].mxu0
      %2413 = vmatprep.mubr.bf16.mxu0 0
      %2414 = vmatmul.mubr.bf16.gmra.mrb[0].mxu0 %v1780
      %v2415 = vpop.f32.mrb[0].mxu0
      %v2416 = vadd.f32 %v1491, %v2415
      %v2417 = vpop.f32.mrb[0].mxu0
      %v2418 = vpop.f32.mrb[0].mxu0
      %v2419 = vadd.f32 %v1494, %v2418
      %v2420 = vpop.f32.mrb[0].mxu0
      %2421 = vmatprep.mubr.bf16.mxu0 0
      %2422 = vmatmul.mubr.bf16.gmra.mrb[0].mxu0 %v1783
      %v2423 = vpop.f32.mrb[0].mxu0
      %v2424 = vadd.f32 %v1499, %v2423
      %v2425 = vpop.f32.mrb[0].mxu0
      %v2426 = vpop.f32.mrb[0].mxu0
      %v2427 = vadd.f32 %v1502, %v2426
      %v2428 = vpop.f32.mrb[0].mxu0
      %2429 = vmatprep.mubr.bf16.mxu0 0
      %2430 = vmatmul.mubr.bf16.gmra.mrb[0].mxu0 %v1786
      %v2431 = vpop.f32.mrb[0].mxu0
      %v2432 = vadd.f32 %v1507, %v2431
      %v2433 = vpop.f32.mrb[0].mxu0
      %v2434 = vpop.f32.mrb[0].mxu0
      %v2435 = vadd.f32 %v1510, %v2434
      %v2436 = vpop.f32.mrb[0].mxu0
      %2437 = vmatprep.mubr.bf16.mxu0 0
      %2438 = vmatmul.mubr.bf16.gmra.mrb[0].mxu0 %v1789
      %v2439 = vpop.f32.mrb[0].mxu0
      %v2440 = vadd.f32 %v1515, %v2439
      %v2441 = vpop.f32.mrb[0].mxu0
      %v2442 = vpop.f32.mrb[0].mxu0
      %v2443 = vadd.f32 %v1518, %v2442
      %v2444 = vpop.f32.mrb[0].mxu0
      %2445 = vmatprep.mubr.bf16.mxu0 0
      %2446 = vmatmul.mubr.bf16.gmra.mrb[0].mxu0 %v1792
      %v2447 = vpop.f32.mrb[0].mxu0
      %v2448 = vadd.f32 %v1523, %v2447
      %v2449 = vpop.f32.mrb[0].mxu0
      %v2450 = vpop.f32.mrb[0].mxu0
      %v2451 = vadd.f32 %v1526, %v2450
      %v2452 = vpop.f32.mrb[0].mxu0
      %2453 = vmatprep.mubr.bf16.mxu0 0
      %2454 = vmatmul.mubr.bf16.gmra.mrb[0].mxu0 %v1795
      %v2455 = vpop.f32.mrb[0].mxu0
      %v2456 = vadd.f32 %v1531, %v2455
      %v2457 = vpop.f32.mrb[0].mxu0
      %v2458 = vpop.f32.mrb[0].mxu0
      %v2459 = vadd.f32 %v1534, %v2458
      %v2460 = vpop.f32.mrb[0].mxu0
      %2461 = vmatprep.mubr.bf16.mxu0 0
      %2462 = vmatmul.mubr.bf16.gmra.mrb[0].mxu0 %v1798
      %v2463 = vpop.f32.mrb[0].mxu0
      %v2464 = vadd.f32 %v1539, %v2463
      %v2465 = vpop.f32.mrb[0].mxu0
      %v2466 = vpop.f32.mrb[0].mxu0
      %v2467 = vadd.f32 %v1542, %v2466
      %v2468 = vpop.f32.mrb[0].mxu0
      %2469 = vmatprep.mubr.bf16.mxu0 0
      %2470 = vmatmul.mubr.bf16.gmra.mrb[0].mxu0 %v1801
      %v2471 = vpop.f32.mrb[0].mxu0
      %v2472 = vadd.f32 %v1547, %v2471
      %v2473 = vpop.f32.mrb[0].mxu0
      %v2474 = vpop.f32.mrb[0].mxu0
      %v2475 = vadd.f32 %v1550, %v2474
      %v2476 = vpop.f32.mrb[0].mxu0
      %2477 = vmatprep.mubr.bf16.mxu0 0
      %2478 = vmatmul.mubr.bf16.gmra.mrb[0].mxu0 %v1804
      %v2479 = vpop.f32.mrb[0].mxu0
      %v2480 = vadd.f32 %v1555, %v2479
      %v2481 = vpop.f32.mrb[0].mxu0
      %v2482 = vpop.f32.mrb[0].mxu0
      %v2483 = vadd.f32 %v1558, %v2482
      %v2484 = vpop.f32.mrb[0].mxu0
      %2485 = vmatprep.mubr.bf16.mxu0 0
      %2486 = vmatmul.mubr.bf16.gmra.mrb[0].mxu0 %v1807
      %v2487 = vpop.f32.mrb[0].mxu0
      %v2488 = vadd.f32 %v1563, %v2487
      %v2489 = vpop.f32.mrb[0].mxu0
      %v2490 = vpop.f32.mrb[0].mxu0
      %v2491 = vadd.f32 %v1566, %v2490
      %v2492 = vpop.f32.mrb[0].mxu0
      %2493 = vdwg.mxu0
      %v2494 = vld [vmem:[%s462 + $0x2] sm:$0xff]
      %v2495 = vld [vmem:[%s462 + $0xa] sm:$0xff]
      %v2496 = vld [vmem:[%s462 + $0x12] sm:$0xff]
      %v2497 = vld [vmem:[%s462 + $0x1a] sm:$0xff]
      %v2498 = vld [vmem:[%s462 + $0x22] sm:$0xff]
      %v2499 = vld [vmem:[%s462 + $0x2a] sm:$0xff]
      %v2500 = vld [vmem:[%s462 + $0x32] sm:$0xff]
      %v2501 = vld [vmem:[%s462 + $0x3a] sm:$0xff]
      %v2502 = vld [vmem:[%s462 + $0x42] sm:$0xff]
      %v2503 = vld [vmem:[%s462 + $0x4a] sm:$0xff]
      %v2504 = vld [vmem:[%s462 + $0x52] sm:$0xff]
      %v2505 = vld [vmem:[%s462 + $0x5a] sm:$0xff]
      %v2506 = vld [vmem:[%s462 + $0x62] sm:$0xff]
      %v2507 = vld [vmem:[%s462 + $0x6a] sm:$0xff]
      %v2508 = vld [vmem:[%s462 + $0x72] sm:$0xff]
      %v2509 = vld [vmem:[%s462 + $0x7a] sm:$0xff]
      %v2510 = vld [vmem:[%s462 + $0x82] sm:$0xff]
      %v2511 = vld [vmem:[%s462 + $0x8a] sm:$0xff]
      %v2512 = vld [vmem:[%s462 + $0x92] sm:$0xff]
      %v2513 = vld [vmem:[%s462 + $0x9a] sm:$0xff]
      %v2514 = vld [vmem:[%s462 + $0xa2] sm:$0xff]
      %v2515 = vld [vmem:[%s462 + $0xaa] sm:$0xff]
      %v2516 = vld [vmem:[%s462 + $0xb2] sm:$0xff]
      %v2517 = vld [vmem:[%s462 + $0xba] sm:$0xff]
      %v2518 = vld [vmem:[%s462 + $0xc2] sm:$0xff]
      %v2519 = vld [vmem:[%s462 + $0xca] sm:$0xff]
      %v2520 = vld [vmem:[%s462 + $0xd2] sm:$0xff]
      %v2521 = vld [vmem:[%s462 + $0xda] sm:$0x3f]
      %v2522 = vpack.c.bf16 %v2495, %v2494
      %v2523 = vpack.c.bf16 %v2497, %v2496
      %v2524 = vpack.c.bf16 %v2499, %v2498
      %v2525 = vpack.c.bf16 %v2501, %v2500
      %v2526 = vpack.c.bf16 %v2503, %v2502
      %v2527 = vpack.c.bf16 %v2505, %v2504
      %v2528 = vpack.c.bf16 %v2507, %v2506
      %v2529 = vpack.c.bf16 %v2509, %v2508
      %v2530 = vpack.c.bf16 %v2511, %v2510
      %v2531 = vpack.c.bf16 %v2513, %v2512
      %v2532 = vpack.c.bf16 %v2515, %v2514
      %v2533 = vpack.c.bf16 %v2517, %v2516
      %v2534 = vpack.c.bf16 %v2519, %v2518
      %v2535 = vpack.c.bf16 %v2521, %v2520
      %s2536 = scalar_lea.vmem %s1, 616
      %v2537 = vld [vmem:[%s2536] sm:$0xff]
      %v2538 = vld [vmem:[%s2536 + $0x8] sm:$0xff]
      %v2539 = vld [vmem:[%s2536 + $0x10] sm:$0xff]
      %v2540 = vld [vmem:[%s2536 + $0x18] sm:$0xf]
      %v2541 = vld [vmem:[%s2536 + $0x1c] sm:$0xff]
      %v2542 = vld [vmem:[%s2536 + $0x24] sm:$0xff]
      %v2543 = vld [vmem:[%s2536 + $0x2c] sm:$0xff]
      %v2544 = vld [vmem:[%s2536 + $0x34] sm:$0xf]
      %v2545 = vld [vmem:[%s2536 + $0x38] sm:$0xff]
      %v2546 = vld [vmem:[%s2536 + $0x40] sm:$0xff]
      %v2547 = vld [vmem:[%s2536 + $0x48] sm:$0xff]
      %v2548 = vld [vmem:[%s2536 + $0x50] sm:$0xf]
      %v2549 = vld [vmem:[%s2536 + $0x54] sm:$0xff]
      %v2550 = vld [vmem:[%s2536 + $0x5c] sm:$0xff]
      %v2551 = vld [vmem:[%s2536 + $0x64] sm:$0xff]
      %v2552 = vld [vmem:[%s2536 + $0x6c] sm:$0xf]
      %v2553 = vld [vmem:[%s2536 + $0x70] sm:$0xff]
      %v2554 = vld [vmem:[%s2536 + $0x78] sm:$0xff]
      %v2555 = vld [vmem:[%s2536 + $0x80] sm:$0xff]
      %v2556 = vld [vmem:[%s2536 + $0x88] sm:$0xf]
      %v2557 = vld [vmem:[%s2536 + $0x8c] sm:$0xff]
      %v2558 = vld [vmem:[%s2536 + $0x94] sm:$0xff]
      %v2559 = vld [vmem:[%s2536 + $0x9c] sm:$0xff]
      %v2560 = vld [vmem:[%s2536 + $0xa4] sm:$0xf]
      %v2561 = vld [vmem:[%s2536 + $0xa8] sm:$0xff]
      %v2562 = vld [vmem:[%s2536 + $0xb0] sm:$0xff]
      %v2563 = vld [vmem:[%s2536 + $0xb8] sm:$0xff]
      %v2564 = vld [vmem:[%s2536 + $0xc0] sm:$0xf]
      %v2565 = vld [vmem:[%s2536 + $0xc4] sm:$0xff]
      %v2566 = vld [vmem:[%s2536 + $0xcc] sm:$0xff]
      %v2567 = vld [vmem:[%s2536 + $0xd4] sm:$0xff]
      %v2568 = vld [vmem:[%s2536 + $0xdc] sm:$0xf]
      %v2569 = vld [vmem:[%s2536 + $0xe0] sm:$0xff]
      %v2570 = vld [vmem:[%s2536 + $0xe8] sm:$0xff]
      %v2571 = vld [vmem:[%s2536 + $0xf0] sm:$0xff]
      %v2572 = vld [vmem:[%s2536 + $0xf8] sm:$0xf]
      %v2573 = vld [vmem:[%s2536 + $0xfc] sm:$0xff]
      %v2574 = vld [vmem:[%s2536 + $0x104] sm:$0xff]
      %v2575 = vld [vmem:[%s2536 + $0x10c] sm:$0xff]
      %v2576 = vld [vmem:[%s2536 + $0x114] sm:$0xf]
      %v2577 = vld [vmem:[%s2536 + $0x118] sm:$0x33]
      %v2578 = vld [vmem:[%s2536 + $0x120] sm:$0x33]
      %v2579 = vld [vmem:[%s2536 + $0x128] sm:$0x33]
      %v2580 = vld [vmem:[%s2536 + $0x130] sm:$0x3]
      %v2625 = vunpack.c.l.b16 %v2537
      %v2626 = vunpack.c.h.b16 %v2537
      %v2627 = vunpack.c.l.b16 %v2538
      %v2628 = vunpack.c.h.b16 %v2538
      %v2629 = vunpack.c.l.b16 %v2539
      %v2630 = vunpack.c.h.b16 %v2539
      %v2631 = vunpack.c.l.b16 %v2540
      %v2632 = vunpack.c.l.b16 %v2541
      %v2633 = vunpack.c.h.b16 %v2541
      %v2634 = vunpack.c.l.b16 %v2542
      %v2635 = vunpack.c.h.b16 %v2542
      %v2636 = vunpack.c.l.b16 %v2543
      %v2637 = vunpack.c.h.b16 %v2543
      %v2638 = vunpack.c.l.b16 %v2544
      %v2639 = vunpack.c.l.b16 %v2545
      %v2640 = vunpack.c.h.b16 %v2545
      %v2641 = vunpack.c.l.b16 %v2546
      %v2642 = vunpack.c.h.b16 %v2546
      %v2643 = vunpack.c.l.b16 %v2547
      %v2644 = vunpack.c.h.b16 %v2547
      %v2645 = vunpack.c.l.b16 %v2548
      %v2646 = vunpack.c.l.b16 %v2549
      %v2647 = vunpack.c.h.b16 %v2549
      %v2648 = vunpack.c.l.b16 %v2550
      %v2649 = vunpack.c.h.b16 %v2550
      %v2650 = vunpack.c.l.b16 %v2551
      %v2651 = vunpack.c.h.b16 %v2551
      %v2652 = vunpack.c.l.b16 %v2552
      %v2653 = vunpack.c.l.b16 %v2553
      %v2654 = vunpack.c.h.b16 %v2553
      %v2655 = vunpack.c.l.b16 %v2554
      %v2656 = vunpack.c.h.b16 %v2554
      %v2657 = vunpack.c.l.b16 %v2555
      %v2658 = vunpack.c.h.b16 %v2555
      %v2659 = vunpack.c.l.b16 %v2556
      %v2660 = vunpack.c.l.b16 %v2557
      %v2661 = vunpack.c.h.b16 %v2557
      %v2662 = vunpack.c.l.b16 %v2558
      %v2663 = vunpack.c.h.b16 %v2558
      %v2664 = vunpack.c.l.b16 %v2559
      %v2665 = vunpack.c.h.b16 %v2559
      %v2666 = vunpack.c.l.b16 %v2560
      %v2667 = vunpack.c.l.b16 %v2561
      %v2668 = vunpack.c.h.b16 %v2561
      %v2669 = vunpack.c.l.b16 %v2562
      %v2670 = vunpack.c.h.b16 %v2562
      %v2671 = vunpack.c.l.b16 %v2563
      %v2672 = vunpack.c.h.b16 %v2563
      %v2673 = vunpack.c.l.b16 %v2564
      %v2674 = vunpack.c.l.b16 %v2565
      %v2675 = vunpack.c.h.b16 %v2565
      %v2676 = vunpack.c.l.b16 %v2566
      %v2677 = vunpack.c.h.b16 %v2566
      %v2678 = vunpack.c.l.b16 %v2567
      %v2679 = vunpack.c.h.b16 %v2567
      %v2680 = vunpack.c.l.b16 %v2568
      %v2681 = vunpack.c.l.b16 %v2569
      %v2682 = vunpack.c.h.b16 %v2569
      %v2683 = vunpack.c.l.b16 %v2570
      %v2684 = vunpack.c.h.b16 %v2570
      %v2685 = vunpack.c.l.b16 %v2571
      %v2686 = vunpack.c.h.b16 %v2571
      %v2687 = vunpack.c.l.b16 %v2572
      %v2688 = vunpack.c.l.b16 %v2573
      %v2689 = vunpack.c.h.b16 %v2573
      %v2690 = vunpack.c.l.b16 %v2574
      %v2691 = vunpack.c.h.b16 %v2574
      %v2692 = vunpack.c.l.b16 %v2575
      %v2693 = vunpack.c.h.b16 %v2575
      %v2694 = vunpack.c.l.b16 %v2576
      %v2695 = vunpack.c.l.b16 %v2577
      %v2696 = vunpack.c.h.b16 %v2577
      %v2697 = vunpack.c.l.b16 %v2578
      %v2698 = vunpack.c.h.b16 %v2578
      %v2699 = vunpack.c.l.b16 %v2579
      %v2700 = vunpack.c.h.b16 %v2579
      %v2701 = vunpack.c.l.b16 %v2580
      %v2702 = vpack.c.b16 %v2632, %v2625
      %v2703 = vpack.c.b16 %v2633, %v2626
      %v2704 = vpack.c.b16 %v2634, %v2627
      %v2705 = vpack.c.b16 %v2635, %v2628
      %v2706 = vpack.c.b16 %v2636, %v2629
      %v2707 = vpack.c.b16 %v2637, %v2630
      %v2708 = vpack.c.b16 %v2638, %v2631
      %v2709 = vpack.c.b16 %v2646, %v2639
      %v2710 = vpack.c.b16 %v2647, %v2640
      %v2711 = vpack.c.b16 %v2648, %v2641
      %v2712 = vpack.c.b16 %v2649, %v2642
      %v2713 = vpack.c.b16 %v2650, %v2643
      %v2714 = vpack.c.b16 %v2651, %v2644
      %v2715 = vpack.c.b16 %v2652, %v2645
      %v2716 = vpack.c.b16 %v2660, %v2653
      %v2717 = vpack.c.b16 %v2661, %v2654
      %v2718 = vpack.c.b16 %v2662, %v2655
      %v2719 = vpack.c.b16 %v2663, %v2656
      %v2720 = vpack.c.b16 %v2664, %v2657
      %v2721 = vpack.c.b16 %v2665, %v2658
      %v2722 = vpack.c.b16 %v2666, %v2659
      %v2723 = vpack.c.b16 %v2674, %v2667
      %v2724 = vpack.c.b16 %v2675, %v2668
      %v2725 = vpack.c.b16 %v2676, %v2669
      %v2726 = vpack.c.b16 %v2677, %v2670
      %v2727 = vpack.c.b16 %v2678, %v2671
      %v2728 = vpack.c.b16 %v2679, %v2672
      %v2729 = vpack.c.b16 %v2680, %v2673
      %v2730 = vpack.c.b16 %v2688, %v2681
      %v2731 = vpack.c.b16 %v2689, %v2682
      %v2732 = vpack.c.b16 %v2690, %v2683
      %v2733 = vpack.c.b16 %v2691, %v2684
      %v2734 = vpack.c.b16 %v2692, %v2685
      %v2735 = vpack.c.b16 %v2693, %v2686
      %v2736 = vpack.c.b16 %v2694, %v2687
      %v2737 = vpack.c.b16 %v2695, %v2695
      %v2738 = vpack.c.b16 %v2696, %v2696
      %v2739 = vpack.c.b16 %v2697, %v2697
      %v2740 = vpack.c.b16 %v2698, %v2698
      %v2741 = vpack.c.b16 %v2699, %v2699
      %v2742 = vpack.c.b16 %v2700, %v2700
      %v2743 = vpack.c.b16 %v2701, %v2701
      %v2780 = vsel %vm840, %v2522, 0
      %v2783 = vsel %vm840, %v2523, 0
      %v2786 = vsel %vm840, %v2524, 0
      %v2789 = vsel %vm840, %v2525, 0
      %v2792 = vsel %vm840, %v2526, 0
      %v2795 = vsel %vm840, %v2527, 0
      %v2798 = vsel %vm840, %v2528, 0
      %v2801 = vsel %vm840, %v2529, 0
      %v2804 = vsel %vm840, %v2530, 0
      %v2807 = vsel %vm840, %v2531, 0
      %v2810 = vsel %vm840, %v2532, 0
      %v2813 = vsel %vm840, %v2533, 0
      %v2816 = vsel %vm840, %v2534, 0
      %v2819 = vsel %vm840, %v2535, 0
      %v2822 = vsel %vm883, %v2737, 0
      %v2825 = vsel %vm883, %v2738, 0
      %v2828 = vsel %vm883, %v2739, 0
      %v2831 = vsel %vm883, %v2740, 0
      %v2834 = vsel %vm883, %v2741, 0
      %v2837 = vsel %vm883, %v2742, 0
      %v2840 = vsel %vm883, %v2743, 0
      %2842 = vmatprep.subr.bf16.mxu0 %v2703
      %2843 = vmatpush1.bf16.msra.mxu0 %v2702
      %2844 = vmatprep.subr.bf16.mxu0 %v2710
      %2845 = vmatpush1.bf16.msra.mxu0 %v2709
      %2846 = vmatprep.subr.bf16.mxu0 %v2717
      %2847 = vmatpush1.bf16.msra.mxu0 %v2716
      %2848 = vmatprep.subr.bf16.mxu0 %v2724
      %2849 = vmatpush1.bf16.msra.mxu0 %v2723
      %2850 = vmatprep.subr.bf16.mxu0 %v2731
      %2851 = vmatpush1.bf16.msra.mxu0 %v2730
      %2852 = vmatprep.subr.bf16.mxu0 %v2825
      %2853 = vmatpush1.bf16.msra.mxu0 %v2822
      %2854 = vmatprep.subr.bf16.mxu0 0
      %2855 = vmatpush1.bf16.msra.mxu0 0
      %2856 = vmatprep.subr.bf16.mxu0 0
      %2857 = vmatpush1.bf16.msra.mxu0 0
      %2858 = vmatprep.subr.bf16.mxu0 0
      %2859 = vmatpush1.bf16.msra.mxu0 0
      %2860 = vmatprep.subr.bf16.mxu0 0
      %2861 = vmatpush1.bf16.msra.mxu0 0
      %2862 = vmatprep.subr.bf16.mxu0 0
      %2863 = vmatpush1.bf16.msra.mxu0 0
      %2864 = vmatprep.subr.bf16.mxu0 0
      %2865 = vmatpush1.bf16.msra.mxu0 0
      %2866 = vmatprep.subr.bf16.mxu0 0
      %2867 = vmatpush1.bf16.msra.mxu0 0
      %2868 = vmatprep.subr.bf16.mxu0 0
      %2869 = vmatpush1.bf16.msra.mxu0 0
      %2870 = vmatprep.subr.bf16.mxu0 0
      %2871 = vmatpush1.bf16.msra.mxu0 0
      %2872 = vmatprep.subr.bf16.mxu0 0
      %2873 = vmatpush1.bf16.msra.mxu0 0
      %2874 = vmatprep.mubr.bf16.mxu0 0
      %2875 = vmatmul.mubr.bf16.gmra.mrb[0].mxu0 %v2780
      %v2876 = vpop.f32.mrb[0].mxu0
      %v2877 = vadd.f32 0.0, %v2876
      %v2878 = vpop.f32.mrb[0].mxu0
      %v2879 = vadd.f32 0.0, %v2878
      %v2880 = vpop.f32.mrb[0].mxu0
      %v2881 = vadd.f32 0.0, %v2880
      %v2882 = vpop.f32.mrb[0].mxu0
      %v2883 = vadd.f32 0.0, %v2882
      %2884 = vmatprep.mubr.bf16.mxu0 0
      %2885 = vmatmul.mubr.bf16.gmra.mrb[0].mxu0 %v2783
      %v2886 = vpop.f32.mrb[0].mxu0
      %v2887 = vadd.f32 0.0, %v2886
      %v2888 = vpop.f32.mrb[0].mxu0
      %v2889 = vadd.f32 0.0, %v2888
      %v2890 = vpop.f32.mrb[0].mxu0
      %v2891 = vadd.f32 0.0, %v2890
      %v2892 = vpop.f32.mrb[0].mxu0
      %v2893 = vadd.f32 0.0, %v2892
      %2894 = vmatprep.mubr.bf16.mxu0 0
      %2895 = vmatmul.mubr.bf16.gmra.mrb[0].mxu0 %v2786
      %v2896 = vpop.f32.mrb[0].mxu0
      %v2897 = vadd.f32 0.0, %v2896
      %v2898 = vpop.f32.mrb[0].mxu0
      %v2899 = vadd.f32 0.0, %v2898
      %v2900 = vpop.f32.mrb[0].mxu0
      %v2901 = vadd.f32 0.0, %v2900
      %v2902 = vpop.f32.mrb[0].mxu0
      %v2903 = vadd.f32 0.0, %v2902
      %2904 = vmatprep.mubr.bf16.mxu0 0
      %2905 = vmatmul.mubr.bf16.gmra.mrb[0].mxu0 %v2789
      %v2906 = vpop.f32.mrb[0].mxu0
      %v2907 = vadd.f32 0.0, %v2906
      %v2908 = vpop.f32.mrb[0].mxu0
      %v2909 = vadd.f32 0.0, %v2908
      %v2910 = vpop.f32.mrb[0].mxu0
      %v2911 = vadd.f32 0.0, %v2910
      %v2912 = vpop.f32.mrb[0].mxu0
      %v2913 = vadd.f32 0.0, %v2912
      %2914 = vmatprep.mubr.bf16.mxu0 0
      %2915 = vmatmul.mubr.bf16.gmra.mrb[0].mxu0 %v2792
      %v2916 = vpop.f32.mrb[0].mxu0
      %v2917 = vadd.f32 0.0, %v2916
      %v2918 = vpop.f32.mrb[0].mxu0
      %v2919 = vadd.f32 0.0, %v2918
      %v2920 = vpop.f32.mrb[0].mxu0
      %v2921 = vadd.f32 0.0, %v2920
      %v2922 = vpop.f32.mrb[0].mxu0
      %v2923 = vadd.f32 0.0, %v2922
      %2924 = vmatprep.mubr.bf16.mxu0 0
      %2925 = vmatmul.mubr.bf16.gmra.mrb[0].mxu0 %v2795
      %v2926 = vpop.f32.mrb[0].mxu0
      %v2927 = vadd.f32 0.0, %v2926
      %v2928 = vpop.f32.mrb[0].mxu0
      %v2929 = vadd.f32 0.0, %v2928
      %v2930 = vpop.f32.mrb[0].mxu0
      %v2931 = vadd.f32 0.0, %v2930
      %v2932 = vpop.f32.mrb[0].mxu0
      %v2933 = vadd.f32 0.0, %v2932
      %2934 = vmatprep.mubr.bf16.mxu0 0
      %2935 = vmatmul.mubr.bf16.gmra.mrb[0].mxu0 %v2798
      %v2936 = vpop.f32.mrb[0].mxu0
      %v2937 = vadd.f32 0.0, %v2936
      %v2938 = vpop.f32.mrb[0].mxu0
      %v2939 = vadd.f32 0.0, %v2938
      %v2940 = vpop.f32.mrb[0].mxu0
      %v2941 = vadd.f32 0.0, %v2940
      %v2942 = vpop.f32.mrb[0].mxu0
      %v2943 = vadd.f32 0.0, %v2942
      %2944 = vmatprep.mubr.bf16.mxu0 0
      %2945 = vmatmul.mubr.bf16.gmra.mrb[0].mxu0 %v2801
      %v2946 = vpop.f32.mrb[0].mxu0
      %v2947 = vadd.f32 0.0, %v2946
      %v2948 = vpop.f32.mrb[0].mxu0
      %v2949 = vadd.f32 0.0, %v2948
      %v2950 = vpop.f32.mrb[0].mxu0
      %v2951 = vadd.f32 0.0, %v2950
      %v2952 = vpop.f32.mrb[0].mxu0
      %v2953 = vadd.f32 0.0, %v2952
      %2954 = vmatprep.mubr.bf16.mxu0 0
      %2955 = vmatmul.mubr.bf16.gmra.mrb[0].mxu0 %v2804
      %v2956 = vpop.f32.mrb[0].mxu0
      %v2957 = vadd.f32 0.0, %v2956
      %v2958 = vpop.f32.mrb[0].mxu0
      %v2959 = vadd.f32 0.0, %v2958
      %v2960 = vpop.f32.mrb[0].mxu0
      %v2961 = vadd.f32 0.0, %v2960
      %v2962 = vpop.f32.mrb[0].mxu0
      %v2963 = vadd.f32 0.0, %v2962
      %2964 = vmatprep.mubr.bf16.mxu0 0
      %2965 = vmatmul.mubr.bf16.gmra.mrb[0].mxu0 %v2807
      %v2966 = vpop.f32.mrb[0].mxu0
      %v2967 = vadd.f32 0.0, %v2966
      %v2968 = vpop.f32.mrb[0].mxu0
      %v2969 = vadd.f32 0.0, %v2968
      %v2970 = vpop.f32.mrb[0].mxu0
      %v2971 = vadd.f32 0.0, %v2970
      %v2972 = vpop.f32.mrb[0].mxu0
      %v2973 = vadd.f32 0.0, %v2972
      %2974 = vmatprep.mubr.bf16.mxu0 0
      %2975 = vmatmul.mubr.bf16.gmra.mrb[0].mxu0 %v2810
      %v2976 = vpop.f32.mrb[0].mxu0
      %v2977 = vadd.f32 0.0, %v2976
      %v2978 = vpop.f32.mrb[0].mxu0
      %v2979 = vadd.f32 0.0, %v2978
      %v2980 = vpop.f32.mrb[0].mxu0
      %v2981 = vadd.f32 0.0, %v2980
      %v2982 = vpop.f32.mrb[0].mxu0
      %v2983 = vadd.f32 0.0, %v2982
      %2984 = vmatprep.mubr.bf16.mxu0 0
      %2985 = vmatmul.mubr.bf16.gmra.mrb[0].mxu0 %v2813
      %v2986 = vpop.f32.mrb[0].mxu0
      %v2987 = vadd.f32 0.0, %v2986
      %v2988 = vpop.f32.mrb[0].mxu0
      %v2989 = vadd.f32 0.0, %v2988
      %v2990 = vpop.f32.mrb[0].mxu0
      %v2991 = vadd.f32 0.0, %v2990
      %v2992 = vpop.f32.mrb[0].mxu0
      %v2993 = vadd.f32 0.0, %v2992
      %2994 = vmatprep.mubr.bf16.mxu0 0
      %2995 = vmatmul.mubr.bf16.gmra.mrb[0].mxu0 %v2816
      %v2996 = vpop.f32.mrb[0].mxu0
      %v2997 = vadd.f32 0.0, %v2996
      %v2998 = vpop.f32.mrb[0].mxu0
      %v2999 = vadd.f32 0.0, %v2998
      %v3000 = vpop.f32.mrb[0].mxu0
      %v3001 = vadd.f32 0.0, %v3000
      %v3002 = vpop.f32.mrb[0].mxu0
      %v3003 = vadd.f32 0.0, %v3002
      %3004 = vmatprep.mubr.bf16.mxu0 0
      %3005 = vmatmul.mubr.bf16.gmra.mrb[0].mxu0 %v2819
      %v3006 = vpop.f32.mrb[0].mxu0
      %v3007 = vadd.f32 0.0, %v3006
      %v3008 = vpop.f32.mrb[0].mxu0
      %v3009 = vadd.f32 0.0, %v3008
      %v3010 = vpop.f32.mrb[0].mxu0
      %v3011 = vadd.f32 0.0, %v3010
      %v3012 = vpop.f32.mrb[0].mxu0
      %v3013 = vadd.f32 0.0, %v3012
      %3014 = vdwg.mxu0
      %3015 = vmatprep.subr.bf16.mxu0 %v2705
      %3016 = vmatpush1.bf16.msra.mxu0 %v2704
      %3017 = vmatprep.subr.bf16.mxu0 %v2712
      %3018 = vmatpush1.bf16.msra.mxu0 %v2711
      %3019 = vmatprep.subr.bf16.mxu0 %v2719
      %3020 = vmatpush1.bf16.msra.mxu0 %v2718
      %3021 = vmatprep.subr.bf16.mxu0 %v2726
      %3022 = vmatpush1.bf16.msra.mxu0 %v2725
      %3023 = vmatprep.subr.bf16.mxu0 %v2733
      %3024 = vmatpush1.bf16.msra.mxu0 %v2732
      %3025 = vmatprep.subr.bf16.mxu0 %v2831
      %3026 = vmatpush1.bf16.msra.mxu0 %v2828
      %3027 = vmatprep.subr.bf16.mxu0 0
      %3028 = vmatpush1.bf16.msra.mxu0 0
      %3029 = vmatprep.subr.bf16.mxu0 0
      %3030 = vmatpush1.bf16.msra.mxu0 0
      %3031 = vmatprep.subr.bf16.mxu0 0
      %3032 = vmatpush1.bf16.msra.mxu0 0
      %3033 = vmatprep.subr.bf16.mxu0 0
      %3034 = vmatpush1.bf16.msra.mxu0 0
      %3035 = vmatprep.subr.bf16.mxu0 0
      %3036 = vmatpush1.bf16.msra.mxu0 0
      %3037 = vmatprep.subr.bf16.mxu0 0
      %3038 = vmatpush1.bf16.msra.mxu0 0
      %3039 = vmatprep.subr.bf16.mxu0 0
      %3040 = vmatpush1.bf16.msra.mxu0 0
      %3041 = vmatprep.subr.bf16.mxu0 0
      %3042 = vmatpush1.bf16.msra.mxu0 0
      %3043 = vmatprep.subr.bf16.mxu0 0
      %3044 = vmatpush1.bf16.msra.mxu0 0
      %3045 = vmatprep.subr.bf16.mxu0 0
      %3046 = vmatpush1.bf16.msra.mxu0 0
      %3047 = vmatprep.mubr.bf16.mxu0 0
      %3048 = vmatmul.mubr.bf16.gmra.mrb[0].mxu0 %v2780
      %v3049 = vpop.f32.mrb[0].mxu0
      %v3050 = vadd.f32 0.0, %v3049
      %v3051 = vpop.f32.mrb[0].mxu0
      %v3052 = vadd.f32 0.0, %v3051
      %v3053 = vpop.f32.mrb[0].mxu0
      %v3054 = vadd.f32 0.0, %v3053
      %v3055 = vpop.f32.mrb[0].mxu0
      %v3056 = vadd.f32 0.0, %v3055
      %3057 = vmatprep.mubr.bf16.mxu0 0
      %3058 = vmatmul.mubr.bf16.gmra.mrb[0].mxu0 %v2783
      %v3059 = vpop.f32.mrb[0].mxu0
      %v3060 = vadd.f32 0.0, %v3059
      %v3061 = vpop.f32.mrb[0].mxu0
      %v3062 = vadd.f32 0.0, %v3061
      %v3063 = vpop.f32.mrb[0].mxu0
      %v3064 = vadd.f32 0.0, %v3063
      %v3065 = vpop.f32.mrb[0].mxu0
      %v3066 = vadd.f32 0.0, %v3065
      %3067 = vmatprep.mubr.bf16.mxu0 0
      %3068 = vmatmul.mubr.bf16.gmra.mrb[0].mxu0 %v2786
      %v3069 = vpop.f32.mrb[0].mxu0
      %v3070 = vadd.f32 0.0, %v3069
      %v3071 = vpop.f32.mrb[0].mxu0
      %v3072 = vadd.f32 0.0, %v3071
      %v3073 = vpop.f32.mrb[0].mxu0
      %v3074 = vadd.f32 0.0, %v3073
      %v3075 = vpop.f32.mrb[0].mxu0
      %v3076 = vadd.f32 0.0, %v3075
      %3077 = vmatprep.mubr.bf16.mxu0 0
      %3078 = vmatmul.mubr.bf16.gmra.mrb[0].mxu0 %v2789
      %v3079 = vpop.f32.mrb[0].mxu0
      %v3080 = vadd.f32 0.0, %v3079
      %v3081 = vpop.f32.mrb[0].mxu0
      %v3082 = vadd.f32 0.0, %v3081
      %v3083 = vpop.f32.mrb[0].mxu0
      %v3084 = vadd.f32 0.0, %v3083
      %v3085 = vpop.f32.mrb[0].mxu0
      %v3086 = vadd.f32 0.0, %v3085
      %3087 = vmatprep.mubr.bf16.mxu0 0
      %3088 = vmatmul.mubr.bf16.gmra.mrb[0].mxu0 %v2792
      %v3089 = vpop.f32.mrb[0].mxu0
      %v3090 = vadd.f32 0.0, %v3089
      %v3091 = vpop.f32.mrb[0].mxu0
      %v3092 = vadd.f32 0.0, %v3091
      %v3093 = vpop.f32.mrb[0].mxu0
      %v3094 = vadd.f32 0.0, %v3093
      %v3095 = vpop.f32.mrb[0].mxu0
      %v3096 = vadd.f32 0.0, %v3095
      %3097 = vmatprep.mubr.bf16.mxu0 0
      %3098 = vmatmul.mubr.bf16.gmra.mrb[0].mxu0 %v2795
      %v3099 = vpop.f32.mrb[0].mxu0
      %v3100 = vadd.f32 0.0, %v3099
      %v3101 = vpop.f32.mrb[0].mxu0
      %v3102 = vadd.f32 0.0, %v3101
      %v3103 = vpop.f32.mrb[0].mxu0
      %v3104 = vadd.f32 0.0, %v3103
      %v3105 = vpop.f32.mrb[0].mxu0
      %v3106 = vadd.f32 0.0, %v3105
      %3107 = vmatprep.mubr.bf16.mxu0 0
      %3108 = vmatmul.mubr.bf16.gmra.mrb[0].mxu0 %v2798
      %v3109 = vpop.f32.mrb[0].mxu0
      %v3110 = vadd.f32 0.0, %v3109
      %v3111 = vpop.f32.mrb[0].mxu0
      %v3112 = vadd.f32 0.0, %v3111
      %v3113 = vpop.f32.mrb[0].mxu0
      %v3114 = vadd.f32 0.0, %v3113
      %v3115 = vpop.f32.mrb[0].mxu0
      %v3116 = vadd.f32 0.0, %v3115
      %3117 = vmatprep.mubr.bf16.mxu0 0
      %3118 = vmatmul.mubr.bf16.gmra.mrb[0].mxu0 %v2801
      %v3119 = vpop.f32.mrb[0].mxu0
      %v3120 = vadd.f32 0.0, %v3119
      %v3121 = vpop.f32.mrb[0].mxu0
      %v3122 = vadd.f32 0.0, %v3121
      %v3123 = vpop.f32.mrb[0].mxu0
      %v3124 = vadd.f32 0.0, %v3123
      %v3125 = vpop.f32.mrb[0].mxu0
      %v3126 = vadd.f32 0.0, %v3125
      %3127 = vmatprep.mubr.bf16.mxu0 0
      %3128 = vmatmul.mubr.bf16.gmra.mrb[0].mxu0 %v2804
      %v3129 = vpop.f32.mrb[0].mxu0
      %v3130 = vadd.f32 0.0, %v3129
      %v3131 = vpop.f32.mrb[0].mxu0
      %v3132 = vadd.f32 0.0, %v3131
      %v3133 = vpop.f32.mrb[0].mxu0
      %v3134 = vadd.f32 0.0, %v3133
      %v3135 = vpop.f32.mrb[0].mxu0
      %v3136 = vadd.f32 0.0, %v3135
      %3137 = vmatprep.mubr.bf16.mxu0 0
      %3138 = vmatmul.mubr.bf16.gmra.mrb[0].mxu0 %v2807
      %v3139 = vpop.f32.mrb[0].mxu0
      %v3140 = vadd.f32 0.0, %v3139
      %v3141 = vpop.f32.mrb[0].mxu0
      %v3142 = vadd.f32 0.0, %v3141
      %v3143 = vpop.f32.mrb[0].mxu0
      %v3144 = vadd.f32 0.0, %v3143
      %v3145 = vpop.f32.mrb[0].mxu0
      %v3146 = vadd.f32 0.0, %v3145
      %3147 = vmatprep.mubr.bf16.mxu0 0
      %3148 = vmatmul.mubr.bf16.gmra.mrb[0].mxu0 %v2810
      %v3149 = vpop.f32.mrb[0].mxu0
      %v3150 = vadd.f32 0.0, %v3149
      %v3151 = vpop.f32.mrb[0].mxu0
      %v3152 = vadd.f32 0.0, %v3151
      %v3153 = vpop.f32.mrb[0].mxu0
      %v3154 = vadd.f32 0.0, %v3153
      %v3155 = vpop.f32.mrb[0].mxu0
      %v3156 = vadd.f32 0.0, %v3155
      %3157 = vmatprep.mubr.bf16.mxu0 0
      %3158 = vmatmul.mubr.bf16.gmra.mrb[0].mxu0 %v2813
      %v3159 = vpop.f32.mrb[0].mxu0
      %v3160 = vadd.f32 0.0, %v3159
      %v3161 = vpop.f32.mrb[0].mxu0
      %v3162 = vadd.f32 0.0, %v3161
      %v3163 = vpop.f32.mrb[0].mxu0
      %v3164 = vadd.f32 0.0, %v3163
      %v3165 = vpop.f32.mrb[0].mxu0
      %v3166 = vadd.f32 0.0, %v3165
      %3167 = vmatprep.mubr.bf16.mxu0 0
      %3168 = vmatmul.mubr.bf16.gmra.mrb[0].mxu0 %v2816
      %v3169 = vpop.f32.mrb[0].mxu0
      %v3170 = vadd.f32 0.0, %v3169
      %v3171 = vpop.f32.mrb[0].mxu0
      %v3172 = vadd.f32 0.0, %v3171
      %v3173 = vpop.f32.mrb[0].mxu0
      %v3174 = vadd.f32 0.0, %v3173
      %v3175 = vpop.f32.mrb[0].mxu0
      %v3176 = vadd.f32 0.0, %v3175
      %3177 = vmatprep.mubr.bf16.mxu0 0
      %3178 = vmatmul.mubr.bf16.gmra.mrb[0].mxu0 %v2819
      %v3179 = vpop.f32.mrb[0].mxu0
      %v3180 = vadd.f32 0.0, %v3179
      %v3181 = vpop.f32.mrb[0].mxu0
      %v3182 = vadd.f32 0.0, %v3181
      %v3183 = vpop.f32.mrb[0].mxu0
      %v3184 = vadd.f32 0.0, %v3183
      %v3185 = vpop.f32.mrb[0].mxu0
      %v3186 = vadd.f32 0.0, %v3185
      %3187 = vdwg.mxu0
      %3188 = vmatprep.subr.bf16.mxu0 %v2707
      %3189 = vmatpush1.bf16.msra.mxu0 %v2706
      %3190 = vmatprep.subr.bf16.mxu0 %v2714
      %3191 = vmatpush1.bf16.msra.mxu0 %v2713
      %3192 = vmatprep.subr.bf16.mxu0 %v2721
      %3193 = vmatpush1.bf16.msra.mxu0 %v2720
      %3194 = vmatprep.subr.bf16.mxu0 %v2728
      %3195 = vmatpush1.bf16.msra.mxu0 %v2727
      %3196 = vmatprep.subr.bf16.mxu0 %v2735
      %3197 = vmatpush1.bf16.msra.mxu0 %v2734
      %3198 = vmatprep.subr.bf16.mxu0 %v2837
      %3199 = vmatpush1.bf16.msra.mxu0 %v2834
      %3200 = vmatprep.subr.bf16.mxu0 0
      %3201 = vmatpush1.bf16.msra.mxu0 0
      %3202 = vmatprep.subr.bf16.mxu0 0
      %3203 = vmatpush1.bf16.msra.mxu0 0
      %3204 = vmatprep.subr.bf16.mxu0 0
      %3205 = vmatpush1.bf16.msra.mxu0 0
      %3206 = vmatprep.subr.bf16.mxu0 0
      %3207 = vmatpush1.bf16.msra.mxu0 0
      %3208 = vmatprep.subr.bf16.mxu0 0
      %3209 = vmatpush1.bf16.msra.mxu0 0
      %3210 = vmatprep.subr.bf16.mxu0 0
      %3211 = vmatpush1.bf16.msra.mxu0 0
      %3212 = vmatprep.subr.bf16.mxu0 0
      %3213 = vmatpush1.bf16.msra.mxu0 0
      %3214 = vmatprep.subr.bf16.mxu0 0
      %3215 = vmatpush1.bf16.msra.mxu0 0
      %3216 = vmatprep.subr.bf16.mxu0 0
      %3217 = vmatpush1.bf16.msra.mxu0 0
      %3218 = vmatprep.subr.bf16.mxu0 0
      %3219 = vmatpush1.bf16.msra.mxu0 0
      %3220 = vmatprep.mubr.bf16.mxu0 0
      %3221 = vmatmul.mubr.bf16.gmra.mrb[0].mxu0 %v2780
      %v3222 = vpop.f32.mrb[0].mxu0
      %v3223 = vadd.f32 0.0, %v3222
      %v3224 = vpop.f32.mrb[0].mxu0
      %v3225 = vadd.f32 0.0, %v3224
      %v3226 = vpop.f32.mrb[0].mxu0
      %v3227 = vadd.f32 0.0, %v3226
      %v3228 = vpop.f32.mrb[0].mxu0
      %v3229 = vadd.f32 0.0, %v3228
      %3230 = vmatprep.mubr.bf16.mxu0 0
      %3231 = vmatmul.mubr.bf16.gmra.mrb[0].mxu0 %v2783
      %v3232 = vpop.f32.mrb[0].mxu0
      %v3233 = vadd.f32 0.0, %v3232
      %v3234 = vpop.f32.mrb[0].mxu0
      %v3235 = vadd.f32 0.0, %v3234
      %v3236 = vpop.f32.mrb[0].mxu0
      %v3237 = vadd.f32 0.0, %v3236
      %v3238 = vpop.f32.mrb[0].mxu0
      %v3239 = vadd.f32 0.0, %v3238
      %3240 = vmatprep.mubr.bf16.mxu0 0
      %3241 = vmatmul.mubr.bf16.gmra.mrb[0].mxu0 %v2786
      %v3242 = vpop.f32.mrb[0].mxu0
      %v3243 = vadd.f32 0.0, %v3242
      %v3244 = vpop.f32.mrb[0].mxu0
      %v3245 = vadd.f32 0.0, %v3244
      %v3246 = vpop.f32.mrb[0].mxu0
      %v3247 = vadd.f32 0.0, %v3246
      %v3248 = vpop.f32.mrb[0].mxu0
      %v3249 = vadd.f32 0.0, %v3248
      %3250 = vmatprep.mubr.bf16.mxu0 0
      %3251 = vmatmul.mubr.bf16.gmra.mrb[0].mxu0 %v2789
      %v3252 = vpop.f32.mrb[0].mxu0
      %v3253 = vadd.f32 0.0, %v3252
      %v3254 = vpop.f32.mrb[0].mxu0
      %v3255 = vadd.f32 0.0, %v3254
      %v3256 = vpop.f32.mrb[0].mxu0
      %v3257 = vadd.f32 0.0, %v3256
      %v3258 = vpop.f32.mrb[0].mxu0
      %v3259 = vadd.f32 0.0, %v3258
      %3260 = vmatprep.mubr.bf16.mxu0 0
      %3261 = vmatmul.mubr.bf16.gmra.mrb[0].mxu0 %v2792
      %v3262 = vpop.f32.mrb[0].mxu0
      %v3263 = vadd.f32 0.0, %v3262
      %v3264 = vpop.f32.mrb[0].mxu0
      %v3265 = vadd.f32 0.0, %v3264
      %v3266 = vpop.f32.mrb[0].mxu0
      %v3267 = vadd.f32 0.0, %v3266
      %v3268 = vpop.f32.mrb[0].mxu0
      %v3269 = vadd.f32 0.0, %v3268
      %3270 = vmatprep.mubr.bf16.mxu0 0
      %3271 = vmatmul.mubr.bf16.gmra.mrb[0].mxu0 %v2795
      %v3272 = vpop.f32.mrb[0].mxu0
      %v3273 = vadd.f32 0.0, %v3272
      %v3274 = vpop.f32.mrb[0].mxu0
      %v3275 = vadd.f32 0.0, %v3274
      %v3276 = vpop.f32.mrb[0].mxu0
      %v3277 = vadd.f32 0.0, %v3276
      %v3278 = vpop.f32.mrb[0].mxu0
      %v3279 = vadd.f32 0.0, %v3278
      %3280 = vmatprep.mubr.bf16.mxu0 0
      %3281 = vmatmul.mubr.bf16.gmra.mrb[0].mxu0 %v2798
      %v3282 = vpop.f32.mrb[0].mxu0
      %v3283 = vadd.f32 0.0, %v3282
      %v3284 = vpop.f32.mrb[0].mxu0
      %v3285 = vadd.f32 0.0, %v3284
      %v3286 = vpop.f32.mrb[0].mxu0
      %v3287 = vadd.f32 0.0, %v3286
      %v3288 = vpop.f32.mrb[0].mxu0
      %v3289 = vadd.f32 0.0, %v3288
      %3290 = vmatprep.mubr.bf16.mxu0 0
      %3291 = vmatmul.mubr.bf16.gmra.mrb[0].mxu0 %v2801
      %v3292 = vpop.f32.mrb[0].mxu0
      %v3293 = vadd.f32 0.0, %v3292
      %v3294 = vpop.f32.mrb[0].mxu0
      %v3295 = vadd.f32 0.0, %v3294
      %v3296 = vpop.f32.mrb[0].mxu0
      %v3297 = vadd.f32 0.0, %v3296
      %v3298 = vpop.f32.mrb[0].mxu0
      %v3299 = vadd.f32 0.0, %v3298
      %3300 = vmatprep.mubr.bf16.mxu0 0
      %3301 = vmatmul.mubr.bf16.gmra.mrb[0].mxu0 %v2804
      %v3302 = vpop.f32.mrb[0].mxu0
      %v3303 = vadd.f32 0.0, %v3302
      %v3304 = vpop.f32.mrb[0].mxu0
      %v3305 = vadd.f32 0.0, %v3304
      %v3306 = vpop.f32.mrb[0].mxu0
      %v3307 = vadd.f32 0.0, %v3306
      %v3308 = vpop.f32.mrb[0].mxu0
      %v3309 = vadd.f32 0.0, %v3308
      %3310 = vmatprep.mubr.bf16.mxu0 0
      %3311 = vmatmul.mubr.bf16.gmra.mrb[0].mxu0 %v2807
      %v3312 = vpop.f32.mrb[0].mxu0
      %v3313 = vadd.f32 0.0, %v3312
      %v3314 = vpop.f32.mrb[0].mxu0
      %v3315 = vadd.f32 0.0, %v3314
      %v3316 = vpop.f32.mrb[0].mxu0
      %v3317 = vadd.f32 0.0, %v3316
      %v3318 = vpop.f32.mrb[0].mxu0
      %v3319 = vadd.f32 0.0, %v3318
      %3320 = vmatprep.mubr.bf16.mxu0 0
      %3321 = vmatmul.mubr.bf16.gmra.mrb[0].mxu0 %v2810
      %v3322 = vpop.f32.mrb[0].mxu0
      %v3323 = vadd.f32 0.0, %v3322
      %v3324 = vpop.f32.mrb[0].mxu0
      %v3325 = vadd.f32 0.0, %v3324
      %v3326 = vpop.f32.mrb[0].mxu0
      %v3327 = vadd.f32 0.0, %v3326
      %v3328 = vpop.f32.mrb[0].mxu0
      %v3329 = vadd.f32 0.0, %v3328
      %3330 = vmatprep.mubr.bf16.mxu0 0
      %3331 = vmatmul.mubr.bf16.gmra.mrb[0].mxu0 %v2813
      %v3332 = vpop.f32.mrb[0].mxu0
      %v3333 = vadd.f32 0.0, %v3332
      %v3334 = vpop.f32.mrb[0].mxu0
      %v3335 = vadd.f32 0.0, %v3334
      %v3336 = vpop.f32.mrb[0].mxu0
      %v3337 = vadd.f32 0.0, %v3336
      %v3338 = vpop.f32.mrb[0].mxu0
      %v3339 = vadd.f32 0.0, %v3338
      %3340 = vmatprep.mubr.bf16.mxu0 0
      %3341 = vmatmul.mubr.bf16.gmra.mrb[0].mxu0 %v2816
      %v3342 = vpop.f32.mrb[0].mxu0
      %v3343 = vadd.f32 0.0, %v3342
      %v3344 = vpop.f32.mrb[0].mxu0
      %v3345 = vadd.f32 0.0, %v3344
      %v3346 = vpop.f32.mrb[0].mxu0
      %v3347 = vadd.f32 0.0, %v3346
      %v3348 = vpop.f32.mrb[0].mxu0
      %v3349 = vadd.f32 0.0, %v3348
      %3350 = vmatprep.mubr.bf16.mxu0 0
      %3351 = vmatmul.mubr.bf16.gmra.mrb[0].mxu0 %v2819
      %v3352 = vpop.f32.mrb[0].mxu0
      %v3353 = vadd.f32 0.0, %v3352
      %v3354 = vpop.f32.mrb[0].mxu0
      %v3355 = vadd.f32 0.0, %v3354
      %v3356 = vpop.f32.mrb[0].mxu0
      %v3357 = vadd.f32 0.0, %v3356
      %v3358 = vpop.f32.mrb[0].mxu0
      %v3359 = vadd.f32 0.0, %v3358
      %3360 = vdwg.mxu0
      %3361 = vmatprep.subr.bf16.mxu0 0
      %3362 = vmatpush1.bf16.msra.mxu0 %v2708
      %3363 = vmatprep.subr.bf16.mxu0 0
      %3364 = vmatpush1.bf16.msra.mxu0 %v2715
      %3365 = vmatprep.subr.bf16.mxu0 0
      %3366 = vmatpush1.bf16.msra.mxu0 %v2722
      %3367 = vmatprep.subr.bf16.mxu0 0
      %3368 = vmatpush1.bf16.msra.mxu0 %v2729
      %3369 = vmatprep.subr.bf16.mxu0 0
      %3370 = vmatpush1.bf16.msra.mxu0 %v2736
      %3371 = vmatprep.subr.bf16.mxu0 0
      %3372 = vmatpush1.bf16.msra.mxu0 %v2840
      %3373 = vmatprep.subr.bf16.mxu0 0
      %3374 = vmatpush1.bf16.msra.mxu0 0
      %3375 = vmatprep.subr.bf16.mxu0 0
      %3376 = vmatpush1.bf16.msra.mxu0 0
      %3377 = vmatprep.subr.bf16.mxu0 0
      %3378 = vmatpush1.bf16.msra.mxu0 0
      %3379 = vmatprep.subr.bf16.mxu0 0
      %3380 = vmatpush1.bf16.msra.mxu0 0
      %3381 = vmatprep.subr.bf16.mxu0 0
      %3382 = vmatpush1.bf16.msra.mxu0 0
      %3383 = vmatprep.subr.bf16.mxu0 0
      %3384 = vmatpush1.bf16.msra.mxu0 0
      %3385 = vmatprep.subr.bf16.mxu0 0
      %3386 = vmatpush1.bf16.msra.mxu0 0
      %3387 = vmatprep.subr.bf16.mxu0 0
      %3388 = vmatpush1.bf16.msra.mxu0 0
      %3389 = vmatprep.subr.bf16.mxu0 0
      %3390 = vmatpush1.bf16.msra.mxu0 0
      %3391 = vmatprep.subr.bf16.mxu0 0
      %3392 = vmatpush1.bf16.msra.mxu0 0
      %3393 = vmatprep.mubr.bf16.mxu0 0
      %3394 = vmatmul.mubr.bf16.gmra.mrb[0].mxu0 %v2780
      %v3395 = vpop.f32.mrb[0].mxu0
      %v3396 = vadd.f32 0.0, %v3395
      %v3397 = vpop.f32.mrb[0].mxu0
      %v3398 = vpop.f32.mrb[0].mxu0
      %v3399 = vadd.f32 0.0, %v3398
      %v3400 = vpop.f32.mrb[0].mxu0
      %3401 = vmatprep.mubr.bf16.mxu0 0
      %3402 = vmatmul.mubr.bf16.gmra.mrb[0].mxu0 %v2783
      %v3403 = vpop.f32.mrb[0].mxu0
      %v3404 = vadd.f32 0.0, %v3403
      %v3405 = vpop.f32.mrb[0].mxu0
      %v3406 = vpop.f32.mrb[0].mxu0
      %v3407 = vadd.f32 0.0, %v3406
      %v3408 = vpop.f32.mrb[0].mxu0
      %3409 = vmatprep.mubr.bf16.mxu0 0
      %3410 = vmatmul.mubr.bf16.gmra.mrb[0].mxu0 %v2786
      %v3411 = vpop.f32.mrb[0].mxu0
      %v3412 = vadd.f32 0.0, %v3411
      %v3413 = vpop.f32.mrb[0].mxu0
      %v3414 = vpop.f32.mrb[0].mxu0
      %v3415 = vadd.f32 0.0, %v3414
      %v3416 = vpop.f32.mrb[0].mxu0
      %3417 = vmatprep.mubr.bf16.mxu0 0
      %3418 = vmatmul.mubr.bf16.gmra.mrb[0].mxu0 %v2789
      %v3419 = vpop.f32.mrb[0].mxu0
      %v3420 = vadd.f32 0.0, %v3419
      %v3421 = vpop.f32.mrb[0].mxu0
      %v3422 = vpop.f32.mrb[0].mxu0
      %v3423 = vadd.f32 0.0, %v3422
      %v3424 = vpop.f32.mrb[0].mxu0
      %3425 = vmatprep.mubr.bf16.mxu0 0
      %3426 = vmatmul.mubr.bf16.gmra.mrb[0].mxu0 %v2792
      %v3427 = vpop.f32.mrb[0].mxu0
      %v3428 = vadd.f32 0.0, %v3427
      %v3429 = vpop.f32.mrb[0].mxu0
      %v3430 = vpop.f32.mrb[0].mxu0
      %v3431 = vadd.f32 0.0, %v3430
      %v3432 = vpop.f32.mrb[0].mxu0
      %3433 = vmatprep.mubr.bf16.mxu0 0
      %3434 = vmatmul.mubr.bf16.gmra.mrb[0].mxu0 %v2795
      %v3435 = vpop.f32.mrb[0].mxu0
      %v3436 = vadd.f32 0.0, %v3435
      %v3437 = vpop.f32.mrb[0].mxu0
      %v3438 = vpop.f32.mrb[0].mxu0
      %v3439 = vadd.f32 0.0, %v3438
      %v3440 = vpop.f32.mrb[0].mxu0
      %3441 = vmatprep.mubr.bf16.mxu0 0
      %3442 = vmatmul.mubr.bf16.gmra.mrb[0].mxu0 %v2798
      %v3443 = vpop.f32.mrb[0].mxu0
      %v3444 = vadd.f32 0.0, %v3443
      %v3445 = vpop.f32.mrb[0].mxu0
      %v3446 = vpop.f32.mrb[0].mxu0
      %v3447 = vadd.f32 0.0, %v3446
      %v3448 = vpop.f32.mrb[0].mxu0
      %3449 = vmatprep.mubr.bf16.mxu0 0
      %3450 = vmatmul.mubr.bf16.gmra.mrb[0].mxu0 %v2801
      %v3451 = vpop.f32.mrb[0].mxu0
      %v3452 = vadd.f32 0.0, %v3451
      %v3453 = vpop.f32.mrb[0].mxu0
      %v3454 = vpop.f32.mrb[0].mxu0
      %v3455 = vadd.f32 0.0, %v3454
      %v3456 = vpop.f32.mrb[0].mxu0
      %3457 = vmatprep.mubr.bf16.mxu0 0
      %3458 = vmatmul.mubr.bf16.gmra.mrb[0].mxu0 %v2804
      %v3459 = vpop.f32.mrb[0].mxu0
      %v3460 = vadd.f32 0.0, %v3459
      %v3461 = vpop.f32.mrb[0].mxu0
      %v3462 = vpop.f32.mrb[0].mxu0
      %v3463 = vadd.f32 0.0, %v3462
      %v3464 = vpop.f32.mrb[0].mxu0
      %3465 = vmatprep.mubr.bf16.mxu0 0
      %3466 = vmatmul.mubr.bf16.gmra.mrb[0].mxu0 %v2807
      %v3467 = vpop.f32.mrb[0].mxu0
      %v3468 = vadd.f32 0.0, %v3467
      %v3469 = vpop.f32.mrb[0].mxu0
      %v3470 = vpop.f32.mrb[0].mxu0
      %v3471 = vadd.f32 0.0, %v3470
      %v3472 = vpop.f32.mrb[0].mxu0
      %3473 = vmatprep.mubr.bf16.mxu0 0
      %3474 = vmatmul.mubr.bf16.gmra.mrb[0].mxu0 %v2810
      %v3475 = vpop.f32.mrb[0].mxu0
      %v3476 = vadd.f32 0.0, %v3475
      %v3477 = vpop.f32.mrb[0].mxu0
      %v3478 = vpop.f32.mrb[0].mxu0
      %v3479 = vadd.f32 0.0, %v3478
      %v3480 = vpop.f32.mrb[0].mxu0
      %3481 = vmatprep.mubr.bf16.mxu0 0
      %3482 = vmatmul.mubr.bf16.gmra.mrb[0].mxu0 %v2813
      %v3483 = vpop.f32.mrb[0].mxu0
      %v3484 = vadd.f32 0.0, %v3483
      %v3485 = vpop.f32.mrb[0].mxu0
      %v3486 = vpop.f32.mrb[0].mxu0
      %v3487 = vadd.f32 0.0, %v3486
      %v3488 = vpop.f32.mrb[0].mxu0
      %3489 = vmatprep.mubr.bf16.mxu0 0
      %3490 = vmatmul.mubr.bf16.gmra.mrb[0].mxu0 %v2816
      %v3491 = vpop.f32.mrb[0].mxu0
      %v3492 = vadd.f32 0.0, %v3491
      %v3493 = vpop.f32.mrb[0].mxu0
      %v3494 = vpop.f32.mrb[0].mxu0
      %v3495 = vadd.f32 0.0, %v3494
      %v3496 = vpop.f32.mrb[0].mxu0
      %3497 = vmatprep.mubr.bf16.mxu0 0
      %3498 = vmatmul.mubr.bf16.gmra.mrb[0].mxu0 %v2819
      %v3499 = vpop.f32.mrb[0].mxu0
      %v3500 = vadd.f32 0.0, %v3499
      %v3501 = vpop.f32.mrb[0].mxu0
      %v3502 = vpop.f32.mrb[0].mxu0
      %v3503 = vadd.f32 0.0, %v3502
      %v3504 = vpop.f32.mrb[0].mxu0
      %3505 = vdwg.mxu0
      %v3506 = vadd.f32 %v1865, %v2877
      %v3507 = vadd.f32 %v1867, %v2879
      %v3508 = vadd.f32 %v2038, %v3050
      %v3509 = vadd.f32 %v2040, %v3052
      %v3510 = vadd.f32 %v2211, %v3223
      %v3511 = vadd.f32 %v2213, %v3225
      %v3512 = vadd.f32 %v2384, %v3396
      %v3513 = vadd.f32 %v1869, %v2881
      %v3514 = vadd.f32 %v1871, %v2883
      %v3515 = vadd.f32 %v2042, %v3054
      %v3516 = vadd.f32 %v2044, %v3056
      %v3517 = vadd.f32 %v2215, %v3227
      %v3518 = vadd.f32 %v2217, %v3229
      %v3519 = vadd.f32 %v2387, %v3399
      %v3520 = vadd.f32 %v1875, %v2887
      %v3521 = vadd.f32 %v1877, %v2889
      %v3522 = vadd.f32 %v2048, %v3060
      %v3523 = vadd.f32 %v2050, %v3062
      %v3524 = vadd.f32 %v2221, %v3233
      %v3525 = vadd.f32 %v2223, %v3235
      %v3526 = vadd.f32 %v2392, %v3404
      %v3527 = vadd.f32 %v1879, %v2891
      %v3528 = vadd.f32 %v1881, %v2893
      %v3529 = vadd.f32 %v2052, %v3064
      %v3530 = vadd.f32 %v2054, %v3066
      %v3531 = vadd.f32 %v2225, %v3237
      %v3532 = vadd.f32 %v2227, %v3239
      %v3533 = vadd.f32 %v2395, %v3407
      %v3534 = vadd.f32 %v1885, %v2897
      %v3535 = vadd.f32 %v1887, %v2899
      %v3536 = vadd.f32 %v2058, %v3070
      %v3537 = vadd.f32 %v2060, %v3072
      %v3538 = vadd.f32 %v2231, %v3243
      %v3539 = vadd.f32 %v2233, %v3245
      %v3540 = vadd.f32 %v2400, %v3412
      %v3541 = vadd.f32 %v1889, %v2901
      %v3542 = vadd.f32 %v1891, %v2903
      %v3543 = vadd.f32 %v2062, %v3074
      %v3544 = vadd.f32 %v2064, %v3076
      %v3545 = vadd.f32 %v2235, %v3247
      %v3546 = vadd.f32 %v2237, %v3249
      %v3547 = vadd.f32 %v2403, %v3415
      %v3548 = vadd.f32 %v1895, %v2907
      %v3549 = vadd.f32 %v1897, %v2909
      %v3550 = vadd.f32 %v2068, %v3080
      %v3551 = vadd.f32 %v2070, %v3082
      %v3552 = vadd.f32 %v2241, %v3253
      %v3553 = vadd.f32 %v2243, %v3255
      %v3554 = vadd.f32 %v2408, %v3420
      %v3555 = vadd.f32 %v1899, %v2911
      %v3556 = vadd.f32 %v1901, %v2913
      %v3557 = vadd.f32 %v2072, %v3084
      %v3558 = vadd.f32 %v2074, %v3086
      %v3559 = vadd.f32 %v2245, %v3257
      %v3560 = vadd.f32 %v2247, %v3259
      %v3561 = vadd.f32 %v2411, %v3423
      %v3562 = vadd.f32 %v1905, %v2917
      %v3563 = vadd.f32 %v1907, %v2919
      %v3564 = vadd.f32 %v2078, %v3090
      %v3565 = vadd.f32 %v2080, %v3092
      %v3566 = vadd.f32 %v2251, %v3263
      %v3567 = vadd.f32 %v2253, %v3265
      %v3568 = vadd.f32 %v2416, %v3428
      %v3569 = vadd.f32 %v1909, %v2921
      %v3570 = vadd.f32 %v1911, %v2923
      %v3571 = vadd.f32 %v2082, %v3094
      %v3572 = vadd.f32 %v2084, %v3096
      %v3573 = vadd.f32 %v2255, %v3267
      %v3574 = vadd.f32 %v2257, %v3269
      %v3575 = vadd.f32 %v2419, %v3431
      %v3576 = vadd.f32 %v1915, %v2927
      %v3577 = vadd.f32 %v1917, %v2929
      %v3578 = vadd.f32 %v2088, %v3100
      %v3579 = vadd.f32 %v2090, %v3102
      %v3580 = vadd.f32 %v2261, %v3273
      %v3581 = vadd.f32 %v2263, %v3275
      %v3582 = vadd.f32 %v2424, %v3436
      %v3583 = vadd.f32 %v1919, %v2931
      %v3584 = vadd.f32 %v1921, %v2933
      %v3585 = vadd.f32 %v2092, %v3104
      %v3586 = vadd.f32 %v2094, %v3106
      %v3587 = vadd.f32 %v2265, %v3277
      %v3588 = vadd.f32 %v2267, %v3279
      %v3589 = vadd.f32 %v2427, %v3439
      %v3590 = vadd.f32 %v1925, %v2937
      %v3591 = vadd.f32 %v1927, %v2939
      %v3592 = vadd.f32 %v2098, %v3110
      %v3593 = vadd.f32 %v2100, %v3112
      %v3594 = vadd.f32 %v2271, %v3283
      %v3595 = vadd.f32 %v2273, %v3285
      %v3596 = vadd.f32 %v2432, %v3444
      %v3597 = vadd.f32 %v1929, %v2941
      %v3598 = vadd.f32 %v1931, %v2943
      %v3599 = vadd.f32 %v2102, %v3114
      %v3600 = vadd.f32 %v2104, %v3116
      %v3601 = vadd.f32 %v2275, %v3287
      %v3602 = vadd.f32 %v2277, %v3289
      %v3603 = vadd.f32 %v2435, %v3447
      %v3604 = vadd.f32 %v1935, %v2947
      %v3605 = vadd.f32 %v1937, %v2949
      %v3606 = vadd.f32 %v2108, %v3120
      %v3607 = vadd.f32 %v2110, %v3122
      %v3608 = vadd.f32 %v2281, %v3293
      %v3609 = vadd.f32 %v2283, %v3295
      %v3610 = vadd.f32 %v2440, %v3452
      %v3611 = vadd.f32 %v1939, %v2951
      %v3612 = vadd.f32 %v1941, %v2953
      %v3613 = vadd.f32 %v2112, %v3124
      %v3614 = vadd.f32 %v2114, %v3126
      %v3615 = vadd.f32 %v2285, %v3297
      %v3616 = vadd.f32 %v2287, %v3299
      %v3617 = vadd.f32 %v2443, %v3455
      %v3618 = vadd.f32 %v1945, %v2957
      %v3619 = vadd.f32 %v1947, %v2959
      %v3620 = vadd.f32 %v2118, %v3130
      %v3621 = vadd.f32 %v2120, %v3132
      %v3622 = vadd.f32 %v2291, %v3303
      %v3623 = vadd.f32 %v2293, %v3305
      %v3624 = vadd.f32 %v2448, %v3460
      %v3625 = vadd.f32 %v1949, %v2961
      %v3626 = vadd.f32 %v1951, %v2963
      %v3627 = vadd.f32 %v2122, %v3134
      %v3628 = vadd.f32 %v2124, %v3136
      %v3629 = vadd.f32 %v2295, %v3307
      %v3630 = vadd.f32 %v2297, %v3309
      %v3631 = vadd.f32 %v2451, %v3463
      %v3632 = vadd.f32 %v1955, %v2967
      %v3633 = vadd.f32 %v1957, %v2969
      %v3634 = vadd.f32 %v2128, %v3140
      %v3635 = vadd.f32 %v2130, %v3142
      %v3636 = vadd.f32 %v2301, %v3313
      %v3637 = vadd.f32 %v2303, %v3315
      %v3638 = vadd.f32 %v2456, %v3468
      %v3639 = vadd.f32 %v1959, %v2971
      %v3640 = vadd.f32 %v1961, %v2973
      %v3641 = vadd.f32 %v2132, %v3144
      %v3642 = vadd.f32 %v2134, %v3146
      %v3643 = vadd.f32 %v2305, %v3317
      %v3644 = vadd.f32 %v2307, %v3319
      %v3645 = vadd.f32 %v2459, %v3471
      %v3646 = vadd.f32 %v1965, %v2977
      %v3647 = vadd.f32 %v1967, %v2979
      %v3648 = vadd.f32 %v2138, %v3150
      %v3649 = vadd.f32 %v2140, %v3152
      %v3650 = vadd.f32 %v2311, %v3323
      %v3651 = vadd.f32 %v2313, %v3325
      %v3652 = vadd.f32 %v2464, %v3476
      %v3653 = vadd.f32 %v1969, %v2981
      %v3654 = vadd.f32 %v1971, %v2983
      %v3655 = vadd.f32 %v2142, %v3154
      %v3656 = vadd.f32 %v2144, %v3156
      %v3657 = vadd.f32 %v2315, %v3327
      %v3658 = vadd.f32 %v2317, %v3329
      %v3659 = vadd.f32 %v2467, %v3479
      %v3660 = vadd.f32 %v1975, %v2987
      %v3661 = vadd.f32 %v1977, %v2989
      %v3662 = vadd.f32 %v2148, %v3160
      %v3663 = vadd.f32 %v2150, %v3162
      %v3664 = vadd.f32 %v2321, %v3333
      %v3665 = vadd.f32 %v2323, %v3335
      %v3666 = vadd.f32 %v2472, %v3484
      %v3667 = vadd.f32 %v1979, %v2991
      %v3668 = vadd.f32 %v1981, %v2993
      %v3669 = vadd.f32 %v2152, %v3164
      %v3670 = vadd.f32 %v2154, %v3166
      %v3671 = vadd.f32 %v2325, %v3337
      %v3672 = vadd.f32 %v2327, %v3339
      %v3673 = vadd.f32 %v2475, %v3487
      %v3674 = vadd.f32 %v1985, %v2997
      %v3675 = vadd.f32 %v1987, %v2999
      %v3676 = vadd.f32 %v2158, %v3170
      %v3677 = vadd.f32 %v2160, %v3172
      %v3678 = vadd.f32 %v2331, %v3343
      %v3679 = vadd.f32 %v2333, %v3345
      %v3680 = vadd.f32 %v2480, %v3492
      %v3681 = vadd.f32 %v1989, %v3001
      %v3682 = vadd.f32 %v1991, %v3003
      %v3683 = vadd.f32 %v2162, %v3174
      %v3684 = vadd.f32 %v2164, %v3176
      %v3685 = vadd.f32 %v2335, %v3347
      %v3686 = vadd.f32 %v2337, %v3349
      %v3687 = vadd.f32 %v2483, %v3495
      %v3688 = vadd.f32 %v1995, %v3007
      %v3689 = vadd.f32 %v1997, %v3009
      %v3690 = vadd.f32 %v2168, %v3180
      %v3691 = vadd.f32 %v2170, %v3182
      %v3692 = vadd.f32 %v2341, %v3353
      %v3693 = vadd.f32 %v2343, %v3355
      %v3694 = vadd.f32 %v2488, %v3500
      %v3695 = vadd.f32 %v1999, %v3011
      %v3696 = vadd.f32 %v2001, %v3013
      %v3697 = vadd.f32 %v2172, %v3184
      %v3698 = vadd.f32 %v2174, %v3186
      %v3699 = vadd.f32 %v2345, %v3357
      %v3700 = vadd.f32 %v2347, %v3359
      %v3701 = vadd.f32 %v2491, %v3503
      %v3702 = vld [vmem:[%s2] sm:$0x7f]
      %v3704 = vlaneseq
      %v3705 = vshrl.u32 %v3704, 7
      %v3706 = vsub.s32 0, %v3705
      %v3707 = vrot.slane %v3702, %v3706
      %v3708 = vlaneseq
      %v3709 = vshrl.u32 %v3708, 7
      %v3710 = vsub.s32 1, %v3709
      %v3711 = vrot.slane %v3702, %v3710
      %v3712 = vlaneseq
      %v3713 = vshrl.u32 %v3712, 7
      %v3714 = vsub.s32 2, %v3713
      %v3715 = vrot.slane %v3702, %v3714
      %v3716 = vlaneseq
      %v3717 = vshrl.u32 %v3716, 7
      %v3718 = vsub.s32 3, %v3717
      %v3719 = vrot.slane %v3702, %v3718
      %v3720 = vlaneseq
      %v3721 = vshrl.u32 %v3720, 7
      %v3722 = vsub.s32 4, %v3721
      %v3723 = vrot.slane %v3702, %v3722
      %v3724 = vlaneseq
      %v3725 = vshrl.u32 %v3724, 7
      %v3726 = vsub.s32 5, %v3725
      %v3727 = vrot.slane %v3702, %v3726
      %v3728 = vlaneseq
      %v3729 = vshrl.u32 %v3728, 7
      %v3730 = vsub.s32 6, %v3729
      %v3731 = vrot.slane %v3702, %v3730
      %v3739 = vadd.f32 %v3506, %v3707
      %v3740 = vadd.f32 %v3507, %v3711
      %v3741 = vadd.f32 %v3508, %v3715
      %v3742 = vadd.f32 %v3509, %v3719
      %v3743 = vadd.f32 %v3510, %v3723
      %v3744 = vadd.f32 %v3511, %v3727
      %v3745 = vadd.f32 %v3512, %v3731
      %v3746 = vadd.f32 %v3513, %v3707
      %v3747 = vadd.f32 %v3514, %v3711
      %v3748 = vadd.f32 %v3515, %v3715
      %v3749 = vadd.f32 %v3516, %v3719
      %v3750 = vadd.f32 %v3517, %v3723
      %v3751 = vadd.f32 %v3518, %v3727
      %v3752 = vadd.f32 %v3519, %v3731
      %v3753 = vadd.f32 %v3520, %v3707
      %v3754 = vadd.f32 %v3521, %v3711
      %v3755 = vadd.f32 %v3522, %v3715
      %v3756 = vadd.f32 %v3523, %v3719
      %v3757 = vadd.f32 %v3524, %v3723
      %v3758 = vadd.f32 %v3525, %v3727
      %v3759 = vadd.f32 %v3526, %v3731
      %v3760 = vadd.f32 %v3527, %v3707
      %v3761 = vadd.f32 %v3528, %v3711
      %v3762 = vadd.f32 %v3529, %v3715
      %v3763 = vadd.f32 %v3530, %v3719
      %v3764 = vadd.f32 %v3531, %v3723
      %v3765 = vadd.f32 %v3532, %v3727
      %v3766 = vadd.f32 %v3533, %v3731
      %v3767 = vadd.f32 %v3534, %v3707
      %v3768 = vadd.f32 %v3535, %v3711
      %v3769 = vadd.f32 %v3536, %v3715
      %v3770 = vadd.f32 %v3537, %v3719
      %v3771 = vadd.f32 %v3538, %v3723
      %v3772 = vadd.f32 %v3539, %v3727
      %v3773 = vadd.f32 %v3540, %v3731
      %v3774 = vadd.f32 %v3541, %v3707
      %v3775 = vadd.f32 %v3542, %v3711
      %v3776 = vadd.f32 %v3543, %v3715
      %v3777 = vadd.f32 %v3544, %v3719
      %v3778 = vadd.f32 %v3545, %v3723
      %v3779 = vadd.f32 %v3546, %v3727
      %v3780 = vadd.f32 %v3547, %v3731
      %v3781 = vadd.f32 %v3548, %v3707
      %v3782 = vadd.f32 %v3549, %v3711
      %v3783 = vadd.f32 %v3550, %v3715
      %v3784 = vadd.f32 %v3551, %v3719
      %v3785 = vadd.f32 %v3552, %v3723
      %v3786 = vadd.f32 %v3553, %v3727
      %v3787 = vadd.f32 %v3554, %v3731
      %v3788 = vadd.f32 %v3555, %v3707
      %v3789 = vadd.f32 %v3556, %v3711
      %v3790 = vadd.f32 %v3557, %v3715
      %v3791 = vadd.f32 %v3558, %v3719
      %v3792 = vadd.f32 %v3559, %v3723
      %v3793 = vadd.f32 %v3560, %v3727
      %v3794 = vadd.f32 %v3561, %v3731
      %v3795 = vadd.f32 %v3562, %v3707
      %v3796 = vadd.f32 %v3563, %v3711
      %v3797 = vadd.f32 %v3564, %v3715
      %v3798 = vadd.f32 %v3565, %v3719
      %v3799 = vadd.f32 %v3566, %v3723
      %v3800 = vadd.f32 %v3567, %v3727
      %v3801 = vadd.f32 %v3568, %v3731
      %v3802 = vadd.f32 %v3569, %v3707
      %v3803 = vadd.f32 %v3570, %v3711
      %v3804 = vadd.f32 %v3571, %v3715
      %v3805 = vadd.f32 %v3572, %v3719
      %v3806 = vadd.f32 %v3573, %v3723
      %v3807 = vadd.f32 %v3574, %v3727
      %v3808 = vadd.f32 %v3575, %v3731
      %v3809 = vadd.f32 %v3576, %v3707
      %v3810 = vadd.f32 %v3577, %v3711
      %v3811 = vadd.f32 %v3578, %v3715
      %v3812 = vadd.f32 %v3579, %v3719
      %v3813 = vadd.f32 %v3580, %v3723
      %v3814 = vadd.f32 %v3581, %v3727
      %v3815 = vadd.f32 %v3582, %v3731
      %v3816 = vadd.f32 %v3583, %v3707
      %v3817 = vadd.f32 %v3584, %v3711
      %v3818 = vadd.f32 %v3585, %v3715
      %v3819 = vadd.f32 %v3586, %v3719
      %v3820 = vadd.f32 %v3587, %v3723
      %v3821 = vadd.f32 %v3588, %v3727
      %v3822 = vadd.f32 %v3589, %v3731
      %v3823 = vadd.f32 %v3590, %v3707
      %v3824 = vadd.f32 %v3591, %v3711
      %v3825 = vadd.f32 %v3592, %v3715
      %v3826 = vadd.f32 %v3593, %v3719
      %v3827 = vadd.f32 %v3594, %v3723
      %v3828 = vadd.f32 %v3595, %v3727
      %v3829 = vadd.f32 %v3596, %v3731
      %v3830 = vadd.f32 %v3597, %v3707
      %v3831 = vadd.f32 %v3598, %v3711
      %v3832 = vadd.f32 %v3599, %v3715
      %v3833 = vadd.f32 %v3600, %v3719
      %v3834 = vadd.f32 %v3601, %v3723
      %v3835 = vadd.f32 %v3602, %v3727
      %v3836 = vadd.f32 %v3603, %v3731
      %v3837 = vadd.f32 %v3604, %v3707
      %v3838 = vadd.f32 %v3605, %v3711
      %v3839 = vadd.f32 %v3606, %v3715
      %v3840 = vadd.f32 %v3607, %v3719
      %v3841 = vadd.f32 %v3608, %v3723
      %v3842 = vadd.f32 %v3609, %v3727
      %v3843 = vadd.f32 %v3610, %v3731
      %v3844 = vadd.f32 %v3611, %v3707
      %v3845 = vadd.f32 %v3612, %v3711
      %v3846 = vadd.f32 %v3613, %v3715
      %v3847 = vadd.f32 %v3614, %v3719
      %v3848 = vadd.f32 %v3615, %v3723
      %v3849 = vadd.f32 %v3616, %v3727
      %v3850 = vadd.f32 %v3617, %v3731
      %v3851 = vadd.f32 %v3618, %v3707
      %v3852 = vadd.f32 %v3619, %v3711
      %v3853 = vadd.f32 %v3620, %v3715
      %v3854 = vadd.f32 %v3621, %v3719
      %v3855 = vadd.f32 %v3622, %v3723
      %v3856 = vadd.f32 %v3623, %v3727
      %v3857 = vadd.f32 %v3624, %v3731
      %v3858 = vadd.f32 %v3625, %v3707
      %v3859 = vadd.f32 %v3626, %v3711
      %v3860 = vadd.f32 %v3627, %v3715
      %v3861 = vadd.f32 %v3628, %v3719
      %v3862 = vadd.f32 %v3629, %v3723
      %v3863 = vadd.f32 %v3630, %v3727
      %v3864 = vadd.f32 %v3631, %v3731
      %v3865 = vadd.f32 %v3632, %v3707
      %v3866 = vadd.f32 %v3633, %v3711
      %v3867 = vadd.f32 %v3634, %v3715
      %v3868 = vadd.f32 %v3635, %v3719
      %v3869 = vadd.f32 %v3636, %v3723
      %v3870 = vadd.f32 %v3637, %v3727
      %v3871 = vadd.f32 %v3638, %v3731
      %v3872 = vadd.f32 %v3639, %v3707
      %v3873 = vadd.f32 %v3640, %v3711
      %v3874 = vadd.f32 %v3641, %v3715
      %v3875 = vadd.f32 %v3642, %v3719
      %v3876 = vadd.f32 %v3643, %v3723
      %v3877 = vadd.f32 %v3644, %v3727
      %v3878 = vadd.f32 %v3645, %v3731
      %v3879 = vadd.f32 %v3646, %v3707
      %v3880 = vadd.f32 %v3647, %v3711
      %v3881 = vadd.f32 %v3648, %v3715
      %v3882 = vadd.f32 %v3649, %v3719
      %v3883 = vadd.f32 %v3650, %v3723
      %v3884 = vadd.f32 %v3651, %v3727
      %v3885 = vadd.f32 %v3652, %v3731
      %v3886 = vadd.f32 %v3653, %v3707
      %v3887 = vadd.f32 %v3654, %v3711
      %v3888 = vadd.f32 %v3655, %v3715
      %v3889 = vadd.f32 %v3656, %v3719
      %v3890 = vadd.f32 %v3657, %v3723
      %v3891 = vadd.f32 %v3658, %v3727
      %v3892 = vadd.f32 %v3659, %v3731
      %v3893 = vadd.f32 %v3660, %v3707
      %v3894 = vadd.f32 %v3661, %v3711
      %v3895 = vadd.f32 %v3662, %v3715
      %v3896 = vadd.f32 %v3663, %v3719
      %v3897 = vadd.f32 %v3664, %v3723
      %v3898 = vadd.f32 %v3665, %v3727
      %v3899 = vadd.f32 %v3666, %v3731
      %v3900 = vadd.f32 %v3667, %v3707
      %v3901 = vadd.f32 %v3668, %v3711
      %v3902 = vadd.f32 %v3669, %v3715
      %v3903 = vadd.f32 %v3670, %v3719
      %v3904 = vadd.f32 %v3671, %v3723
      %v3905 = vadd.f32 %v3672, %v3727
      %v3906 = vadd.f32 %v3673, %v3731
      %v3907 = vadd.f32 %v3674, %v3707
      %v3908 = vadd.f32 %v3675, %v3711
      %v3909 = vadd.f32 %v3676, %v3715
      %v3910 = vadd.f32 %v3677, %v3719
      %v3911 = vadd.f32 %v3678, %v3723
      %v3912 = vadd.f32 %v3679, %v3727
      %v3913 = vadd.f32 %v3680, %v3731
      %v3914 = vadd.f32 %v3681, %v3707
      %v3915 = vadd.f32 %v3682, %v3711
      %v3916 = vadd.f32 %v3683, %v3715
      %v3917 = vadd.f32 %v3684, %v3719
      %v3918 = vadd.f32 %v3685, %v3723
      %v3919 = vadd.f32 %v3686, %v3727
      %v3920 = vadd.f32 %v3687, %v3731
      %v3921 = vadd.f32 %v3688, %v3707
      %v3922 = vadd.f32 %v3689, %v3711
      %v3923 = vadd.f32 %v3690, %v3715
      %v3924 = vadd.f32 %v3691, %v3719
      %v3925 = vadd.f32 %v3692, %v3723
      %v3926 = vadd.f32 %v3693, %v3727
      %v3927 = vadd.f32 %v3694, %v3731
      %v3928 = vadd.f32 %v3695, %v3707
      %v3929 = vadd.f32 %v3696, %v3711
      %v3930 = vadd.f32 %v3697, %v3715
      %v3931 = vadd.f32 %v3698, %v3719
      %v3932 = vadd.f32 %v3699, %v3723
      %v3933 = vadd.f32 %v3700, %v3727
      %v3934 = vadd.f32 %v3701, %v3731
      %v3935 = vmax.f32 %v3739, 0.0
      %v3936 = vmax.f32 %v3740, 0.0
      %v3937 = vmax.f32 %v3741, 0.0
      %v3938 = vmax.f32 %v3742, 0.0
      %v3939 = vmax.f32 %v3743, 0.0
      %v3940 = vmax.f32 %v3744, 0.0
      %v3941 = vmax.f32 %v3745, 0.0
      %v3942 = vmax.f32 %v3746, 0.0
      %v3943 = vmax.f32 %v3747, 0.0
      %v3944 = vmax.f32 %v3748, 0.0
      %v3945 = vmax.f32 %v3749, 0.0
      %v3946 = vmax.f32 %v3750, 0.0
      %v3947 = vmax.f32 %v3751, 0.0
      %v3948 = vmax.f32 %v3752, 0.0
      %v3949 = vmax.f32 %v3753, 0.0
      %v3950 = vmax.f32 %v3754, 0.0
      %v3951 = vmax.f32 %v3755, 0.0
      %v3952 = vmax.f32 %v3756, 0.0
      %v3953 = vmax.f32 %v3757, 0.0
      %v3954 = vmax.f32 %v3758, 0.0
      %v3955 = vmax.f32 %v3759, 0.0
      %v3956 = vmax.f32 %v3760, 0.0
      %v3957 = vmax.f32 %v3761, 0.0
      %v3958 = vmax.f32 %v3762, 0.0
      %v3959 = vmax.f32 %v3763, 0.0
      %v3960 = vmax.f32 %v3764, 0.0
      %v3961 = vmax.f32 %v3765, 0.0
      %v3962 = vmax.f32 %v3766, 0.0
      %v3963 = vmax.f32 %v3767, 0.0
      %v3964 = vmax.f32 %v3768, 0.0
      %v3965 = vmax.f32 %v3769, 0.0
      %v3966 = vmax.f32 %v3770, 0.0
      %v3967 = vmax.f32 %v3771, 0.0
      %v3968 = vmax.f32 %v3772, 0.0
      %v3969 = vmax.f32 %v3773, 0.0
      %v3970 = vmax.f32 %v3774, 0.0
      %v3971 = vmax.f32 %v3775, 0.0
      %v3972 = vmax.f32 %v3776, 0.0
      %v3973 = vmax.f32 %v3777, 0.0
      %v3974 = vmax.f32 %v3778, 0.0
      %v3975 = vmax.f32 %v3779, 0.0
      %v3976 = vmax.f32 %v3780, 0.0
      %v3977 = vmax.f32 %v3781, 0.0
      %v3978 = vmax.f32 %v3782, 0.0
      %v3979 = vmax.f32 %v3783, 0.0
      %v3980 = vmax.f32 %v3784, 0.0
      %v3981 = vmax.f32 %v3785, 0.0
      %v3982 = vmax.f32 %v3786, 0.0
      %v3983 = vmax.f32 %v3787, 0.0
      %v3984 = vmax.f32 %v3788, 0.0
      %v3985 = vmax.f32 %v3789, 0.0
      %v3986 = vmax.f32 %v3790, 0.0
      %v3987 = vmax.f32 %v3791, 0.0
      %v3988 = vmax.f32 %v3792, 0.0
      %v3989 = vmax.f32 %v3793, 0.0
      %v3990 = vmax.f32 %v3794, 0.0
      %v3991 = vmax.f32 %v3795, 0.0
      %v3992 = vmax.f32 %v3796, 0.0
      %v3993 = vmax.f32 %v3797, 0.0
      %v3994 = vmax.f32 %v3798, 0.0
      %v3995 = vmax.f32 %v3799, 0.0
      %v3996 = vmax.f32 %v3800, 0.0
      %v3997 = vmax.f32 %v3801, 0.0
      %v3998 = vmax.f32 %v3802, 0.0
      %v3999 = vmax.f32 %v3803, 0.0
      %v4000 = vmax.f32 %v3804, 0.0
      %v4001 = vmax.f32 %v3805, 0.0
      %v4002 = vmax.f32 %v3806, 0.0
      %v4003 = vmax.f32 %v3807, 0.0
      %v4004 = vmax.f32 %v3808, 0.0
      %v4005 = vmax.f32 %v3809, 0.0
      %v4006 = vmax.f32 %v3810, 0.0
      %v4007 = vmax.f32 %v3811, 0.0
      %v4008 = vmax.f32 %v3812, 0.0
      %v4009 = vmax.f32 %v3813, 0.0
      %v4010 = vmax.f32 %v3814, 0.0
      %v4011 = vmax.f32 %v3815, 0.0
      %v4012 = vmax.f32 %v3816, 0.0
      %v4013 = vmax.f32 %v3817, 0.0
      %v4014 = vmax.f32 %v3818, 0.0
      %v4015 = vmax.f32 %v3819, 0.0
      %v4016 = vmax.f32 %v3820, 0.0
      %v4017 = vmax.f32 %v3821, 0.0
      %v4018 = vmax.f32 %v3822, 0.0
      %v4019 = vmax.f32 %v3823, 0.0
      %v4020 = vmax.f32 %v3824, 0.0
      %v4021 = vmax.f32 %v3825, 0.0
      %v4022 = vmax.f32 %v3826, 0.0
      %v4023 = vmax.f32 %v3827, 0.0
      %v4024 = vmax.f32 %v3828, 0.0
      %v4025 = vmax.f32 %v3829, 0.0
      %v4026 = vmax.f32 %v3830, 0.0
      %v4027 = vmax.f32 %v3831, 0.0
      %v4028 = vmax.f32 %v3832, 0.0
      %v4029 = vmax.f32 %v3833, 0.0
      %v4030 = vmax.f32 %v3834, 0.0
      %v4031 = vmax.f32 %v3835, 0.0
      %v4032 = vmax.f32 %v3836, 0.0
      %v4033 = vmax.f32 %v3837, 0.0
      %v4034 = vmax.f32 %v3838, 0.0
      %v4035 = vmax.f32 %v3839, 0.0
      %v4036 = vmax.f32 %v3840, 0.0
      %v4037 = vmax.f32 %v3841, 0.0
      %v4038 = vmax.f32 %v3842, 0.0
      %v4039 = vmax.f32 %v3843, 0.0
      %v4040 = vmax.f32 %v3844, 0.0
      %v4041 = vmax.f32 %v3845, 0.0
      %v4042 = vmax.f32 %v3846, 0.0
      %v4043 = vmax.f32 %v3847, 0.0
      %v4044 = vmax.f32 %v3848, 0.0
      %v4045 = vmax.f32 %v3849, 0.0
      %v4046 = vmax.f32 %v3850, 0.0
      %v4047 = vmax.f32 %v3851, 0.0
      %v4048 = vmax.f32 %v3852, 0.0
      %v4049 = vmax.f32 %v3853, 0.0
      %v4050 = vmax.f32 %v3854, 0.0
      %v4051 = vmax.f32 %v3855, 0.0
      %v4052 = vmax.f32 %v3856, 0.0
      %v4053 = vmax.f32 %v3857, 0.0
      %v4054 = vmax.f32 %v3858, 0.0
      %v4055 = vmax.f32 %v3859, 0.0
      %v4056 = vmax.f32 %v3860, 0.0
      %v4057 = vmax.f32 %v3861, 0.0
      %v4058 = vmax.f32 %v3862, 0.0
      %v4059 = vmax.f32 %v3863, 0.0
      %v4060 = vmax.f32 %v3864, 0.0
      %v4061 = vmax.f32 %v3865, 0.0
      %v4062 = vmax.f32 %v3866, 0.0
      %v4063 = vmax.f32 %v3867, 0.0
      %v4064 = vmax.f32 %v3868, 0.0
      %v4065 = vmax.f32 %v3869, 0.0
      %v4066 = vmax.f32 %v3870, 0.0
      %v4067 = vmax.f32 %v3871, 0.0
      %v4068 = vmax.f32 %v3872, 0.0
      %v4069 = vmax.f32 %v3873, 0.0
      %v4070 = vmax.f32 %v3874, 0.0
      %v4071 = vmax.f32 %v3875, 0.0
      %v4072 = vmax.f32 %v3876, 0.0
      %v4073 = vmax.f32 %v3877, 0.0
      %v4074 = vmax.f32 %v3878, 0.0
      %v4075 = vmax.f32 %v3879, 0.0
      %v4076 = vmax.f32 %v3880, 0.0
      %v4077 = vmax.f32 %v3881, 0.0
      %v4078 = vmax.f32 %v3882, 0.0
      %v4079 = vmax.f32 %v3883, 0.0
      %v4080 = vmax.f32 %v3884, 0.0
      %v4081 = vmax.f32 %v3885, 0.0
      %v4082 = vmax.f32 %v3886, 0.0
      %v4083 = vmax.f32 %v3887, 0.0
      %v4084 = vmax.f32 %v3888, 0.0
      %v4085 = vmax.f32 %v3889, 0.0
      %v4086 = vmax.f32 %v3890, 0.0
      %v4087 = vmax.f32 %v3891, 0.0
      %v4088 = vmax.f32 %v3892, 0.0
      %v4089 = vmax.f32 %v3893, 0.0
      %v4090 = vmax.f32 %v3894, 0.0
      %v4091 = vmax.f32 %v3895, 0.0
      %v4092 = vmax.f32 %v3896, 0.0
      %v4093 = vmax.f32 %v3897, 0.0
      %v4094 = vmax.f32 %v3898, 0.0
      %v4095 = vmax.f32 %v3899, 0.0
      %v4096 = vmax.f32 %v3900, 0.0
      %v4097 = vmax.f32 %v3901, 0.0
      %v4098 = vmax.f32 %v3902, 0.0
      %v4099 = vmax.f32 %v3903, 0.0
      %v4100 = vmax.f32 %v3904, 0.0
      %v4101 = vmax.f32 %v3905, 0.0
      %v4102 = vmax.f32 %v3906, 0.0
      %v4103 = vmax.f32 %v3907, 0.0
      %v4104 = vmax.f32 %v3908, 0.0
      %v4105 = vmax.f32 %v3909, 0.0
      %v4106 = vmax.f32 %v3910, 0.0
      %v4107 = vmax.f32 %v3911, 0.0
      %v4108 = vmax.f32 %v3912, 0.0
      %v4109 = vmax.f32 %v3913, 0.0
      %v4110 = vmax.f32 %v3914, 0.0
      %v4111 = vmax.f32 %v3915, 0.0
      %v4112 = vmax.f32 %v3916, 0.0
      %v4113 = vmax.f32 %v3917, 0.0
      %v4114 = vmax.f32 %v3918, 0.0
      %v4115 = vmax.f32 %v3919, 0.0
      %v4116 = vmax.f32 %v3920, 0.0
      %v4117 = vmax.f32 %v3921, 0.0
      %v4118 = vmax.f32 %v3922, 0.0
      %v4119 = vmax.f32 %v3923, 0.0
      %v4120 = vmax.f32 %v3924, 0.0
      %v4121 = vmax.f32 %v3925, 0.0
      %v4122 = vmax.f32 %v3926, 0.0
      %v4123 = vmax.f32 %v3927, 0.0
      %v4124 = vmax.f32 %v3928, 0.0
      %v4125 = vmax.f32 %v3929, 0.0
      %v4126 = vmax.f32 %v3930, 0.0
      %v4127 = vmax.f32 %v3931, 0.0
      %v4128 = vmax.f32 %v3932, 0.0
      %v4129 = vmax.f32 %v3933, 0.0
      %v4130 = vmax.f32 %v3934, 0.0
      %vm4327 = vcmask 1046528
      %v4328 = vrot.slane %v3935, 1
      %v4329 = vrot.slane %v3942, 1
      %v4330 = vsel %vm4327, %v4328, %v4329
      %v4331 = vrot.slane %v3936, 1
      %v4332 = vrot.slane %v3943, 1
      %v4333 = vsel %vm4327, %v4331, %v4332
      %v4334 = vrot.slane %v3937, 1
      %v4335 = vrot.slane %v3944, 1
      %v4336 = vsel %vm4327, %v4334, %v4335
      %v4337 = vrot.slane %v3938, 1
      %v4338 = vrot.slane %v3945, 1
      %v4339 = vsel %vm4327, %v4337, %v4338
      %v4340 = vrot.slane %v3939, 1
      %v4341 = vrot.slane %v3946, 1
      %v4342 = vsel %vm4327, %v4340, %v4341
      %v4343 = vrot.slane %v3940, 1
      %v4344 = vrot.slane %v3947, 1
      %v4345 = vsel %vm4327, %v4343, %v4344
      %v4346 = vrot.slane %v3941, 1
      %v4347 = vrot.slane %v3948, 1
      %v4348 = vsel %vm4327, %v4346, %v4347
      %v4349 = vrot.slane %v3949, 1
      %v4350 = vsel %vm4327, %v4329, %v4349
      %v4351 = vrot.slane %v3950, 1
      %v4352 = vsel %vm4327, %v4332, %v4351
      %v4353 = vrot.slane %v3951, 1
      %v4354 = vsel %vm4327, %v4335, %v4353
      %v4355 = vrot.slane %v3952, 1
      %v4356 = vsel %vm4327, %v4338, %v4355
      %v4357 = vrot.slane %v3953, 1
      %v4358 = vsel %vm4327, %v4341, %v4357
      %v4359 = vrot.slane %v3954, 1
      %v4360 = vsel %vm4327, %v4344, %v4359
      %v4361 = vrot.slane %v3955, 1
      %v4362 = vsel %vm4327, %v4347, %v4361
      %v4363 = vrot.slane %v3956, 1
      %v4364 = vsel %vm4327, %v4349, %v4363
      %v4365 = vrot.slane %v3957, 1
      %v4366 = vsel %vm4327, %v4351, %v4365
      %v4367 = vrot.slane %v3958, 1
      %v4368 = vsel %vm4327, %v4353, %v4367
      %v4369 = vrot.slane %v3959, 1
      %v4370 = vsel %vm4327, %v4355, %v4369
      %v4371 = vrot.slane %v3960, 1
      %v4372 = vsel %vm4327, %v4357, %v4371
      %v4373 = vrot.slane %v3961, 1
      %v4374 = vsel %vm4327, %v4359, %v4373
      %v4375 = vrot.slane %v3962, 1
      %v4376 = vsel %vm4327, %v4361, %v4375
      %v4377 = vrot.slane %v3963, 1
      %v4378 = vsel %vm4327, %v4363, %v4377
      %v4379 = vrot.slane %v3964, 1
      %v4380 = vsel %vm4327, %v4365, %v4379
      %v4381 = vrot.slane %v3965, 1
      %v4382 = vsel %vm4327, %v4367, %v4381
      %v4383 = vrot.slane %v3966, 1
      %v4384 = vsel %vm4327, %v4369, %v4383
      %v4385 = vrot.slane %v3967, 1
      %v4386 = vsel %vm4327, %v4371, %v4385
      %v4387 = vrot.slane %v3968, 1
      %v4388 = vsel %vm4327, %v4373, %v4387
      %v4389 = vrot.slane %v3969, 1
      %v4390 = vsel %vm4327, %v4375, %v4389
      %v4391 = vrot.slane %v3970, 1
      %v4392 = vsel %vm4327, %v4377, %v4391
      %v4393 = vrot.slane %v3971, 1
      %v4394 = vsel %vm4327, %v4379, %v4393
      %v4395 = vrot.slane %v3972, 1
      %v4396 = vsel %vm4327, %v4381, %v4395
      %v4397 = vrot.slane %v3973, 1
      %v4398 = vsel %vm4327, %v4383, %v4397
      %v4399 = vrot.slane %v3974, 1
      %v4400 = vsel %vm4327, %v4385, %v4399
      %v4401 = vrot.slane %v3975, 1
      %v4402 = vsel %vm4327, %v4387, %v4401
      %v4403 = vrot.slane %v3976, 1
      %v4404 = vsel %vm4327, %v4389, %v4403
      %v4405 = vrot.slane %v3977, 1
      %v4406 = vsel %vm4327, %v4391, %v4405
      %v4407 = vrot.slane %v3978, 1
      %v4408 = vsel %vm4327, %v4393, %v4407
      %v4409 = vrot.slane %v3979, 1
      %v4410 = vsel %vm4327, %v4395, %v4409
      %v4411 = vrot.slane %v3980, 1
      %v4412 = vsel %vm4327, %v4397, %v4411
      %v4413 = vrot.slane %v3981, 1
      %v4414 = vsel %vm4327, %v4399, %v4413
      %v4415 = vrot.slane %v3982, 1
      %v4416 = vsel %vm4327, %v4401, %v4415
      %v4417 = vrot.slane %v3983, 1
      %v4418 = vsel %vm4327, %v4403, %v4417
      %v4419 = vrot.slane %v3984, 1
      %v4420 = vsel %vm4327, %v4405, %v4419
      %v4421 = vrot.slane %v3985, 1
      %v4422 = vsel %vm4327, %v4407, %v4421
      %v4423 = vrot.slane %v3986, 1
      %v4424 = vsel %vm4327, %v4409, %v4423
      %v4425 = vrot.slane %v3987, 1
      %v4426 = vsel %vm4327, %v4411, %v4425
      %v4427 = vrot.slane %v3988, 1
      %v4428 = vsel %vm4327, %v4413, %v4427
      %v4429 = vrot.slane %v3989, 1
      %v4430 = vsel %vm4327, %v4415, %v4429
      %v4431 = vrot.slane %v3990, 1
      %v4432 = vsel %vm4327, %v4417, %v4431
      %v4433 = vrot.slane %v3991, 1
      %v4434 = vsel %vm4327, %v4419, %v4433
      %v4435 = vrot.slane %v3992, 1
      %v4436 = vsel %vm4327, %v4421, %v4435
      %v4437 = vrot.slane %v3993, 1
      %v4438 = vsel %vm4327, %v4423, %v4437
      %v4439 = vrot.slane %v3994, 1
      %v4440 = vsel %vm4327, %v4425, %v4439
      %v4441 = vrot.slane %v3995, 1
      %v4442 = vsel %vm4327, %v4427, %v4441
      %v4443 = vrot.slane %v3996, 1
      %v4444 = vsel %vm4327, %v4429, %v4443
      %v4445 = vrot.slane %v3997, 1
      %v4446 = vsel %vm4327, %v4431, %v4445
      %v4447 = vrot.slane %v3998, 1
      %v4448 = vsel %vm4327, %v4433, %v4447
      %v4449 = vrot.slane %v3999, 1
      %v4450 = vsel %vm4327, %v4435, %v4449
      %v4451 = vrot.slane %v4000, 1
      %v4452 = vsel %vm4327, %v4437, %v4451
      %v4453 = vrot.slane %v4001, 1
      %v4454 = vsel %vm4327, %v4439, %v4453
      %v4455 = vrot.slane %v4002, 1
      %v4456 = vsel %vm4327, %v4441, %v4455
      %v4457 = vrot.slane %v4003, 1
      %v4458 = vsel %vm4327, %v4443, %v4457
      %v4459 = vrot.slane %v4004, 1
      %v4460 = vsel %vm4327, %v4445, %v4459
      %v4461 = vrot.slane %v4005, 1
      %v4462 = vsel %vm4327, %v4447, %v4461
      %v4463 = vrot.slane %v4006, 1
      %v4464 = vsel %vm4327, %v4449, %v4463
      %v4465 = vrot.slane %v4007, 1
      %v4466 = vsel %vm4327, %v4451, %v4465
      %v4467 = vrot.slane %v4008, 1
      %v4468 = vsel %vm4327, %v4453, %v4467
      %v4469 = vrot.slane %v4009, 1
      %v4470 = vsel %vm4327, %v4455, %v4469
      %v4471 = vrot.slane %v4010, 1
      %v4472 = vsel %vm4327, %v4457, %v4471
      %v4473 = vrot.slane %v4011, 1
      %v4474 = vsel %vm4327, %v4459, %v4473
      %v4475 = vrot.slane %v4012, 1
      %v4476 = vsel %vm4327, %v4461, %v4475
      %v4477 = vrot.slane %v4013, 1
      %v4478 = vsel %vm4327, %v4463, %v4477
      %v4479 = vrot.slane %v4014, 1
      %v4480 = vsel %vm4327, %v4465, %v4479
      %v4481 = vrot.slane %v4015, 1
      %v4482 = vsel %vm4327, %v4467, %v4481
      %v4483 = vrot.slane %v4016, 1
      %v4484 = vsel %vm4327, %v4469, %v4483
      %v4485 = vrot.slane %v4017, 1
      %v4486 = vsel %vm4327, %v4471, %v4485
      %v4487 = vrot.slane %v4018, 1
      %v4488 = vsel %vm4327, %v4473, %v4487
      %v4489 = vrot.slane %v4019, 1
      %v4490 = vsel %vm4327, %v4475, %v4489
      %v4491 = vrot.slane %v4020, 1
      %v4492 = vsel %vm4327, %v4477, %v4491
      %v4493 = vrot.slane %v4021, 1
      %v4494 = vsel %vm4327, %v4479, %v4493
      %v4495 = vrot.slane %v4022, 1
      %v4496 = vsel %vm4327, %v4481, %v4495
      %v4497 = vrot.slane %v4023, 1
      %v4498 = vsel %vm4327, %v4483, %v4497
      %v4499 = vrot.slane %v4024, 1
      %v4500 = vsel %vm4327, %v4485, %v4499
      %v4501 = vrot.slane %v4025, 1
      %v4502 = vsel %vm4327, %v4487, %v4501
      %v4503 = vrot.slane %v4026, 1
      %v4504 = vsel %vm4327, %v4489, %v4503
      %v4505 = vrot.slane %v4027, 1
      %v4506 = vsel %vm4327, %v4491, %v4505
      %v4507 = vrot.slane %v4028, 1
      %v4508 = vsel %vm4327, %v4493, %v4507
      %v4509 = vrot.slane %v4029, 1
      %v4510 = vsel %vm4327, %v4495, %v4509
      %v4511 = vrot.slane %v4030, 1
      %v4512 = vsel %vm4327, %v4497, %v4511
      %v4513 = vrot.slane %v4031, 1
      %v4514 = vsel %vm4327, %v4499, %v4513
      %v4515 = vrot.slane %v4032, 1
      %v4516 = vsel %vm4327, %v4501, %v4515
      %v4517 = vrot.slane %v4033, 1
      %v4518 = vsel %vm4327, %v4503, %v4517
      %v4519 = vrot.slane %v4034, 1
      %v4520 = vsel %vm4327, %v4505, %v4519
      %v4521 = vrot.slane %v4035, 1
      %v4522 = vsel %vm4327, %v4507, %v4521
      %v4523 = vrot.slane %v4036, 1
      %v4524 = vsel %vm4327, %v4509, %v4523
      %v4525 = vrot.slane %v4037, 1
      %v4526 = vsel %vm4327, %v4511, %v4525
      %v4527 = vrot.slane %v4038, 1
      %v4528 = vsel %vm4327, %v4513, %v4527
      %v4529 = vrot.slane %v4039, 1
      %v4530 = vsel %vm4327, %v4515, %v4529
      %v4531 = vrot.slane %v4040, 1
      %v4532 = vsel %vm4327, %v4517, %v4531
      %v4533 = vrot.slane %v4041, 1
      %v4534 = vsel %vm4327, %v4519, %v4533
      %v4535 = vrot.slane %v4042, 1
      %v4536 = vsel %vm4327, %v4521, %v4535
      %v4537 = vrot.slane %v4043, 1
      %v4538 = vsel %vm4327, %v4523, %v4537
      %v4539 = vrot.slane %v4044, 1
      %v4540 = vsel %vm4327, %v4525, %v4539
      %v4541 = vrot.slane %v4045, 1
      %v4542 = vsel %vm4327, %v4527, %v4541
      %v4543 = vrot.slane %v4046, 1
      %v4544 = vsel %vm4327, %v4529, %v4543
      %v4545 = vrot.slane %v4047, 1
      %v4546 = vsel %vm4327, %v4531, %v4545
      %v4547 = vrot.slane %v4048, 1
      %v4548 = vsel %vm4327, %v4533, %v4547
      %v4549 = vrot.slane %v4049, 1
      %v4550 = vsel %vm4327, %v4535, %v4549
      %v4551 = vrot.slane %v4050, 1
      %v4552 = vsel %vm4327, %v4537, %v4551
      %v4553 = vrot.slane %v4051, 1
      %v4554 = vsel %vm4327, %v4539, %v4553
      %v4555 = vrot.slane %v4052, 1
      %v4556 = vsel %vm4327, %v4541, %v4555
      %v4557 = vrot.slane %v4053, 1
      %v4558 = vsel %vm4327, %v4543, %v4557
      %v4559 = vrot.slane %v4054, 1
      %v4560 = vsel %vm4327, %v4545, %v4559
      %v4561 = vrot.slane %v4055, 1
      %v4562 = vsel %vm4327, %v4547, %v4561
      %v4563 = vrot.slane %v4056, 1
      %v4564 = vsel %vm4327, %v4549, %v4563
      %v4565 = vrot.slane %v4057, 1
      %v4566 = vsel %vm4327, %v4551, %v4565
      %v4567 = vrot.slane %v4058, 1
      %v4568 = vsel %vm4327, %v4553, %v4567
      %v4569 = vrot.slane %v4059, 1
      %v4570 = vsel %vm4327, %v4555, %v4569
      %v4571 = vrot.slane %v4060, 1
      %v4572 = vsel %vm4327, %v4557, %v4571
      %v4573 = vrot.slane %v4061, 1
      %v4574 = vsel %vm4327, %v4559, %v4573
      %v4575 = vrot.slane %v4062, 1
      %v4576 = vsel %vm4327, %v4561, %v4575
      %v4577 = vrot.slane %v4063, 1
      %v4578 = vsel %vm4327, %v4563, %v4577
      %v4579 = vrot.slane %v4064, 1
      %v4580 = vsel %vm4327, %v4565, %v4579
      %v4581 = vrot.slane %v4065, 1
      %v4582 = vsel %vm4327, %v4567, %v4581
      %v4583 = vrot.slane %v4066, 1
      %v4584 = vsel %vm4327, %v4569, %v4583
      %v4585 = vrot.slane %v4067, 1
      %v4586 = vsel %vm4327, %v4571, %v4585
      %v4587 = vrot.slane %v4068, 1
      %v4588 = vsel %vm4327, %v4573, %v4587
      %v4589 = vrot.slane %v4069, 1
      %v4590 = vsel %vm4327, %v4575, %v4589
      %v4591 = vrot.slane %v4070, 1
      %v4592 = vsel %vm4327, %v4577, %v4591
      %v4593 = vrot.slane %v4071, 1
      %v4594 = vsel %vm4327, %v4579, %v4593
      %v4595 = vrot.slane %v4072, 1
      %v4596 = vsel %vm4327, %v4581, %v4595
      %v4597 = vrot.slane %v4073, 1
      %v4598 = vsel %vm4327, %v4583, %v4597
      %v4599 = vrot.slane %v4074, 1
      %v4600 = vsel %vm4327, %v4585, %v4599
      %v4601 = vrot.slane %v4075, 1
      %v4602 = vsel %vm4327, %v4587, %v4601
      %v4603 = vrot.slane %v4076, 1
      %v4604 = vsel %vm4327, %v4589, %v4603
      %v4605 = vrot.slane %v4077, 1
      %v4606 = vsel %vm4327, %v4591, %v4605
      %v4607 = vrot.slane %v4078, 1
      %v4608 = vsel %vm4327, %v4593, %v4607
      %v4609 = vrot.slane %v4079, 1
      %v4610 = vsel %vm4327, %v4595, %v4609
      %v4611 = vrot.slane %v4080, 1
      %v4612 = vsel %vm4327, %v4597, %v4611
      %v4613 = vrot.slane %v4081, 1
      %v4614 = vsel %vm4327, %v4599, %v4613
      %v4615 = vrot.slane %v4082, 1
      %v4616 = vsel %vm4327, %v4601, %v4615
      %v4617 = vrot.slane %v4083, 1
      %v4618 = vsel %vm4327, %v4603, %v4617
      %v4619 = vrot.slane %v4084, 1
      %v4620 = vsel %vm4327, %v4605, %v4619
      %v4621 = vrot.slane %v4085, 1
      %v4622 = vsel %vm4327, %v4607, %v4621
      %v4623 = vrot.slane %v4086, 1
      %v4624 = vsel %vm4327, %v4609, %v4623
      %v4625 = vrot.slane %v4087, 1
      %v4626 = vsel %vm4327, %v4611, %v4625
      %v4627 = vrot.slane %v4088, 1
      %v4628 = vsel %vm4327, %v4613, %v4627
      %v4629 = vrot.slane %v4089, 1
      %v4630 = vsel %vm4327, %v4615, %v4629
      %v4631 = vrot.slane %v4090, 1
      %v4632 = vsel %vm4327, %v4617, %v4631
      %v4633 = vrot.slane %v4091, 1
      %v4634 = vsel %vm4327, %v4619, %v4633
      %v4635 = vrot.slane %v4092, 1
      %v4636 = vsel %vm4327, %v4621, %v4635
      %v4637 = vrot.slane %v4093, 1
      %v4638 = vsel %vm4327, %v4623, %v4637
      %v4639 = vrot.slane %v4094, 1
      %v4640 = vsel %vm4327, %v4625, %v4639
      %v4641 = vrot.slane %v4095, 1
      %v4642 = vsel %vm4327, %v4627, %v4641
      %v4643 = vrot.slane %v4096, 1
      %v4644 = vsel %vm4327, %v4629, %v4643
      %v4645 = vrot.slane %v4097, 1
      %v4646 = vsel %vm4327, %v4631, %v4645
      %v4647 = vrot.slane %v4098, 1
      %v4648 = vsel %vm4327, %v4633, %v4647
      %v4649 = vrot.slane %v4099, 1
      %v4650 = vsel %vm4327, %v4635, %v4649
      %v4651 = vrot.slane %v4100, 1
      %v4652 = vsel %vm4327, %v4637, %v4651
      %v4653 = vrot.slane %v4101, 1
      %v4654 = vsel %vm4327, %v4639, %v4653
      %v4655 = vrot.slane %v4102, 1
      %v4656 = vsel %vm4327, %v4641, %v4655
      %v4657 = vrot.slane %v4103, 1
      %v4658 = vsel %vm4327, %v4643, %v4657
      %v4659 = vrot.slane %v4104, 1
      %v4660 = vsel %vm4327, %v4645, %v4659
      %v4661 = vrot.slane %v4105, 1
      %v4662 = vsel %vm4327, %v4647, %v4661
      %v4663 = vrot.slane %v4106, 1
      %v4664 = vsel %vm4327, %v4649, %v4663
      %v4665 = vrot.slane %v4107, 1
      %v4666 = vsel %vm4327, %v4651, %v4665
      %v4667 = vrot.slane %v4108, 1
      %v4668 = vsel %vm4327, %v4653, %v4667
      %v4669 = vrot.slane %v4109, 1
      %v4670 = vsel %vm4327, %v4655, %v4669
      %v4671 = vrot.slane %v4110, 1
      %v4672 = vsel %vm4327, %v4657, %v4671
      %v4673 = vrot.slane %v4111, 1
      %v4674 = vsel %vm4327, %v4659, %v4673
      %v4675 = vrot.slane %v4112, 1
      %v4676 = vsel %vm4327, %v4661, %v4675
      %v4677 = vrot.slane %v4113, 1
      %v4678 = vsel %vm4327, %v4663, %v4677
      %v4679 = vrot.slane %v4114, 1
      %v4680 = vsel %vm4327, %v4665, %v4679
      %v4681 = vrot.slane %v4115, 1
      %v4682 = vsel %vm4327, %v4667, %v4681
      %v4683 = vrot.slane %v4116, 1
      %v4684 = vsel %vm4327, %v4669, %v4683
      %v4685 = vrot.slane %v4117, 1
      %v4686 = vsel %vm4327, %v4671, %v4685
      %v4687 = vrot.slane %v4118, 1
      %v4688 = vsel %vm4327, %v4673, %v4687
      %v4689 = vrot.slane %v4119, 1
      %v4690 = vsel %vm4327, %v4675, %v4689
      %v4691 = vrot.slane %v4120, 1
      %v4692 = vsel %vm4327, %v4677, %v4691
      %v4693 = vrot.slane %v4121, 1
      %v4694 = vsel %vm4327, %v4679, %v4693
      %v4695 = vrot.slane %v4122, 1
      %v4696 = vsel %vm4327, %v4681, %v4695
      %v4697 = vrot.slane %v4123, 1
      %v4698 = vsel %vm4327, %v4683, %v4697
      %v4699 = vrot.slane %v4124, 1
      %v4700 = vsel %vm4327, %v4685, %v4699
      %v4701 = vrot.slane %v4125, 1
      %v4702 = vsel %vm4327, %v4687, %v4701
      %v4703 = vrot.slane %v4126, 1
      %v4704 = vsel %vm4327, %v4689, %v4703
      %v4705 = vrot.slane %v4127, 1
      %v4706 = vsel %vm4327, %v4691, %v4705
      %v4707 = vrot.slane %v4128, 1
      %v4708 = vsel %vm4327, %v4693, %v4707
      %v4709 = vrot.slane %v4129, 1
      %v4710 = vsel %vm4327, %v4695, %v4709
      %v4711 = vrot.slane %v4130, 1
      %v4712 = vsel %vm4327, %v4697, %v4711
      %v4909 = vmax.f32 %v3935, %v4330
      %v4910 = vmax.f32 %v3936, %v4333
      %v4911 = vmax.f32 %v3937, %v4336
      %v4912 = vmax.f32 %v3938, %v4339
      %v4913 = vmax.f32 %v3939, %v4342
      %v4914 = vmax.f32 %v3940, %v4345
      %v4915 = vmax.f32 %v3941, %v4348
      %v4916 = vmax.f32 %v3942, %v4350
      %v4917 = vmax.f32 %v3943, %v4352
      %v4918 = vmax.f32 %v3944, %v4354
      %v4919 = vmax.f32 %v3945, %v4356
      %v4920 = vmax.f32 %v3946, %v4358
      %v4921 = vmax.f32 %v3947, %v4360
      %v4922 = vmax.f32 %v3948, %v4362
      %v4923 = vmax.f32 %v3949, %v4364
      %v4924 = vmax.f32 %v3950, %v4366
      %v4925 = vmax.f32 %v3951, %v4368
      %v4926 = vmax.f32 %v3952, %v4370
      %v4927 = vmax.f32 %v3953, %v4372
      %v4928 = vmax.f32 %v3954, %v4374
      %v4929 = vmax.f32 %v3955, %v4376
      %v4930 = vmax.f32 %v3956, %v4378
      %v4931 = vmax.f32 %v3957, %v4380
      %v4932 = vmax.f32 %v3958, %v4382
      %v4933 = vmax.f32 %v3959, %v4384
      %v4934 = vmax.f32 %v3960, %v4386
      %v4935 = vmax.f32 %v3961, %v4388
      %v4936 = vmax.f32 %v3962, %v4390
      %v4937 = vmax.f32 %v3963, %v4392
      %v4938 = vmax.f32 %v3964, %v4394
      %v4939 = vmax.f32 %v3965, %v4396
      %v4940 = vmax.f32 %v3966, %v4398
      %v4941 = vmax.f32 %v3967, %v4400
      %v4942 = vmax.f32 %v3968, %v4402
      %v4943 = vmax.f32 %v3969, %v4404
      %v4944 = vmax.f32 %v3970, %v4406
      %v4945 = vmax.f32 %v3971, %v4408
      %v4946 = vmax.f32 %v3972, %v4410
      %v4947 = vmax.f32 %v3973, %v4412
      %v4948 = vmax.f32 %v3974, %v4414
      %v4949 = vmax.f32 %v3975, %v4416
      %v4950 = vmax.f32 %v3976, %v4418
      %v4951 = vmax.f32 %v3977, %v4420
      %v4952 = vmax.f32 %v3978, %v4422
      %v4953 = vmax.f32 %v3979, %v4424
      %v4954 = vmax.f32 %v3980, %v4426
      %v4955 = vmax.f32 %v3981, %v4428
      %v4956 = vmax.f32 %v3982, %v4430
      %v4957 = vmax.f32 %v3983, %v4432
      %v4958 = vmax.f32 %v3984, %v4434
      %v4959 = vmax.f32 %v3985, %v4436
      %v4960 = vmax.f32 %v3986, %v4438
      %v4961 = vmax.f32 %v3987, %v4440
      %v4962 = vmax.f32 %v3988, %v4442
      %v4963 = vmax.f32 %v3989, %v4444
      %v4964 = vmax.f32 %v3990, %v4446
      %v4965 = vmax.f32 %v3991, %v4448
      %v4966 = vmax.f32 %v3992, %v4450
      %v4967 = vmax.f32 %v3993, %v4452
      %v4968 = vmax.f32 %v3994, %v4454
      %v4969 = vmax.f32 %v3995, %v4456
      %v4970 = vmax.f32 %v3996, %v4458
      %v4971 = vmax.f32 %v3997, %v4460
      %v4972 = vmax.f32 %v3998, %v4462
      %v4973 = vmax.f32 %v3999, %v4464
      %v4974 = vmax.f32 %v4000, %v4466
      %v4975 = vmax.f32 %v4001, %v4468
      %v4976 = vmax.f32 %v4002, %v4470
      %v4977 = vmax.f32 %v4003, %v4472
      %v4978 = vmax.f32 %v4004, %v4474
      %v4979 = vmax.f32 %v4005, %v4476
      %v4980 = vmax.f32 %v4006, %v4478
      %v4981 = vmax.f32 %v4007, %v4480
      %v4982 = vmax.f32 %v4008, %v4482
      %v4983 = vmax.f32 %v4009, %v4484
      %v4984 = vmax.f32 %v4010, %v4486
      %v4985 = vmax.f32 %v4011, %v4488
      %v4986 = vmax.f32 %v4012, %v4490
      %v4987 = vmax.f32 %v4013, %v4492
      %v4988 = vmax.f32 %v4014, %v4494
      %v4989 = vmax.f32 %v4015, %v4496
      %v4990 = vmax.f32 %v4016, %v4498
      %v4991 = vmax.f32 %v4017, %v4500
      %v4992 = vmax.f32 %v4018, %v4502
      %v4993 = vmax.f32 %v4019, %v4504
      %v4994 = vmax.f32 %v4020, %v4506
      %v4995 = vmax.f32 %v4021, %v4508
      %v4996 = vmax.f32 %v4022, %v4510
      %v4997 = vmax.f32 %v4023, %v4512
      %v4998 = vmax.f32 %v4024, %v4514
      %v4999 = vmax.f32 %v4025, %v4516
      %v5000 = vmax.f32 %v4026, %v4518
      %v5001 = vmax.f32 %v4027, %v4520
      %v5002 = vmax.f32 %v4028, %v4522
      %v5003 = vmax.f32 %v4029, %v4524
      %v5004 = vmax.f32 %v4030, %v4526
      %v5005 = vmax.f32 %v4031, %v4528
      %v5006 = vmax.f32 %v4032, %v4530
      %v5007 = vmax.f32 %v4033, %v4532
      %v5008 = vmax.f32 %v4034, %v4534
      %v5009 = vmax.f32 %v4035, %v4536
      %v5010 = vmax.f32 %v4036, %v4538
      %v5011 = vmax.f32 %v4037, %v4540
      %v5012 = vmax.f32 %v4038, %v4542
      %v5013 = vmax.f32 %v4039, %v4544
      %v5014 = vmax.f32 %v4040, %v4546
      %v5015 = vmax.f32 %v4041, %v4548
      %v5016 = vmax.f32 %v4042, %v4550
      %v5017 = vmax.f32 %v4043, %v4552
      %v5018 = vmax.f32 %v4044, %v4554
      %v5019 = vmax.f32 %v4045, %v4556
      %v5020 = vmax.f32 %v4046, %v4558
      %v5021 = vmax.f32 %v4047, %v4560
      %v5022 = vmax.f32 %v4048, %v4562
      %v5023 = vmax.f32 %v4049, %v4564
      %v5024 = vmax.f32 %v4050, %v4566
      %v5025 = vmax.f32 %v4051, %v4568
      %v5026 = vmax.f32 %v4052, %v4570
      %v5027 = vmax.f32 %v4053, %v4572
      %v5028 = vmax.f32 %v4054, %v4574
      %v5029 = vmax.f32 %v4055, %v4576
      %v5030 = vmax.f32 %v4056, %v4578
      %v5031 = vmax.f32 %v4057, %v4580
      %v5032 = vmax.f32 %v4058, %v4582
      %v5033 = vmax.f32 %v4059, %v4584
      %v5034 = vmax.f32 %v4060, %v4586
      %v5035 = vmax.f32 %v4061, %v4588
      %v5036 = vmax.f32 %v4062, %v4590
      %v5037 = vmax.f32 %v4063, %v4592
      %v5038 = vmax.f32 %v4064, %v4594
      %v5039 = vmax.f32 %v4065, %v4596
      %v5040 = vmax.f32 %v4066, %v4598
      %v5041 = vmax.f32 %v4067, %v4600
      %v5042 = vmax.f32 %v4068, %v4602
      %v5043 = vmax.f32 %v4069, %v4604
      %v5044 = vmax.f32 %v4070, %v4606
      %v5045 = vmax.f32 %v4071, %v4608
      %v5046 = vmax.f32 %v4072, %v4610
      %v5047 = vmax.f32 %v4073, %v4612
      %v5048 = vmax.f32 %v4074, %v4614
      %v5049 = vmax.f32 %v4075, %v4616
      %v5050 = vmax.f32 %v4076, %v4618
      %v5051 = vmax.f32 %v4077, %v4620
      %v5052 = vmax.f32 %v4078, %v4622
      %v5053 = vmax.f32 %v4079, %v4624
      %v5054 = vmax.f32 %v4080, %v4626
      %v5055 = vmax.f32 %v4081, %v4628
      %v5056 = vmax.f32 %v4082, %v4630
      %v5057 = vmax.f32 %v4083, %v4632
      %v5058 = vmax.f32 %v4084, %v4634
      %v5059 = vmax.f32 %v4085, %v4636
      %v5060 = vmax.f32 %v4086, %v4638
      %v5061 = vmax.f32 %v4087, %v4640
      %v5062 = vmax.f32 %v4088, %v4642
      %v5063 = vmax.f32 %v4089, %v4644
      %v5064 = vmax.f32 %v4090, %v4646
      %v5065 = vmax.f32 %v4091, %v4648
      %v5066 = vmax.f32 %v4092, %v4650
      %v5067 = vmax.f32 %v4093, %v4652
      %v5068 = vmax.f32 %v4094, %v4654
      %v5069 = vmax.f32 %v4095, %v4656
      %v5070 = vmax.f32 %v4096, %v4658
      %v5071 = vmax.f32 %v4097, %v4660
      %v5072 = vmax.f32 %v4098, %v4662
      %v5073 = vmax.f32 %v4099, %v4664
      %v5074 = vmax.f32 %v4100, %v4666
      %v5075 = vmax.f32 %v4101, %v4668
      %v5076 = vmax.f32 %v4102, %v4670
      %v5077 = vmax.f32 %v4103, %v4672
      %v5078 = vmax.f32 %v4104, %v4674
      %v5079 = vmax.f32 %v4105, %v4676
      %v5080 = vmax.f32 %v4106, %v4678
      %v5081 = vmax.f32 %v4107, %v4680
      %v5082 = vmax.f32 %v4108, %v4682
      %v5083 = vmax.f32 %v4109, %v4684
      %v5084 = vmax.f32 %v4110, %v4686
      %v5085 = vmax.f32 %v4111, %v4688
      %v5086 = vmax.f32 %v4112, %v4690
      %v5087 = vmax.f32 %v4113, %v4692
      %v5088 = vmax.f32 %v4114, %v4694
      %v5089 = vmax.f32 %v4115, %v4696
      %v5090 = vmax.f32 %v4116, %v4698
      %v5091 = vmax.f32 %v4117, %v4700
      %v5092 = vmax.f32 %v4118, %v4702
      %v5093 = vmax.f32 %v4119, %v4704
      %v5094 = vmax.f32 %v4120, %v4706
      %v5095 = vmax.f32 %v4121, %v4708
      %v5096 = vmax.f32 %v4122, %v4710
      %v5097 = vmax.f32 %v4123, %v4712
      %v5098 = vmax.f32 %v4124, %v4699
      %v5099 = vmax.f32 %v4125, %v4701
      %v5100 = vmax.f32 %v4126, %v4703
      %v5101 = vmax.f32 %v4127, %v4705
      %v5102 = vmax.f32 %v4128, %v4707
      %v5103 = vmax.f32 %v4129, %v4709
      %v5104 = vmax.f32 %v4130, %v4711
      %v5105 = vld [vmem:[%s3] sm:$0xff]
      %v5106 = vld [vmem:[%s3 + $0x8] sm:$0xff]
      %v5107 = vld [vmem:[%s3 + $0x10] sm:$0xff]
      %v5108 = vld [vmem:[%s3 + $0x18] sm:$0xff]
      %v5109 = vld [vmem:[%s3 + $0x20] sm:$0xff]
      %v5110 = vld [vmem:[%s3 + $0x28] sm:$0xff]
      %v5111 = vld [vmem:[%s3 + $0x30] sm:$0xff]
      %v5112 = vld [vmem:[%s3 + $0x38] sm:$0xff]
      %v5113 = vld [vmem:[%s3 + $0x40] sm:$0xff]
      %v5114 = vld [vmem:[%s3 + $0x48] sm:$0xff]
      %v5115 = vld [vmem:[%s3 + $0x50] sm:$0xff]
      %v5116 = vld [vmem:[%s3 + $0x58] sm:$0xff]
      %v5117 = vld [vmem:[%s3 + $0x60] sm:$0xff]
      %v5118 = vld [vmem:[%s3 + $0x68] sm:$0xff]
      %v5119 = vld [vmem:[%s3 + $0x70] sm:$0xff]
      %v5120 = vld [vmem:[%s3 + $0x78] sm:$0xff]
      %v5121 = vld [vmem:[%s3 + $0x80] sm:$0xff]
      %v5122 = vld [vmem:[%s3 + $0x88] sm:$0xff]
      %v5123 = vld [vmem:[%s3 + $0x90] sm:$0xff]
      %v5124 = vld [vmem:[%s3 + $0x98] sm:$0xff]
      %v5125 = vld [vmem:[%s3 + $0xa0] sm:$0xff]
      %v5126 = vld [vmem:[%s3 + $0xa8] sm:$0xff]
      %v5127 = vld [vmem:[%s3 + $0xb0] sm:$0xff]
      %v5128 = vld [vmem:[%s3 + $0xb8] sm:$0xff]
      %v5129 = vld [vmem:[%s3 + $0xc0] sm:$0xff]
      %v5130 = vld [vmem:[%s3 + $0xc8] sm:$0xff]
      %vm5131 = vcmask 760832
      %v5133 = vsel %vm5131, %v5106, 0
      %v5136 = vsel %vm5131, %v5108, 0
      %v5139 = vsel %vm5131, %v5110, 0
      %v5142 = vsel %vm5131, %v5112, 0
      %v5145 = vsel %vm5131, %v5114, 0
      %v5148 = vsel %vm5131, %v5116, 0
      %v5151 = vsel %vm5131, %v5118, 0
      %v5154 = vsel %vm5131, %v5120, 0
      %v5157 = vsel %vm5131, %v5122, 0
      %v5160 = vsel %vm5131, %v5124, 0
      %v5163 = vsel %vm5131, %v5126, 0
      %v5166 = vsel %vm5131, %v5128, 0
      %v5169 = vsel %vm5131, %v5130, 0
      %vm5171 = vcmask 1044480
      %v5173 = vsel %vm5171, %v5098, 0
      %v5176 = vsel %vm5171, %v5099, 0
      %v5179 = vsel %vm5171, %v5100, 0
      %v5182 = vsel %vm5171, %v5101, 0
      %v5185 = vsel %vm5171, %v5102, 0
      %v5188 = vsel %vm5171, %v5103, 0
      %v5191 = vsel %vm5171, %v5104, 0
      %5193 = vmatprep.subr.mxu0 %v4910
      %5194 = vmatpush1.msra.mxu0 %v4909
      %5195 = vmatprep.subr.mxu0 %v4917
      %5196 = vmatpush1.msra.mxu0 %v4916
      %5197 = vmatprep.subr.mxu0 %v4924
      %5198 = vmatpush1.msra.mxu0 %v4923
      %5199 = vmatprep.subr.mxu0 %v4931
      %5200 = vmatpush1.msra.mxu0 %v4930
      %5201 = vmatprep.subr.mxu0 %v4938
      %5202 = vmatpush1.msra.mxu0 %v4937
      %5203 = vmatprep.subr.mxu0 %v4945
      %5204 = vmatpush1.msra.mxu0 %v4944
      %5205 = vmatprep.subr.mxu0 %v4952
      %5206 = vmatpush1.msra.mxu0 %v4951
      %5207 = vmatprep.subr.mxu0 %v4959
      %5208 = vmatpush1.msra.mxu0 %v4958
      %5209 = vmatprep.subr.mxu0 %v4966
      %5210 = vmatpush1.msra.mxu0 %v4965
      %5211 = vmatprep.subr.mxu0 %v4973
      %5212 = vmatpush1.msra.mxu0 %v4972
      %5213 = vmatprep.subr.mxu0 %v4980
      %5214 = vmatpush1.msra.mxu0 %v4979
      %5215 = vmatprep.subr.mxu0 %v4987
      %5216 = vmatpush1.msra.mxu0 %v4986
      %5217 = vmatprep.subr.mxu0 %v4994
      %5218 = vmatpush1.msra.mxu0 %v4993
      %5219 = vmatprep.subr.mxu0 %v5001
      %5220 = vmatpush1.msra.mxu0 %v5000
      %5221 = vmatprep.subr.mxu0 %v5008
      %5222 = vmatpush1.msra.mxu0 %v5007
      %5223 = vmatprep.subr.mxu0 %v5015
      %5224 = vmatpush1.msra.mxu0 %v5014
      %5225 = vmatprep.subr.mxu0 %v5022
      %5226 = vmatpush1.msra.mxu0 %v5021
      %5227 = vmatprep.subr.mxu0 %v5029
      %5228 = vmatpush1.msra.mxu0 %v5028
      %5229 = vmatprep.subr.mxu0 %v5036
      %5230 = vmatpush1.msra.mxu0 %v5035
      %5231 = vmatprep.subr.mxu0 %v5043
      %5232 = vmatpush1.msra.mxu0 %v5042
      %5233 = vmatprep.subr.mxu0 %v5050
      %5234 = vmatpush1.msra.mxu0 %v5049
      %5235 = vmatprep.subr.mxu0 %v5057
      %5236 = vmatpush1.msra.mxu0 %v5056
      %5237 = vmatprep.subr.mxu0 %v5064
      %5238 = vmatpush1.msra.mxu0 %v5063
      %5239 = vmatprep.subr.mxu0 %v5071
      %5240 = vmatpush1.msra.mxu0 %v5070
      %5241 = vmatprep.subr.mxu0 %v5078
      %5242 = vmatpush1.msra.mxu0 %v5077
      %5243 = vmatprep.subr.mxu0 %v5085
      %5244 = vmatpush1.msra.mxu0 %v5084
      %5245 = vmatprep.subr.mxu0 %v5092
      %5246 = vmatpush1.msra.mxu0 %v5091
      %5247 = vmatprep.subr.mxu0 %v5176
      %5248 = vmatpush1.msra.mxu0 %v5173
      %5249 = vmatprep.subr.mxu0 0.0
      %5250 = vmatpush1.msra.mxu0 0.0
      %5251 = vmatprep.subr.mxu0 0.0
      %5252 = vmatpush1.msra.mxu0 0.0
      %5253 = vmatprep.subr.mxu0 0.0
      %5254 = vmatpush1.msra.mxu0 0.0
      %5255 = vmatprep.subr.mxu0 0.0
      %5256 = vmatpush1.msra.mxu0 0.0
      %5257 = vmatprep.mubr.f32.mxu0 %v5133
      %5258 = vmatmul.mubr.f32.gmra.mrb[0].mxu0 %v5105
      %v5259 = vpop.f32.mrb[0].mxu0
      %v5260 = vadd.f32 0.0, %v5259
      %v5261 = vpop.f32.mrb[0].mxu0
      %v5262 = vadd.f32 0.0, %v5261
      %5263 = vmatprep.mubr.f32.mxu0 %v5136
      %5264 = vmatmul.mubr.f32.gmra.mrb[0].mxu0 %v5107
      %v5265 = vpop.f32.mrb[0].mxu0
      %v5266 = vadd.f32 0.0, %v5265
      %v5267 = vpop.f32.mrb[0].mxu0
      %v5268 = vadd.f32 0.0, %v5267
      %5269 = vmatprep.mubr.f32.mxu0 %v5139
      %5270 = vmatmul.mubr.f32.gmra.mrb[0].mxu0 %v5109
      %v5271 = vpop.f32.mrb[0].mxu0
      %v5272 = vadd.f32 0.0, %v5271
      %v5273 = vpop.f32.mrb[0].mxu0
      %v5274 = vadd.f32 0.0, %v5273
      %5275 = vmatprep.mubr.f32.mxu0 %v5142
      %5276 = vmatmul.mubr.f32.gmra.mrb[0].mxu0 %v5111
      %v5277 = vpop.f32.mrb[0].mxu0
      %v5278 = vadd.f32 0.0, %v5277
      %v5279 = vpop.f32.mrb[0].mxu0
      %v5280 = vadd.f32 0.0, %v5279
      %5281 = vmatprep.mubr.f32.mxu0 %v5145
      %5282 = vmatmul.mubr.f32.gmra.mrb[0].mxu0 %v5113
      %v5283 = vpop.f32.mrb[0].mxu0
      %v5284 = vadd.f32 0.0, %v5283
      %v5285 = vpop.f32.mrb[0].mxu0
      %v5286 = vadd.f32 0.0, %v5285
      %5287 = vmatprep.mubr.f32.mxu0 %v5148
      %5288 = vmatmul.mubr.f32.gmra.mrb[0].mxu0 %v5115
      %v5289 = vpop.f32.mrb[0].mxu0
      %v5290 = vadd.f32 0.0, %v5289
      %v5291 = vpop.f32.mrb[0].mxu0
      %v5292 = vadd.f32 0.0, %v5291
      %5293 = vmatprep.mubr.f32.mxu0 %v5151
      %5294 = vmatmul.mubr.f32.gmra.mrb[0].mxu0 %v5117
      %v5295 = vpop.f32.mrb[0].mxu0
      %v5296 = vadd.f32 0.0, %v5295
      %v5297 = vpop.f32.mrb[0].mxu0
      %v5298 = vadd.f32 0.0, %v5297
      %5299 = vmatprep.mubr.f32.mxu0 %v5154
      %5300 = vmatmul.mubr.f32.gmra.mrb[0].mxu0 %v5119
      %v5301 = vpop.f32.mrb[0].mxu0
      %v5302 = vadd.f32 0.0, %v5301
      %v5303 = vpop.f32.mrb[0].mxu0
      %v5304 = vadd.f32 0.0, %v5303
      %5305 = vmatprep.mubr.f32.mxu0 %v5157
      %5306 = vmatmul.mubr.f32.gmra.mrb[0].mxu0 %v5121
      %v5307 = vpop.f32.mrb[0].mxu0
      %v5308 = vadd.f32 0.0, %v5307
      %v5309 = vpop.f32.mrb[0].mxu0
      %v5310 = vadd.f32 0.0, %v5309
      %5311 = vmatprep.mubr.f32.mxu0 %v5160
      %5312 = vmatmul.mubr.f32.gmra.mrb[0].mxu0 %v5123
      %v5313 = vpop.f32.mrb[0].mxu0
      %v5314 = vadd.f32 0.0, %v5313
      %v5315 = vpop.f32.mrb[0].mxu0
      %v5316 = vadd.f32 0.0, %v5315
      %5317 = vmatprep.mubr.f32.mxu0 %v5163
      %5318 = vmatmul.mubr.f32.gmra.mrb[0].mxu0 %v5125
      %v5319 = vpop.f32.mrb[0].mxu0
      %v5320 = vadd.f32 0.0, %v5319
      %v5321 = vpop.f32.mrb[0].mxu0
      %v5322 = vadd.f32 0.0, %v5321
      %5323 = vmatprep.mubr.f32.mxu0 %v5166
      %5324 = vmatmul.mubr.f32.gmra.mrb[0].mxu0 %v5127
      %v5325 = vpop.f32.mrb[0].mxu0
      %v5326 = vadd.f32 0.0, %v5325
      %v5327 = vpop.f32.mrb[0].mxu0
      %v5328 = vadd.f32 0.0, %v5327
      %5329 = vmatprep.mubr.f32.mxu0 %v5169
      %5330 = vmatmul.mubr.f32.gmra.mrb[0].mxu0 %v5129
      %v5331 = vpop.f32.mrb[0].mxu0
      %v5332 = vadd.f32 0.0, %v5331
      %v5333 = vpop.f32.mrb[0].mxu0
      %v5334 = vadd.f32 0.0, %v5333
      %5335 = vdwg.mxu0
      %5336 = vmatprep.subr.mxu0 %v4912
      %5337 = vmatpush1.msra.mxu0 %v4911
      %5338 = vmatprep.subr.mxu0 %v4919
      %5339 = vmatpush1.msra.mxu0 %v4918
      %5340 = vmatprep.subr.mxu0 %v4926
      %5341 = vmatpush1.msra.mxu0 %v4925
      %5342 = vmatprep.subr.mxu0 %v4933
      %5343 = vmatpush1.msra.mxu0 %v4932
      %5344 = vmatprep.subr.mxu0 %v4940
      %5345 = vmatpush1.msra.mxu0 %v4939
      %5346 = vmatprep.subr.mxu0 %v4947
      %5347 = vmatpush1.msra.mxu0 %v4946
      %5348 = vmatprep.subr.mxu0 %v4954
      %5349 = vmatpush1.msra.mxu0 %v4953
      %5350 = vmatprep.subr.mxu0 %v4961
      %5351 = vmatpush1.msra.mxu0 %v4960
      %5352 = vmatprep.subr.mxu0 %v4968
      %5353 = vmatpush1.msra.mxu0 %v4967
      %5354 = vmatprep.subr.mxu0 %v4975
      %5355 = vmatpush1.msra.mxu0 %v4974
      %5356 = vmatprep.subr.mxu0 %v4982
      %5357 = vmatpush1.msra.mxu0 %v4981
      %5358 = vmatprep.subr.mxu0 %v4989
      %5359 = vmatpush1.msra.mxu0 %v4988
      %5360 = vmatprep.subr.mxu0 %v4996
      %5361 = vmatpush1.msra.mxu0 %v4995
      %5362 = vmatprep.subr.mxu0 %v5003
      %5363 = vmatpush1.msra.mxu0 %v5002
      %5364 = vmatprep.subr.mxu0 %v5010
      %5365 = vmatpush1.msra.mxu0 %v5009
      %5366 = vmatprep.subr.mxu0 %v5017
      %5367 = vmatpush1.msra.mxu0 %v5016
      %5368 = vmatprep.subr.mxu0 %v5024
      %5369 = vmatpush1.msra.mxu0 %v5023
      %5370 = vmatprep.subr.mxu0 %v5031
      %5371 = vmatpush1.msra.mxu0 %v5030
      %5372 = vmatprep.subr.mxu0 %v5038
      %5373 = vmatpush1.msra.mxu0 %v5037
      %5374 = vmatprep.subr.mxu0 %v5045
      %5375 = vmatpush1.msra.mxu0 %v5044
      %5376 = vmatprep.subr.mxu0 %v5052
      %5377 = vmatpush1.msra.mxu0 %v5051
      %5378 = vmatprep.subr.mxu0 %v5059
      %5379 = vmatpush1.msra.mxu0 %v5058
      %5380 = vmatprep.subr.mxu0 %v5066
      %5381 = vmatpush1.msra.mxu0 %v5065
      %5382 = vmatprep.subr.mxu0 %v5073
      %5383 = vmatpush1.msra.mxu0 %v5072
      %5384 = vmatprep.subr.mxu0 %v5080
      %5385 = vmatpush1.msra.mxu0 %v5079
      %5386 = vmatprep.subr.mxu0 %v5087
      %5387 = vmatpush1.msra.mxu0 %v5086
      %5388 = vmatprep.subr.mxu0 %v5094
      %5389 = vmatpush1.msra.mxu0 %v5093
      %5390 = vmatprep.subr.mxu0 %v5182
      %5391 = vmatpush1.msra.mxu0 %v5179
      %5392 = vmatprep.subr.mxu0 0.0
      %5393 = vmatpush1.msra.mxu0 0.0
      %5394 = vmatprep.subr.mxu0 0.0
      %5395 = vmatpush1.msra.mxu0 0.0
      %5396 = vmatprep.subr.mxu0 0.0
      %5397 = vmatpush1.msra.mxu0 0.0
      %5398 = vmatprep.subr.mxu0 0.0
      %5399 = vmatpush1.msra.mxu0 0.0
      %5400 = vmatprep.mubr.f32.mxu0 %v5133
      %5401 = vmatmul.mubr.f32.gmra.mrb[0].mxu0 %v5105
      %v5402 = vpop.f32.mrb[0].mxu0
      %v5403 = vadd.f32 0.0, %v5402
      %v5404 = vpop.f32.mrb[0].mxu0
      %v5405 = vadd.f32 0.0, %v5404
      %5406 = vmatprep.mubr.f32.mxu0 %v5136
      %5407 = vmatmul.mubr.f32.gmra.mrb[0].mxu0 %v5107
      %v5408 = vpop.f32.mrb[0].mxu0
      %v5409 = vadd.f32 0.0, %v5408
      %v5410 = vpop.f32.mrb[0].mxu0
      %v5411 = vadd.f32 0.0, %v5410
      %5412 = vmatprep.mubr.f32.mxu0 %v5139
      %5413 = vmatmul.mubr.f32.gmra.mrb[0].mxu0 %v5109
      %v5414 = vpop.f32.mrb[0].mxu0
      %v5415 = vadd.f32 0.0, %v5414
      %v5416 = vpop.f32.mrb[0].mxu0
      %v5417 = vadd.f32 0.0, %v5416
      %5418 = vmatprep.mubr.f32.mxu0 %v5142
      %5419 = vmatmul.mubr.f32.gmra.mrb[0].mxu0 %v5111
      %v5420 = vpop.f32.mrb[0].mxu0
      %v5421 = vadd.f32 0.0, %v5420
      %v5422 = vpop.f32.mrb[0].mxu0
      %v5423 = vadd.f32 0.0, %v5422
      %5424 = vmatprep.mubr.f32.mxu0 %v5145
      %5425 = vmatmul.mubr.f32.gmra.mrb[0].mxu0 %v5113
      %v5426 = vpop.f32.mrb[0].mxu0
      %v5427 = vadd.f32 0.0, %v5426
      %v5428 = vpop.f32.mrb[0].mxu0
      %v5429 = vadd.f32 0.0, %v5428
      %5430 = vmatprep.mubr.f32.mxu0 %v5148
      %5431 = vmatmul.mubr.f32.gmra.mrb[0].mxu0 %v5115
      %v5432 = vpop.f32.mrb[0].mxu0
      %v5433 = vadd.f32 0.0, %v5432
      %v5434 = vpop.f32.mrb[0].mxu0
      %v5435 = vadd.f32 0.0, %v5434
      %5436 = vmatprep.mubr.f32.mxu0 %v5151
      %5437 = vmatmul.mubr.f32.gmra.mrb[0].mxu0 %v5117
      %v5438 = vpop.f32.mrb[0].mxu0
      %v5439 = vadd.f32 0.0, %v5438
      %v5440 = vpop.f32.mrb[0].mxu0
      %v5441 = vadd.f32 0.0, %v5440
      %5442 = vmatprep.mubr.f32.mxu0 %v5154
      %5443 = vmatmul.mubr.f32.gmra.mrb[0].mxu0 %v5119
      %v5444 = vpop.f32.mrb[0].mxu0
      %v5445 = vadd.f32 0.0, %v5444
      %v5446 = vpop.f32.mrb[0].mxu0
      %v5447 = vadd.f32 0.0, %v5446
      %5448 = vmatprep.mubr.f32.mxu0 %v5157
      %5449 = vmatmul.mubr.f32.gmra.mrb[0].mxu0 %v5121
      %v5450 = vpop.f32.mrb[0].mxu0
      %v5451 = vadd.f32 0.0, %v5450
      %v5452 = vpop.f32.mrb[0].mxu0
      %v5453 = vadd.f32 0.0, %v5452
      %5454 = vmatprep.mubr.f32.mxu0 %v5160
      %5455 = vmatmul.mubr.f32.gmra.mrb[0].mxu0 %v5123
      %v5456 = vpop.f32.mrb[0].mxu0
      %v5457 = vadd.f32 0.0, %v5456
      %v5458 = vpop.f32.mrb[0].mxu0
      %v5459 = vadd.f32 0.0, %v5458
      %5460 = vmatprep.mubr.f32.mxu0 %v5163
      %5461 = vmatmul.mubr.f32.gmra.mrb[0].mxu0 %v5125
      %v5462 = vpop.f32.mrb[0].mxu0
      %v5463 = vadd.f32 0.0, %v5462
      %v5464 = vpop.f32.mrb[0].mxu0
      %v5465 = vadd.f32 0.0, %v5464
      %5466 = vmatprep.mubr.f32.mxu0 %v5166
      %5467 = vmatmul.mubr.f32.gmra.mrb[0].mxu0 %v5127
      %v5468 = vpop.f32.mrb[0].mxu0
      %v5469 = vadd.f32 0.0, %v5468
      %v5470 = vpop.f32.mrb[0].mxu0
      %v5471 = vadd.f32 0.0, %v5470
      %5472 = vmatprep.mubr.f32.mxu0 %v5169
      %5473 = vmatmul.mubr.f32.gmra.mrb[0].mxu0 %v5129
      %v5474 = vpop.f32.mrb[0].mxu0
      %v5475 = vadd.f32 0.0, %v5474
      %v5476 = vpop.f32.mrb[0].mxu0
      %v5477 = vadd.f32 0.0, %v5476
      %5478 = vdwg.mxu0
      %5479 = vmatprep.subr.mxu0 %v4914
      %5480 = vmatpush1.msra.mxu0 %v4913
      %5481 = vmatprep.subr.mxu0 %v4921
      %5482 = vmatpush1.msra.mxu0 %v4920
      %5483 = vmatprep.subr.mxu0 %v4928
      %5484 = vmatpush1.msra.mxu0 %v4927
      %5485 = vmatprep.subr.mxu0 %v4935
      %5486 = vmatpush1.msra.mxu0 %v4934
      %5487 = vmatprep.subr.mxu0 %v4942
      %5488 = vmatpush1.msra.mxu0 %v4941
      %5489 = vmatprep.subr.mxu0 %v4949
      %5490 = vmatpush1.msra.mxu0 %v4948
      %5491 = vmatprep.subr.mxu0 %v4956
      %5492 = vmatpush1.msra.mxu0 %v4955
      %5493 = vmatprep.subr.mxu0 %v4963
      %5494 = vmatpush1.msra.mxu0 %v4962
      %5495 = vmatprep.subr.mxu0 %v4970
      %5496 = vmatpush1.msra.mxu0 %v4969
      %5497 = vmatprep.subr.mxu0 %v4977
      %5498 = vmatpush1.msra.mxu0 %v4976
      %5499 = vmatprep.subr.mxu0 %v4984
      %5500 = vmatpush1.msra.mxu0 %v4983
      %5501 = vmatprep.subr.mxu0 %v4991
      %5502 = vmatpush1.msra.mxu0 %v4990
      %5503 = vmatprep.subr.mxu0 %v4998
      %5504 = vmatpush1.msra.mxu0 %v4997
      %5505 = vmatprep.subr.mxu0 %v5005
      %5506 = vmatpush1.msra.mxu0 %v5004
      %5507 = vmatprep.subr.mxu0 %v5012
      %5508 = vmatpush1.msra.mxu0 %v5011
      %5509 = vmatprep.subr.mxu0 %v5019
      %5510 = vmatpush1.msra.mxu0 %v5018
      %5511 = vmatprep.subr.mxu0 %v5026
      %5512 = vmatpush1.msra.mxu0 %v5025
      %5513 = vmatprep.subr.mxu0 %v5033
      %5514 = vmatpush1.msra.mxu0 %v5032
      %5515 = vmatprep.subr.mxu0 %v5040
      %5516 = vmatpush1.msra.mxu0 %v5039
      %5517 = vmatprep.subr.mxu0 %v5047
      %5518 = vmatpush1.msra.mxu0 %v5046
      %5519 = vmatprep.subr.mxu0 %v5054
      %5520 = vmatpush1.msra.mxu0 %v5053
      %5521 = vmatprep.subr.mxu0 %v5061
      %5522 = vmatpush1.msra.mxu0 %v5060
      %5523 = vmatprep.subr.mxu0 %v5068
      %5524 = vmatpush1.msra.mxu0 %v5067
      %5525 = vmatprep.subr.mxu0 %v5075
      %5526 = vmatpush1.msra.mxu0 %v5074
      %5527 = vmatprep.subr.mxu0 %v5082
      %5528 = vmatpush1.msra.mxu0 %v5081
      %5529 = vmatprep.subr.mxu0 %v5089
      %5530 = vmatpush1.msra.mxu0 %v5088
      %5531 = vmatprep.subr.mxu0 %v5096
      %5532 = vmatpush1.msra.mxu0 %v5095
      %5533 = vmatprep.subr.mxu0 %v5188
      %5534 = vmatpush1.msra.mxu0 %v5185
      %5535 = vmatprep.subr.mxu0 0.0
      %5536 = vmatpush1.msra.mxu0 0.0
      %5537 = vmatprep.subr.mxu0 0.0
      %5538 = vmatpush1.msra.mxu0 0.0
      %5539 = vmatprep.subr.mxu0 0.0
      %5540 = vmatpush1.msra.mxu0 0.0
      %5541 = vmatprep.subr.mxu0 0.0
      %5542 = vmatpush1.msra.mxu0 0.0
      %5543 = vmatprep.mubr.f32.mxu0 %v5133
      %5544 = vmatmul.mubr.f32.gmra.mrb[0].mxu0 %v5105
      %v5545 = vpop.f32.mrb[0].mxu0
      %v5546 = vadd.f32 0.0, %v5545
      %v5547 = vpop.f32.mrb[0].mxu0
      %v5548 = vadd.f32 0.0, %v5547
      %5549 = vmatprep.mubr.f32.mxu0 %v5136
      %5550 = vmatmul.mubr.f32.gmra.mrb[0].mxu0 %v5107
      %v5551 = vpop.f32.mrb[0].mxu0
      %v5552 = vadd.f32 0.0, %v5551
      %v5553 = vpop.f32.mrb[0].mxu0
      %v5554 = vadd.f32 0.0, %v5553
      %5555 = vmatprep.mubr.f32.mxu0 %v5139
      %5556 = vmatmul.mubr.f32.gmra.mrb[0].mxu0 %v5109
      %v5557 = vpop.f32.mrb[0].mxu0
      %v5558 = vadd.f32 0.0, %v5557
      %v5559 = vpop.f32.mrb[0].mxu0
      %v5560 = vadd.f32 0.0, %v5559
      %5561 = vmatprep.mubr.f32.mxu0 %v5142
      %5562 = vmatmul.mubr.f32.gmra.mrb[0].mxu0 %v5111
      %v5563 = vpop.f32.mrb[0].mxu0
      %v5564 = vadd.f32 0.0, %v5563
      %v5565 = vpop.f32.mrb[0].mxu0
      %v5566 = vadd.f32 0.0, %v5565
      %5567 = vmatprep.mubr.f32.mxu0 %v5145
      %5568 = vmatmul.mubr.f32.gmra.mrb[0].mxu0 %v5113
      %v5569 = vpop.f32.mrb[0].mxu0
      %v5570 = vadd.f32 0.0, %v5569
      %v5571 = vpop.f32.mrb[0].mxu0
      %v5572 = vadd.f32 0.0, %v5571
      %5573 = vmatprep.mubr.f32.mxu0 %v5148
      %5574 = vmatmul.mubr.f32.gmra.mrb[0].mxu0 %v5115
      %v5575 = vpop.f32.mrb[0].mxu0
      %v5576 = vadd.f32 0.0, %v5575
      %v5577 = vpop.f32.mrb[0].mxu0
      %v5578 = vadd.f32 0.0, %v5577
      %5579 = vmatprep.mubr.f32.mxu0 %v5151
      %5580 = vmatmul.mubr.f32.gmra.mrb[0].mxu0 %v5117
      %v5581 = vpop.f32.mrb[0].mxu0
      %v5582 = vadd.f32 0.0, %v5581
      %v5583 = vpop.f32.mrb[0].mxu0
      %v5584 = vadd.f32 0.0, %v5583
      %5585 = vmatprep.mubr.f32.mxu0 %v5154
      %5586 = vmatmul.mubr.f32.gmra.mrb[0].mxu0 %v5119
      %v5587 = vpop.f32.mrb[0].mxu0
      %v5588 = vadd.f32 0.0, %v5587
      %v5589 = vpop.f32.mrb[0].mxu0
      %v5590 = vadd.f32 0.0, %v5589
      %5591 = vmatprep.mubr.f32.mxu0 %v5157
      %5592 = vmatmul.mubr.f32.gmra.mrb[0].mxu0 %v5121
      %v5593 = vpop.f32.mrb[0].mxu0
      %v5594 = vadd.f32 0.0, %v5593
      %v5595 = vpop.f32.mrb[0].mxu0
      %v5596 = vadd.f32 0.0, %v5595
      %5597 = vmatprep.mubr.f32.mxu0 %v5160
      %5598 = vmatmul.mubr.f32.gmra.mrb[0].mxu0 %v5123
      %v5599 = vpop.f32.mrb[0].mxu0
      %v5600 = vadd.f32 0.0, %v5599
      %v5601 = vpop.f32.mrb[0].mxu0
      %v5602 = vadd.f32 0.0, %v5601
      %5603 = vmatprep.mubr.f32.mxu0 %v5163
      %5604 = vmatmul.mubr.f32.gmra.mrb[0].mxu0 %v5125
      %v5605 = vpop.f32.mrb[0].mxu0
      %v5606 = vadd.f32 0.0, %v5605
      %v5607 = vpop.f32.mrb[0].mxu0
      %v5608 = vadd.f32 0.0, %v5607
      %5609 = vmatprep.mubr.f32.mxu0 %v5166
      %5610 = vmatmul.mubr.f32.gmra.mrb[0].mxu0 %v5127
      %v5611 = vpop.f32.mrb[0].mxu0
      %v5612 = vadd.f32 0.0, %v5611
      %v5613 = vpop.f32.mrb[0].mxu0
      %v5614 = vadd.f32 0.0, %v5613
      %5615 = vmatprep.mubr.f32.mxu0 %v5169
      %5616 = vmatmul.mubr.f32.gmra.mrb[0].mxu0 %v5129
      %v5617 = vpop.f32.mrb[0].mxu0
      %v5618 = vadd.f32 0.0, %v5617
      %v5619 = vpop.f32.mrb[0].mxu0
      %v5620 = vadd.f32 0.0, %v5619
      %5621 = vdwg.mxu0
      %5622 = vmatprep.subr.mxu0 0.0
      %5623 = vmatpush1.msra.mxu0 %v4915
      %5624 = vmatprep.subr.mxu0 0.0
      %5625 = vmatpush1.msra.mxu0 %v4922
      %5626 = vmatprep.subr.mxu0 0.0
      %5627 = vmatpush1.msra.mxu0 %v4929
      %5628 = vmatprep.subr.mxu0 0.0
      %5629 = vmatpush1.msra.mxu0 %v4936
      %5630 = vmatprep.subr.mxu0 0.0
      %5631 = vmatpush1.msra.mxu0 %v4943
      %5632 = vmatprep.subr.mxu0 0.0
      %5633 = vmatpush1.msra.mxu0 %v4950
      %5634 = vmatprep.subr.mxu0 0.0
      %5635 = vmatpush1.msra.mxu0 %v4957
      %5636 = vmatprep.subr.mxu0 0.0
      %5637 = vmatpush1.msra.mxu0 %v4964
      %5638 = vmatprep.subr.mxu0 0.0
      %5639 = vmatpush1.msra.mxu0 %v4971
      %5640 = vmatprep.subr.mxu0 0.0
      %5641 = vmatpush1.msra.mxu0 %v4978
      %5642 = vmatprep.subr.mxu0 0.0
      %5643 = vmatpush1.msra.mxu0 %v4985
      %5644 = vmatprep.subr.mxu0 0.0
      %5645 = vmatpush1.msra.mxu0 %v4992
      %5646 = vmatprep.subr.mxu0 0.0
      %5647 = vmatpush1.msra.mxu0 %v4999
      %5648 = vmatprep.subr.mxu0 0.0
      %5649 = vmatpush1.msra.mxu0 %v5006
      %5650 = vmatprep.subr.mxu0 0.0
      %5651 = vmatpush1.msra.mxu0 %v5013
      %5652 = vmatprep.subr.mxu0 0.0
      %5653 = vmatpush1.msra.mxu0 %v5020
      %5654 = vmatprep.subr.mxu0 0.0
      %5655 = vmatpush1.msra.mxu0 %v5027
      %5656 = vmatprep.subr.mxu0 0.0
      %5657 = vmatpush1.msra.mxu0 %v5034
      %5658 = vmatprep.subr.mxu0 0.0
      %5659 = vmatpush1.msra.mxu0 %v5041
      %5660 = vmatprep.subr.mxu0 0.0
      %5661 = vmatpush1.msra.mxu0 %v5048
      %5662 = vmatprep.subr.mxu0 0.0
      %5663 = vmatpush1.msra.mxu0 %v5055
      %5664 = vmatprep.subr.mxu0 0.0
      %5665 = vmatpush1.msra.mxu0 %v5062
      %5666 = vmatprep.subr.mxu0 0.0
      %5667 = vmatpush1.msra.mxu0 %v5069
      %5668 = vmatprep.subr.mxu0 0.0
      %5669 = vmatpush1.msra.mxu0 %v5076
      %5670 = vmatprep.subr.mxu0 0.0
      %5671 = vmatpush1.msra.mxu0 %v5083
      %5672 = vmatprep.subr.mxu0 0.0
      %5673 = vmatpush1.msra.mxu0 %v5090
      %5674 = vmatprep.subr.mxu0 0.0
      %5675 = vmatpush1.msra.mxu0 %v5097
      %5676 = vmatprep.subr.mxu0 0.0
      %5677 = vmatpush1.msra.mxu0 %v5191
      %5678 = vmatprep.subr.mxu0 0.0
      %5679 = vmatpush1.msra.mxu0 0.0
      %5680 = vmatprep.subr.mxu0 0.0
      %5681 = vmatpush1.msra.mxu0 0.0
      %5682 = vmatprep.subr.mxu0 0.0
      %5683 = vmatpush1.msra.mxu0 0.0
      %5684 = vmatprep.subr.mxu0 0.0
      %5685 = vmatpush1.msra.mxu0 0.0
      %5686 = vmatprep.mubr.f32.mxu0 %v5133
      %5687 = vmatmul.mubr.f32.gmra.mrb[0].mxu0 %v5105
      %v5688 = vpop.f32.mrb[0].mxu0
      %v5689 = vadd.f32 0.0, %v5688
      %v5690 = vpop.f32.mrb[0].mxu0
      %5691 = vmatprep.mubr.f32.mxu0 %v5136
      %5692 = vmatmul.mubr.f32.gmra.mrb[0].mxu0 %v5107
      %v5693 = vpop.f32.mrb[0].mxu0
      %v5694 = vadd.f32 0.0, %v5693
      %v5695 = vpop.f32.mrb[0].mxu0
      %5696 = vmatprep.mubr.f32.mxu0 %v5139
      %5697 = vmatmul.mubr.f32.gmra.mrb[0].mxu0 %v5109
      %v5698 = vpop.f32.mrb[0].mxu0
      %v5699 = vadd.f32 0.0, %v5698
      %v5700 = vpop.f32.mrb[0].mxu0
      %5701 = vmatprep.mubr.f32.mxu0 %v5142
      %5702 = vmatmul.mubr.f32.gmra.mrb[0].mxu0 %v5111
      %v5703 = vpop.f32.mrb[0].mxu0
      %v5704 = vadd.f32 0.0, %v5703
      %v5705 = vpop.f32.mrb[0].mxu0
      %5706 = vmatprep.mubr.f32.mxu0 %v5145
      %5707 = vmatmul.mubr.f32.gmra.mrb[0].mxu0 %v5113
      %v5708 = vpop.f32.mrb[0].mxu0
      %v5709 = vadd.f32 0.0, %v5708
      %v5710 = vpop.f32.mrb[0].mxu0
      %5711 = vmatprep.mubr.f32.mxu0 %v5148
      %5712 = vmatmul.mubr.f32.gmra.mrb[0].mxu0 %v5115
      %v5713 = vpop.f32.mrb[0].mxu0
      %v5714 = vadd.f32 0.0, %v5713
      %v5715 = vpop.f32.mrb[0].mxu0
      %5716 = vmatprep.mubr.f32.mxu0 %v5151
      %5717 = vmatmul.mubr.f32.gmra.mrb[0].mxu0 %v5117
      %v5718 = vpop.f32.mrb[0].mxu0
      %v5719 = vadd.f32 0.0, %v5718
      %v5720 = vpop.f32.mrb[0].mxu0
      %5721 = vmatprep.mubr.f32.mxu0 %v5154
      %5722 = vmatmul.mubr.f32.gmra.mrb[0].mxu0 %v5119
      %v5723 = vpop.f32.mrb[0].mxu0
      %v5724 = vadd.f32 0.0, %v5723
      %v5725 = vpop.f32.mrb[0].mxu0
      %5726 = vmatprep.mubr.f32.mxu0 %v5157
      %5727 = vmatmul.mubr.f32.gmra.mrb[0].mxu0 %v5121
      %v5728 = vpop.f32.mrb[0].mxu0
      %v5729 = vadd.f32 0.0, %v5728
      %v5730 = vpop.f32.mrb[0].mxu0
      %5731 = vmatprep.mubr.f32.mxu0 %v5160
      %5732 = vmatmul.mubr.f32.gmra.mrb[0].mxu0 %v5123
      %v5733 = vpop.f32.mrb[0].mxu0
      %v5734 = vadd.f32 0.0, %v5733
      %v5735 = vpop.f32.mrb[0].mxu0
      %5736 = vmatprep.mubr.f32.mxu0 %v5163
      %5737 = vmatmul.mubr.f32.gmra.mrb[0].mxu0 %v5125
      %v5738 = vpop.f32.mrb[0].mxu0
      %v5739 = vadd.f32 0.0, %v5738
      %v5740 = vpop.f32.mrb[0].mxu0
      %5741 = vmatprep.mubr.f32.mxu0 %v5166
      %5742 = vmatmul.mubr.f32.gmra.mrb[0].mxu0 %v5127
      %v5743 = vpop.f32.mrb[0].mxu0
      %v5744 = vadd.f32 0.0, %v5743
      %v5745 = vpop.f32.mrb[0].mxu0
      %5746 = vmatprep.mubr.f32.mxu0 %v5169
      %5747 = vmatmul.mubr.f32.gmra.mrb[0].mxu0 %v5129
      %v5748 = vpop.f32.mrb[0].mxu0
      %v5749 = vadd.f32 0.0, %v5748
      %v5750 = vpop.f32.mrb[0].mxu0
      %5751 = vdwg.mxu0
      %5843 = vrot.lane.b32.xlu0 %v5260, 96
      %v5844 = vpop.permute.xlu0 %5843
      %5845 = vrot.lane.b32.xlu0 %v5262, 96
      %v5846 = vpop.permute.xlu0 %5845
      %5847 = vrot.lane.b32.xlu0 %v5403, 96
      %v5848 = vpop.permute.xlu0 %5847
      %5849 = vrot.lane.b32.xlu0 %v5405, 96
      %v5850 = vpop.permute.xlu0 %5849
      %5851 = vrot.lane.b32.xlu0 %v5546, 96
      %v5852 = vpop.permute.xlu0 %5851
      %5853 = vrot.lane.b32.xlu0 %v5548, 96
      %v5854 = vpop.permute.xlu0 %5853
      %5855 = vrot.lane.b32.xlu0 %v5689, 96
      %v5856 = vpop.permute.xlu0 %5855
      %5857 = vrot.lane.b32.xlu0 %v5266, 96
      %v5858 = vpop.permute.xlu0 %5857
      %5859 = vrot.lane.b32.xlu0 %v5268, 96
      %v5860 = vpop.permute.xlu0 %5859
      %5861 = vrot.lane.b32.xlu0 %v5409, 96
      %v5862 = vpop.permute.xlu0 %5861
      %5863 = vrot.lane.b32.xlu0 %v5411, 96
      %v5864 = vpop.permute.xlu0 %5863
      %5865 = vrot.lane.b32.xlu0 %v5552, 96
      %v5866 = vpop.permute.xlu0 %5865
      %5867 = vrot.lane.b32.xlu0 %v5554, 96
      %v5868 = vpop.permute.xlu0 %5867
      %5869 = vrot.lane.b32.xlu0 %v5694, 96
      %v5870 = vpop.permute.xlu0 %5869
      %5871 = vrot.lane.b32.xlu0 %v5272, 96
      %v5872 = vpop.permute.xlu0 %5871
      %5873 = vrot.lane.b32.xlu0 %v5274, 96
      %v5874 = vpop.permute.xlu0 %5873
      %5875 = vrot.lane.b32.xlu0 %v5415, 96
      %v5876 = vpop.permute.xlu0 %5875
      %5877 = vrot.lane.b32.xlu0 %v5417, 96
      %v5878 = vpop.permute.xlu0 %5877
      %5879 = vrot.lane.b32.xlu0 %v5558, 96
      %v5880 = vpop.permute.xlu0 %5879
      %5881 = vrot.lane.b32.xlu0 %v5560, 96
      %v5882 = vpop.permute.xlu0 %5881
      %5883 = vrot.lane.b32.xlu0 %v5699, 96
      %v5884 = vpop.permute.xlu0 %5883
      %5885 = vrot.lane.b32.xlu0 %v5278, 96
      %v5886 = vpop.permute.xlu0 %5885
      %5887 = vrot.lane.b32.xlu0 %v5280, 96
      %v5888 = vpop.permute.xlu0 %5887
      %5889 = vrot.lane.b32.xlu0 %v5421, 96
      %v5890 = vpop.permute.xlu0 %5889
      %5891 = vrot.lane.b32.xlu0 %v5423, 96
      %v5892 = vpop.permute.xlu0 %5891
      %5893 = vrot.lane.b32.xlu0 %v5564, 96
      %v5894 = vpop.permute.xlu0 %5893
      %5895 = vrot.lane.b32.xlu0 %v5566, 96
      %v5896 = vpop.permute.xlu0 %5895
      %5897 = vrot.lane.b32.xlu0 %v5704, 96
      %v5898 = vpop.permute.xlu0 %5897
      %5899 = vrot.lane.b32.xlu0 %v5284, 96
      %v5900 = vpop.permute.xlu0 %5899
      %5901 = vrot.lane.b32.xlu0 %v5286, 96
      %v5902 = vpop.permute.xlu0 %5901
      %5903 = vrot.lane.b32.xlu0 %v5427, 96
      %v5904 = vpop.permute.xlu0 %5903
      %5905 = vrot.lane.b32.xlu0 %v5429, 96
      %v5906 = vpop.permute.xlu0 %5905
      %5907 = vrot.lane.b32.xlu0 %v5570, 96
      %v5908 = vpop.permute.xlu0 %5907
      %5909 = vrot.lane.b32.xlu0 %v5572, 96
      %v5910 = vpop.permute.xlu0 %5909
      %5911 = vrot.lane.b32.xlu0 %v5709, 96
      %v5912 = vpop.permute.xlu0 %5911
      %5913 = vrot.lane.b32.xlu0 %v5290, 96
      %v5914 = vpop.permute.xlu0 %5913
      %5915 = vrot.lane.b32.xlu0 %v5292, 96
      %v5916 = vpop.permute.xlu0 %5915
      %5917 = vrot.lane.b32.xlu0 %v5433, 96
      %v5918 = vpop.permute.xlu0 %5917
      %5919 = vrot.lane.b32.xlu0 %v5435, 96
      %v5920 = vpop.permute.xlu0 %5919
      %5921 = vrot.lane.b32.xlu0 %v5576, 96
      %v5922 = vpop.permute.xlu0 %5921
      %5923 = vrot.lane.b32.xlu0 %v5578, 96
      %v5924 = vpop.permute.xlu0 %5923
      %5925 = vrot.lane.b32.xlu0 %v5714, 96
      %v5926 = vpop.permute.xlu0 %5925
      %5927 = vrot.lane.b32.xlu0 %v5296, 96
      %v5928 = vpop.permute.xlu0 %5927
      %5929 = vrot.lane.b32.xlu0 %v5298, 96
      %v5930 = vpop.permute.xlu0 %5929
      %5931 = vrot.lane.b32.xlu0 %v5439, 96
      %v5932 = vpop.permute.xlu0 %5931
      %5933 = vrot.lane.b32.xlu0 %v5441, 96
      %v5934 = vpop.permute.xlu0 %5933
      %5935 = vrot.lane.b32.xlu0 %v5582, 96
      %v5936 = vpop.permute.xlu0 %5935
      %5937 = vrot.lane.b32.xlu0 %v5584, 96
      %v5938 = vpop.permute.xlu0 %5937
      %5939 = vrot.lane.b32.xlu0 %v5719, 96
      %v5940 = vpop.permute.xlu0 %5939
      %5941 = vrot.lane.b32.xlu0 %v5302, 96
      %v5942 = vpop.permute.xlu0 %5941
      %5943 = vrot.lane.b32.xlu0 %v5304, 96
      %v5944 = vpop.permute.xlu0 %5943
      %5945 = vrot.lane.b32.xlu0 %v5445, 96
      %v5946 = vpop.permute.xlu0 %5945
      %5947 = vrot.lane.b32.xlu0 %v5447, 96
      %v5948 = vpop.permute.xlu0 %5947
      %5949 = vrot.lane.b32.xlu0 %v5588, 96
      %v5950 = vpop.permute.xlu0 %5949
      %5951 = vrot.lane.b32.xlu0 %v5590, 96
      %v5952 = vpop.permute.xlu0 %5951
      %5953 = vrot.lane.b32.xlu0 %v5724, 96
      %v5954 = vpop.permute.xlu0 %5953
      %5955 = vrot.lane.b32.xlu0 %v5308, 96
      %v5956 = vpop.permute.xlu0 %5955
      %5957 = vrot.lane.b32.xlu0 %v5310, 96
      %v5958 = vpop.permute.xlu0 %5957
      %5959 = vrot.lane.b32.xlu0 %v5451, 96
      %v5960 = vpop.permute.xlu0 %5959
      %5961 = vrot.lane.b32.xlu0 %v5453, 96
      %v5962 = vpop.permute.xlu0 %5961
      %5963 = vrot.lane.b32.xlu0 %v5594, 96
      %v5964 = vpop.permute.xlu0 %5963
      %5965 = vrot.lane.b32.xlu0 %v5596, 96
      %v5966 = vpop.permute.xlu0 %5965
      %5967 = vrot.lane.b32.xlu0 %v5729, 96
      %v5968 = vpop.permute.xlu0 %5967
      %5969 = vrot.lane.b32.xlu0 %v5314, 96
      %v5970 = vpop.permute.xlu0 %5969
      %5971 = vrot.lane.b32.xlu0 %v5316, 96
      %v5972 = vpop.permute.xlu0 %5971
      %5973 = vrot.lane.b32.xlu0 %v5457, 96
      %v5974 = vpop.permute.xlu0 %5973
      %5975 = vrot.lane.b32.xlu0 %v5459, 96
      %v5976 = vpop.permute.xlu0 %5975
      %5977 = vrot.lane.b32.xlu0 %v5600, 96
      %v5978 = vpop.permute.xlu0 %5977
      %5979 = vrot.lane.b32.xlu0 %v5602, 96
      %v5980 = vpop.permute.xlu0 %5979
      %5981 = vrot.lane.b32.xlu0 %v5734, 96
      %v5982 = vpop.permute.xlu0 %5981
      %5983 = vrot.lane.b32.xlu0 %v5320, 96
      %v5984 = vpop.permute.xlu0 %5983
      %5985 = vrot.lane.b32.xlu0 %v5322, 96
      %v5986 = vpop.permute.xlu0 %5985
      %5987 = vrot.lane.b32.xlu0 %v5463, 96
      %v5988 = vpop.permute.xlu0 %5987
      %5989 = vrot.lane.b32.xlu0 %v5465, 96
      %v5990 = vpop.permute.xlu0 %5989
      %5991 = vrot.lane.b32.xlu0 %v5606, 96
      %v5992 = vpop.permute.xlu0 %5991
      %5993 = vrot.lane.b32.xlu0 %v5608, 96
      %v5994 = vpop.permute.xlu0 %5993
      %5995 = vrot.lane.b32.xlu0 %v5739, 96
      %v5996 = vpop.permute.xlu0 %5995
      %5997 = vrot.lane.b32.xlu0 %v5326, 96
      %v5998 = vpop.permute.xlu0 %5997
      %5999 = vrot.lane.b32.xlu0 %v5328, 96
      %v6000 = vpop.permute.xlu0 %5999
      %6001 = vrot.lane.b32.xlu0 %v5469, 96
      %v6002 = vpop.permute.xlu0 %6001
      %6003 = vrot.lane.b32.xlu0 %v5471, 96
      %v6004 = vpop.permute.xlu0 %6003
      %6005 = vrot.lane.b32.xlu0 %v5612, 96
      %v6006 = vpop.permute.xlu0 %6005
      %6007 = vrot.lane.b32.xlu0 %v5614, 96
      %v6008 = vpop.permute.xlu0 %6007
      %6009 = vrot.lane.b32.xlu0 %v5744, 96
      %v6010 = vpop.permute.xlu0 %6009
      %6011 = vrot.lane.b32.xlu0 %v5332, 96
      %v6012 = vpop.permute.xlu0 %6011
      %6013 = vrot.lane.b32.xlu0 %v5334, 96
      %v6014 = vpop.permute.xlu0 %6013
      %6015 = vrot.lane.b32.xlu0 %v5475, 96
      %v6016 = vpop.permute.xlu0 %6015
      %6017 = vrot.lane.b32.xlu0 %v5477, 96
      %v6018 = vpop.permute.xlu0 %6017
      %6019 = vrot.lane.b32.xlu0 %v5618, 96
      %v6020 = vpop.permute.xlu0 %6019
      %6021 = vrot.lane.b32.xlu0 %v5620, 96
      %v6022 = vpop.permute.xlu0 %6021
      %6023 = vrot.lane.b32.xlu0 %v5749, 96
      %v6024 = vpop.permute.xlu0 %6023
      %vm6025 = vcmask 785408
      %v6026 = vsel %vm6025, %v5844, %v5846
      %v6027 = vsel %vm6025, %v5846, %v5848
      %v6028 = vsel %vm6025, %v5848, %v5850
      %v6029 = vsel %vm6025, %v5850, %v5852
      %v6030 = vsel %vm6025, %v5852, %v5854
      %v6031 = vsel %vm6025, %v5854, %v5856
      %v6032 = vsel %vm6025, %v5858, %v5860
      %v6033 = vsel %vm6025, %v5860, %v5862
      %v6034 = vsel %vm6025, %v5862, %v5864
      %v6035 = vsel %vm6025, %v5864, %v5866
      %v6036 = vsel %vm6025, %v5866, %v5868
      %v6037 = vsel %vm6025, %v5868, %v5870
      %v6038 = vsel %vm6025, %v5872, %v5874
      %v6039 = vsel %vm6025, %v5874, %v5876
      %v6040 = vsel %vm6025, %v5876, %v5878
      %v6041 = vsel %vm6025, %v5878, %v5880
      %v6042 = vsel %vm6025, %v5880, %v5882
      %v6043 = vsel %vm6025, %v5882, %v5884
      %v6044 = vsel %vm6025, %v5886, %v5888
      %v6045 = vsel %vm6025, %v5888, %v5890
      %v6046 = vsel %vm6025, %v5890, %v5892
      %v6047 = vsel %vm6025, %v5892, %v5894
      %v6048 = vsel %vm6025, %v5894, %v5896
      %v6049 = vsel %vm6025, %v5896, %v5898
      %v6050 = vsel %vm6025, %v5900, %v5902
      %v6051 = vsel %vm6025, %v5902, %v5904
      %v6052 = vsel %vm6025, %v5904, %v5906
      %v6053 = vsel %vm6025, %v5906, %v5908
      %v6054 = vsel %vm6025, %v5908, %v5910
      %v6055 = vsel %vm6025, %v5910, %v5912
      %v6056 = vsel %vm6025, %v5914, %v5916
      %v6057 = vsel %vm6025, %v5916, %v5918
      %v6058 = vsel %vm6025, %v5918, %v5920
      %v6059 = vsel %vm6025, %v5920, %v5922
      %v6060 = vsel %vm6025, %v5922, %v5924
      %v6061 = vsel %vm6025, %v5924, %v5926
      %v6062 = vsel %vm6025, %v5928, %v5930
      %v6063 = vsel %vm6025, %v5930, %v5932
      %v6064 = vsel %vm6025, %v5932, %v5934
      %v6065 = vsel %vm6025, %v5934, %v5936
      %v6066 = vsel %vm6025, %v5936, %v5938
      %v6067 = vsel %vm6025, %v5938, %v5940
      %v6068 = vsel %vm6025, %v5942, %v5944
      %v6069 = vsel %vm6025, %v5944, %v5946
      %v6070 = vsel %vm6025, %v5946, %v5948
      %v6071 = vsel %vm6025, %v5948, %v5950
      %v6072 = vsel %vm6025, %v5950, %v5952
      %v6073 = vsel %vm6025, %v5952, %v5954
      %v6074 = vsel %vm6025, %v5956, %v5958
      %v6075 = vsel %vm6025, %v5958, %v5960
      %v6076 = vsel %vm6025, %v5960, %v5962
      %v6077 = vsel %vm6025, %v5962, %v5964
      %v6078 = vsel %vm6025, %v5964, %v5966
      %v6079 = vsel %vm6025, %v5966, %v5968
      %v6080 = vsel %vm6025, %v5970, %v5972
      %v6081 = vsel %vm6025, %v5972, %v5974
      %v6082 = vsel %vm6025, %v5974, %v5976
      %v6083 = vsel %vm6025, %v5976, %v5978
      %v6084 = vsel %vm6025, %v5978, %v5980
      %v6085 = vsel %vm6025, %v5980, %v5982
      %v6086 = vsel %vm6025, %v5984, %v5986
      %v6087 = vsel %vm6025, %v5986, %v5988
      %v6088 = vsel %vm6025, %v5988, %v5990
      %v6089 = vsel %vm6025, %v5990, %v5992
      %v6090 = vsel %vm6025, %v5992, %v5994
      %v6091 = vsel %vm6025, %v5994, %v5996
      %v6092 = vsel %vm6025, %v5998, %v6000
      %v6093 = vsel %vm6025, %v6000, %v6002
      %v6094 = vsel %vm6025, %v6002, %v6004
      %v6095 = vsel %vm6025, %v6004, %v6006
      %v6096 = vsel %vm6025, %v6006, %v6008
      %v6097 = vsel %vm6025, %v6008, %v6010
      %v6098 = vsel %vm6025, %v6012, %v6014
      %v6099 = vsel %vm6025, %v6014, %v6016
      %v6100 = vsel %vm6025, %v6016, %v6018
      %v6101 = vsel %vm6025, %v6018, %v6020
      %v6102 = vsel %vm6025, %v6020, %v6022
      %v6103 = vsel %vm6025, %v6022, %v6024
      %v6195 = vmax.f32 %v5260, %v6026
      %v6196 = vmax.f32 %v5262, %v6027
      %v6197 = vmax.f32 %v5403, %v6028
      %v6198 = vmax.f32 %v5405, %v6029
      %v6199 = vmax.f32 %v5546, %v6030
      %v6200 = vmax.f32 %v5548, %v6031
      %v6201 = vmax.f32 %v5689, %v5856
      %v6202 = vmax.f32 %v5266, %v6032
      %v6203 = vmax.f32 %v5268, %v6033
      %v6204 = vmax.f32 %v5409, %v6034
      %v6205 = vmax.f32 %v5411, %v6035
      %v6206 = vmax.f32 %v5552, %v6036
      %v6207 = vmax.f32 %v5554, %v6037
      %v6208 = vmax.f32 %v5694, %v5870
      %v6209 = vmax.f32 %v5272, %v6038
      %v6210 = vmax.f32 %v5274, %v6039
      %v6211 = vmax.f32 %v5415, %v6040
      %v6212 = vmax.f32 %v5417, %v6041
      %v6213 = vmax.f32 %v5558, %v6042
      %v6214 = vmax.f32 %v5560, %v6043
      %v6215 = vmax.f32 %v5699, %v5884
      %v6216 = vmax.f32 %v5278, %v6044
      %v6217 = vmax.f32 %v5280, %v6045
      %v6218 = vmax.f32 %v5421, %v6046
      %v6219 = vmax.f32 %v5423, %v6047
      %v6220 = vmax.f32 %v5564, %v6048
      %v6221 = vmax.f32 %v5566, %v6049
      %v6222 = vmax.f32 %v5704, %v5898
      %v6223 = vmax.f32 %v5284, %v6050
      %v6224 = vmax.f32 %v5286, %v6051
      %v6225 = vmax.f32 %v5427, %v6052
      %v6226 = vmax.f32 %v5429, %v6053
      %v6227 = vmax.f32 %v5570, %v6054
      %v6228 = vmax.f32 %v5572, %v6055
      %v6229 = vmax.f32 %v5709, %v5912
      %v6230 = vmax.f32 %v5290, %v6056
      %v6231 = vmax.f32 %v5292, %v6057
      %v6232 = vmax.f32 %v5433, %v6058
      %v6233 = vmax.f32 %v5435, %v6059
      %v6234 = vmax.f32 %v5576, %v6060
      %v6235 = vmax.f32 %v5578, %v6061
      %v6236 = vmax.f32 %v5714, %v5926
      %v6237 = vmax.f32 %v5296, %v6062
      %v6238 = vmax.f32 %v5298, %v6063
      %v6239 = vmax.f32 %v5439, %v6064
      %v6240 = vmax.f32 %v5441, %v6065
      %v6241 = vmax.f32 %v5582, %v6066
      %v6242 = vmax.f32 %v5584, %v6067
      %v6243 = vmax.f32 %v5719, %v5940
      %v6244 = vmax.f32 %v5302, %v6068
      %v6245 = vmax.f32 %v5304, %v6069
      %v6246 = vmax.f32 %v5445, %v6070
      %v6247 = vmax.f32 %v5447, %v6071
      %v6248 = vmax.f32 %v5588, %v6072
      %v6249 = vmax.f32 %v5590, %v6073
      %v6250 = vmax.f32 %v5724, %v5954
      %v6251 = vmax.f32 %v5308, %v6074
      %v6252 = vmax.f32 %v5310, %v6075
      %v6253 = vmax.f32 %v5451, %v6076
      %v6254 = vmax.f32 %v5453, %v6077
      %v6255 = vmax.f32 %v5594, %v6078
      %v6256 = vmax.f32 %v5596, %v6079
      %v6257 = vmax.f32 %v5729, %v5968
      %v6258 = vmax.f32 %v5314, %v6080
      %v6259 = vmax.f32 %v5316, %v6081
      %v6260 = vmax.f32 %v5457, %v6082
      %v6261 = vmax.f32 %v5459, %v6083
      %v6262 = vmax.f32 %v5600, %v6084
      %v6263 = vmax.f32 %v5602, %v6085
      %v6264 = vmax.f32 %v5734, %v5982
      %v6265 = vmax.f32 %v5320, %v6086
      %v6266 = vmax.f32 %v5322, %v6087
      %v6267 = vmax.f32 %v5463, %v6088
      %v6268 = vmax.f32 %v5465, %v6089
      %v6269 = vmax.f32 %v5606, %v6090
      %v6270 = vmax.f32 %v5608, %v6091
      %v6271 = vmax.f32 %v5739, %v5996
      %v6272 = vmax.f32 %v5326, %v6092
      %v6273 = vmax.f32 %v5328, %v6093
      %v6274 = vmax.f32 %v5469, %v6094
      %v6275 = vmax.f32 %v5471, %v6095
      %v6276 = vmax.f32 %v5612, %v6096
      %v6277 = vmax.f32 %v5614, %v6097
      %v6278 = vmax.f32 %v5744, %v6010
      %v6279 = vmax.f32 %v5332, %v6098
      %v6280 = vmax.f32 %v5334, %v6099
      %v6281 = vmax.f32 %v5475, %v6100
      %v6282 = vmax.f32 %v5477, %v6101
      %v6283 = vmax.f32 %v5618, %v6102
      %v6284 = vmax.f32 %v5620, %v6103
      %v6285 = vmax.f32 %v5749, %v6024
      %v6286 = vpack.c.bf16 %v6202, %v6195
      %v6287 = vpack.c.bf16 %v6203, %v6196
      %v6288 = vpack.c.bf16 %v6204, %v6197
      %v6289 = vpack.c.bf16 %v6205, %v6198
      %v6290 = vpack.c.bf16 %v6206, %v6199
      %v6291 = vpack.c.bf16 %v6207, %v6200
      %v6292 = vpack.c.bf16 %v6208, %v6201
      %v6293 = vpack.c.bf16 %v6216, %v6209
      %v6294 = vpack.c.bf16 %v6217, %v6210
      %v6295 = vpack.c.bf16 %v6218, %v6211
      %v6296 = vpack.c.bf16 %v6219, %v6212
      %v6297 = vpack.c.bf16 %v6220, %v6213
      %v6298 = vpack.c.bf16 %v6221, %v6214
      %v6299 = vpack.c.bf16 %v6222, %v6215
      %v6300 = vpack.c.bf16 %v6230, %v6223
      %v6301 = vpack.c.bf16 %v6231, %v6224
      %v6302 = vpack.c.bf16 %v6232, %v6225
      %v6303 = vpack.c.bf16 %v6233, %v6226
      %v6304 = vpack.c.bf16 %v6234, %v6227
      %v6305 = vpack.c.bf16 %v6235, %v6228
      %v6306 = vpack.c.bf16 %v6236, %v6229
      %v6307 = vpack.c.bf16 %v6244, %v6237
      %v6308 = vpack.c.bf16 %v6245, %v6238
      %v6309 = vpack.c.bf16 %v6246, %v6239
      %v6310 = vpack.c.bf16 %v6247, %v6240
      %v6311 = vpack.c.bf16 %v6248, %v6241
      %v6312 = vpack.c.bf16 %v6249, %v6242
      %v6313 = vpack.c.bf16 %v6250, %v6243
      %v6314 = vpack.c.bf16 %v6258, %v6251
      %v6315 = vpack.c.bf16 %v6259, %v6252
      %v6316 = vpack.c.bf16 %v6260, %v6253
      %v6317 = vpack.c.bf16 %v6261, %v6254
      %v6318 = vpack.c.bf16 %v6262, %v6255
      %v6319 = vpack.c.bf16 %v6263, %v6256
      %v6320 = vpack.c.bf16 %v6264, %v6257
      %v6321 = vpack.c.bf16 %v6272, %v6265
      %v6322 = vpack.c.bf16 %v6273, %v6266
      %v6323 = vpack.c.bf16 %v6274, %v6267
      %v6324 = vpack.c.bf16 %v6275, %v6268
      %v6325 = vpack.c.bf16 %v6276, %v6269
      %v6326 = vpack.c.bf16 %v6277, %v6270
      %v6327 = vpack.c.bf16 %v6278, %v6271
      %v6328 = vpack.c.bf16 %v6279, %v6279
      %v6329 = vpack.c.bf16 %v6280, %v6280
      %v6330 = vpack.c.bf16 %v6281, %v6281
      %v6331 = vpack.c.bf16 %v6282, %v6282
      %v6332 = vpack.c.bf16 %v6283, %v6283
      %v6333 = vpack.c.bf16 %v6284, %v6284
      %v6334 = vpack.c.bf16 %v6285, %v6285
      %v6335 = vld [vmem:[%s4] sm:$0xff]
      %v6336 = vld [vmem:[%s4 + $0x8] sm:$0xff]
      %v6337 = vld [vmem:[%s4 + $0x10] sm:$0xff]
      %v6338 = vld [vmem:[%s4 + $0x18] sm:$0xff]
      %v6339 = vld [vmem:[%s4 + $0x20] sm:$0xff]
      %v6340 = vld [vmem:[%s4 + $0x28] sm:$0xff]
      %v6341 = vld [vmem:[%s4 + $0x30] sm:$0xff]
      %v6342 = vld [vmem:[%s4 + $0x38] sm:$0xff]
      %v6343 = vld [vmem:[%s4 + $0x40] sm:$0xff]
      %v6344 = vld [vmem:[%s4 + $0x48] sm:$0xff]
      %v6345 = vld [vmem:[%s4 + $0x50] sm:$0xff]
      %v6346 = vld [vmem:[%s4 + $0x58] sm:$0xff]
      %v6347 = vld [vmem:[%s4 + $0x60] sm:$0xff]
      %v6348 = vld [vmem:[%s4 + $0x68] sm:$0xff]
      %v6349 = vld [vmem:[%s4 + $0x70] sm:$0xff]
      %v6350 = vld [vmem:[%s4 + $0x78] sm:$0xff]
      %v6351 = vld [vmem:[%s4 + $0x80] sm:$0xff]
      %v6352 = vld [vmem:[%s4 + $0x88] sm:$0xff]
      %v6353 = vld [vmem:[%s4 + $0x90] sm:$0xff]
      %v6354 = vld [vmem:[%s4 + $0x98] sm:$0xff]
      %v6355 = vld [vmem:[%s4 + $0xa0] sm:$0xff]
      %v6356 = vld [vmem:[%s4 + $0xa8] sm:$0xff]
      %v6357 = vld [vmem:[%s4 + $0xb0] sm:$0xff]
      %v6358 = vld [vmem:[%s4 + $0xb8] sm:$0xff]
      %v6359 = vld [vmem:[%s4 + $0xc0] sm:$0xff]
      %v6360 = vld [vmem:[%s4 + $0xc8] sm:$0xff]
      %v6361 = vld [vmem:[%s4 + $0xd0] sm:$0xff]
      %v6362 = vld [vmem:[%s4 + $0xd8] sm:$0xff]
      %v6363 = vld [vmem:[%s4 + $0xe0] sm:$0xff]
      %v6364 = vld [vmem:[%s4 + $0xe8] sm:$0xff]
      %v6365 = vld [vmem:[%s4 + $0xf0] sm:$0xff]
      %v6366 = vld [vmem:[%s4 + $0xf8] sm:$0xff]
      %v6367 = vld [vmem:[%s4 + $0x100] sm:$0xff]
      %v6368 = vld [vmem:[%s4 + $0x108] sm:$0xff]
      %v6369 = vld [vmem:[%s4 + $0x110] sm:$0xff]
      %v6370 = vld [vmem:[%s4 + $0x118] sm:$0xff]
      %v6371 = vld [vmem:[%s4 + $0x120] sm:$0xff]
      %v6372 = vld [vmem:[%s4 + $0x128] sm:$0xff]
      %v6373 = vld [vmem:[%s4 + $0x130] sm:$0xff]
      %v6374 = vld [vmem:[%s4 + $0x138] sm:$0xff]
      %v6375 = vld [vmem:[%s4 + $0x140] sm:$0xff]
      %v6376 = vld [vmem:[%s4 + $0x148] sm:$0xff]
      %v6377 = vld [vmem:[%s4 + $0x150] sm:$0xff]
      %v6378 = vld [vmem:[%s4 + $0x158] sm:$0xff]
      %v6379 = vld [vmem:[%s4 + $0x160] sm:$0xff]
      %v6380 = vld [vmem:[%s4 + $0x168] sm:$0xff]
      %v6381 = vld [vmem:[%s4 + $0x170] sm:$0xff]
      %v6382 = vld [vmem:[%s4 + $0x178] sm:$0xff]
      %v6383 = vld [vmem:[%s4 + $0x180] sm:$0xff]
      %v6384 = vld [vmem:[%s4 + $0x188] sm:$0xff]
      %v6385 = vld [vmem:[%s4 + $0x190] sm:$0xff]
      %v6386 = vld [vmem:[%s4 + $0x198] sm:$0xff]
      %v6387 = vld [vmem:[%s4 + $0x1a0] sm:$0xff]
      %v6388 = vld [vmem:[%s4 + $0x1a8] sm:$0xff]
      %v6389 = vld [vmem:[%s4 + $0x1b0] sm:$0xff]
      %v6390 = vld [vmem:[%s4 + $0x1b8] sm:$0xff]
      %v6391 = vld [vmem:[%s4 + $0x1c0] sm:$0xff]
      %v6392 = vld [vmem:[%s4 + $0x1c8] sm:$0xff]
      %v6393 = vld [vmem:[%s4 + $0x1d0] sm:$0xff]
      %v6394 = vld [vmem:[%s4 + $0x1d8] sm:$0xff]
      %v6395 = vld [vmem:[%s4 + $0x1e0] sm:$0xff]
      %v6396 = vld [vmem:[%s4 + $0x1e8] sm:$0xff]
      %v6397 = vld [vmem:[%s4 + $0x1f0] sm:$0xff]
      %v6398 = vld [vmem:[%s4 + $0x1f8] sm:$0xff]
      %v6399 = vld [vmem:[%s4 + $0x200] sm:$0xff]
      %v6400 = vld [vmem:[%s4 + $0x208] sm:$0xff]
      %v6401 = vld [vmem:[%s4 + $0x210] sm:$0xff]
      %v6402 = vld [vmem:[%s4 + $0x218] sm:$0xff]
      %v6403 = vld [vmem:[%s4 + $0x220] sm:$0xff]
      %v6404 = vld [vmem:[%s4 + $0x228] sm:$0xff]
      %v6405 = vld [vmem:[%s4 + $0x230] sm:$0xff]
      %v6406 = vld [vmem:[%s4 + $0x238] sm:$0xff]
      %v6407 = vld [vmem:[%s4 + $0x240] sm:$0xff]
      %v6408 = vld [vmem:[%s4 + $0x248] sm:$0xff]
      %v6409 = vld [vmem:[%s4 + $0x250] sm:$0xff]
      %v6410 = vld [vmem:[%s4 + $0x258] sm:$0xff]
      %v6411 = vld [vmem:[%s4 + $0x260] sm:$0xff]
      %v6412 = vld [vmem:[%s4 + $0x268] sm:$0xff]
      %v6413 = vld [vmem:[%s4 + $0x270] sm:$0xff]
      %v6414 = vld [vmem:[%s4 + $0x278] sm:$0xff]
      %v6415 = vld [vmem:[%s4 + $0x280] sm:$0xff]
      %v6416 = vld [vmem:[%s4 + $0x288] sm:$0xff]
      %v6417 = vld [vmem:[%s4 + $0x290] sm:$0xff]
      %v6418 = vld [vmem:[%s4 + $0x298] sm:$0xff]
      %v6419 = vld [vmem:[%s4 + $0x2a0] sm:$0xff]
      %v6420 = vld [vmem:[%s4 + $0x2a8] sm:$0xff]
      %v6421 = vld [vmem:[%s4 + $0x2b0] sm:$0xff]
      %v6422 = vld [vmem:[%s4 + $0x2b8] sm:$0xff]
      %v6423 = vld [vmem:[%s4 + $0x2c0] sm:$0xff]
      %v6424 = vld [vmem:[%s4 + $0x2c8] sm:$0xff]
      %v6425 = vld [vmem:[%s4 + $0x2d0] sm:$0xff]
      %v6426 = vld [vmem:[%s4 + $0x2d8] sm:$0xff]
      %v6427 = vld [vmem:[%s4 + $0x2e0] sm:$0xff]
      %v6428 = vld [vmem:[%s4 + $0x2e8] sm:$0xff]
      %v6429 = vld [vmem:[%s4 + $0x2f0] sm:$0xff]
      %v6430 = vld [vmem:[%s4 + $0x2f8] sm:$0xff]
      %v6431 = vld [vmem:[%s4 + $0x300] sm:$0xff]
      %v6432 = vld [vmem:[%s4 + $0x308] sm:$0xff]
      %v6433 = vld [vmem:[%s4 + $0x310] sm:$0xff]
      %v6434 = vld [vmem:[%s4 + $0x318] sm:$0xff]
      %s6435 = scalar_lea.vmem %s4, 800
      %v6436 = vld [vmem:[%s6435] sm:$0xff]
      %v6437 = vld [vmem:[%s6435 + $0x8] sm:$0xff]
      %v6438 = vld [vmem:[%s6435 + $0x10] sm:$0xff]
      %v6439 = vld [vmem:[%s6435 + $0x18] sm:$0xff]
      %v6440 = vld [vmem:[%s6435 + $0x20] sm:$0xff]
      %v6441 = vld [vmem:[%s6435 + $0x28] sm:$0xff]
      %v6442 = vld [vmem:[%s6435 + $0x30] sm:$0xff]
      %v6443 = vld [vmem:[%s6435 + $0x38] sm:$0xff]
      %v6444 = vld [vmem:[%s6435 + $0x40] sm:$0xff]
      %v6445 = vld [vmem:[%s6435 + $0x48] sm:$0xff]
      %v6446 = vld [vmem:[%s6435 + $0x50] sm:$0xff]
      %v6447 = vld [vmem:[%s6435 + $0x58] sm:$0xff]
      %v6448 = vld [vmem:[%s6435 + $0x60] sm:$0xff]
      %v6449 = vld [vmem:[%s6435 + $0x68] sm:$0xff]
      %v6450 = vld [vmem:[%s6435 + $0x70] sm:$0xff]
      %v6451 = vld [vmem:[%s6435 + $0x78] sm:$0xff]
      %v6452 = vld [vmem:[%s6435 + $0x80] sm:$0xff]
      %v6453 = vld [vmem:[%s6435 + $0x88] sm:$0xff]
      %v6454 = vld [vmem:[%s6435 + $0x90] sm:$0xff]
      %v6455 = vld [vmem:[%s6435 + $0x98] sm:$0xff]
      %v6456 = vld [vmem:[%s6435 + $0xa0] sm:$0xff]
      %v6457 = vld [vmem:[%s6435 + $0xa8] sm:$0xff]
      %v6458 = vld [vmem:[%s6435 + $0xb0] sm:$0xff]
      %v6459 = vld [vmem:[%s6435 + $0xb8] sm:$0xff]
      %v6460 = vld [vmem:[%s6435 + $0xc0] sm:$0xff]
      %v6461 = vld [vmem:[%s6435 + $0xc8] sm:$0xff]
      %v6462 = vld [vmem:[%s6435 + $0xd0] sm:$0xff]
      %v6463 = vld [vmem:[%s6435 + $0xd8] sm:$0xff]
      %v6464 = vld [vmem:[%s6435 + $0xe0] sm:$0xff]
      %v6465 = vld [vmem:[%s6435 + $0xe8] sm:$0xff]
      %v6466 = vld [vmem:[%s6435 + $0xf0] sm:$0xff]
      %v6467 = vld [vmem:[%s6435 + $0xf8] sm:$0xff]
      %v6468 = vld [vmem:[%s6435 + $0x100] sm:$0xff]
      %v6469 = vld [vmem:[%s6435 + $0x108] sm:$0xff]
      %v6470 = vld [vmem:[%s6435 + $0x110] sm:$0xff]
      %v6471 = vld [vmem:[%s6435 + $0x118] sm:$0xff]
      %v6472 = vld [vmem:[%s6435 + $0x120] sm:$0xff]
      %v6473 = vld [vmem:[%s6435 + $0x128] sm:$0xff]
      %v6474 = vld [vmem:[%s6435 + $0x130] sm:$0xff]
      %v6475 = vld [vmem:[%s6435 + $0x138] sm:$0xff]
      %v6476 = vld [vmem:[%s6435 + $0x140] sm:$0xff]
      %v6477 = vld [vmem:[%s6435 + $0x148] sm:$0xff]
      %v6478 = vld [vmem:[%s6435 + $0x150] sm:$0xff]
      %v6479 = vld [vmem:[%s6435 + $0x158] sm:$0xff]
      %v6480 = vld [vmem:[%s6435 + $0x160] sm:$0xff]
      %v6481 = vld [vmem:[%s6435 + $0x168] sm:$0xff]
      %v6482 = vld [vmem:[%s6435 + $0x170] sm:$0xff]
      %v6483 = vld [vmem:[%s6435 + $0x178] sm:$0xff]
      %v6484 = vld [vmem:[%s6435 + $0x180] sm:$0xff]
      %v6485 = vld [vmem:[%s6435 + $0x188] sm:$0xff]
      %v6486 = vld [vmem:[%s6435 + $0x190] sm:$0xff]
      %v6487 = vld [vmem:[%s6435 + $0x198] sm:$0xff]
      %v6488 = vld [vmem:[%s6435 + $0x1a0] sm:$0xff]
      %v6489 = vld [vmem:[%s6435 + $0x1a8] sm:$0xff]
      %v6490 = vld [vmem:[%s6435 + $0x1b0] sm:$0xff]
      %v6491 = vld [vmem:[%s6435 + $0x1b8] sm:$0xff]
      %v6492 = vld [vmem:[%s6435 + $0x1c0] sm:$0xff]
      %v6493 = vld [vmem:[%s6435 + $0x1c8] sm:$0xff]
      %v6494 = vld [vmem:[%s6435 + $0x1d0] sm:$0xff]
      %v6495 = vld [vmem:[%s6435 + $0x1d8] sm:$0xff]
      %v6496 = vld [vmem:[%s6435 + $0x1e0] sm:$0xff]
      %v6497 = vld [vmem:[%s6435 + $0x1e8] sm:$0xff]
      %v6498 = vld [vmem:[%s6435 + $0x1f0] sm:$0xff]
      %v6499 = vld [vmem:[%s6435 + $0x1f8] sm:$0xff]
      %v6500 = vld [vmem:[%s6435 + $0x200] sm:$0xff]
      %v6501 = vld [vmem:[%s6435 + $0x208] sm:$0xff]
      %v6502 = vld [vmem:[%s6435 + $0x210] sm:$0xff]
      %v6503 = vld [vmem:[%s6435 + $0x218] sm:$0xff]
      %v6504 = vld [vmem:[%s6435 + $0x220] sm:$0xff]
      %v6505 = vld [vmem:[%s6435 + $0x228] sm:$0xff]
      %v6506 = vld [vmem:[%s6435 + $0x230] sm:$0xff]
      %v6507 = vld [vmem:[%s6435 + $0x238] sm:$0xff]
      %v6508 = vld [vmem:[%s6435 + $0x240] sm:$0xff]
      %v6509 = vld [vmem:[%s6435 + $0x248] sm:$0xff]
      %v6510 = vld [vmem:[%s6435 + $0x250] sm:$0xff]
      %v6511 = vld [vmem:[%s6435 + $0x258] sm:$0xff]
      %v6512 = vld [vmem:[%s6435 + $0x260] sm:$0xff]
      %v6513 = vld [vmem:[%s6435 + $0x268] sm:$0xff]
      %v6514 = vld [vmem:[%s6435 + $0x270] sm:$0xff]
      %v6515 = vld [vmem:[%s6435 + $0x278] sm:$0xff]
      %v6516 = vld [vmem:[%s6435 + $0x280] sm:$0xff]
      %v6517 = vld [vmem:[%s6435 + $0x288] sm:$0xff]
      %v6518 = vld [vmem:[%s6435 + $0x290] sm:$0xff]
      %v6519 = vld [vmem:[%s6435 + $0x298] sm:$0xff]
      %v6520 = vld [vmem:[%s6435 + $0x2a0] sm:$0xff]
      %v6521 = vld [vmem:[%s6435 + $0x2a8] sm:$0xff]
      %v6522 = vld [vmem:[%s6435 + $0x2b0] sm:$0xff]
      %v6523 = vld [vmem:[%s6435 + $0x2b8] sm:$0xff]
      %v6524 = vld [vmem:[%s6435 + $0x2c0] sm:$0xff]
      %v6525 = vld [vmem:[%s6435 + $0x2c8] sm:$0xff]
      %v6526 = vld [vmem:[%s6435 + $0x2d0] sm:$0xff]
      %v6527 = vld [vmem:[%s6435 + $0x2d8] sm:$0xff]
      %v6528 = vld [vmem:[%s6435 + $0x2e0] sm:$0xff]
      %v6529 = vld [vmem:[%s6435 + $0x2e8] sm:$0xff]
      %v6530 = vld [vmem:[%s6435 + $0x2f0] sm:$0xff]
      %v6531 = vld [vmem:[%s6435 + $0x2f8] sm:$0xff]
      %v6532 = vld [vmem:[%s6435 + $0x300] sm:$0xff]
      %v6533 = vld [vmem:[%s6435 + $0x308] sm:$0xff]
      %v6534 = vld [vmem:[%s6435 + $0x310] sm:$0xff]
      %v6535 = vld [vmem:[%s6435 + $0x318] sm:$0xff]
      %vm6536 = vsmask.f32 7424
      %v6538 = vshrl.u32 %v6286, 16
      %v6540 = vshll.u32 %v6286, 16
      %v6542 = vrot.slane %v6540, 1
      %v6543 = vor.u32 %v6538, %v6542
      %v6545 = vshll.u32 %v6293, 16
      %v6547 = vrot.slane %v6545, 1
      %v6548 = vsel %vm6536, %v6543, %v6547
      %v6550 = vshrl.u32 %v6287, 16
      %v6552 = vshll.u32 %v6287, 16
      %v6554 = vrot.slane %v6552, 1
      %v6555 = vor.u32 %v6550, %v6554
      %v6557 = vshll.u32 %v6294, 16
      %v6559 = vrot.slane %v6557, 1
      %v6560 = vsel %vm6536, %v6555, %v6559
      %v6562 = vshrl.u32 %v6288, 16
      %v6564 = vshll.u32 %v6288, 16
      %v6566 = vrot.slane %v6564, 1
      %v6567 = vor.u32 %v6562, %v6566
      %v6569 = vshll.u32 %v6295, 16
      %v6571 = vrot.slane %v6569, 1
      %v6572 = vsel %vm6536, %v6567, %v6571
      %v6574 = vshrl.u32 %v6289, 16
      %v6576 = vshll.u32 %v6289, 16
      %v6578 = vrot.slane %v6576, 1
      %v6579 = vor.u32 %v6574, %v6578
      %v6581 = vshll.u32 %v6296, 16
      %v6583 = vrot.slane %v6581, 1
      %v6584 = vsel %vm6536, %v6579, %v6583
      %v6586 = vshrl.u32 %v6290, 16
      %v6588 = vshll.u32 %v6290, 16
      %v6590 = vrot.slane %v6588, 1
      %v6591 = vor.u32 %v6586, %v6590
      %v6593 = vshll.u32 %v6297, 16
      %v6595 = vrot.slane %v6593, 1
      %v6596 = vsel %vm6536, %v6591, %v6595
      %v6598 = vshrl.u32 %v6291, 16
      %v6600 = vshll.u32 %v6291, 16
      %v6602 = vrot.slane %v6600, 1
      %v6603 = vor.u32 %v6598, %v6602
      %v6605 = vshll.u32 %v6298, 16
      %v6607 = vrot.slane %v6605, 1
      %v6608 = vsel %vm6536, %v6603, %v6607
      %v6610 = vshrl.u32 %v6292, 16
      %v6612 = vshll.u32 %v6292, 16
      %v6614 = vrot.slane %v6612, 1
      %v6615 = vor.u32 %v6610, %v6614
      %v6617 = vshll.u32 %v6299, 16
      %v6619 = vrot.slane %v6617, 1
      %v6620 = vsel %vm6536, %v6615, %v6619
      %v6621 = vshrl.u32 %v6293, 16
      %v6623 = vor.u32 %v6621, %v6547
      %v6625 = vshll.u32 %v6300, 16
      %v6627 = vrot.slane %v6625, 1
      %v6628 = vsel %vm6536, %v6623, %v6627
      %v6629 = vshrl.u32 %v6294, 16
      %v6631 = vor.u32 %v6629, %v6559
      %v6633 = vshll.u32 %v6301, 16
      %v6635 = vrot.slane %v6633, 1
      %v6636 = vsel %vm6536, %v6631, %v6635
      %v6637 = vshrl.u32 %v6295, 16
      %v6639 = vor.u32 %v6637, %v6571
      %v6641 = vshll.u32 %v6302, 16
      %v6643 = vrot.slane %v6641, 1
      %v6644 = vsel %vm6536, %v6639, %v6643
      %v6645 = vshrl.u32 %v6296, 16
      %v6647 = vor.u32 %v6645, %v6583
      %v6649 = vshll.u32 %v6303, 16
      %v6651 = vrot.slane %v6649, 1
      %v6652 = vsel %vm6536, %v6647, %v6651
      %v6653 = vshrl.u32 %v6297, 16
      %v6655 = vor.u32 %v6653, %v6595
      %v6657 = vshll.u32 %v6304, 16
      %v6659 = vrot.slane %v6657, 1
      %v6660 = vsel %vm6536, %v6655, %v6659
      %v6661 = vshrl.u32 %v6298, 16
      %v6663 = vor.u32 %v6661, %v6607
      %v6665 = vshll.u32 %v6305, 16
      %v6667 = vrot.slane %v6665, 1
      %v6668 = vsel %vm6536, %v6663, %v6667
      %v6669 = vshrl.u32 %v6299, 16
      %v6671 = vor.u32 %v6669, %v6619
      %v6673 = vshll.u32 %v6306, 16
      %v6675 = vrot.slane %v6673, 1
      %v6676 = vsel %vm6536, %v6671, %v6675
      %v6677 = vshrl.u32 %v6300, 16
      %v6679 = vor.u32 %v6677, %v6627
      %v6681 = vshll.u32 %v6307, 16
      %v6683 = vrot.slane %v6681, 1
      %v6684 = vsel %vm6536, %v6679, %v6683
      %v6685 = vshrl.u32 %v6301, 16
      %v6687 = vor.u32 %v6685, %v6635
      %v6689 = vshll.u32 %v6308, 16
      %v6691 = vrot.slane %v6689, 1
      %v6692 = vsel %vm6536, %v6687, %v6691
      %v6693 = vshrl.u32 %v6302, 16
      %v6695 = vor.u32 %v6693, %v6643
      %v6697 = vshll.u32 %v6309, 16
      %v6699 = vrot.slane %v6697, 1
      %v6700 = vsel %vm6536, %v6695, %v6699
      %v6701 = vshrl.u32 %v6303, 16
      %v6703 = vor.u32 %v6701, %v6651
      %v6705 = vshll.u32 %v6310, 16
      %v6707 = vrot.slane %v6705, 1
      %v6708 = vsel %vm6536, %v6703, %v6707
      %v6709 = vshrl.u32 %v6304, 16
      %v6711 = vor.u32 %v6709, %v6659
      %v6713 = vshll.u32 %v6311, 16
      %v6715 = vrot.slane %v6713, 1
      %v6716 = vsel %vm6536, %v6711, %v6715
      %v6717 = vshrl.u32 %v6305, 16
      %v6719 = vor.u32 %v6717, %v6667
      %v6721 = vshll.u32 %v6312, 16
      %v6723 = vrot.slane %v6721, 1
      %v6724 = vsel %vm6536, %v6719, %v6723
      %v6725 = vshrl.u32 %v6306, 16
      %v6727 = vor.u32 %v6725, %v6675
      %v6729 = vshll.u32 %v6313, 16
      %v6731 = vrot.slane %v6729, 1
      %v6732 = vsel %vm6536, %v6727, %v6731
      %v6733 = vshrl.u32 %v6307, 16
      %v6735 = vor.u32 %v6733, %v6683
      %v6737 = vshll.u32 %v6314, 16
      %v6739 = vrot.slane %v6737, 1
      %v6740 = vsel %vm6536, %v6735, %v6739
      %v6741 = vshrl.u32 %v6308, 16
      %v6743 = vor.u32 %v6741, %v6691
      %v6745 = vshll.u32 %v6315, 16
      %v6747 = vrot.slane %v6745, 1
      %v6748 = vsel %vm6536, %v6743, %v6747
      %v6749 = vshrl.u32 %v6309, 16
      %v6751 = vor.u32 %v6749, %v6699
      %v6753 = vshll.u32 %v6316, 16
      %v6755 = vrot.slane %v6753, 1
      %v6756 = vsel %vm6536, %v6751, %v6755
      %v6757 = vshrl.u32 %v6310, 16
      %v6759 = vor.u32 %v6757, %v6707
      %v6761 = vshll.u32 %v6317, 16
      %v6763 = vrot.slane %v6761, 1
      %v6764 = vsel %vm6536, %v6759, %v6763
      %v6765 = vshrl.u32 %v6311, 16
      %v6767 = vor.u32 %v6765, %v6715
      %v6769 = vshll.u32 %v6318, 16
      %v6771 = vrot.slane %v6769, 1
      %v6772 = vsel %vm6536, %v6767, %v6771
      %v6773 = vshrl.u32 %v6312, 16
      %v6775 = vor.u32 %v6773, %v6723
      %v6777 = vshll.u32 %v6319, 16
      %v6779 = vrot.slane %v6777, 1
      %v6780 = vsel %vm6536, %v6775, %v6779
      %v6781 = vshrl.u32 %v6313, 16
      %v6783 = vor.u32 %v6781, %v6731
      %v6785 = vshll.u32 %v6320, 16
      %v6787 = vrot.slane %v6785, 1
      %v6788 = vsel %vm6536, %v6783, %v6787
      %v6789 = vshrl.u32 %v6314, 16
      %v6791 = vor.u32 %v6789, %v6739
      %v6793 = vshll.u32 %v6321, 16
      %v6795 = vrot.slane %v6793, 1
      %v6796 = vsel %vm6536, %v6791, %v6795
      %v6797 = vshrl.u32 %v6315, 16
      %v6799 = vor.u32 %v6797, %v6747
      %v6801 = vshll.u32 %v6322, 16
      %v6803 = vrot.slane %v6801, 1
      %v6804 = vsel %vm6536, %v6799, %v6803
      %v6805 = vshrl.u32 %v6316, 16
      %v6807 = vor.u32 %v6805, %v6755
      %v6809 = vshll.u32 %v6323, 16
      %v6811 = vrot.slane %v6809, 1
      %v6812 = vsel %vm6536, %v6807, %v6811
      %v6813 = vshrl.u32 %v6317, 16
      %v6815 = vor.u32 %v6813, %v6763
      %v6817 = vshll.u32 %v6324, 16
      %v6819 = vrot.slane %v6817, 1
      %v6820 = vsel %vm6536, %v6815, %v6819
      %v6821 = vshrl.u32 %v6318, 16
      %v6823 = vor.u32 %v6821, %v6771
      %v6825 = vshll.u32 %v6325, 16
      %v6827 = vrot.slane %v6825, 1
      %v6828 = vsel %vm6536, %v6823, %v6827
      %v6829 = vshrl.u32 %v6319, 16
      %v6831 = vor.u32 %v6829, %v6779
      %v6833 = vshll.u32 %v6326, 16
      %v6835 = vrot.slane %v6833, 1
      %v6836 = vsel %vm6536, %v6831, %v6835
      %v6837 = vshrl.u32 %v6320, 16
      %v6839 = vor.u32 %v6837, %v6787
      %v6841 = vshll.u32 %v6327, 16
      %v6843 = vrot.slane %v6841, 1
      %v6844 = vsel %vm6536, %v6839, %v6843
      %v6845 = vshrl.u32 %v6321, 16
      %v6847 = vor.u32 %v6845, %v6795
      %v6849 = vshll.u32 %v6328, 16
      %v6851 = vrot.slane %v6849, 1
      %v6852 = vsel %vm6536, %v6847, %v6851
      %v6853 = vshrl.u32 %v6322, 16
      %v6855 = vor.u32 %v6853, %v6803
      %v6857 = vshll.u32 %v6329, 16
      %v6859 = vrot.slane %v6857, 1
      %v6860 = vsel %vm6536, %v6855, %v6859
      %v6861 = vshrl.u32 %v6323, 16
      %v6863 = vor.u32 %v6861, %v6811
      %v6865 = vshll.u32 %v6330, 16
      %v6867 = vrot.slane %v6865, 1
      %v6868 = vsel %vm6536, %v6863, %v6867
      %v6869 = vshrl.u32 %v6324, 16
      %v6871 = vor.u32 %v6869, %v6819
      %v6873 = vshll.u32 %v6331, 16
      %v6875 = vrot.slane %v6873, 1
      %v6876 = vsel %vm6536, %v6871, %v6875
      %v6877 = vshrl.u32 %v6325, 16
      %v6879 = vor.u32 %v6877, %v6827
      %v6881 = vshll.u32 %v6332, 16
      %v6883 = vrot.slane %v6881, 1
      %v6884 = vsel %vm6536, %v6879, %v6883
      %v6885 = vshrl.u32 %v6326, 16
      %v6887 = vor.u32 %v6885, %v6835
      %v6889 = vshll.u32 %v6333, 16
      %v6891 = vrot.slane %v6889, 1
      %v6892 = vsel %vm6536, %v6887, %v6891
      %v6893 = vshrl.u32 %v6327, 16
      %v6895 = vor.u32 %v6893, %v6843
      %v6897 = vshll.u32 %v6334, 16
      %v6899 = vrot.slane %v6897, 1
      %v6900 = vsel %vm6536, %v6895, %v6899
      %v6901 = vshrl.u32 %v6328, 16
      %v6903 = vor.u32 %v6901, %v6851
      %v6904 = vshrl.u32 %v6329, 16
      %v6906 = vor.u32 %v6904, %v6859
      %v6907 = vshrl.u32 %v6330, 16
      %v6909 = vor.u32 %v6907, %v6867
      %v6910 = vshrl.u32 %v6331, 16
      %v6912 = vor.u32 %v6910, %v6875
      %v6913 = vshrl.u32 %v6332, 16
      %v6915 = vor.u32 %v6913, %v6883
      %v6916 = vshrl.u32 %v6333, 16
      %v6918 = vor.u32 %v6916, %v6891
      %v6919 = vshrl.u32 %v6334, 16
      %v6921 = vor.u32 %v6919, %v6899
      %v7064 = vunpack.c.l.b16 %v6436
      %v7065 = vunpack.c.h.b16 %v6436
      %v7066 = vunpack.c.l.b16 %v6437
      %v7067 = vunpack.c.h.b16 %v6437
      %v7068 = vunpack.c.l.b16 %v6438
      %v7069 = vunpack.c.h.b16 %v6438
      %v7070 = vunpack.c.l.b16 %v6439
      %v7071 = vunpack.c.h.b16 %v6439
      %v7072 = vunpack.c.l.b16 %v6440
      %v7073 = vunpack.c.h.b16 %v6440
      %v7074 = vunpack.c.l.b16 %v6441
      %v7075 = vunpack.c.h.b16 %v6441
      %v7076 = vunpack.c.l.b16 %v6442
      %v7077 = vunpack.c.h.b16 %v6442
      %v7078 = vunpack.c.l.b16 %v6443
      %v7079 = vunpack.c.h.b16 %v6443
      %v7080 = vunpack.c.l.b16 %v6444
      %v7081 = vunpack.c.h.b16 %v6444
      %v7082 = vunpack.c.l.b16 %v6445
      %v7083 = vunpack.c.h.b16 %v6445
      %v7084 = vunpack.c.l.b16 %v6446
      %v7085 = vunpack.c.h.b16 %v6446
      %v7086 = vunpack.c.l.b16 %v6447
      %v7087 = vunpack.c.h.b16 %v6447
      %v7088 = vunpack.c.l.b16 %v6448
      %v7089 = vunpack.c.h.b16 %v6448
      %v7090 = vunpack.c.l.b16 %v6449
      %v7091 = vunpack.c.h.b16 %v6449
      %v7092 = vunpack.c.l.b16 %v6450
      %v7093 = vunpack.c.h.b16 %v6450
      %v7094 = vunpack.c.l.b16 %v6451
      %v7095 = vunpack.c.h.b16 %v6451
      %v7096 = vunpack.c.l.b16 %v6452
      %v7097 = vunpack.c.h.b16 %v6452
      %v7098 = vunpack.c.l.b16 %v6453
      %v7099 = vunpack.c.h.b16 %v6453
      %v7100 = vunpack.c.l.b16 %v6454
      %v7101 = vunpack.c.h.b16 %v6454
      %v7102 = vunpack.c.l.b16 %v6455
      %v7103 = vunpack.c.h.b16 %v6455
      %v7104 = vunpack.c.l.b16 %v6456
      %v7105 = vunpack.c.h.b16 %v6456
      %v7106 = vunpack.c.l.b16 %v6457
      %v7107 = vunpack.c.h.b16 %v6457
      %v7108 = vunpack.c.l.b16 %v6458
      %v7109 = vunpack.c.h.b16 %v6458
      %v7110 = vunpack.c.l.b16 %v6459
      %v7111 = vunpack.c.h.b16 %v6459
      %v7112 = vunpack.c.l.b16 %v6460
      %v7113 = vunpack.c.h.b16 %v6460
      %v7114 = vunpack.c.l.b16 %v6461
      %v7115 = vunpack.c.h.b16 %v6461
      %v7116 = vunpack.c.l.b16 %v6462
      %v7117 = vunpack.c.h.b16 %v6462
      %v7118 = vunpack.c.l.b16 %v6463
      %v7119 = vunpack.c.h.b16 %v6463
      %v7120 = vunpack.c.l.b16 %v6464
      %v7121 = vunpack.c.h.b16 %v6464
      %v7122 = vunpack.c.l.b16 %v6465
      %v7123 = vunpack.c.h.b16 %v6465
      %v7124 = vunpack.c.l.b16 %v6466
      %v7125 = vunpack.c.h.b16 %v6466
      %v7126 = vunpack.c.l.b16 %v6467
      %v7127 = vunpack.c.h.b16 %v6467
      %v7128 = vunpack.c.l.b16 %v6468
      %v7129 = vunpack.c.h.b16 %v6468
      %v7130 = vunpack.c.l.b16 %v6469
      %v7131 = vunpack.c.h.b16 %v6469
      %v7132 = vunpack.c.l.b16 %v6470
      %v7133 = vunpack.c.h.b16 %v6470
      %v7134 = vunpack.c.l.b16 %v6471
      %v7135 = vunpack.c.h.b16 %v6471
      %v7136 = vunpack.c.l.b16 %v6472
      %v7137 = vunpack.c.h.b16 %v6472
      %v7138 = vunpack.c.l.b16 %v6473
      %v7139 = vunpack.c.h.b16 %v6473
      %v7140 = vunpack.c.l.b16 %v6474
      %v7141 = vunpack.c.h.b16 %v6474
      %v7142 = vunpack.c.l.b16 %v6475
      %v7143 = vunpack.c.h.b16 %v6475
      %v7144 = vunpack.c.l.b16 %v6476
      %v7145 = vunpack.c.h.b16 %v6476
      %v7146 = vunpack.c.l.b16 %v6477
      %v7147 = vunpack.c.h.b16 %v6477
      %v7148 = vunpack.c.l.b16 %v6478
      %v7149 = vunpack.c.h.b16 %v6478
      %v7150 = vunpack.c.l.b16 %v6479
      %v7151 = vunpack.c.h.b16 %v6479
      %v7152 = vunpack.c.l.b16 %v6480
      %v7153 = vunpack.c.h.b16 %v6480
      %v7154 = vunpack.c.l.b16 %v6481
      %v7155 = vunpack.c.h.b16 %v6481
      %v7156 = vunpack.c.l.b16 %v6482
      %v7157 = vunpack.c.h.b16 %v6482
      %v7158 = vunpack.c.l.b16 %v6483
      %v7159 = vunpack.c.h.b16 %v6483
      %v7160 = vunpack.c.l.b16 %v6484
      %v7161 = vunpack.c.h.b16 %v6484
      %v7162 = vunpack.c.l.b16 %v6485
      %v7163 = vunpack.c.h.b16 %v6485
      %v7164 = vunpack.c.l.b16 %v6486
      %v7165 = vunpack.c.h.b16 %v6486
      %v7166 = vunpack.c.l.b16 %v6487
      %v7167 = vunpack.c.h.b16 %v6487
      %v7168 = vunpack.c.l.b16 %v6488
      %v7169 = vunpack.c.h.b16 %v6488
      %v7170 = vunpack.c.l.b16 %v6489
      %v7171 = vunpack.c.h.b16 %v6489
      %v7172 = vunpack.c.l.b16 %v6490
      %v7173 = vunpack.c.h.b16 %v6490
      %v7174 = vunpack.c.l.b16 %v6491
      %v7175 = vunpack.c.h.b16 %v6491
      %v7176 = vunpack.c.l.b16 %v6492
      %v7177 = vunpack.c.h.b16 %v6492
      %v7178 = vunpack.c.l.b16 %v6493
      %v7179 = vunpack.c.h.b16 %v6493
      %v7180 = vunpack.c.l.b16 %v6494
      %v7181 = vunpack.c.h.b16 %v6494
      %v7182 = vunpack.c.l.b16 %v6495
      %v7183 = vunpack.c.h.b16 %v6495
      %v7184 = vunpack.c.l.b16 %v6496
      %v7185 = vunpack.c.h.b16 %v6496
      %v7186 = vunpack.c.l.b16 %v6497
      %v7187 = vunpack.c.h.b16 %v6497
      %v7188 = vunpack.c.l.b16 %v6498
      %v7189 = vunpack.c.h.b16 %v6498
      %v7190 = vunpack.c.l.b16 %v6499
      %v7191 = vunpack.c.h.b16 %v6499
      %v7192 = vunpack.c.l.b16 %v6500
      %v7193 = vunpack.c.h.b16 %v6500
      %v7194 = vunpack.c.l.b16 %v6501
      %v7195 = vunpack.c.h.b16 %v6501
      %v7196 = vunpack.c.l.b16 %v6502
      %v7197 = vunpack.c.h.b16 %v6502
      %v7198 = vunpack.c.l.b16 %v6503
      %v7199 = vunpack.c.h.b16 %v6503
      %v7200 = vunpack.c.l.b16 %v6504
      %v7201 = vunpack.c.h.b16 %v6504
      %v7202 = vunpack.c.l.b16 %v6505
      %v7203 = vunpack.c.h.b16 %v6505
      %v7204 = vunpack.c.l.b16 %v6506
      %v7205 = vunpack.c.h.b16 %v6506
      %v7206 = vunpack.c.l.b16 %v6507
      %v7207 = vunpack.c.h.b16 %v6507
      %v7208 = vunpack.c.l.b16 %v6508
      %v7209 = vunpack.c.h.b16 %v6508
      %v7210 = vunpack.c.l.b16 %v6509
      %v7211 = vunpack.c.h.b16 %v6509
      %v7212 = vunpack.c.l.b16 %v6510
      %v7213 = vunpack.c.h.b16 %v6510
      %v7214 = vunpack.c.l.b16 %v6511
      %v7215 = vunpack.c.h.b16 %v6511
      %v7216 = vunpack.c.l.b16 %v6512
      %v7217 = vunpack.c.h.b16 %v6512
      %v7218 = vunpack.c.l.b16 %v6513
      %v7219 = vunpack.c.h.b16 %v6513
      %v7220 = vunpack.c.l.b16 %v6514
      %v7221 = vunpack.c.h.b16 %v6514
      %v7222 = vunpack.c.l.b16 %v6515
      %v7223 = vunpack.c.h.b16 %v6515
      %v7224 = vunpack.c.l.b16 %v6516
      %v7225 = vunpack.c.h.b16 %v6516
      %v7226 = vunpack.c.l.b16 %v6517
      %v7227 = vunpack.c.h.b16 %v6517
      %v7228 = vunpack.c.l.b16 %v6518
      %v7229 = vunpack.c.h.b16 %v6518
      %v7230 = vunpack.c.l.b16 %v6519
      %v7231 = vunpack.c.h.b16 %v6519
      %v7232 = vunpack.c.l.b16 %v6520
      %v7233 = vunpack.c.h.b16 %v6520
      %v7234 = vunpack.c.l.b16 %v6521
      %v7235 = vunpack.c.h.b16 %v6521
      %v7236 = vunpack.c.l.b16 %v6522
      %v7237 = vunpack.c.h.b16 %v6522
      %v7238 = vunpack.c.l.b16 %v6523
      %v7239 = vunpack.c.h.b16 %v6523
      %v7240 = vunpack.c.l.b16 %v6524
      %v7241 = vunpack.c.h.b16 %v6524
      %v7242 = vunpack.c.l.b16 %v6525
      %v7243 = vunpack.c.h.b16 %v6525
      %v7244 = vunpack.c.l.b16 %v6526
      %v7245 = vunpack.c.h.b16 %v6526
      %v7246 = vunpack.c.l.b16 %v6527
      %v7247 = vunpack.c.h.b16 %v6527
      %v7248 = vunpack.c.l.b16 %v6528
      %v7249 = vunpack.c.h.b16 %v6528
      %v7250 = vunpack.c.l.b16 %v6529
      %v7251 = vunpack.c.h.b16 %v6529
      %v7252 = vunpack.c.l.b16 %v6530
      %v7253 = vunpack.c.h.b16 %v6530
      %v7254 = vunpack.c.l.b16 %v6531
      %v7255 = vunpack.c.h.b16 %v6531
      %v7256 = vunpack.c.l.b16 %v6532
      %v7257 = vunpack.c.h.b16 %v6532
      %v7258 = vunpack.c.l.b16 %v6533
      %v7259 = vunpack.c.h.b16 %v6533
      %v7260 = vunpack.c.l.b16 %v6534
      %v7261 = vunpack.c.h.b16 %v6534
      %v7262 = vunpack.c.l.b16 %v6535
      %v7263 = vunpack.c.h.b16 %v6535
      %v7264 = vpack.c.b16 %v7066, %v7064
      %v7265 = vpack.c.b16 %v7067, %v7065
      %v7266 = vpack.c.b16 %v7070, %v7068
      %v7267 = vpack.c.b16 %v7071, %v7069
      %v7268 = vpack.c.b16 %v7074, %v7072
      %v7269 = vpack.c.b16 %v7075, %v7073
      %v7270 = vpack.c.b16 %v7078, %v7076
      %v7271 = vpack.c.b16 %v7079, %v7077
      %v7272 = vpack.c.b16 %v7082, %v7080
      %v7273 = vpack.c.b16 %v7083, %v7081
      %v7274 = vpack.c.b16 %v7086, %v7084
      %v7275 = vpack.c.b16 %v7087, %v7085
      %v7276 = vpack.c.b16 %v7090, %v7088
      %v7277 = vpack.c.b16 %v7091, %v7089
      %v7278 = vpack.c.b16 %v7094, %v7092
      %v7279 = vpack.c.b16 %v7095, %v7093
      %v7280 = vpack.c.b16 %v7098, %v7096
      %v7281 = vpack.c.b16 %v7099, %v7097
      %v7282 = vpack.c.b16 %v7102, %v7100
      %v7283 = vpack.c.b16 %v7103, %v7101
      %v7284 = vpack.c.b16 %v7106, %v7104
      %v7285 = vpack.c.b16 %v7107, %v7105
      %v7286 = vpack.c.b16 %v7110, %v7108
      %v7287 = vpack.c.b16 %v7111, %v7109
      %v7288 = vpack.c.b16 %v7114, %v7112
      %v7289 = vpack.c.b16 %v7115, %v7113
      %v7290 = vpack.c.b16 %v7118, %v7116
      %v7291 = vpack.c.b16 %v7119, %v7117
      %v7292 = vpack.c.b16 %v7122, %v7120
      %v7293 = vpack.c.b16 %v7123, %v7121
      %v7294 = vpack.c.b16 %v7126, %v7124
      %v7295 = vpack.c.b16 %v7127, %v7125
      %v7296 = vpack.c.b16 %v7130, %v7128
      %v7297 = vpack.c.b16 %v7131, %v7129
      %v7298 = vpack.c.b16 %v7134, %v7132
      %v7299 = vpack.c.b16 %v7135, %v7133
      %v7300 = vpack.c.b16 %v7138, %v7136
      %v7301 = vpack.c.b16 %v7139, %v7137
      %v7302 = vpack.c.b16 %v7142, %v7140
      %v7303 = vpack.c.b16 %v7143, %v7141
      %v7304 = vpack.c.b16 %v7146, %v7144
      %v7305 = vpack.c.b16 %v7147, %v7145
      %v7306 = vpack.c.b16 %v7150, %v7148
      %v7307 = vpack.c.b16 %v7151, %v7149
      %v7308 = vpack.c.b16 %v7154, %v7152
      %v7309 = vpack.c.b16 %v7155, %v7153
      %v7310 = vpack.c.b16 %v7158, %v7156
      %v7311 = vpack.c.b16 %v7159, %v7157
      %v7312 = vpack.c.b16 %v7162, %v7160
      %v7313 = vpack.c.b16 %v7163, %v7161
      %v7314 = vpack.c.b16 %v7166, %v7164
      %v7315 = vpack.c.b16 %v7167, %v7165
      %v7316 = vpack.c.b16 %v7170, %v7168
      %v7317 = vpack.c.b16 %v7171, %v7169
      %v7318 = vpack.c.b16 %v7174, %v7172
      %v7319 = vpack.c.b16 %v7175, %v7173
      %v7320 = vpack.c.b16 %v7178, %v7176
      %v7321 = vpack.c.b16 %v7179, %v7177
      %v7322 = vpack.c.b16 %v7182, %v7180
      %v7323 = vpack.c.b16 %v7183, %v7181
      %v7324 = vpack.c.b16 %v7186, %v7184
      %v7325 = vpack.c.b16 %v7187, %v7185
      %v7326 = vpack.c.b16 %v7190, %v7188
      %v7327 = vpack.c.b16 %v7191, %v7189
      %v7328 = vpack.c.b16 %v7194, %v7192
      %v7329 = vpack.c.b16 %v7195, %v7193
      %v7330 = vpack.c.b16 %v7198, %v7196
      %v7331 = vpack.c.b16 %v7199, %v7197
      %v7332 = vpack.c.b16 %v7202, %v7200
      %v7333 = vpack.c.b16 %v7203, %v7201
      %v7334 = vpack.c.b16 %v7206, %v7204
      %v7335 = vpack.c.b16 %v7207, %v7205
      %v7336 = vpack.c.b16 %v7210, %v7208
      %v7337 = vpack.c.b16 %v7211, %v7209
      %v7338 = vpack.c.b16 %v7214, %v7212
      %v7339 = vpack.c.b16 %v7215, %v7213
      %v7340 = vpack.c.b16 %v7218, %v7216
      %v7341 = vpack.c.b16 %v7219, %v7217
      %v7342 = vpack.c.b16 %v7222, %v7220
      %v7343 = vpack.c.b16 %v7223, %v7221
      %v7344 = vpack.c.b16 %v7226, %v7224
      %v7345 = vpack.c.b16 %v7227, %v7225
      %v7346 = vpack.c.b16 %v7230, %v7228
      %v7347 = vpack.c.b16 %v7231, %v7229
      %v7348 = vpack.c.b16 %v7234, %v7232
      %v7349 = vpack.c.b16 %v7235, %v7233
      %v7350 = vpack.c.b16 %v7238, %v7236
      %v7351 = vpack.c.b16 %v7239, %v7237
      %v7352 = vpack.c.b16 %v7242, %v7240
      %v7353 = vpack.c.b16 %v7243, %v7241
      %v7354 = vpack.c.b16 %v7246, %v7244
      %v7355 = vpack.c.b16 %v7247, %v7245
      %v7356 = vpack.c.b16 %v7250, %v7248
      %v7357 = vpack.c.b16 %v7251, %v7249
      %v7358 = vpack.c.b16 %v7254, %v7252
      %v7359 = vpack.c.b16 %v7255, %v7253
      %v7360 = vpack.c.b16 %v7258, %v7256
      %v7361 = vpack.c.b16 %v7259, %v7257
      %v7362 = vpack.c.b16 %v7262, %v7260
      %v7363 = vpack.c.b16 %v7263, %v7261
      %vm7464 = vcmask 261120
      %v7466 = vsel %vm7464, %v6620, 0
      %v7469 = vsel %vm7464, %v6676, 0
      %v7472 = vsel %vm7464, %v6732, 0
      %v7475 = vsel %vm7464, %v6788, 0
      %v7478 = vsel %vm7464, %v6844, 0
      %v7481 = vsel %vm7464, %v6900, 0
      %v7484 = vsel %vm7464, %v6921, 0
      %7486 = vmatprep.subr.bf16.mxu0 %v7265
      %7487 = vmatpush1.bf16.msra.mxu0 %v7264
      %7488 = vmatprep.subr.bf16.mxu0 %v7267
      %7489 = vmatpush1.bf16.msra.mxu0 %v7266
      %7490 = vmatprep.subr.bf16.mxu0 %v7269
      %7491 = vmatpush1.bf16.msra.mxu0 %v7268
      %7492 = vmatprep.subr.bf16.mxu0 %v7271
      %7493 = vmatpush1.bf16.msra.mxu0 %v7270
      %7494 = vmatprep.subr.bf16.mxu0 %v7273
      %7495 = vmatpush1.bf16.msra.mxu0 %v7272
      %7496 = vmatprep.subr.bf16.mxu0 %v7275
      %7497 = vmatpush1.bf16.msra.mxu0 %v7274
      %7498 = vmatprep.subr.bf16.mxu0 %v7277
      %7499 = vmatpush1.bf16.msra.mxu0 %v7276
      %7500 = vmatprep.subr.bf16.mxu0 %v7279
      %7501 = vmatpush1.bf16.msra.mxu0 %v7278
      %7502 = vmatprep.subr.bf16.mxu0 %v7281
      %7503 = vmatpush1.bf16.msra.mxu0 %v7280
      %7504 = vmatprep.subr.bf16.mxu0 %v7283
      %7505 = vmatpush1.bf16.msra.mxu0 %v7282
      %7506 = vmatprep.subr.bf16.mxu0 %v7285
      %7507 = vmatpush1.bf16.msra.mxu0 %v7284
      %7508 = vmatprep.subr.bf16.mxu0 %v7287
      %7509 = vmatpush1.bf16.msra.mxu0 %v7286
      %7510 = vmatprep.subr.bf16.mxu0 %v7289
      %7511 = vmatpush1.bf16.msra.mxu0 %v7288
      %7512 = vmatprep.subr.bf16.mxu0 %v7291
      %7513 = vmatpush1.bf16.msra.mxu0 %v7290
      %7514 = vmatprep.subr.bf16.mxu0 %v7293
      %7515 = vmatpush1.bf16.msra.mxu0 %v7292
      %7516 = vmatprep.subr.bf16.mxu0 %v7295
      %7517 = vmatpush1.bf16.msra.mxu0 %v7294
      %7518 = vmatprep.mubr.bf16.mxu0 %v6560
      %7519 = vmatmul.mubr.bf16.gmra.mrb[0].mxu0 %v6548
      %v7520 = vpop.f32.mrb[0].mxu0
      %v7521 = vadd.f32 0.0, %v7520
      %v7522 = vpop.f32.mrb[0].mxu0
      %v7523 = vadd.f32 0.0, %v7522
      %v7524 = vpop.f32.mrb[0].mxu0
      %v7525 = vadd.f32 0.0, %v7524
      %v7526 = vpop.f32.mrb[0].mxu0
      %v7527 = vadd.f32 0.0, %v7526
      %7528 = vmatprep.mubr.bf16.mxu0 %v6636
      %7529 = vmatmul.mubr.bf16.gmra.mrb[0].mxu0 %v6628
      %v7530 = vpop.f32.mrb[0].mxu0
      %v7531 = vadd.f32 0.0, %v7530
      %v7532 = vpop.f32.mrb[0].mxu0
      %v7533 = vadd.f32 0.0, %v7532
      %v7534 = vpop.f32.mrb[0].mxu0
      %v7535 = vadd.f32 0.0, %v7534
      %v7536 = vpop.f32.mrb[0].mxu0
      %v7537 = vadd.f32 0.0, %v7536
      %7538 = vmatprep.mubr.bf16.mxu0 %v6692
      %7539 = vmatmul.mubr.bf16.gmra.mrb[0].mxu0 %v6684
      %v7540 = vpop.f32.mrb[0].mxu0
      %v7541 = vadd.f32 0.0, %v7540
      %v7542 = vpop.f32.mrb[0].mxu0
      %v7543 = vadd.f32 0.0, %v7542
      %v7544 = vpop.f32.mrb[0].mxu0
      %v7545 = vadd.f32 0.0, %v7544
      %v7546 = vpop.f32.mrb[0].mxu0
      %v7547 = vadd.f32 0.0, %v7546
      %7548 = vmatprep.mubr.bf16.mxu0 %v6748
      %7549 = vmatmul.mubr.bf16.gmra.mrb[0].mxu0 %v6740
      %v7550 = vpop.f32.mrb[0].mxu0
      %v7551 = vadd.f32 0.0, %v7550
      %v7552 = vpop.f32.mrb[0].mxu0
      %v7553 = vadd.f32 0.0, %v7552
      %v7554 = vpop.f32.mrb[0].mxu0
      %v7555 = vadd.f32 0.0, %v7554
      %v7556 = vpop.f32.mrb[0].mxu0
      %v7557 = vadd.f32 0.0, %v7556
      %7558 = vmatprep.mubr.bf16.mxu0 %v6804
      %7559 = vmatmul.mubr.bf16.gmra.mrb[0].mxu0 %v6796
      %v7560 = vpop.f32.mrb[0].mxu0
      %v7561 = vadd.f32 0.0, %v7560
      %v7562 = vpop.f32.mrb[0].mxu0
      %v7563 = vadd.f32 0.0, %v7562
      %v7564 = vpop.f32.mrb[0].mxu0
      %v7565 = vadd.f32 0.0, %v7564
      %v7566 = vpop.f32.mrb[0].mxu0
      %v7567 = vadd.f32 0.0, %v7566
      %7568 = vmatprep.mubr.bf16.mxu0 %v6860
      %7569 = vmatmul.mubr.bf16.gmra.mrb[0].mxu0 %v6852
      %v7570 = vpop.f32.mrb[0].mxu0
      %v7571 = vadd.f32 0.0, %v7570
      %v7572 = vpop.f32.mrb[0].mxu0
      %v7573 = vadd.f32 0.0, %v7572
      %v7574 = vpop.f32.mrb[0].mxu0
      %v7575 = vadd.f32 0.0, %v7574
      %v7576 = vpop.f32.mrb[0].mxu0
      %v7577 = vadd.f32 0.0, %v7576
      %7578 = vmatprep.mubr.bf16.mxu0 %v6906
      %7579 = vmatmul.mubr.bf16.gmra.mrb[0].mxu0 %v6903
      %v7580 = vpop.f32.mrb[0].mxu0
      %v7581 = vadd.f32 0.0, %v7580
      %v7582 = vpop.f32.mrb[0].mxu0
      %v7583 = vadd.f32 0.0, %v7582
      %v7584 = vpop.f32.mrb[0].mxu0
      %v7585 = vpop.f32.mrb[0].mxu0
      %7586 = vdwg.mxu0
      %7587 = vmatprep.subr.bf16.mxu0 %v7297
      %7588 = vmatpush1.bf16.msra.mxu0 %v7296
      %7589 = vmatprep.subr.bf16.mxu0 %v7299
      %7590 = vmatpush1.bf16.msra.mxu0 %v7298
      %7591 = vmatprep.subr.bf16.mxu0 %v7301
      %7592 = vmatpush1.bf16.msra.mxu0 %v7300
      %7593 = vmatprep.subr.bf16.mxu0 %v7303
      %7594 = vmatpush1.bf16.msra.mxu0 %v7302
      %7595 = vmatprep.subr.bf16.mxu0 %v7305
      %7596 = vmatpush1.bf16.msra.mxu0 %v7304
      %7597 = vmatprep.subr.bf16.mxu0 %v7307
      %7598 = vmatpush1.bf16.msra.mxu0 %v7306
      %7599 = vmatprep.subr.bf16.mxu0 %v7309
      %7600 = vmatpush1.bf16.msra.mxu0 %v7308
      %7601 = vmatprep.subr.bf16.mxu0 %v7311
      %7602 = vmatpush1.bf16.msra.mxu0 %v7310
      %7603 = vmatprep.subr.bf16.mxu0 %v7313
      %7604 = vmatpush1.bf16.msra.mxu0 %v7312
      %7605 = vmatprep.subr.bf16.mxu0 %v7315
      %7606 = vmatpush1.bf16.msra.mxu0 %v7314
      %7607 = vmatprep.subr.bf16.mxu0 %v7317
      %7608 = vmatpush1.bf16.msra.mxu0 %v7316
      %7609 = vmatprep.subr.bf16.mxu0 %v7319
      %7610 = vmatpush1.bf16.msra.mxu0 %v7318
      %7611 = vmatprep.subr.bf16.mxu0 %v7321
      %7612 = vmatpush1.bf16.msra.mxu0 %v7320
      %7613 = vmatprep.subr.bf16.mxu0 %v7323
      %7614 = vmatpush1.bf16.msra.mxu0 %v7322
      %7615 = vmatprep.subr.bf16.mxu0 %v7325
      %7616 = vmatpush1.bf16.msra.mxu0 %v7324
      %7617 = vmatprep.subr.bf16.mxu0 %v7327
      %7618 = vmatpush1.bf16.msra.mxu0 %v7326
      %7619 = vmatprep.mubr.bf16.mxu0 %v6584
      %7620 = vmatmul.mubr.bf16.gmra.mrb[0].mxu0 %v6572
      %v7621 = vpop.f32.mrb[0].mxu0
      %v7622 = vadd.f32 %v7521, %v7621
      %v7623 = vpop.f32.mrb[0].mxu0
      %v7624 = vadd.f32 %v7523, %v7623
      %v7625 = vpop.f32.mrb[0].mxu0
      %v7626 = vadd.f32 %v7525, %v7625
      %v7627 = vpop.f32.mrb[0].mxu0
      %v7628 = vadd.f32 %v7527, %v7627
      %7629 = vmatprep.mubr.bf16.mxu0 %v6652
      %7630 = vmatmul.mubr.bf16.gmra.mrb[0].mxu0 %v6644
      %v7631 = vpop.f32.mrb[0].mxu0
      %v7632 = vadd.f32 %v7531, %v7631
      %v7633 = vpop.f32.mrb[0].mxu0
      %v7634 = vadd.f32 %v7533, %v7633
      %v7635 = vpop.f32.mrb[0].mxu0
      %v7636 = vadd.f32 %v7535, %v7635
      %v7637 = vpop.f32.mrb[0].mxu0
      %v7638 = vadd.f32 %v7537, %v7637
      %7639 = vmatprep.mubr.bf16.mxu0 %v6708
      %7640 = vmatmul.mubr.bf16.gmra.mrb[0].mxu0 %v6700
      %v7641 = vpop.f32.mrb[0].mxu0
      %v7642 = vadd.f32 %v7541, %v7641
      %v7643 = vpop.f32.mrb[0].mxu0
      %v7644 = vadd.f32 %v7543, %v7643
      %v7645 = vpop.f32.mrb[0].mxu0
      %v7646 = vadd.f32 %v7545, %v7645
      %v7647 = vpop.f32.mrb[0].mxu0
      %v7648 = vadd.f32 %v7547, %v7647
      %7649 = vmatprep.mubr.bf16.mxu0 %v6764
      %7650 = vmatmul.mubr.bf16.gmra.mrb[0].mxu0 %v6756
      %v7651 = vpop.f32.mrb[0].mxu0
      %v7652 = vadd.f32 %v7551, %v7651
      %v7653 = vpop.f32.mrb[0].mxu0
      %v7654 = vadd.f32 %v7553, %v7653
      %v7655 = vpop.f32.mrb[0].mxu0
      %v7656 = vadd.f32 %v7555, %v7655
      %v7657 = vpop.f32.mrb[0].mxu0
      %v7658 = vadd.f32 %v7557, %v7657
      %7659 = vmatprep.mubr.bf16.mxu0 %v6820
      %7660 = vmatmul.mubr.bf16.gmra.mrb[0].mxu0 %v6812
      %v7661 = vpop.f32.mrb[0].mxu0
      %v7662 = vadd.f32 %v7561, %v7661
      %v7663 = vpop.f32.mrb[0].mxu0
      %v7664 = vadd.f32 %v7563, %v7663
      %v7665 = vpop.f32.mrb[0].mxu0
      %v7666 = vadd.f32 %v7565, %v7665
      %v7667 = vpop.f32.mrb[0].mxu0
      %v7668 = vadd.f32 %v7567, %v7667
      %7669 = vmatprep.mubr.bf16.mxu0 %v6876
      %7670 = vmatmul.mubr.bf16.gmra.mrb[0].mxu0 %v6868
      %v7671 = vpop.f32.mrb[0].mxu0
      %v7672 = vadd.f32 %v7571, %v7671
      %v7673 = vpop.f32.mrb[0].mxu0
      %v7674 = vadd.f32 %v7573, %v7673
      %v7675 = vpop.f32.mrb[0].mxu0
      %v7676 = vadd.f32 %v7575, %v7675
      %v7677 = vpop.f32.mrb[0].mxu0
      %v7678 = vadd.f32 %v7577, %v7677
      %7679 = vmatprep.mubr.bf16.mxu0 %v6912
      %7680 = vmatmul.mubr.bf16.gmra.mrb[0].mxu0 %v6909
      %v7681 = vpop.f32.mrb[0].mxu0
      %v7682 = vadd.f32 %v7581, %v7681
      %v7683 = vpop.f32.mrb[0].mxu0
      %v7684 = vadd.f32 %v7583, %v7683
      %v7685 = vpop.f32.mrb[0].mxu0
      %v7686 = vpop.f32.mrb[0].mxu0
      %7687 = vdwg.mxu0
      %7688 = vmatprep.subr.bf16.mxu0 %v7329
      %7689 = vmatpush1.bf16.msra.mxu0 %v7328
      %7690 = vmatprep.subr.bf16.mxu0 %v7331
      %7691 = vmatpush1.bf16.msra.mxu0 %v7330
      %7692 = vmatprep.subr.bf16.mxu0 %v7333
      %7693 = vmatpush1.bf16.msra.mxu0 %v7332
      %7694 = vmatprep.subr.bf16.mxu0 %v7335
      %7695 = vmatpush1.bf16.msra.mxu0 %v7334
      %7696 = vmatprep.subr.bf16.mxu0 %v7337
      %7697 = vmatpush1.bf16.msra.mxu0 %v7336
      %7698 = vmatprep.subr.bf16.mxu0 %v7339
      %7699 = vmatpush1.bf16.msra.mxu0 %v7338
      %7700 = vmatprep.subr.bf16.mxu0 %v7341
      %7701 = vmatpush1.bf16.msra.mxu0 %v7340
      %7702 = vmatprep.subr.bf16.mxu0 %v7343
      %7703 = vmatpush1.bf16.msra.mxu0 %v7342
      %7704 = vmatprep.subr.bf16.mxu0 %v7345
      %7705 = vmatpush1.bf16.msra.mxu0 %v7344
      %7706 = vmatprep.subr.bf16.mxu0 %v7347
      %7707 = vmatpush1.bf16.msra.mxu0 %v7346
      %7708 = vmatprep.subr.bf16.mxu0 %v7349
      %7709 = vmatpush1.bf16.msra.mxu0 %v7348
      %7710 = vmatprep.subr.bf16.mxu0 %v7351
      %7711 = vmatpush1.bf16.msra.mxu0 %v7350
      %7712 = vmatprep.subr.bf16.mxu0 %v7353
      %7713 = vmatpush1.bf16.msra.mxu0 %v7352
      %7714 = vmatprep.subr.bf16.mxu0 %v7355
      %7715 = vmatpush1.bf16.msra.mxu0 %v7354
      %7716 = vmatprep.subr.bf16.mxu0 %v7357
      %7717 = vmatpush1.bf16.msra.mxu0 %v7356
      %7718 = vmatprep.subr.bf16.mxu0 %v7359
      %7719 = vmatpush1.bf16.msra.mxu0 %v7358
      %7720 = vmatprep.mubr.bf16.mxu0 %v6608
      %7721 = vmatmul.mubr.bf16.gmra.mrb[0].mxu0 %v6596
      %v7722 = vpop.f32.mrb[0].mxu0
      %v7723 = vadd.f32 %v7622, %v7722
      %v7724 = vpop.f32.mrb[0].mxu0
      %v7725 = vadd.f32 %v7624, %v7724
      %v7726 = vpop.f32.mrb[0].mxu0
      %v7727 = vadd.f32 %v7626, %v7726
      %v7728 = vpop.f32.mrb[0].mxu0
      %v7729 = vadd.f32 %v7628, %v7728
      %7730 = vmatprep.mubr.bf16.mxu0 %v6668
      %7731 = vmatmul.mubr.bf16.gmra.mrb[0].mxu0 %v6660
      %v7732 = vpop.f32.mrb[0].mxu0
      %v7733 = vadd.f32 %v7632, %v7732
      %v7734 = vpop.f32.mrb[0].mxu0
      %v7735 = vadd.f32 %v7634, %v7734
      %v7736 = vpop.f32.mrb[0].mxu0
      %v7737 = vadd.f32 %v7636, %v7736
      %v7738 = vpop.f32.mrb[0].mxu0
      %v7739 = vadd.f32 %v7638, %v7738
      %7740 = vmatprep.mubr.bf16.mxu0 %v6724
      %7741 = vmatmul.mubr.bf16.gmra.mrb[0].mxu0 %v6716
      %v7742 = vpop.f32.mrb[0].mxu0
      %v7743 = vadd.f32 %v7642, %v7742
      %v7744 = vpop.f32.mrb[0].mxu0
      %v7745 = vadd.f32 %v7644, %v7744
      %v7746 = vpop.f32.mrb[0].mxu0
      %v7747 = vadd.f32 %v7646, %v7746
      %v7748 = vpop.f32.mrb[0].mxu0
      %v7749 = vadd.f32 %v7648, %v7748
      %7750 = vmatprep.mubr.bf16.mxu0 %v6780
      %7751 = vmatmul.mubr.bf16.gmra.mrb[0].mxu0 %v6772
      %v7752 = vpop.f32.mrb[0].mxu0
      %v7753 = vadd.f32 %v7652, %v7752
      %v7754 = vpop.f32.mrb[0].mxu0
      %v7755 = vadd.f32 %v7654, %v7754
      %v7756 = vpop.f32.mrb[0].mxu0
      %v7757 = vadd.f32 %v7656, %v7756
      %v7758 = vpop.f32.mrb[0].mxu0
      %v7759 = vadd.f32 %v7658, %v7758
      %7760 = vmatprep.mubr.bf16.mxu0 %v6836
      %7761 = vmatmul.mubr.bf16.gmra.mrb[0].mxu0 %v6828
      %v7762 = vpop.f32.mrb[0].mxu0
      %v7763 = vadd.f32 %v7662, %v7762
      %v7764 = vpop.f32.mrb[0].mxu0
      %v7765 = vadd.f32 %v7664, %v7764
      %v7766 = vpop.f32.mrb[0].mxu0
      %v7767 = vadd.f32 %v7666, %v7766
      %v7768 = vpop.f32.mrb[0].mxu0
      %v7769 = vadd.f32 %v7668, %v7768
      %7770 = vmatprep.mubr.bf16.mxu0 %v6892
      %7771 = vmatmul.mubr.bf16.gmra.mrb[0].mxu0 %v6884
      %v7772 = vpop.f32.mrb[0].mxu0
      %v7773 = vadd.f32 %v7672, %v7772
      %v7774 = vpop.f32.mrb[0].mxu0
      %v7775 = vadd.f32 %v7674, %v7774
      %v7776 = vpop.f32.mrb[0].mxu0
      %v7777 = vadd.f32 %v7676, %v7776
      %v7778 = vpop.f32.mrb[0].mxu0
      %v7779 = vadd.f32 %v7678, %v7778
      %7780 = vmatprep.mubr.bf16.mxu0 %v6918
      %7781 = vmatmul.mubr.bf16.gmra.mrb[0].mxu0 %v6915
      %v7782 = vpop.f32.mrb[0].mxu0
      %v7783 = vadd.f32 %v7682, %v7782
      %v7784 = vpop.f32.mrb[0].mxu0
      %v7785 = vadd.f32 %v7684, %v7784
      %v7786 = vpop.f32.mrb[0].mxu0
      %v7787 = vpop.f32.mrb[0].mxu0
      %7788 = vdwg.mxu0
      %7789 = vmatprep.subr.bf16.mxu0 %v7361
      %7790 = vmatpush1.bf16.msra.mxu0 %v7360
      %7791 = vmatprep.subr.bf16.mxu0 %v7363
      %7792 = vmatpush1.bf16.msra.mxu0 %v7362
      %7793 = vmatprep.subr.bf16.mxu0 0
      %7794 = vmatpush1.bf16.msra.mxu0 0
      %7795 = vmatprep.subr.bf16.mxu0 0
      %7796 = vmatpush1.bf16.msra.mxu0 0
      %7797 = vmatprep.subr.bf16.mxu0 0
      %7798 = vmatpush1.bf16.msra.mxu0 0
      %7799 = vmatprep.subr.bf16.mxu0 0
      %7800 = vmatpush1.bf16.msra.mxu0 0
      %7801 = vmatprep.subr.bf16.mxu0 0
      %7802 = vmatpush1.bf16.msra.mxu0 0
      %7803 = vmatprep.subr.bf16.mxu0 0
      %7804 = vmatpush1.bf16.msra.mxu0 0
      %7805 = vmatprep.subr.bf16.mxu0 0
      %7806 = vmatpush1.bf16.msra.mxu0 0
      %7807 = vmatprep.subr.bf16.mxu0 0
      %7808 = vmatpush1.bf16.msra.mxu0 0
      %7809 = vmatprep.subr.bf16.mxu0 0
      %7810 = vmatpush1.bf16.msra.mxu0 0
      %7811 = vmatprep.subr.bf16.mxu0 0
      %7812 = vmatpush1.bf16.msra.mxu0 0
      %7813 = vmatprep.subr.bf16.mxu0 0
      %7814 = vmatpush1.bf16.msra.mxu0 0
      %7815 = vmatprep.subr.bf16.mxu0 0
      %7816 = vmatpush1.bf16.msra.mxu0 0
      %7817 = vmatprep.subr.bf16.mxu0 0
      %7818 = vmatpush1.bf16.msra.mxu0 0
      %7819 = vmatprep.subr.bf16.mxu0 0
      %7820 = vmatpush1.bf16.msra.mxu0 0
      %7821 = vmatprep.mubr.bf16.mxu0 0
      %7822 = vmatmul.mubr.bf16.gmra.mrb[0].mxu0 %v7466
      %v7823 = vpop.f32.mrb[0].mxu0
      %v7824 = vadd.f32 %v7723, %v7823
      %v7825 = vpop.f32.mrb[0].mxu0
      %v7826 = vadd.f32 %v7725, %v7825
      %v7827 = vpop.f32.mrb[0].mxu0
      %v7828 = vadd.f32 %v7727, %v7827
      %v7829 = vpop.f32.mrb[0].mxu0
      %v7830 = vadd.f32 %v7729, %v7829
      %7831 = vmatprep.mubr.bf16.mxu0 0
      %7832 = vmatmul.mubr.bf16.gmra.mrb[0].mxu0 %v7469
      %v7833 = vpop.f32.mrb[0].mxu0
      %v7834 = vadd.f32 %v7733, %v7833
      %v7835 = vpop.f32.mrb[0].mxu0
      %v7836 = vadd.f32 %v7735, %v7835
      %v7837 = vpop.f32.mrb[0].mxu0
      %v7838 = vadd.f32 %v7737, %v7837
      %v7839 = vpop.f32.mrb[0].mxu0
      %v7840 = vadd.f32 %v7739, %v7839
      %7841 = vmatprep.mubr.bf16.mxu0 0
      %7842 = vmatmul.mubr.bf16.gmra.mrb[0].mxu0 %v7472
      %v7843 = vpop.f32.mrb[0].mxu0
      %v7844 = vadd.f32 %v7743, %v7843
      %v7845 = vpop.f32.mrb[0].mxu0
      %v7846 = vadd.f32 %v7745, %v7845
      %v7847 = vpop.f32.mrb[0].mxu0
      %v7848 = vadd.f32 %v7747, %v7847
      %v7849 = vpop.f32.mrb[0].mxu0
      %v7850 = vadd.f32 %v7749, %v7849
      %7851 = vmatprep.mubr.bf16.mxu0 0
      %7852 = vmatmul.mubr.bf16.gmra.mrb[0].mxu0 %v7475
      %v7853 = vpop.f32.mrb[0].mxu0
      %v7854 = vadd.f32 %v7753, %v7853
      %v7855 = vpop.f32.mrb[0].mxu0
      %v7856 = vadd.f32 %v7755, %v7855
      %v7857 = vpop.f32.mrb[0].mxu0
      %v7858 = vadd.f32 %v7757, %v7857
      %v7859 = vpop.f32.mrb[0].mxu0
      %v7860 = vadd.f32 %v7759, %v7859
      %7861 = vmatprep.mubr.bf16.mxu0 0
      %7862 = vmatmul.mubr.bf16.gmra.mrb[0].mxu0 %v7478
      %v7863 = vpop.f32.mrb[0].mxu0
      %v7864 = vadd.f32 %v7763, %v7863
      %v7865 = vpop.f32.mrb[0].mxu0
      %v7866 = vadd.f32 %v7765, %v7865
      %v7867 = vpop.f32.mrb[0].mxu0
      %v7868 = vadd.f32 %v7767, %v7867
      %v7869 = vpop.f32.mrb[0].mxu0
      %v7870 = vadd.f32 %v7769, %v7869
      %7871 = vmatprep.mubr.bf16.mxu0 0
      %7872 = vmatmul.mubr.bf16.gmra.mrb[0].mxu0 %v7481
      %v7873 = vpop.f32.mrb[0].mxu0
      %v7874 = vadd.f32 %v7773, %v7873
      %v7875 = vpop.f32.mrb[0].mxu0
      %v7876 = vadd.f32 %v7775, %v7875
      %v7877 = vpop.f32.mrb[0].mxu0
      %v7878 = vadd.f32 %v7777, %v7877
      %v7879 = vpop.f32.mrb[0].mxu0
      %v7880 = vadd.f32 %v7779, %v7879
      %7881 = vmatprep.mubr.bf16.mxu0 0
      %7882 = vmatmul.mubr.bf16.gmra.mrb[0].mxu0 %v7484
      %v7883 = vpop.f32.mrb[0].mxu0
      %v7884 = vadd.f32 %v7783, %v7883
      %v7885 = vpop.f32.mrb[0].mxu0
      %v7886 = vadd.f32 %v7785, %v7885
      %v7887 = vpop.f32.mrb[0].mxu0
      %v7888 = vpop.f32.mrb[0].mxu0
      %7889 = vdwg.mxu0
      %v7990 = vunpack.c.l.b16 %v6335
      %v7991 = vunpack.c.h.b16 %v6335
      %v7992 = vunpack.c.l.b16 %v6336
      %v7993 = vunpack.c.h.b16 %v6336
      %v7994 = vunpack.c.l.b16 %v6337
      %v7995 = vunpack.c.h.b16 %v6337
      %v7996 = vunpack.c.l.b16 %v6338
      %v7997 = vunpack.c.h.b16 %v6338
      %v7998 = vunpack.c.l.b16 %v6339
      %v7999 = vunpack.c.h.b16 %v6339
      %v8000 = vunpack.c.l.b16 %v6340
      %v8001 = vunpack.c.h.b16 %v6340
      %v8002 = vunpack.c.l.b16 %v6341
      %v8003 = vunpack.c.h.b16 %v6341
      %v8004 = vunpack.c.l.b16 %v6342
      %v8005 = vunpack.c.h.b16 %v6342
      %v8006 = vunpack.c.l.b16 %v6343
      %v8007 = vunpack.c.h.b16 %v6343
      %v8008 = vunpack.c.l.b16 %v6344
      %v8009 = vunpack.c.h.b16 %v6344
      %v8010 = vunpack.c.l.b16 %v6345
      %v8011 = vunpack.c.h.b16 %v6345
      %v8012 = vunpack.c.l.b16 %v6346
      %v8013 = vunpack.c.h.b16 %v6346
      %v8014 = vunpack.c.l.b16 %v6347
      %v8015 = vunpack.c.h.b16 %v6347
      %v8016 = vunpack.c.l.b16 %v6348
      %v8017 = vunpack.c.h.b16 %v6348
      %v8018 = vunpack.c.l.b16 %v6349
      %v8019 = vunpack.c.h.b16 %v6349
      %v8020 = vunpack.c.l.b16 %v6350
      %v8021 = vunpack.c.h.b16 %v6350
      %v8022 = vunpack.c.l.b16 %v6351
      %v8023 = vunpack.c.h.b16 %v6351
      %v8024 = vunpack.c.l.b16 %v6352
      %v8025 = vunpack.c.h.b16 %v6352
      %v8026 = vunpack.c.l.b16 %v6353
      %v8027 = vunpack.c.h.b16 %v6353
      %v8028 = vunpack.c.l.b16 %v6354
      %v8029 = vunpack.c.h.b16 %v6354
      %v8030 = vunpack.c.l.b16 %v6355
      %v8031 = vunpack.c.h.b16 %v6355
      %v8032 = vunpack.c.l.b16 %v6356
      %v8033 = vunpack.c.h.b16 %v6356
      %v8034 = vunpack.c.l.b16 %v6357
      %v8035 = vunpack.c.h.b16 %v6357
      %v8036 = vunpack.c.l.b16 %v6358
      %v8037 = vunpack.c.h.b16 %v6358
      %v8038 = vunpack.c.l.b16 %v6359
      %v8039 = vunpack.c.h.b16 %v6359
      %v8040 = vunpack.c.l.b16 %v6360
      %v8041 = vunpack.c.h.b16 %v6360
      %v8042 = vunpack.c.l.b16 %v6361
      %v8043 = vunpack.c.h.b16 %v6361
      %v8044 = vunpack.c.l.b16 %v6362
      %v8045 = vunpack.c.h.b16 %v6362
      %v8046 = vunpack.c.l.b16 %v6363
      %v8047 = vunpack.c.h.b16 %v6363
      %v8048 = vunpack.c.l.b16 %v6364
      %v8049 = vunpack.c.h.b16 %v6364
      %v8050 = vunpack.c.l.b16 %v6365
      %v8051 = vunpack.c.h.b16 %v6365
      %v8052 = vunpack.c.l.b16 %v6366
      %v8053 = vunpack.c.h.b16 %v6366
      %v8054 = vunpack.c.l.b16 %v6367
      %v8055 = vunpack.c.h.b16 %v6367
      %v8056 = vunpack.c.l.b16 %v6368
      %v8057 = vunpack.c.h.b16 %v6368
      %v8058 = vunpack.c.l.b16 %v6369
      %v8059 = vunpack.c.h.b16 %v6369
      %v8060 = vunpack.c.l.b16 %v6370
      %v8061 = vunpack.c.h.b16 %v6370
      %v8062 = vunpack.c.l.b16 %v6371
      %v8063 = vunpack.c.h.b16 %v6371
      %v8064 = vunpack.c.l.b16 %v6372
      %v8065 = vunpack.c.h.b16 %v6372
      %v8066 = vunpack.c.l.b16 %v6373
      %v8067 = vunpack.c.h.b16 %v6373
      %v8068 = vunpack.c.l.b16 %v6374
      %v8069 = vunpack.c.h.b16 %v6374
      %v8070 = vunpack.c.l.b16 %v6375
      %v8071 = vunpack.c.h.b16 %v6375
      %v8072 = vunpack.c.l.b16 %v6376
      %v8073 = vunpack.c.h.b16 %v6376
      %v8074 = vunpack.c.l.b16 %v6377
      %v8075 = vunpack.c.h.b16 %v6377
      %v8076 = vunpack.c.l.b16 %v6378
      %v8077 = vunpack.c.h.b16 %v6378
      %v8078 = vunpack.c.l.b16 %v6379
      %v8079 = vunpack.c.h.b16 %v6379
      %v8080 = vunpack.c.l.b16 %v6380
      %v8081 = vunpack.c.h.b16 %v6380
      %v8082 = vunpack.c.l.b16 %v6381
      %v8083 = vunpack.c.h.b16 %v6381
      %v8084 = vunpack.c.l.b16 %v6382
      %v8085 = vunpack.c.h.b16 %v6382
      %v8086 = vunpack.c.l.b16 %v6383
      %v8087 = vunpack.c.h.b16 %v6383
      %v8088 = vunpack.c.l.b16 %v6384
      %v8089 = vunpack.c.h.b16 %v6384
      %v8090 = vunpack.c.l.b16 %v6385
      %v8091 = vunpack.c.h.b16 %v6385
      %v8092 = vunpack.c.l.b16 %v6386
      %v8093 = vunpack.c.h.b16 %v6386
      %v8094 = vunpack.c.l.b16 %v6387
      %v8095 = vunpack.c.h.b16 %v6387
      %v8096 = vunpack.c.l.b16 %v6388
      %v8097 = vunpack.c.h.b16 %v6388
      %v8098 = vunpack.c.l.b16 %v6389
      %v8099 = vunpack.c.h.b16 %v6389
      %v8100 = vunpack.c.l.b16 %v6390
      %v8101 = vunpack.c.h.b16 %v6390
      %v8102 = vunpack.c.l.b16 %v6391
      %v8103 = vunpack.c.h.b16 %v6391
      %v8104 = vunpack.c.l.b16 %v6392
      %v8105 = vunpack.c.h.b16 %v6392
      %v8106 = vunpack.c.l.b16 %v6393
      %v8107 = vunpack.c.h.b16 %v6393
      %v8108 = vunpack.c.l.b16 %v6394
      %v8109 = vunpack.c.h.b16 %v6394
      %v8110 = vunpack.c.l.b16 %v6395
      %v8111 = vunpack.c.h.b16 %v6395
      %v8112 = vunpack.c.l.b16 %v6396
      %v8113 = vunpack.c.h.b16 %v6396
      %v8114 = vunpack.c.l.b16 %v6397
      %v8115 = vunpack.c.h.b16 %v6397
      %v8116 = vunpack.c.l.b16 %v6398
      %v8117 = vunpack.c.h.b16 %v6398
      %v8118 = vunpack.c.l.b16 %v6399
      %v8119 = vunpack.c.h.b16 %v6399
      %v8120 = vunpack.c.l.b16 %v6400
      %v8121 = vunpack.c.h.b16 %v6400
      %v8122 = vunpack.c.l.b16 %v6401
      %v8123 = vunpack.c.h.b16 %v6401
      %v8124 = vunpack.c.l.b16 %v6402
      %v8125 = vunpack.c.h.b16 %v6402
      %v8126 = vunpack.c.l.b16 %v6403
      %v8127 = vunpack.c.h.b16 %v6403
      %v8128 = vunpack.c.l.b16 %v6404
      %v8129 = vunpack.c.h.b16 %v6404
      %v8130 = vunpack.c.l.b16 %v6405
      %v8131 = vunpack.c.h.b16 %v6405
      %v8132 = vunpack.c.l.b16 %v6406
      %v8133 = vunpack.c.h.b16 %v6406
      %v8134 = vunpack.c.l.b16 %v6407
      %v8135 = vunpack.c.h.b16 %v6407
      %v8136 = vunpack.c.l.b16 %v6408
      %v8137 = vunpack.c.h.b16 %v6408
      %v8138 = vunpack.c.l.b16 %v6409
      %v8139 = vunpack.c.h.b16 %v6409
      %v8140 = vunpack.c.l.b16 %v6410
      %v8141 = vunpack.c.h.b16 %v6410
      %v8142 = vunpack.c.l.b16 %v6411
      %v8143 = vunpack.c.h.b16 %v6411
      %v8144 = vunpack.c.l.b16 %v6412
      %v8145 = vunpack.c.h.b16 %v6412
      %v8146 = vunpack.c.l.b16 %v6413
      %v8147 = vunpack.c.h.b16 %v6413
      %v8148 = vunpack.c.l.b16 %v6414
      %v8149 = vunpack.c.h.b16 %v6414
      %v8150 = vunpack.c.l.b16 %v6415
      %v8151 = vunpack.c.h.b16 %v6415
      %v8152 = vunpack.c.l.b16 %v6416
      %v8153 = vunpack.c.h.b16 %v6416
      %v8154 = vunpack.c.l.b16 %v6417
      %v8155 = vunpack.c.h.b16 %v6417
      %v8156 = vunpack.c.l.b16 %v6418
      %v8157 = vunpack.c.h.b16 %v6418
      %v8158 = vunpack.c.l.b16 %v6419
      %v8159 = vunpack.c.h.b16 %v6419
      %v8160 = vunpack.c.l.b16 %v6420
      %v8161 = vunpack.c.h.b16 %v6420
      %v8162 = vunpack.c.l.b16 %v6421
      %v8163 = vunpack.c.h.b16 %v6421
      %v8164 = vunpack.c.l.b16 %v6422
      %v8165 = vunpack.c.h.b16 %v6422
      %v8166 = vunpack.c.l.b16 %v6423
      %v8167 = vunpack.c.h.b16 %v6423
      %v8168 = vunpack.c.l.b16 %v6424
      %v8169 = vunpack.c.h.b16 %v6424
      %v8170 = vunpack.c.l.b16 %v6425
      %v8171 = vunpack.c.h.b16 %v6425
      %v8172 = vunpack.c.l.b16 %v6426
      %v8173 = vunpack.c.h.b16 %v6426
      %v8174 = vunpack.c.l.b16 %v6427
      %v8175 = vunpack.c.h.b16 %v6427
      %v8176 = vunpack.c.l.b16 %v6428
      %v8177 = vunpack.c.h.b16 %v6428
      %v8178 = vunpack.c.l.b16 %v6429
      %v8179 = vunpack.c.h.b16 %v6429
      %v8180 = vunpack.c.l.b16 %v6430
      %v8181 = vunpack.c.h.b16 %v6430
      %v8182 = vunpack.c.l.b16 %v6431
      %v8183 = vunpack.c.h.b16 %v6431
      %v8184 = vunpack.c.l.b16 %v6432
      %v8185 = vunpack.c.h.b16 %v6432
      %v8186 = vunpack.c.l.b16 %v6433
      %v8187 = vunpack.c.h.b16 %v6433
      %v8188 = vunpack.c.l.b16 %v6434
      %v8189 = vunpack.c.h.b16 %v6434
      %v8190 = vpack.c.b16 %v7992, %v7990
      %v8191 = vpack.c.b16 %v7993, %v7991
      %v8192 = vpack.c.b16 %v7996, %v7994
      %v8193 = vpack.c.b16 %v7997, %v7995
      %v8194 = vpack.c.b16 %v8000, %v7998
      %v8195 = vpack.c.b16 %v8001, %v7999
      %v8196 = vpack.c.b16 %v8004, %v8002
      %v8197 = vpack.c.b16 %v8005, %v8003
      %v8198 = vpack.c.b16 %v8008, %v8006
      %v8199 = vpack.c.b16 %v8009, %v8007
      %v8200 = vpack.c.b16 %v8012, %v8010
      %v8201 = vpack.c.b16 %v8013, %v8011
      %v8202 = vpack.c.b16 %v8016, %v8014
      %v8203 = vpack.c.b16 %v8017, %v8015
      %v8204 = vpack.c.b16 %v8020, %v8018
      %v8205 = vpack.c.b16 %v8021, %v8019
      %v8206 = vpack.c.b16 %v8024, %v8022
      %v8207 = vpack.c.b16 %v8025, %v8023
      %v8208 = vpack.c.b16 %v8028, %v8026
      %v8209 = vpack.c.b16 %v8029, %v8027
      %v8210 = vpack.c.b16 %v8032, %v8030
      %v8211 = vpack.c.b16 %v8033, %v8031
      %v8212 = vpack.c.b16 %v8036, %v8034
      %v8213 = vpack.c.b16 %v8037, %v8035
      %v8214 = vpack.c.b16 %v8040, %v8038
      %v8215 = vpack.c.b16 %v8041, %v8039
      %v8216 = vpack.c.b16 %v8044, %v8042
      %v8217 = vpack.c.b16 %v8045, %v8043
      %v8218 = vpack.c.b16 %v8048, %v8046
      %v8219 = vpack.c.b16 %v8049, %v8047
      %v8220 = vpack.c.b16 %v8052, %v8050
      %v8221 = vpack.c.b16 %v8053, %v8051
      %v8222 = vpack.c.b16 %v8056, %v8054
      %v8223 = vpack.c.b16 %v8057, %v8055
      %v8224 = vpack.c.b16 %v8060, %v8058
      %v8225 = vpack.c.b16 %v8061, %v8059
      %v8226 = vpack.c.b16 %v8064, %v8062
      %v8227 = vpack.c.b16 %v8065, %v8063
      %v8228 = vpack.c.b16 %v8068, %v8066
      %v8229 = vpack.c.b16 %v8069, %v8067
      %v8230 = vpack.c.b16 %v8072, %v8070
      %v8231 = vpack.c.b16 %v8073, %v8071
      %v8232 = vpack.c.b16 %v8076, %v8074
      %v8233 = vpack.c.b16 %v8077, %v8075
      %v8234 = vpack.c.b16 %v8080, %v8078
      %v8235 = vpack.c.b16 %v8081, %v8079
      %v8236 = vpack.c.b16 %v8084, %v8082
      %v8237 = vpack.c.b16 %v8085, %v8083
      %v8238 = vpack.c.b16 %v8088, %v8086
      %v8239 = vpack.c.b16 %v8089, %v8087
      %v8240 = vpack.c.b16 %v8092, %v8090
      %v8241 = vpack.c.b16 %v8093, %v8091
      %v8242 = vpack.c.b16 %v8096, %v8094
      %v8243 = vpack.c.b16 %v8097, %v8095
      %v8244 = vpack.c.b16 %v8100, %v8098
      %v8245 = vpack.c.b16 %v8101, %v8099
      %v8246 = vpack.c.b16 %v8104, %v8102
      %v8247 = vpack.c.b16 %v8105, %v8103
      %v8248 = vpack.c.b16 %v8108, %v8106
      %v8249 = vpack.c.b16 %v8109, %v8107
      %v8250 = vpack.c.b16 %v8112, %v8110
      %v8251 = vpack.c.b16 %v8113, %v8111
      %v8252 = vpack.c.b16 %v8116, %v8114
      %v8253 = vpack.c.b16 %v8117, %v8115
      %v8254 = vpack.c.b16 %v8120, %v8118
      %v8255 = vpack.c.b16 %v8121, %v8119
      %v8256 = vpack.c.b16 %v8124, %v8122
      %v8257 = vpack.c.b16 %v8125, %v8123
      %v8258 = vpack.c.b16 %v8128, %v8126
      %v8259 = vpack.c.b16 %v8129, %v8127
      %v8260 = vpack.c.b16 %v8132, %v8130
      %v8261 = vpack.c.b16 %v8133, %v8131
      %v8262 = vpack.c.b16 %v8136, %v8134
      %v8263 = vpack.c.b16 %v8137, %v8135
      %v8264 = vpack.c.b16 %v8140, %v8138
      %v8265 = vpack.c.b16 %v8141, %v8139
      %v8266 = vpack.c.b16 %v8144, %v8142
      %v8267 = vpack.c.b16 %v8145, %v8143
      %v8268 = vpack.c.b16 %v8148, %v8146
      %v8269 = vpack.c.b16 %v8149, %v8147
      %v8270 = vpack.c.b16 %v8152, %v8150
      %v8271 = vpack.c.b16 %v8153, %v8151
      %v8272 = vpack.c.b16 %v8156, %v8154
      %v8273 = vpack.c.b16 %v8157, %v8155
      %v8274 = vpack.c.b16 %v8160, %v8158
      %v8275 = vpack.c.b16 %v8161, %v8159
      %v8276 = vpack.c.b16 %v8164, %v8162
      %v8277 = vpack.c.b16 %v8165, %v8163
      %v8278 = vpack.c.b16 %v8168, %v8166
      %v8279 = vpack.c.b16 %v8169, %v8167
      %v8280 = vpack.c.b16 %v8172, %v8170
      %v8281 = vpack.c.b16 %v8173, %v8171
      %v8282 = vpack.c.b16 %v8176, %v8174
      %v8283 = vpack.c.b16 %v8177, %v8175
      %v8284 = vpack.c.b16 %v8180, %v8178
      %v8285 = vpack.c.b16 %v8181, %v8179
      %v8286 = vpack.c.b16 %v8184, %v8182
      %v8287 = vpack.c.b16 %v8185, %v8183
      %v8288 = vpack.c.b16 %v8188, %v8186
      %v8289 = vpack.c.b16 %v8189, %v8187
      %v8390 = vsel %vm7464, %v6292, 0
      %v8392 = vsel %vm7464, %v6299, 0
      %v8394 = vsel %vm7464, %v6306, 0
      %v8396 = vsel %vm7464, %v6313, 0
      %v8398 = vsel %vm7464, %v6320, 0
      %v8400 = vsel %vm7464, %v6327, 0
      %v8402 = vsel %vm7464, %v6334, 0
      %8404 = vmatprep.subr.bf16.mxu0 %v8191
      %8405 = vmatpush1.bf16.msra.mxu0 %v8190
      %8406 = vmatprep.subr.bf16.mxu0 %v8193
      %8407 = vmatpush1.bf16.msra.mxu0 %v8192
      %8408 = vmatprep.subr.bf16.mxu0 %v8195
      %8409 = vmatpush1.bf16.msra.mxu0 %v8194
      %8410 = vmatprep.subr.bf16.mxu0 %v8197
      %8411 = vmatpush1.bf16.msra.mxu0 %v8196
      %8412 = vmatprep.subr.bf16.mxu0 %v8199
      %8413 = vmatpush1.bf16.msra.mxu0 %v8198
      %8414 = vmatprep.subr.bf16.mxu0 %v8201
      %8415 = vmatpush1.bf16.msra.mxu0 %v8200
      %8416 = vmatprep.subr.bf16.mxu0 %v8203
      %8417 = vmatpush1.bf16.msra.mxu0 %v8202
      %8418 = vmatprep.subr.bf16.mxu0 %v8205
      %8419 = vmatpush1.bf16.msra.mxu0 %v8204
      %8420 = vmatprep.subr.bf16.mxu0 %v8207
      %8421 = vmatpush1.bf16.msra.mxu0 %v8206
      %8422 = vmatprep.subr.bf16.mxu0 %v8209
      %8423 = vmatpush1.bf16.msra.mxu0 %v8208
      %8424 = vmatprep.subr.bf16.mxu0 %v8211
      %8425 = vmatpush1.bf16.msra.mxu0 %v8210
      %8426 = vmatprep.subr.bf16.mxu0 %v8213
      %8427 = vmatpush1.bf16.msra.mxu0 %v8212
      %8428 = vmatprep.subr.bf16.mxu0 %v8215
      %8429 = vmatpush1.bf16.msra.mxu0 %v8214
      %8430 = vmatprep.subr.bf16.mxu0 %v8217
      %8431 = vmatpush1.bf16.msra.mxu0 %v8216
      %8432 = vmatprep.subr.bf16.mxu0 %v8219
      %8433 = vmatpush1.bf16.msra.mxu0 %v8218
      %8434 = vmatprep.subr.bf16.mxu0 %v8221
      %8435 = vmatpush1.bf16.msra.mxu0 %v8220
      %8436 = vmatprep.mubr.bf16.mxu0 %v6287
      %8437 = vmatmul.mubr.bf16.gmra.mrb[0].mxu0 %v6286
      %v8438 = vpop.f32.mrb[0].mxu0
      %v8439 = vadd.f32 %v7824, %v8438
      %v8440 = vpop.f32.mrb[0].mxu0
      %v8441 = vadd.f32 %v7826, %v8440
      %v8442 = vpop.f32.mrb[0].mxu0
      %v8443 = vadd.f32 %v7828, %v8442
      %v8444 = vpop.f32.mrb[0].mxu0
      %v8445 = vadd.f32 %v7830, %v8444
      %8446 = vmatprep.mubr.bf16.mxu0 %v6294
      %8447 = vmatmul.mubr.bf16.gmra.mrb[0].mxu0 %v6293
      %v8448 = vpop.f32.mrb[0].mxu0
      %v8449 = vadd.f32 %v7834, %v8448
      %v8450 = vpop.f32.mrb[0].mxu0
      %v8451 = vadd.f32 %v7836, %v8450
      %v8452 = vpop.f32.mrb[0].mxu0
      %v8453 = vadd.f32 %v7838, %v8452
      %v8454 = vpop.f32.mrb[0].mxu0
      %v8455 = vadd.f32 %v7840, %v8454
      %8456 = vmatprep.mubr.bf16.mxu0 %v6301
      %8457 = vmatmul.mubr.bf16.gmra.mrb[0].mxu0 %v6300
      %v8458 = vpop.f32.mrb[0].mxu0
      %v8459 = vadd.f32 %v7844, %v8458
      %v8460 = vpop.f32.mrb[0].mxu0
      %v8461 = vadd.f32 %v7846, %v8460
      %v8462 = vpop.f32.mrb[0].mxu0
      %v8463 = vadd.f32 %v7848, %v8462
      %v8464 = vpop.f32.mrb[0].mxu0
      %v8465 = vadd.f32 %v7850, %v8464
      %8466 = vmatprep.mubr.bf16.mxu0 %v6308
      %8467 = vmatmul.mubr.bf16.gmra.mrb[0].mxu0 %v6307
      %v8468 = vpop.f32.mrb[0].mxu0
      %v8469 = vadd.f32 %v7854, %v8468
      %v8470 = vpop.f32.mrb[0].mxu0
      %v8471 = vadd.f32 %v7856, %v8470
      %v8472 = vpop.f32.mrb[0].mxu0
      %v8473 = vadd.f32 %v7858, %v8472
      %v8474 = vpop.f32.mrb[0].mxu0
      %v8475 = vadd.f32 %v7860, %v8474
      %8476 = vmatprep.mubr.bf16.mxu0 %v6315
      %8477 = vmatmul.mubr.bf16.gmra.mrb[0].mxu0 %v6314
      %v8478 = vpop.f32.mrb[0].mxu0
      %v8479 = vadd.f32 %v7864, %v8478
      %v8480 = vpop.f32.mrb[0].mxu0
      %v8481 = vadd.f32 %v7866, %v8480
      %v8482 = vpop.f32.mrb[0].mxu0
      %v8483 = vadd.f32 %v7868, %v8482
      %v8484 = vpop.f32.mrb[0].mxu0
      %v8485 = vadd.f32 %v7870, %v8484
      %8486 = vmatprep.mubr.bf16.mxu0 %v6322
      %8487 = vmatmul.mubr.bf16.gmra.mrb[0].mxu0 %v6321
      %v8488 = vpop.f32.mrb[0].mxu0
      %v8489 = vadd.f32 %v7874, %v8488
      %v8490 = vpop.f32.mrb[0].mxu0
      %v8491 = vadd.f32 %v7876, %v8490
      %v8492 = vpop.f32.mrb[0].mxu0
      %v8493 = vadd.f32 %v7878, %v8492
      %v8494 = vpop.f32.mrb[0].mxu0
      %v8495 = vadd.f32 %v7880, %v8494
      %8496 = vmatprep.mubr.bf16.mxu0 %v6329
      %8497 = vmatmul.mubr.bf16.gmra.mrb[0].mxu0 %v6328
      %v8498 = vpop.f32.mrb[0].mxu0
      %v8499 = vadd.f32 %v7884, %v8498
      %v8500 = vpop.f32.mrb[0].mxu0
      %v8501 = vadd.f32 %v7886, %v8500
      %v8502 = vpop.f32.mrb[0].mxu0
      %v8503 = vpop.f32.mrb[0].mxu0
      %8504 = vdwg.mxu0
      %8505 = vmatprep.subr.bf16.mxu0 %v8223
      %8506 = vmatpush1.bf16.msra.mxu0 %v8222
      %8507 = vmatprep.subr.bf16.mxu0 %v8225
      %8508 = vmatpush1.bf16.msra.mxu0 %v8224
      %8509 = vmatprep.subr.bf16.mxu0 %v8227
      %8510 = vmatpush1.bf16.msra.mxu0 %v8226
      %8511 = vmatprep.subr.bf16.mxu0 %v8229
      %8512 = vmatpush1.bf16.msra.mxu0 %v8228
      %8513 = vmatprep.subr.bf16.mxu0 %v8231
      %8514 = vmatpush1.bf16.msra.mxu0 %v8230
      %8515 = vmatprep.subr.bf16.mxu0 %v8233
      %8516 = vmatpush1.bf16.msra.mxu0 %v8232
      %8517 = vmatprep.subr.bf16.mxu0 %v8235
      %8518 = vmatpush1.bf16.msra.mxu0 %v8234
      %8519 = vmatprep.subr.bf16.mxu0 %v8237
      %8520 = vmatpush1.bf16.msra.mxu0 %v8236
      %8521 = vmatprep.subr.bf16.mxu0 %v8239
      %8522 = vmatpush1.bf16.msra.mxu0 %v8238
      %8523 = vmatprep.subr.bf16.mxu0 %v8241
      %8524 = vmatpush1.bf16.msra.mxu0 %v8240
      %8525 = vmatprep.subr.bf16.mxu0 %v8243
      %8526 = vmatpush1.bf16.msra.mxu0 %v8242
      %8527 = vmatprep.subr.bf16.mxu0 %v8245
      %8528 = vmatpush1.bf16.msra.mxu0 %v8244
      %8529 = vmatprep.subr.bf16.mxu0 %v8247
      %8530 = vmatpush1.bf16.msra.mxu0 %v8246
      %8531 = vmatprep.subr.bf16.mxu0 %v8249
      %8532 = vmatpush1.bf16.msra.mxu0 %v8248
      %8533 = vmatprep.subr.bf16.mxu0 %v8251
      %8534 = vmatpush1.bf16.msra.mxu0 %v8250
      %8535 = vmatprep.subr.bf16.mxu0 %v8253
      %8536 = vmatpush1.bf16.msra.mxu0 %v8252
      %8537 = vmatprep.mubr.bf16.mxu0 %v6289
      %8538 = vmatmul.mubr.bf16.gmra.mrb[0].mxu0 %v6288
      %v8539 = vpop.f32.mrb[0].mxu0
      %v8540 = vadd.f32 %v8439, %v8539
      %v8541 = vpop.f32.mrb[0].mxu0
      %v8542 = vadd.f32 %v8441, %v8541
      %v8543 = vpop.f32.mrb[0].mxu0
      %v8544 = vadd.f32 %v8443, %v8543
      %v8545 = vpop.f32.mrb[0].mxu0
      %v8546 = vadd.f32 %v8445, %v8545
      %8547 = vmatprep.mubr.bf16.mxu0 %v6296
      %8548 = vmatmul.mubr.bf16.gmra.mrb[0].mxu0 %v6295
      %v8549 = vpop.f32.mrb[0].mxu0
      %v8550 = vadd.f32 %v8449, %v8549
      %v8551 = vpop.f32.mrb[0].mxu0
      %v8552 = vadd.f32 %v8451, %v8551
      %v8553 = vpop.f32.mrb[0].mxu0
      %v8554 = vadd.f32 %v8453, %v8553
      %v8555 = vpop.f32.mrb[0].mxu0
      %v8556 = vadd.f32 %v8455, %v8555
      %8557 = vmatprep.mubr.bf16.mxu0 %v6303
      %8558 = vmatmul.mubr.bf16.gmra.mrb[0].mxu0 %v6302
      %v8559 = vpop.f32.mrb[0].mxu0
      %v8560 = vadd.f32 %v8459, %v8559
      %v8561 = vpop.f32.mrb[0].mxu0
      %v8562 = vadd.f32 %v8461, %v8561
      %v8563 = vpop.f32.mrb[0].mxu0
      %v8564 = vadd.f32 %v8463, %v8563
      %v8565 = vpop.f32.mrb[0].mxu0
      %v8566 = vadd.f32 %v8465, %v8565
      %8567 = vmatprep.mubr.bf16.mxu0 %v6310
      %8568 = vmatmul.mubr.bf16.gmra.mrb[0].mxu0 %v6309
      %v8569 = vpop.f32.mrb[0].mxu0
      %v8570 = vadd.f32 %v8469, %v8569
      %v8571 = vpop.f32.mrb[0].mxu0
      %v8572 = vadd.f32 %v8471, %v8571
      %v8573 = vpop.f32.mrb[0].mxu0
      %v8574 = vadd.f32 %v8473, %v8573
      %v8575 = vpop.f32.mrb[0].mxu0
      %v8576 = vadd.f32 %v8475, %v8575
      %8577 = vmatprep.mubr.bf16.mxu0 %v6317
      %8578 = vmatmul.mubr.bf16.gmra.mrb[0].mxu0 %v6316
      %v8579 = vpop.f32.mrb[0].mxu0
      %v8580 = vadd.f32 %v8479, %v8579
      %v8581 = vpop.f32.mrb[0].mxu0
      %v8582 = vadd.f32 %v8481, %v8581
      %v8583 = vpop.f32.mrb[0].mxu0
      %v8584 = vadd.f32 %v8483, %v8583
      %v8585 = vpop.f32.mrb[0].mxu0
      %v8586 = vadd.f32 %v8485, %v8585
      %8587 = vmatprep.mubr.bf16.mxu0 %v6324
      %8588 = vmatmul.mubr.bf16.gmra.mrb[0].mxu0 %v6323
      %v8589 = vpop.f32.mrb[0].mxu0
      %v8590 = vadd.f32 %v8489, %v8589
      %v8591 = vpop.f32.mrb[0].mxu0
      %v8592 = vadd.f32 %v8491, %v8591
      %v8593 = vpop.f32.mrb[0].mxu0
      %v8594 = vadd.f32 %v8493, %v8593
      %v8595 = vpop.f32.mrb[0].mxu0
      %v8596 = vadd.f32 %v8495, %v8595
      %8597 = vmatprep.mubr.bf16.mxu0 %v6331
      %8598 = vmatmul.mubr.bf16.gmra.mrb[0].mxu0 %v6330
      %v8599 = vpop.f32.mrb[0].mxu0
      %v8600 = vadd.f32 %v8499, %v8599
      %v8601 = vpop.f32.mrb[0].mxu0
      %v8602 = vadd.f32 %v8501, %v8601
      %v8603 = vpop.f32.mrb[0].mxu0
      %v8604 = vpop.f32.mrb[0].mxu0
      %8605 = vdwg.mxu0
      %8606 = vmatprep.subr.bf16.mxu0 %v8255
      %8607 = vmatpush1.bf16.msra.mxu0 %v8254
      %8608 = vmatprep.subr.bf16.mxu0 %v8257
      %8609 = vmatpush1.bf16.msra.mxu0 %v8256
      %8610 = vmatprep.subr.bf16.mxu0 %v8259
      %8611 = vmatpush1.bf16.msra.mxu0 %v8258
      %8612 = vmatprep.subr.bf16.mxu0 %v8261
      %8613 = vmatpush1.bf16.msra.mxu0 %v8260
      %8614 = vmatprep.subr.bf16.mxu0 %v8263
      %8615 = vmatpush1.bf16.msra.mxu0 %v8262
      %8616 = vmatprep.subr.bf16.mxu0 %v8265
      %8617 = vmatpush1.bf16.msra.mxu0 %v8264
      %8618 = vmatprep.subr.bf16.mxu0 %v8267
      %8619 = vmatpush1.bf16.msra.mxu0 %v8266
      %8620 = vmatprep.subr.bf16.mxu0 %v8269
      %8621 = vmatpush1.bf16.msra.mxu0 %v8268
      %8622 = vmatprep.subr.bf16.mxu0 %v8271
      %8623 = vmatpush1.bf16.msra.mxu0 %v8270
      %8624 = vmatprep.subr.bf16.mxu0 %v8273
      %8625 = vmatpush1.bf16.msra.mxu0 %v8272
      %8626 = vmatprep.subr.bf16.mxu0 %v8275
      %8627 = vmatpush1.bf16.msra.mxu0 %v8274
      %8628 = vmatprep.subr.bf16.mxu0 %v8277
      %8629 = vmatpush1.bf16.msra.mxu0 %v8276
      %8630 = vmatprep.subr.bf16.mxu0 %v8279
      %8631 = vmatpush1.bf16.msra.mxu0 %v8278
      %8632 = vmatprep.subr.bf16.mxu0 %v8281
      %8633 = vmatpush1.bf16.msra.mxu0 %v8280
      %8634 = vmatprep.subr.bf16.mxu0 %v8283
      %8635 = vmatpush1.bf16.msra.mxu0 %v8282
      %8636 = vmatprep.subr.bf16.mxu0 %v8285
      %8637 = vmatpush1.bf16.msra.mxu0 %v8284
      %8638 = vmatprep.mubr.bf16.mxu0 %v6291
      %8639 = vmatmul.mubr.bf16.gmra.mrb[0].mxu0 %v6290
      %v8640 = vpop.f32.mrb[0].mxu0
      %v8641 = vadd.f32 %v8540, %v8640
      %v8642 = vpop.f32.mrb[0].mxu0
      %v8643 = vadd.f32 %v8542, %v8642
      %v8644 = vpop.f32.mrb[0].mxu0
      %v8645 = vadd.f32 %v8544, %v8644
      %v8646 = vpop.f32.mrb[0].mxu0
      %v8647 = vadd.f32 %v8546, %v8646
      %8648 = vmatprep.mubr.bf16.mxu0 %v6298
      %8649 = vmatmul.mubr.bf16.gmra.mrb[0].mxu0 %v6297
      %v8650 = vpop.f32.mrb[0].mxu0
      %v8651 = vadd.f32 %v8550, %v8650
      %v8652 = vpop.f32.mrb[0].mxu0
      %v8653 = vadd.f32 %v8552, %v8652
      %v8654 = vpop.f32.mrb[0].mxu0
      %v8655 = vadd.f32 %v8554, %v8654
      %v8656 = vpop.f32.mrb[0].mxu0
      %v8657 = vadd.f32 %v8556, %v8656
      %8658 = vmatprep.mubr.bf16.mxu0 %v6305
      %8659 = vmatmul.mubr.bf16.gmra.mrb[0].mxu0 %v6304
      %v8660 = vpop.f32.mrb[0].mxu0
      %v8661 = vadd.f32 %v8560, %v8660
      %v8662 = vpop.f32.mrb[0].mxu0
      %v8663 = vadd.f32 %v8562, %v8662
      %v8664 = vpop.f32.mrb[0].mxu0
      %v8665 = vadd.f32 %v8564, %v8664
      %v8666 = vpop.f32.mrb[0].mxu0
      %v8667 = vadd.f32 %v8566, %v8666
      %8668 = vmatprep.mubr.bf16.mxu0 %v6312
      %8669 = vmatmul.mubr.bf16.gmra.mrb[0].mxu0 %v6311
      %v8670 = vpop.f32.mrb[0].mxu0
      %v8671 = vadd.f32 %v8570, %v8670
      %v8672 = vpop.f32.mrb[0].mxu0
      %v8673 = vadd.f32 %v8572, %v8672
      %v8674 = vpop.f32.mrb[0].mxu0
      %v8675 = vadd.f32 %v8574, %v8674
      %v8676 = vpop.f32.mrb[0].mxu0
      %v8677 = vadd.f32 %v8576, %v8676
      %8678 = vmatprep.mubr.bf16.mxu0 %v6319
      %8679 = vmatmul.mubr.bf16.gmra.mrb[0].mxu0 %v6318
      %v8680 = vpop.f32.mrb[0].mxu0
      %v8681 = vadd.f32 %v8580, %v8680
      %v8682 = vpop.f32.mrb[0].mxu0
      %v8683 = vadd.f32 %v8582, %v8682
      %v8684 = vpop.f32.mrb[0].mxu0
      %v8685 = vadd.f32 %v8584, %v8684
      %v8686 = vpop.f32.mrb[0].mxu0
      %v8687 = vadd.f32 %v8586, %v8686
      %8688 = vmatprep.mubr.bf16.mxu0 %v6326
      %8689 = vmatmul.mubr.bf16.gmra.mrb[0].mxu0 %v6325
      %v8690 = vpop.f32.mrb[0].mxu0
      %v8691 = vadd.f32 %v8590, %v8690
      %v8692 = vpop.f32.mrb[0].mxu0
      %v8693 = vadd.f32 %v8592, %v8692
      %v8694 = vpop.f32.mrb[0].mxu0
      %v8695 = vadd.f32 %v8594, %v8694
      %v8696 = vpop.f32.mrb[0].mxu0
      %v8697 = vadd.f32 %v8596, %v8696
      %8698 = vmatprep.mubr.bf16.mxu0 %v6333
      %8699 = vmatmul.mubr.bf16.gmra.mrb[0].mxu0 %v6332
      %v8700 = vpop.f32.mrb[0].mxu0
      %v8701 = vadd.f32 %v8600, %v8700
      %v8702 = vpop.f32.mrb[0].mxu0
      %v8703 = vadd.f32 %v8602, %v8702
      %v8704 = vpop.f32.mrb[0].mxu0
      %v8705 = vpop.f32.mrb[0].mxu0
      %8706 = vdwg.mxu0
      %8707 = vmatprep.subr.bf16.mxu0 %v8287
      %8708 = vmatpush1.bf16.msra.mxu0 %v8286
      %8709 = vmatprep.subr.bf16.mxu0 %v8289
      %8710 = vmatpush1.bf16.msra.mxu0 %v8288
      %8711 = vmatprep.subr.bf16.mxu0 0
      %8712 = vmatpush1.bf16.msra.mxu0 0
      %8713 = vmatprep.subr.bf16.mxu0 0
      %8714 = vmatpush1.bf16.msra.mxu0 0
      %8715 = vmatprep.subr.bf16.mxu0 0
      %8716 = vmatpush1.bf16.msra.mxu0 0
      %8717 = vmatprep.subr.bf16.mxu0 0
      %8718 = vmatpush1.bf16.msra.mxu0 0
      %8719 = vmatprep.subr.bf16.mxu0 0
      %8720 = vmatpush1.bf16.msra.mxu0 0
      %8721 = vmatprep.subr.bf16.mxu0 0
      %8722 = vmatpush1.bf16.msra.mxu0 0
      %8723 = vmatprep.subr.bf16.mxu0 0
      %8724 = vmatpush1.bf16.msra.mxu0 0
      %8725 = vmatprep.subr.bf16.mxu0 0
      %8726 = vmatpush1.bf16.msra.mxu0 0
      %8727 = vmatprep.subr.bf16.mxu0 0
      %8728 = vmatpush1.bf16.msra.mxu0 0
      %8729 = vmatprep.subr.bf16.mxu0 0
      %8730 = vmatpush1.bf16.msra.mxu0 0
      %8731 = vmatprep.subr.bf16.mxu0 0
      %8732 = vmatpush1.bf16.msra.mxu0 0
      %8733 = vmatprep.subr.bf16.mxu0 0
      %8734 = vmatpush1.bf16.msra.mxu0 0
      %8735 = vmatprep.subr.bf16.mxu0 0
      %8736 = vmatpush1.bf16.msra.mxu0 0
      %8737 = vmatprep.subr.bf16.mxu0 0
      %8738 = vmatpush1.bf16.msra.mxu0 0
      %8739 = vmatprep.mubr.bf16.mxu0 0
      %8740 = vmatmul.mubr.bf16.gmra.mrb[0].mxu0 %v8390
      %v8741 = vpop.f32.mrb[0].mxu0
      %v8742 = vadd.f32 %v8641, %v8741
      %v8743 = vpop.f32.mrb[0].mxu0
      %v8744 = vadd.f32 %v8643, %v8743
      %v8745 = vpop.f32.mrb[0].mxu0
      %v8746 = vadd.f32 %v8645, %v8745
      %v8747 = vpop.f32.mrb[0].mxu0
      %v8748 = vadd.f32 %v8647, %v8747
      %8749 = vmatprep.mubr.bf16.mxu0 0
      %8750 = vmatmul.mubr.bf16.gmra.mrb[0].mxu0 %v8392
      %v8751 = vpop.f32.mrb[0].mxu0
      %v8752 = vadd.f32 %v8651, %v8751
      %v8753 = vpop.f32.mrb[0].mxu0
      %v8754 = vadd.f32 %v8653, %v8753
      %v8755 = vpop.f32.mrb[0].mxu0
      %v8756 = vadd.f32 %v8655, %v8755
      %v8757 = vpop.f32.mrb[0].mxu0
      %v8758 = vadd.f32 %v8657, %v8757
      %8759 = vmatprep.mubr.bf16.mxu0 0
      %8760 = vmatmul.mubr.bf16.gmra.mrb[0].mxu0 %v8394
      %v8761 = vpop.f32.mrb[0].mxu0
      %v8762 = vadd.f32 %v8661, %v8761
      %v8763 = vpop.f32.mrb[0].mxu0
      %v8764 = vadd.f32 %v8663, %v8763
      %v8765 = vpop.f32.mrb[0].mxu0
      %v8766 = vadd.f32 %v8665, %v8765
      %v8767 = vpop.f32.mrb[0].mxu0
      %v8768 = vadd.f32 %v8667, %v8767
      %8769 = vmatprep.mubr.bf16.mxu0 0
      %8770 = vmatmul.mubr.bf16.gmra.mrb[0].mxu0 %v8396
      %v8771 = vpop.f32.mrb[0].mxu0
      %v8772 = vadd.f32 %v8671, %v8771
      %v8773 = vpop.f32.mrb[0].mxu0
      %v8774 = vadd.f32 %v8673, %v8773
      %v8775 = vpop.f32.mrb[0].mxu0
      %v8776 = vadd.f32 %v8675, %v8775
      %v8777 = vpop.f32.mrb[0].mxu0
      %v8778 = vadd.f32 %v8677, %v8777
      %8779 = vmatprep.mubr.bf16.mxu0 0
      %8780 = vmatmul.mubr.bf16.gmra.mrb[0].mxu0 %v8398
      %v8781 = vpop.f32.mrb[0].mxu0
      %v8782 = vadd.f32 %v8681, %v8781
      %v8783 = vpop.f32.mrb[0].mxu0
      %v8784 = vadd.f32 %v8683, %v8783
      %v8785 = vpop.f32.mrb[0].mxu0
      %v8786 = vadd.f32 %v8685, %v8785
      %v8787 = vpop.f32.mrb[0].mxu0
      %v8788 = vadd.f32 %v8687, %v8787
      %8789 = vmatprep.mubr.bf16.mxu0 0
      %8790 = vmatmul.mubr.bf16.gmra.mrb[0].mxu0 %v8400
      %v8791 = vpop.f32.mrb[0].mxu0
      %v8792 = vadd.f32 %v8691, %v8791
      %v8793 = vpop.f32.mrb[0].mxu0
      %v8794 = vadd.f32 %v8693, %v8793
      %v8795 = vpop.f32.mrb[0].mxu0
      %v8796 = vadd.f32 %v8695, %v8795
      %v8797 = vpop.f32.mrb[0].mxu0
      %v8798 = vadd.f32 %v8697, %v8797
      %8799 = vmatprep.mubr.bf16.mxu0 0
      %8800 = vmatmul.mubr.bf16.gmra.mrb[0].mxu0 %v8402
      %v8801 = vpop.f32.mrb[0].mxu0
      %v8802 = vadd.f32 %v8701, %v8801
      %v8803 = vpop.f32.mrb[0].mxu0
      %v8804 = vadd.f32 %v8703, %v8803
      %v8805 = vpop.f32.mrb[0].mxu0
      %v8806 = vpop.f32.mrb[0].mxu0
      %8807 = vdwg.mxu0
      %s8808 = scalar_lea.vmem %s4, 1600
      %v8809 = vld [vmem:[%s8808] sm:$0xff]
      %v8810 = vld [vmem:[%s8808 + $0x8] sm:$0xff]
      %v8811 = vld [vmem:[%s8808 + $0x10] sm:$0xff]
      %v8812 = vld [vmem:[%s8808 + $0x18] sm:$0xff]
      %v8813 = vld [vmem:[%s8808 + $0x20] sm:$0xff]
      %v8814 = vld [vmem:[%s8808 + $0x28] sm:$0xff]
      %v8815 = vld [vmem:[%s8808 + $0x30] sm:$0xff]
      %v8816 = vld [vmem:[%s8808 + $0x38] sm:$0xff]
      %v8817 = vld [vmem:[%s8808 + $0x40] sm:$0xff]
      %v8818 = vld [vmem:[%s8808 + $0x48] sm:$0xff]
      %v8819 = vld [vmem:[%s8808 + $0x50] sm:$0xff]
      %v8820 = vld [vmem:[%s8808 + $0x58] sm:$0xff]
      %v8821 = vld [vmem:[%s8808 + $0x60] sm:$0xff]
      %v8822 = vld [vmem:[%s8808 + $0x68] sm:$0xff]
      %v8823 = vld [vmem:[%s8808 + $0x70] sm:$0xff]
      %v8824 = vld [vmem:[%s8808 + $0x78] sm:$0xff]
      %v8825 = vld [vmem:[%s8808 + $0x80] sm:$0xff]
      %v8826 = vld [vmem:[%s8808 + $0x88] sm:$0xff]
      %v8827 = vld [vmem:[%s8808 + $0x90] sm:$0xff]
      %v8828 = vld [vmem:[%s8808 + $0x98] sm:$0xff]
      %v8829 = vld [vmem:[%s8808 + $0xa0] sm:$0xff]
      %v8830 = vld [vmem:[%s8808 + $0xa8] sm:$0xff]
      %v8831 = vld [vmem:[%s8808 + $0xb0] sm:$0xff]
      %v8832 = vld [vmem:[%s8808 + $0xb8] sm:$0xff]
      %v8833 = vld [vmem:[%s8808 + $0xc0] sm:$0xff]
      %v8834 = vld [vmem:[%s8808 + $0xc8] sm:$0xff]
      %v8835 = vld [vmem:[%s8808 + $0xd0] sm:$0xff]
      %v8836 = vld [vmem:[%s8808 + $0xd8] sm:$0xff]
      %v8837 = vld [vmem:[%s8808 + $0xe0] sm:$0xff]
      %v8838 = vld [vmem:[%s8808 + $0xe8] sm:$0xff]
      %v8839 = vld [vmem:[%s8808 + $0xf0] sm:$0xff]
      %v8840 = vld [vmem:[%s8808 + $0xf8] sm:$0xff]
      %v8841 = vld [vmem:[%s8808 + $0x100] sm:$0xff]
      %v8842 = vld [vmem:[%s8808 + $0x108] sm:$0xff]
      %v8843 = vld [vmem:[%s8808 + $0x110] sm:$0xff]
      %v8844 = vld [vmem:[%s8808 + $0x118] sm:$0xff]
      %v8845 = vld [vmem:[%s8808 + $0x120] sm:$0xff]
      %v8846 = vld [vmem:[%s8808 + $0x128] sm:$0xff]
      %v8847 = vld [vmem:[%s8808 + $0x130] sm:$0xff]
      %v8848 = vld [vmem:[%s8808 + $0x138] sm:$0xff]
      %v8849 = vld [vmem:[%s8808 + $0x140] sm:$0xff]
      %v8850 = vld [vmem:[%s8808 + $0x148] sm:$0xff]
      %v8851 = vld [vmem:[%s8808 + $0x150] sm:$0xff]
      %v8852 = vld [vmem:[%s8808 + $0x158] sm:$0xff]
      %v8853 = vld [vmem:[%s8808 + $0x160] sm:$0xff]
      %v8854 = vld [vmem:[%s8808 + $0x168] sm:$0xff]
      %v8855 = vld [vmem:[%s8808 + $0x170] sm:$0xff]
      %v8856 = vld [vmem:[%s8808 + $0x178] sm:$0xff]
      %v8857 = vld [vmem:[%s8808 + $0x180] sm:$0xff]
      %v8858 = vld [vmem:[%s8808 + $0x188] sm:$0xff]
      %v8859 = vld [vmem:[%s8808 + $0x190] sm:$0xff]
      %v8860 = vld [vmem:[%s8808 + $0x198] sm:$0xff]
      %v8861 = vld [vmem:[%s8808 + $0x1a0] sm:$0xff]
      %v8862 = vld [vmem:[%s8808 + $0x1a8] sm:$0xff]
      %v8863 = vld [vmem:[%s8808 + $0x1b0] sm:$0xff]
      %v8864 = vld [vmem:[%s8808 + $0x1b8] sm:$0xff]
      %v8865 = vld [vmem:[%s8808 + $0x1c0] sm:$0xff]
      %v8866 = vld [vmem:[%s8808 + $0x1c8] sm:$0xff]
      %v8867 = vld [vmem:[%s8808 + $0x1d0] sm:$0xff]
      %v8868 = vld [vmem:[%s8808 + $0x1d8] sm:$0xff]
      %v8869 = vld [vmem:[%s8808 + $0x1e0] sm:$0xff]
      %v8870 = vld [vmem:[%s8808 + $0x1e8] sm:$0xff]
      %v8871 = vld [vmem:[%s8808 + $0x1f0] sm:$0xff]
      %v8872 = vld [vmem:[%s8808 + $0x1f8] sm:$0xff]
      %v8873 = vld [vmem:[%s8808 + $0x200] sm:$0xff]
      %v8874 = vld [vmem:[%s8808 + $0x208] sm:$0xff]
      %v8875 = vld [vmem:[%s8808 + $0x210] sm:$0xff]
      %v8876 = vld [vmem:[%s8808 + $0x218] sm:$0xff]
      %v8877 = vld [vmem:[%s8808 + $0x220] sm:$0xff]
      %v8878 = vld [vmem:[%s8808 + $0x228] sm:$0xff]
      %v8879 = vld [vmem:[%s8808 + $0x230] sm:$0xff]
      %v8880 = vld [vmem:[%s8808 + $0x238] sm:$0xff]
      %v8881 = vld [vmem:[%s8808 + $0x240] sm:$0xff]
      %v8882 = vld [vmem:[%s8808 + $0x248] sm:$0xff]
      %v8883 = vld [vmem:[%s8808 + $0x250] sm:$0xff]
      %v8884 = vld [vmem:[%s8808 + $0x258] sm:$0xff]
      %v8885 = vld [vmem:[%s8808 + $0x260] sm:$0xff]
      %v8886 = vld [vmem:[%s8808 + $0x268] sm:$0xff]
      %v8887 = vld [vmem:[%s8808 + $0x270] sm:$0xff]
      %v8888 = vld [vmem:[%s8808 + $0x278] sm:$0xff]
      %v8889 = vld [vmem:[%s8808 + $0x280] sm:$0xff]
      %v8890 = vld [vmem:[%s8808 + $0x288] sm:$0xff]
      %v8891 = vld [vmem:[%s8808 + $0x290] sm:$0xff]
      %v8892 = vld [vmem:[%s8808 + $0x298] sm:$0xff]
      %v8893 = vld [vmem:[%s8808 + $0x2a0] sm:$0xff]
      %v8894 = vld [vmem:[%s8808 + $0x2a8] sm:$0xff]
      %v8895 = vld [vmem:[%s8808 + $0x2b0] sm:$0xff]
      %v8896 = vld [vmem:[%s8808 + $0x2b8] sm:$0xff]
      %v8897 = vld [vmem:[%s8808 + $0x2c0] sm:$0xff]
      %v8898 = vld [vmem:[%s8808 + $0x2c8] sm:$0xff]
      %v8899 = vld [vmem:[%s8808 + $0x2d0] sm:$0xff]
      %v8900 = vld [vmem:[%s8808 + $0x2d8] sm:$0xff]
      %v8901 = vld [vmem:[%s8808 + $0x2e0] sm:$0xff]
      %v8902 = vld [vmem:[%s8808 + $0x2e8] sm:$0xff]
      %v8903 = vld [vmem:[%s8808 + $0x2f0] sm:$0xff]
      %v8904 = vld [vmem:[%s8808 + $0x2f8] sm:$0xff]
      %v8905 = vld [vmem:[%s8808 + $0x300] sm:$0xff]
      %v8906 = vld [vmem:[%s8808 + $0x308] sm:$0xff]
      %v8907 = vld [vmem:[%s8808 + $0x310] sm:$0xff]
      %v8908 = vld [vmem:[%s8808 + $0x318] sm:$0xff]
      %vm8958 = vcmask 1046528
      %v8959 = vrot.slane %v6286, 1
      %v8960 = vrot.slane %v6293, 1
      %v8961 = vsel %vm8958, %v8959, %v8960
      %v8962 = vrot.slane %v6287, 1
      %v8963 = vrot.slane %v6294, 1
      %v8964 = vsel %vm8958, %v8962, %v8963
      %v8965 = vrot.slane %v6288, 1
      %v8966 = vrot.slane %v6295, 1
      %v8967 = vsel %vm8958, %v8965, %v8966
      %v8968 = vrot.slane %v6289, 1
      %v8969 = vrot.slane %v6296, 1
      %v8970 = vsel %vm8958, %v8968, %v8969
      %v8971 = vrot.slane %v6290, 1
      %v8972 = vrot.slane %v6297, 1
      %v8973 = vsel %vm8958, %v8971, %v8972
      %v8974 = vrot.slane %v6291, 1
      %v8975 = vrot.slane %v6298, 1
      %v8976 = vsel %vm8958, %v8974, %v8975
      %v8977 = vrot.slane %v6292, 1
      %v8978 = vrot.slane %v6299, 1
      %v8979 = vsel %vm8958, %v8977, %v8978
      %v8980 = vrot.slane %v6300, 1
      %v8981 = vsel %vm8958, %v8960, %v8980
      %v8982 = vrot.slane %v6301, 1
      %v8983 = vsel %vm8958, %v8963, %v8982
      %v8984 = vrot.slane %v6302, 1
      %v8985 = vsel %vm8958, %v8966, %v8984
      %v8986 = vrot.slane %v6303, 1
      %v8987 = vsel %vm8958, %v8969, %v8986
      %v8988 = vrot.slane %v6304, 1
      %v8989 = vsel %vm8958, %v8972, %v8988
      %v8990 = vrot.slane %v6305, 1
      %v8991 = vsel %vm8958, %v8975, %v8990
      %v8992 = vrot.slane %v6306, 1
      %v8993 = vsel %vm8958, %v8978, %v8992
      %v8994 = vrot.slane %v6307, 1
      %v8995 = vsel %vm8958, %v8980, %v8994
      %v8996 = vrot.slane %v6308, 1
      %v8997 = vsel %vm8958, %v8982, %v8996
      %v8998 = vrot.slane %v6309, 1
      %v8999 = vsel %vm8958, %v8984, %v8998
      %v9000 = vrot.slane %v6310, 1
      %v9001 = vsel %vm8958, %v8986, %v9000
      %v9002 = vrot.slane %v6311, 1
      %v9003 = vsel %vm8958, %v8988, %v9002
      %v9004 = vrot.slane %v6312, 1
      %v9005 = vsel %vm8958, %v8990, %v9004
      %v9006 = vrot.slane %v6313, 1
      %v9007 = vsel %vm8958, %v8992, %v9006
      %v9008 = vrot.slane %v6314, 1
      %v9009 = vsel %vm8958, %v8994, %v9008
      %v9010 = vrot.slane %v6315, 1
      %v9011 = vsel %vm8958, %v8996, %v9010
      %v9012 = vrot.slane %v6316, 1
      %v9013 = vsel %vm8958, %v8998, %v9012
      %v9014 = vrot.slane %v6317, 1
      %v9015 = vsel %vm8958, %v9000, %v9014
      %v9016 = vrot.slane %v6318, 1
      %v9017 = vsel %vm8958, %v9002, %v9016
      %v9018 = vrot.slane %v6319, 1
      %v9019 = vsel %vm8958, %v9004, %v9018
      %v9020 = vrot.slane %v6320, 1
      %v9021 = vsel %vm8958, %v9006, %v9020
      %v9022 = vrot.slane %v6321, 1
      %v9023 = vsel %vm8958, %v9008, %v9022
      %v9024 = vrot.slane %v6322, 1
      %v9025 = vsel %vm8958, %v9010, %v9024
      %v9026 = vrot.slane %v6323, 1
      %v9027 = vsel %vm8958, %v9012, %v9026
      %v9028 = vrot.slane %v6324, 1
      %v9029 = vsel %vm8958, %v9014, %v9028
      %v9030 = vrot.slane %v6325, 1
      %v9031 = vsel %vm8958, %v9016, %v9030
      %v9032 = vrot.slane %v6326, 1
      %v9033 = vsel %vm8958, %v9018, %v9032
      %v9034 = vrot.slane %v6327, 1
      %v9035 = vsel %vm8958, %v9020, %v9034
      %v9036 = vrot.slane %v6328, 1
      %v9037 = vsel %vm8958, %v9022, %v9036
      %v9038 = vrot.slane %v6329, 1
      %v9039 = vsel %vm8958, %v9024, %v9038
      %v9040 = vrot.slane %v6330, 1
      %v9041 = vsel %vm8958, %v9026, %v9040
      %v9042 = vrot.slane %v6331, 1
      %v9043 = vsel %vm8958, %v9028, %v9042
      %v9044 = vrot.slane %v6332, 1
      %v9045 = vsel %vm8958, %v9030, %v9044
      %v9046 = vrot.slane %v6333, 1
      %v9047 = vsel %vm8958, %v9032, %v9046
      %v9048 = vrot.slane %v6334, 1
      %v9049 = vsel %vm8958, %v9034, %v9048
      %v9192 = vunpack.c.l.b16 %v8809
      %v9193 = vunpack.c.h.b16 %v8809
      %v9194 = vunpack.c.l.b16 %v8810
      %v9195 = vunpack.c.h.b16 %v8810
      %v9196 = vunpack.c.l.b16 %v8811
      %v9197 = vunpack.c.h.b16 %v8811
      %v9198 = vunpack.c.l.b16 %v8812
      %v9199 = vunpack.c.h.b16 %v8812
      %v9200 = vunpack.c.l.b16 %v8813
      %v9201 = vunpack.c.h.b16 %v8813
      %v9202 = vunpack.c.l.b16 %v8814
      %v9203 = vunpack.c.h.b16 %v8814
      %v9204 = vunpack.c.l.b16 %v8815
      %v9205 = vunpack.c.h.b16 %v8815
      %v9206 = vunpack.c.l.b16 %v8816
      %v9207 = vunpack.c.h.b16 %v8816
      %v9208 = vunpack.c.l.b16 %v8817
      %v9209 = vunpack.c.h.b16 %v8817
      %v9210 = vunpack.c.l.b16 %v8818
      %v9211 = vunpack.c.h.b16 %v8818
      %v9212 = vunpack.c.l.b16 %v8819
      %v9213 = vunpack.c.h.b16 %v8819
      %v9214 = vunpack.c.l.b16 %v8820
      %v9215 = vunpack.c.h.b16 %v8820
      %v9216 = vunpack.c.l.b16 %v8821
      %v9217 = vunpack.c.h.b16 %v8821
      %v9218 = vunpack.c.l.b16 %v8822
      %v9219 = vunpack.c.h.b16 %v8822
      %v9220 = vunpack.c.l.b16 %v8823
      %v9221 = vunpack.c.h.b16 %v8823
      %v9222 = vunpack.c.l.b16 %v8824
      %v9223 = vunpack.c.h.b16 %v8824
      %v9224 = vunpack.c.l.b16 %v8825
      %v9225 = vunpack.c.h.b16 %v8825
      %v9226 = vunpack.c.l.b16 %v8826
      %v9227 = vunpack.c.h.b16 %v8826
      %v9228 = vunpack.c.l.b16 %v8827
      %v9229 = vunpack.c.h.b16 %v8827
      %v9230 = vunpack.c.l.b16 %v8828
      %v9231 = vunpack.c.h.b16 %v8828
      %v9232 = vunpack.c.l.b16 %v8829
      %v9233 = vunpack.c.h.b16 %v8829
      %v9234 = vunpack.c.l.b16 %v8830
      %v9235 = vunpack.c.h.b16 %v8830
      %v9236 = vunpack.c.l.b16 %v8831
      %v9237 = vunpack.c.h.b16 %v8831
      %v9238 = vunpack.c.l.b16 %v8832
      %v9239 = vunpack.c.h.b16 %v8832
      %v9240 = vunpack.c.l.b16 %v8833
      %v9241 = vunpack.c.h.b16 %v8833
      %v9242 = vunpack.c.l.b16 %v8834
      %v9243 = vunpack.c.h.b16 %v8834
      %v9244 = vunpack.c.l.b16 %v8835
      %v9245 = vunpack.c.h.b16 %v8835
      %v9246 = vunpack.c.l.b16 %v8836
      %v9247 = vunpack.c.h.b16 %v8836
      %v9248 = vunpack.c.l.b16 %v8837
      %v9249 = vunpack.c.h.b16 %v8837
      %v9250 = vunpack.c.l.b16 %v8838
      %v9251 = vunpack.c.h.b16 %v8838
      %v9252 = vunpack.c.l.b16 %v8839
      %v9253 = vunpack.c.h.b16 %v8839
      %v9254 = vunpack.c.l.b16 %v8840
      %v9255 = vunpack.c.h.b16 %v8840
      %v9256 = vunpack.c.l.b16 %v8841
      %v9257 = vunpack.c.h.b16 %v8841
      %v9258 = vunpack.c.l.b16 %v8842
      %v9259 = vunpack.c.h.b16 %v8842
      %v9260 = vunpack.c.l.b16 %v8843
      %v9261 = vunpack.c.h.b16 %v8843
      %v9262 = vunpack.c.l.b16 %v8844
      %v9263 = vunpack.c.h.b16 %v8844
      %v9264 = vunpack.c.l.b16 %v8845
      %v9265 = vunpack.c.h.b16 %v8845
      %v9266 = vunpack.c.l.b16 %v8846
      %v9267 = vunpack.c.h.b16 %v8846
      %v9268 = vunpack.c.l.b16 %v8847
      %v9269 = vunpack.c.h.b16 %v8847
      %v9270 = vunpack.c.l.b16 %v8848
      %v9271 = vunpack.c.h.b16 %v8848
      %v9272 = vunpack.c.l.b16 %v8849
      %v9273 = vunpack.c.h.b16 %v8849
      %v9274 = vunpack.c.l.b16 %v8850
      %v9275 = vunpack.c.h.b16 %v8850
      %v9276 = vunpack.c.l.b16 %v8851
      %v9277 = vunpack.c.h.b16 %v8851
      %v9278 = vunpack.c.l.b16 %v8852
      %v9279 = vunpack.c.h.b16 %v8852
      %v9280 = vunpack.c.l.b16 %v8853
      %v9281 = vunpack.c.h.b16 %v8853
      %v9282 = vunpack.c.l.b16 %v8854
      %v9283 = vunpack.c.h.b16 %v8854
      %v9284 = vunpack.c.l.b16 %v8855
      %v9285 = vunpack.c.h.b16 %v8855
      %v9286 = vunpack.c.l.b16 %v8856
      %v9287 = vunpack.c.h.b16 %v8856
      %v9288 = vunpack.c.l.b16 %v8857
      %v9289 = vunpack.c.h.b16 %v8857
      %v9290 = vunpack.c.l.b16 %v8858
      %v9291 = vunpack.c.h.b16 %v8858
      %v9292 = vunpack.c.l.b16 %v8859
      %v9293 = vunpack.c.h.b16 %v8859
      %v9294 = vunpack.c.l.b16 %v8860
      %v9295 = vunpack.c.h.b16 %v8860
      %v9296 = vunpack.c.l.b16 %v8861
      %v9297 = vunpack.c.h.b16 %v8861
      %v9298 = vunpack.c.l.b16 %v8862
      %v9299 = vunpack.c.h.b16 %v8862
      %v9300 = vunpack.c.l.b16 %v8863
      %v9301 = vunpack.c.h.b16 %v8863
      %v9302 = vunpack.c.l.b16 %v8864
      %v9303 = vunpack.c.h.b16 %v8864
      %v9304 = vunpack.c.l.b16 %v8865
      %v9305 = vunpack.c.h.b16 %v8865
      %v9306 = vunpack.c.l.b16 %v8866
      %v9307 = vunpack.c.h.b16 %v8866
      %v9308 = vunpack.c.l.b16 %v8867
      %v9309 = vunpack.c.h.b16 %v8867
      %v9310 = vunpack.c.l.b16 %v8868
      %v9311 = vunpack.c.h.b16 %v8868
      %v9312 = vunpack.c.l.b16 %v8869
      %v9313 = vunpack.c.h.b16 %v8869
      %v9314 = vunpack.c.l.b16 %v8870
      %v9315 = vunpack.c.h.b16 %v8870
      %v9316 = vunpack.c.l.b16 %v8871
      %v9317 = vunpack.c.h.b16 %v8871
      %v9318 = vunpack.c.l.b16 %v8872
      %v9319 = vunpack.c.h.b16 %v8872
      %v9320 = vunpack.c.l.b16 %v8873
      %v9321 = vunpack.c.h.b16 %v8873
      %v9322 = vunpack.c.l.b16 %v8874
      %v9323 = vunpack.c.h.b16 %v8874
      %v9324 = vunpack.c.l.b16 %v8875
      %v9325 = vunpack.c.h.b16 %v8875
      %v9326 = vunpack.c.l.b16 %v8876
      %v9327 = vunpack.c.h.b16 %v8876
      %v9328 = vunpack.c.l.b16 %v8877
      %v9329 = vunpack.c.h.b16 %v8877
      %v9330 = vunpack.c.l.b16 %v8878
      %v9331 = vunpack.c.h.b16 %v8878
      %v9332 = vunpack.c.l.b16 %v8879
      %v9333 = vunpack.c.h.b16 %v8879
      %v9334 = vunpack.c.l.b16 %v8880
      %v9335 = vunpack.c.h.b16 %v8880
      %v9336 = vunpack.c.l.b16 %v8881
      %v9337 = vunpack.c.h.b16 %v8881
      %v9338 = vunpack.c.l.b16 %v8882
      %v9339 = vunpack.c.h.b16 %v8882
      %v9340 = vunpack.c.l.b16 %v8883
      %v9341 = vunpack.c.h.b16 %v8883
      %v9342 = vunpack.c.l.b16 %v8884
      %v9343 = vunpack.c.h.b16 %v8884
      %v9344 = vunpack.c.l.b16 %v8885
      %v9345 = vunpack.c.h.b16 %v8885
      %v9346 = vunpack.c.l.b16 %v8886
      %v9347 = vunpack.c.h.b16 %v8886
      %v9348 = vunpack.c.l.b16 %v8887
      %v9349 = vunpack.c.h.b16 %v8887
      %v9350 = vunpack.c.l.b16 %v8888
      %v9351 = vunpack.c.h.b16 %v8888
      %v9352 = vunpack.c.l.b16 %v8889
      %v9353 = vunpack.c.h.b16 %v8889
      %v9354 = vunpack.c.l.b16 %v8890
      %v9355 = vunpack.c.h.b16 %v8890
      %v9356 = vunpack.c.l.b16 %v8891
      %v9357 = vunpack.c.h.b16 %v8891
      %v9358 = vunpack.c.l.b16 %v8892
      %v9359 = vunpack.c.h.b16 %v8892
      %v9360 = vunpack.c.l.b16 %v8893
      %v9361 = vunpack.c.h.b16 %v8893
      %v9362 = vunpack.c.l.b16 %v8894
      %v9363 = vunpack.c.h.b16 %v8894
      %v9364 = vunpack.c.l.b16 %v8895
      %v9365 = vunpack.c.h.b16 %v8895
      %v9366 = vunpack.c.l.b16 %v8896
      %v9367 = vunpack.c.h.b16 %v8896
      %v9368 = vunpack.c.l.b16 %v8897
      %v9369 = vunpack.c.h.b16 %v8897
      %v9370 = vunpack.c.l.b16 %v8898
      %v9371 = vunpack.c.h.b16 %v8898
      %v9372 = vunpack.c.l.b16 %v8899
      %v9373 = vunpack.c.h.b16 %v8899
      %v9374 = vunpack.c.l.b16 %v8900
      %v9375 = vunpack.c.h.b16 %v8900
      %v9376 = vunpack.c.l.b16 %v8901
      %v9377 = vunpack.c.h.b16 %v8901
      %v9378 = vunpack.c.l.b16 %v8902
      %v9379 = vunpack.c.h.b16 %v8902
      %v9380 = vunpack.c.l.b16 %v8903
      %v9381 = vunpack.c.h.b16 %v8903
      %v9382 = vunpack.c.l.b16 %v8904
      %v9383 = vunpack.c.h.b16 %v8904
      %v9384 = vunpack.c.l.b16 %v8905
      %v9385 = vunpack.c.h.b16 %v8905
      %v9386 = vunpack.c.l.b16 %v8906
      %v9387 = vunpack.c.h.b16 %v8906
      %v9388 = vunpack.c.l.b16 %v8907
      %v9389 = vunpack.c.h.b16 %v8907
      %v9390 = vunpack.c.l.b16 %v8908
      %v9391 = vunpack.c.h.b16 %v8908
      %v9392 = vpack.c.b16 %v9194, %v9192
      %v9393 = vpack.c.b16 %v9195, %v9193
      %v9394 = vpack.c.b16 %v9198, %v9196
      %v9395 = vpack.c.b16 %v9199, %v9197
      %v9396 = vpack.c.b16 %v9202, %v9200
      %v9397 = vpack.c.b16 %v9203, %v9201
      %v9398 = vpack.c.b16 %v9206, %v9204
      %v9399 = vpack.c.b16 %v9207, %v9205
      %v9400 = vpack.c.b16 %v9210, %v9208
      %v9401 = vpack.c.b16 %v9211, %v9209
      %v9402 = vpack.c.b16 %v9214, %v9212
      %v9403 = vpack.c.b16 %v9215, %v9213
      %v9404 = vpack.c.b16 %v9218, %v9216
      %v9405 = vpack.c.b16 %v9219, %v9217
      %v9406 = vpack.c.b16 %v9222, %v9220
      %v9407 = vpack.c.b16 %v9223, %v9221
      %v9408 = vpack.c.b16 %v9226, %v9224
      %v9409 = vpack.c.b16 %v9227, %v9225
      %v9410 = vpack.c.b16 %v9230, %v9228
      %v9411 = vpack.c.b16 %v9231, %v9229
      %v9412 = vpack.c.b16 %v9234, %v9232
      %v9413 = vpack.c.b16 %v9235, %v9233
      %v9414 = vpack.c.b16 %v9238, %v9236
      %v9415 = vpack.c.b16 %v9239, %v9237
      %v9416 = vpack.c.b16 %v9242, %v9240
      %v9417 = vpack.c.b16 %v9243, %v9241
      %v9418 = vpack.c.b16 %v9246, %v9244
      %v9419 = vpack.c.b16 %v9247, %v9245
      %v9420 = vpack.c.b16 %v9250, %v9248
      %v9421 = vpack.c.b16 %v9251, %v9249
      %v9422 = vpack.c.b16 %v9254, %v9252
      %v9423 = vpack.c.b16 %v9255, %v9253
      %v9424 = vpack.c.b16 %v9258, %v9256
      %v9425 = vpack.c.b16 %v9259, %v9257
      %v9426 = vpack.c.b16 %v9262, %v9260
      %v9427 = vpack.c.b16 %v9263, %v9261
      %v9428 = vpack.c.b16 %v9266, %v9264
      %v9429 = vpack.c.b16 %v9267, %v9265
      %v9430 = vpack.c.b16 %v9270, %v9268
      %v9431 = vpack.c.b16 %v9271, %v9269
      %v9432 = vpack.c.b16 %v9274, %v9272
      %v9433 = vpack.c.b16 %v9275, %v9273
      %v9434 = vpack.c.b16 %v9278, %v9276
      %v9435 = vpack.c.b16 %v9279, %v9277
      %v9436 = vpack.c.b16 %v9282, %v9280
      %v9437 = vpack.c.b16 %v9283, %v9281
      %v9438 = vpack.c.b16 %v9286, %v9284
      %v9439 = vpack.c.b16 %v9287, %v9285
      %v9440 = vpack.c.b16 %v9290, %v9288
      %v9441 = vpack.c.b16 %v9291, %v9289
      %v9442 = vpack.c.b16 %v9294, %v9292
      %v9443 = vpack.c.b16 %v9295, %v9293
      %v9444 = vpack.c.b16 %v9298, %v9296
      %v9445 = vpack.c.b16 %v9299, %v9297
      %v9446 = vpack.c.b16 %v9302, %v9300
      %v9447 = vpack.c.b16 %v9303, %v9301
      %v9448 = vpack.c.b16 %v9306, %v9304
      %v9449 = vpack.c.b16 %v9307, %v9305
      %v9450 = vpack.c.b16 %v9310, %v9308
      %v9451 = vpack.c.b16 %v9311, %v9309
      %v9452 = vpack.c.b16 %v9314, %v9312
      %v9453 = vpack.c.b16 %v9315, %v9313
      %v9454 = vpack.c.b16 %v9318, %v9316
      %v9455 = vpack.c.b16 %v9319, %v9317
      %v9456 = vpack.c.b16 %v9322, %v9320
      %v9457 = vpack.c.b16 %v9323, %v9321
      %v9458 = vpack.c.b16 %v9326, %v9324
      %v9459 = vpack.c.b16 %v9327, %v9325
      %v9460 = vpack.c.b16 %v9330, %v9328
      %v9461 = vpack.c.b16 %v9331, %v9329
      %v9462 = vpack.c.b16 %v9334, %v9332
      %v9463 = vpack.c.b16 %v9335, %v9333
      %v9464 = vpack.c.b16 %v9338, %v9336
      %v9465 = vpack.c.b16 %v9339, %v9337
      %v9466 = vpack.c.b16 %v9342, %v9340
      %v9467 = vpack.c.b16 %v9343, %v9341
      %v9468 = vpack.c.b16 %v9346, %v9344
      %v9469 = vpack.c.b16 %v9347, %v9345
      %v9470 = vpack.c.b16 %v9350, %v9348
      %v9471 = vpack.c.b16 %v9351, %v9349
      %v9472 = vpack.c.b16 %v9354, %v9352
      %v9473 = vpack.c.b16 %v9355, %v9353
      %v9474 = vpack.c.b16 %v9358, %v9356
      %v9475 = vpack.c.b16 %v9359, %v9357
      %v9476 = vpack.c.b16 %v9362, %v9360
      %v9477 = vpack.c.b16 %v9363, %v9361
      %v9478 = vpack.c.b16 %v9366, %v9364
      %v9479 = vpack.c.b16 %v9367, %v9365
      %v9480 = vpack.c.b16 %v9370, %v9368
      %v9481 = vpack.c.b16 %v9371, %v9369
      %v9482 = vpack.c.b16 %v9374, %v9372
      %v9483 = vpack.c.b16 %v9375, %v9373
      %v9484 = vpack.c.b16 %v9378, %v9376
      %v9485 = vpack.c.b16 %v9379, %v9377
      %v9486 = vpack.c.b16 %v9382, %v9380
      %v9487 = vpack.c.b16 %v9383, %v9381
      %v9488 = vpack.c.b16 %v9386, %v9384
      %v9489 = vpack.c.b16 %v9387, %v9385
      %v9490 = vpack.c.b16 %v9390, %v9388
      %v9491 = vpack.c.b16 %v9391, %v9389
      %v9593 = vsel %vm7464, %v8979, 0
      %v9596 = vsel %vm7464, %v8993, 0
      %v9599 = vsel %vm7464, %v9007, 0
      %v9602 = vsel %vm7464, %v9021, 0
      %v9605 = vsel %vm7464, %v9035, 0
      %v9608 = vsel %vm7464, %v9049, 0
      %v9611 = vsel %vm7464, %v9048, 0
      %9613 = vmatprep.subr.bf16.mxu0 %v9393
      %9614 = vmatpush1.bf16.msra.mxu0 %v9392
      %9615 = vmatprep.subr.bf16.mxu0 %v9395
      %9616 = vmatpush1.bf16.msra.mxu0 %v9394
      %9617 = vmatprep.subr.bf16.mxu0 %v9397
      %9618 = vmatpush1.bf16.msra.mxu0 %v9396
      %9619 = vmatprep.subr.bf16.mxu0 %v9399
      %9620 = vmatpush1.bf16.msra.mxu0 %v9398
      %9621 = vmatprep.subr.bf16.mxu0 %v9401
      %9622 = vmatpush1.bf16.msra.mxu0 %v9400
      %9623 = vmatprep.subr.bf16.mxu0 %v9403
      %9624 = vmatpush1.bf16.msra.mxu0 %v9402
      %9625 = vmatprep.subr.bf16.mxu0 %v9405
      %9626 = vmatpush1.bf16.msra.mxu0 %v9404
      %9627 = vmatprep.subr.bf16.mxu0 %v9407
      %9628 = vmatpush1.bf16.msra.mxu0 %v9406
      %9629 = vmatprep.subr.bf16.mxu0 %v9409
      %9630 = vmatpush1.bf16.msra.mxu0 %v9408
      %9631 = vmatprep.subr.bf16.mxu0 %v9411
      %9632 = vmatpush1.bf16.msra.mxu0 %v9410
      %9633 = vmatprep.subr.bf16.mxu0 %v9413
      %9634 = vmatpush1.bf16.msra.mxu0 %v9412
      %9635 = vmatprep.subr.bf16.mxu0 %v9415
      %9636 = vmatpush1.bf16.msra.mxu0 %v9414
      %9637 = vmatprep.subr.bf16.mxu0 %v9417
      %9638 = vmatpush1.bf16.msra.mxu0 %v9416
      %9639 = vmatprep.subr.bf16.mxu0 %v9419
      %9640 = vmatpush1.bf16.msra.mxu0 %v9418
      %9641 = vmatprep.subr.bf16.mxu0 %v9421
      %9642 = vmatpush1.bf16.msra.mxu0 %v9420
      %9643 = vmatprep.subr.bf16.mxu0 %v9423
      %9644 = vmatpush1.bf16.msra.mxu0 %v9422
      %9645 = vmatprep.mubr.bf16.mxu0 %v8964
      %9646 = vmatmul.mubr.bf16.gmra.mrb[0].mxu0 %v8961
      %v9647 = vpop.f32.mrb[0].mxu0
      %v9648 = vadd.f32 0.0, %v9647
      %v9649 = vpop.f32.mrb[0].mxu0
      %v9650 = vadd.f32 0.0, %v9649
      %v9651 = vpop.f32.mrb[0].mxu0
      %v9652 = vadd.f32 0.0, %v9651
      %v9653 = vpop.f32.mrb[0].mxu0
      %v9654 = vadd.f32 0.0, %v9653
      %9655 = vmatprep.mubr.bf16.mxu0 %v8983
      %9656 = vmatmul.mubr.bf16.gmra.mrb[0].mxu0 %v8981
      %v9657 = vpop.f32.mrb[0].mxu0
      %v9658 = vadd.f32 0.0, %v9657
      %v9659 = vpop.f32.mrb[0].mxu0
      %v9660 = vadd.f32 0.0, %v9659
      %v9661 = vpop.f32.mrb[0].mxu0
      %v9662 = vadd.f32 0.0, %v9661
      %v9663 = vpop.f32.mrb[0].mxu0
      %v9664 = vadd.f32 0.0, %v9663
      %9665 = vmatprep.mubr.bf16.mxu0 %v8997
      %9666 = vmatmul.mubr.bf16.gmra.mrb[0].mxu0 %v8995
      %v9667 = vpop.f32.mrb[0].mxu0
      %v9668 = vadd.f32 0.0, %v9667
      %v9669 = vpop.f32.mrb[0].mxu0
      %v9670 = vadd.f32 0.0, %v9669
      %v9671 = vpop.f32.mrb[0].mxu0
      %v9672 = vadd.f32 0.0, %v9671
      %v9673 = vpop.f32.mrb[0].mxu0
      %v9674 = vadd.f32 0.0, %v9673
      %9675 = vmatprep.mubr.bf16.mxu0 %v9011
      %9676 = vmatmul.mubr.bf16.gmra.mrb[0].mxu0 %v9009
      %v9677 = vpop.f32.mrb[0].mxu0
      %v9678 = vadd.f32 0.0, %v9677
      %v9679 = vpop.f32.mrb[0].mxu0
      %v9680 = vadd.f32 0.0, %v9679
      %v9681 = vpop.f32.mrb[0].mxu0
      %v9682 = vadd.f32 0.0, %v9681
      %v9683 = vpop.f32.mrb[0].mxu0
      %v9684 = vadd.f32 0.0, %v9683
      %9685 = vmatprep.mubr.bf16.mxu0 %v9025
      %9686 = vmatmul.mubr.bf16.gmra.mrb[0].mxu0 %v9023
      %v9687 = vpop.f32.mrb[0].mxu0
      %v9688 = vadd.f32 0.0, %v9687
      %v9689 = vpop.f32.mrb[0].mxu0
      %v9690 = vadd.f32 0.0, %v9689
      %v9691 = vpop.f32.mrb[0].mxu0
      %v9692 = vadd.f32 0.0, %v9691
      %v9693 = vpop.f32.mrb[0].mxu0
      %v9694 = vadd.f32 0.0, %v9693
      %9695 = vmatprep.mubr.bf16.mxu0 %v9039
      %9696 = vmatmul.mubr.bf16.gmra.mrb[0].mxu0 %v9037
      %v9697 = vpop.f32.mrb[0].mxu0
      %v9698 = vadd.f32 0.0, %v9697
      %v9699 = vpop.f32.mrb[0].mxu0
      %v9700 = vadd.f32 0.0, %v9699
      %v9701 = vpop.f32.mrb[0].mxu0
      %v9702 = vadd.f32 0.0, %v9701
      %v9703 = vpop.f32.mrb[0].mxu0
      %v9704 = vadd.f32 0.0, %v9703
      %9705 = vmatprep.mubr.bf16.mxu0 %v9038
      %9706 = vmatmul.mubr.bf16.gmra.mrb[0].mxu0 %v9036
      %v9707 = vpop.f32.mrb[0].mxu0
      %v9708 = vadd.f32 0.0, %v9707
      %v9709 = vpop.f32.mrb[0].mxu0
      %v9710 = vadd.f32 0.0, %v9709
      %v9711 = vpop.f32.mrb[0].mxu0
      %v9712 = vpop.f32.mrb[0].mxu0
      %9713 = vdwg.mxu0
      %9714 = vmatprep.subr.bf16.mxu0 %v9425
      %9715 = vmatpush1.bf16.msra.mxu0 %v9424
      %9716 = vmatprep.subr.bf16.mxu0 %v9427
      %9717 = vmatpush1.bf16.msra.mxu0 %v9426
      %9718 = vmatprep.subr.bf16.mxu0 %v9429
      %9719 = vmatpush1.bf16.msra.mxu0 %v9428
      %9720 = vmatprep.subr.bf16.mxu0 %v9431
      %9721 = vmatpush1.bf16.msra.mxu0 %v9430
      %9722 = vmatprep.subr.bf16.mxu0 %v9433
      %9723 = vmatpush1.bf16.msra.mxu0 %v9432
      %9724 = vmatprep.subr.bf16.mxu0 %v9435
      %9725 = vmatpush1.bf16.msra.mxu0 %v9434
      %9726 = vmatprep.subr.bf16.mxu0 %v9437
      %9727 = vmatpush1.bf16.msra.mxu0 %v9436
      %9728 = vmatprep.subr.bf16.mxu0 %v9439
      %9729 = vmatpush1.bf16.msra.mxu0 %v9438
      %9730 = vmatprep.subr.bf16.mxu0 %v9441
      %9731 = vmatpush1.bf16.msra.mxu0 %v9440
      %9732 = vmatprep.subr.bf16.mxu0 %v9443
      %9733 = vmatpush1.bf16.msra.mxu0 %v9442
      %9734 = vmatprep.subr.bf16.mxu0 %v9445
      %9735 = vmatpush1.bf16.msra.mxu0 %v9444
      %9736 = vmatprep.subr.bf16.mxu0 %v9447
      %9737 = vmatpush1.bf16.msra.mxu0 %v9446
      %9738 = vmatprep.subr.bf16.mxu0 %v9449
      %9739 = vmatpush1.bf16.msra.mxu0 %v9448
      %9740 = vmatprep.subr.bf16.mxu0 %v9451
      %9741 = vmatpush1.bf16.msra.mxu0 %v9450
      %9742 = vmatprep.subr.bf16.mxu0 %v9453
      %9743 = vmatpush1.bf16.msra.mxu0 %v9452
      %9744 = vmatprep.subr.bf16.mxu0 %v9455
      %9745 = vmatpush1.bf16.msra.mxu0 %v9454
      %9746 = vmatprep.mubr.bf16.mxu0 %v8970
      %9747 = vmatmul.mubr.bf16.gmra.mrb[0].mxu0 %v8967
      %v9748 = vpop.f32.mrb[0].mxu0
      %v9749 = vadd.f32 %v9648, %v9748
      %v9750 = vpop.f32.mrb[0].mxu0
      %v9751 = vadd.f32 %v9650, %v9750
      %v9752 = vpop.f32.mrb[0].mxu0
      %v9753 = vadd.f32 %v9652, %v9752
      %v9754 = vpop.f32.mrb[0].mxu0
      %v9755 = vadd.f32 %v9654, %v9754
      %9756 = vmatprep.mubr.bf16.mxu0 %v8987
      %9757 = vmatmul.mubr.bf16.gmra.mrb[0].mxu0 %v8985
      %v9758 = vpop.f32.mrb[0].mxu0
      %v9759 = vadd.f32 %v9658, %v9758
      %v9760 = vpop.f32.mrb[0].mxu0
      %v9761 = vadd.f32 %v9660, %v9760
      %v9762 = vpop.f32.mrb[0].mxu0
      %v9763 = vadd.f32 %v9662, %v9762
      %v9764 = vpop.f32.mrb[0].mxu0
      %v9765 = vadd.f32 %v9664, %v9764
      %9766 = vmatprep.mubr.bf16.mxu0 %v9001
      %9767 = vmatmul.mubr.bf16.gmra.mrb[0].mxu0 %v8999
      %v9768 = vpop.f32.mrb[0].mxu0
      %v9769 = vadd.f32 %v9668, %v9768
      %v9770 = vpop.f32.mrb[0].mxu0
      %v9771 = vadd.f32 %v9670, %v9770
      %v9772 = vpop.f32.mrb[0].mxu0
      %v9773 = vadd.f32 %v9672, %v9772
      %v9774 = vpop.f32.mrb[0].mxu0
      %v9775 = vadd.f32 %v9674, %v9774
      %9776 = vmatprep.mubr.bf16.mxu0 %v9015
      %9777 = vmatmul.mubr.bf16.gmra.mrb[0].mxu0 %v9013
      %v9778 = vpop.f32.mrb[0].mxu0
      %v9779 = vadd.f32 %v9678, %v9778
      %v9780 = vpop.f32.mrb[0].mxu0
      %v9781 = vadd.f32 %v9680, %v9780
      %v9782 = vpop.f32.mrb[0].mxu0
      %v9783 = vadd.f32 %v9682, %v9782
      %v9784 = vpop.f32.mrb[0].mxu0
      %v9785 = vadd.f32 %v9684, %v9784
      %9786 = vmatprep.mubr.bf16.mxu0 %v9029
      %9787 = vmatmul.mubr.bf16.gmra.mrb[0].mxu0 %v9027
      %v9788 = vpop.f32.mrb[0].mxu0
      %v9789 = vadd.f32 %v9688, %v9788
      %v9790 = vpop.f32.mrb[0].mxu0
      %v9791 = vadd.f32 %v9690, %v9790
      %v9792 = vpop.f32.mrb[0].mxu0
      %v9793 = vadd.f32 %v9692, %v9792
      %v9794 = vpop.f32.mrb[0].mxu0
      %v9795 = vadd.f32 %v9694, %v9794
      %9796 = vmatprep.mubr.bf16.mxu0 %v9043
      %9797 = vmatmul.mubr.bf16.gmra.mrb[0].mxu0 %v9041
      %v9798 = vpop.f32.mrb[0].mxu0
      %v9799 = vadd.f32 %v9698, %v9798
      %v9800 = vpop.f32.mrb[0].mxu0
      %v9801 = vadd.f32 %v9700, %v9800
      %v9802 = vpop.f32.mrb[0].mxu0
      %v9803 = vadd.f32 %v9702, %v9802
      %v9804 = vpop.f32.mrb[0].mxu0
      %v9805 = vadd.f32 %v9704, %v9804
      %9806 = vmatprep.mubr.bf16.mxu0 %v9042
      %9807 = vmatmul.mubr.bf16.gmra.mrb[0].mxu0 %v9040
      %v9808 = vpop.f32.mrb[0].mxu0
      %v9809 = vadd.f32 %v9708, %v9808
      %v9810 = vpop.f32.mrb[0].mxu0
      %v9811 = vadd.f32 %v9710, %v9810
      %v9812 = vpop.f32.mrb[0].mxu0
      %v9813 = vpop.f32.mrb[0].mxu0
      %9814 = vdwg.mxu0
      %9815 = vmatprep.subr.bf16.mxu0 %v9457
      %9816 = vmatpush1.bf16.msra.mxu0 %v9456
      %9817 = vmatprep.subr.bf16.mxu0 %v9459
      %9818 = vmatpush1.bf16.msra.mxu0 %v9458
      %9819 = vmatprep.subr.bf16.mxu0 %v9461
      %9820 = vmatpush1.bf16.msra.mxu0 %v9460
      %9821 = vmatprep.subr.bf16.mxu0 %v9463
      %9822 = vmatpush1.bf16.msra.mxu0 %v9462
      %9823 = vmatprep.subr.bf16.mxu0 %v9465
      %9824 = vmatpush1.bf16.msra.mxu0 %v9464
      %9825 = vmatprep.subr.bf16.mxu0 %v9467
      %9826 = vmatpush1.bf16.msra.mxu0 %v9466
      %9827 = vmatprep.subr.bf16.mxu0 %v9469
      %9828 = vmatpush1.bf16.msra.mxu0 %v9468
      %9829 = vmatprep.subr.bf16.mxu0 %v9471
      %9830 = vmatpush1.bf16.msra.mxu0 %v9470
      %9831 = vmatprep.subr.bf16.mxu0 %v9473
      %9832 = vmatpush1.bf16.msra.mxu0 %v9472
      %9833 = vmatprep.subr.bf16.mxu0 %v9475
      %9834 = vmatpush1.bf16.msra.mxu0 %v9474
      %9835 = vmatprep.subr.bf16.mxu0 %v9477
      %9836 = vmatpush1.bf16.msra.mxu0 %v9476
      %9837 = vmatprep.subr.bf16.mxu0 %v9479
      %9838 = vmatpush1.bf16.msra.mxu0 %v9478
      %9839 = vmatprep.subr.bf16.mxu0 %v9481
      %9840 = vmatpush1.bf16.msra.mxu0 %v9480
      %9841 = vmatprep.subr.bf16.mxu0 %v9483
      %9842 = vmatpush1.bf16.msra.mxu0 %v9482
      %9843 = vmatprep.subr.bf16.mxu0 %v9485
      %9844 = vmatpush1.bf16.msra.mxu0 %v9484
      %9845 = vmatprep.subr.bf16.mxu0 %v9487
      %9846 = vmatpush1.bf16.msra.mxu0 %v9486
      %9847 = vmatprep.mubr.bf16.mxu0 %v8976
      %9848 = vmatmul.mubr.bf16.gmra.mrb[0].mxu0 %v8973
      %v9849 = vpop.f32.mrb[0].mxu0
      %v9850 = vadd.f32 %v9749, %v9849
      %v9851 = vpop.f32.mrb[0].mxu0
      %v9852 = vadd.f32 %v9751, %v9851
      %v9853 = vpop.f32.mrb[0].mxu0
      %v9854 = vadd.f32 %v9753, %v9853
      %v9855 = vpop.f32.mrb[0].mxu0
      %v9856 = vadd.f32 %v9755, %v9855
      %9857 = vmatprep.mubr.bf16.mxu0 %v8991
      %9858 = vmatmul.mubr.bf16.gmra.mrb[0].mxu0 %v8989
      %v9859 = vpop.f32.mrb[0].mxu0
      %v9860 = vadd.f32 %v9759, %v9859
      %v9861 = vpop.f32.mrb[0].mxu0
      %v9862 = vadd.f32 %v9761, %v9861
      %v9863 = vpop.f32.mrb[0].mxu0
      %v9864 = vadd.f32 %v9763, %v9863
      %v9865 = vpop.f32.mrb[0].mxu0
      %v9866 = vadd.f32 %v9765, %v9865
      %9867 = vmatprep.mubr.bf16.mxu0 %v9005
      %9868 = vmatmul.mubr.bf16.gmra.mrb[0].mxu0 %v9003
      %v9869 = vpop.f32.mrb[0].mxu0
      %v9870 = vadd.f32 %v9769, %v9869
      %v9871 = vpop.f32.mrb[0].mxu0
      %v9872 = vadd.f32 %v9771, %v9871
      %v9873 = vpop.f32.mrb[0].mxu0
      %v9874 = vadd.f32 %v9773, %v9873
      %v9875 = vpop.f32.mrb[0].mxu0
      %v9876 = vadd.f32 %v9775, %v9875
      %9877 = vmatprep.mubr.bf16.mxu0 %v9019
      %9878 = vmatmul.mubr.bf16.gmra.mrb[0].mxu0 %v9017
      %v9879 = vpop.f32.mrb[0].mxu0
      %v9880 = vadd.f32 %v9779, %v9879
      %v9881 = vpop.f32.mrb[0].mxu0
      %v9882 = vadd.f32 %v9781, %v9881
      %v9883 = vpop.f32.mrb[0].mxu0
      %v9884 = vadd.f32 %v9783, %v9883
      %v9885 = vpop.f32.mrb[0].mxu0
      %v9886 = vadd.f32 %v9785, %v9885
      %9887 = vmatprep.mubr.bf16.mxu0 %v9033
      %9888 = vmatmul.mubr.bf16.gmra.mrb[0].mxu0 %v9031
      %v9889 = vpop.f32.mrb[0].mxu0
      %v9890 = vadd.f32 %v9789, %v9889
      %v9891 = vpop.f32.mrb[0].mxu0
      %v9892 = vadd.f32 %v9791, %v9891
      %v9893 = vpop.f32.mrb[0].mxu0
      %v9894 = vadd.f32 %v9793, %v9893
      %v9895 = vpop.f32.mrb[0].mxu0
      %v9896 = vadd.f32 %v9795, %v9895
      %9897 = vmatprep.mubr.bf16.mxu0 %v9047
      %9898 = vmatmul.mubr.bf16.gmra.mrb[0].mxu0 %v9045
      %v9899 = vpop.f32.mrb[0].mxu0
      %v9900 = vadd.f32 %v9799, %v9899
      %v9901 = vpop.f32.mrb[0].mxu0
      %v9902 = vadd.f32 %v9801, %v9901
      %v9903 = vpop.f32.mrb[0].mxu0
      %v9904 = vadd.f32 %v9803, %v9903
      %v9905 = vpop.f32.mrb[0].mxu0
      %v9906 = vadd.f32 %v9805, %v9905
      %9907 = vmatprep.mubr.bf16.mxu0 %v9046
      %9908 = vmatmul.mubr.bf16.gmra.mrb[0].mxu0 %v9044
      %v9909 = vpop.f32.mrb[0].mxu0
      %v9910 = vadd.f32 %v9809, %v9909
      %v9911 = vpop.f32.mrb[0].mxu0
      %v9912 = vadd.f32 %v9811, %v9911
      %v9913 = vpop.f32.mrb[0].mxu0
      %v9914 = vpop.f32.mrb[0].mxu0
      %9915 = vdwg.mxu0
      %9916 = vmatprep.subr.bf16.mxu0 %v9489
      %9917 = vmatpush1.bf16.msra.mxu0 %v9488
      %9918 = vmatprep.subr.bf16.mxu0 %v9491
      %9919 = vmatpush1.bf16.msra.mxu0 %v9490
      %9920 = vmatprep.subr.bf16.mxu0 0
      %9921 = vmatpush1.bf16.msra.mxu0 0
      %9922 = vmatprep.subr.bf16.mxu0 0
      %9923 = vmatpush1.bf16.msra.mxu0 0
      %9924 = vmatprep.subr.bf16.mxu0 0
      %9925 = vmatpush1.bf16.msra.mxu0 0
      %9926 = vmatprep.subr.bf16.mxu0 0
      %9927 = vmatpush1.bf16.msra.mxu0 0
      %9928 = vmatprep.subr.bf16.mxu0 0
      %9929 = vmatpush1.bf16.msra.mxu0 0
      %9930 = vmatprep.subr.bf16.mxu0 0
      %9931 = vmatpush1.bf16.msra.mxu0 0
      %9932 = vmatprep.subr.bf16.mxu0 0
      %9933 = vmatpush1.bf16.msra.mxu0 0
      %9934 = vmatprep.subr.bf16.mxu0 0
      %9935 = vmatpush1.bf16.msra.mxu0 0
      %9936 = vmatprep.subr.bf16.mxu0 0
      %9937 = vmatpush1.bf16.msra.mxu0 0
      %9938 = vmatprep.subr.bf16.mxu0 0
      %9939 = vmatpush1.bf16.msra.mxu0 0
      %9940 = vmatprep.subr.bf16.mxu0 0
      %9941 = vmatpush1.bf16.msra.mxu0 0
      %9942 = vmatprep.subr.bf16.mxu0 0
      %9943 = vmatpush1.bf16.msra.mxu0 0
      %9944 = vmatprep.subr.bf16.mxu0 0
      %9945 = vmatpush1.bf16.msra.mxu0 0
      %9946 = vmatprep.subr.bf16.mxu0 0
      %9947 = vmatpush1.bf16.msra.mxu0 0
      %9948 = vmatprep.mubr.bf16.mxu0 0
      %9949 = vmatmul.mubr.bf16.gmra.mrb[0].mxu0 %v9593
      %v9950 = vpop.f32.mrb[0].mxu0
      %v9951 = vadd.f32 %v9850, %v9950
      %v9952 = vpop.f32.mrb[0].mxu0
      %v9953 = vadd.f32 %v9852, %v9952
      %v9954 = vpop.f32.mrb[0].mxu0
      %v9955 = vadd.f32 %v9854, %v9954
      %v9956 = vpop.f32.mrb[0].mxu0
      %v9957 = vadd.f32 %v9856, %v9956
      %9958 = vmatprep.mubr.bf16.mxu0 0
      %9959 = vmatmul.mubr.bf16.gmra.mrb[0].mxu0 %v9596
      %v9960 = vpop.f32.mrb[0].mxu0
      %v9961 = vadd.f32 %v9860, %v9960
      %v9962 = vpop.f32.mrb[0].mxu0
      %v9963 = vadd.f32 %v9862, %v9962
      %v9964 = vpop.f32.mrb[0].mxu0
      %v9965 = vadd.f32 %v9864, %v9964
      %v9966 = vpop.f32.mrb[0].mxu0
      %v9967 = vadd.f32 %v9866, %v9966
      %9968 = vmatprep.mubr.bf16.mxu0 0
      %9969 = vmatmul.mubr.bf16.gmra.mrb[0].mxu0 %v9599
      %v9970 = vpop.f32.mrb[0].mxu0
      %v9971 = vadd.f32 %v9870, %v9970
      %v9972 = vpop.f32.mrb[0].mxu0
      %v9973 = vadd.f32 %v9872, %v9972
      %v9974 = vpop.f32.mrb[0].mxu0
      %v9975 = vadd.f32 %v9874, %v9974
      %v9976 = vpop.f32.mrb[0].mxu0
      %v9977 = vadd.f32 %v9876, %v9976
      %9978 = vmatprep.mubr.bf16.mxu0 0
      %9979 = vmatmul.mubr.bf16.gmra.mrb[0].mxu0 %v9602
      %v9980 = vpop.f32.mrb[0].mxu0
      %v9981 = vadd.f32 %v9880, %v9980
      %v9982 = vpop.f32.mrb[0].mxu0
      %v9983 = vadd.f32 %v9882, %v9982
      %v9984 = vpop.f32.mrb[0].mxu0
      %v9985 = vadd.f32 %v9884, %v9984
      %v9986 = vpop.f32.mrb[0].mxu0
      %v9987 = vadd.f32 %v9886, %v9986
      %9988 = vmatprep.mubr.bf16.mxu0 0
      %9989 = vmatmul.mubr.bf16.gmra.mrb[0].mxu0 %v9605
      %v9990 = vpop.f32.mrb[0].mxu0
      %v9991 = vadd.f32 %v9890, %v9990
      %v9992 = vpop.f32.mrb[0].mxu0
      %v9993 = vadd.f32 %v9892, %v9992
      %v9994 = vpop.f32.mrb[0].mxu0
      %v9995 = vadd.f32 %v9894, %v9994
      %v9996 = vpop.f32.mrb[0].mxu0
      %v9997 = vadd.f32 %v9896, %v9996
      %9998 = vmatprep.mubr.bf16.mxu0 0
      %9999 = vmatmul.mubr.bf16.gmra.mrb[0].mxu0 %v9608
      %v10000 = vpop.f32.mrb[0].mxu0
      %v10001 = vadd.f32 %v9900, %v10000
      %v10002 = vpop.f32.mrb[0].mxu0
      %v10003 = vadd.f32 %v9902, %v10002
      %v10004 = vpop.f32.mrb[0].mxu0
      %v10005 = vadd.f32 %v9904, %v10004
      %v10006 = vpop.f32.mrb[0].mxu0
      %v10007 = vadd.f32 %v9906, %v10006
      %10008 = vmatprep.mubr.bf16.mxu0 0
      %10009 = vmatmul.mubr.bf16.gmra.mrb[0].mxu0 %v9611
      %v10010 = vpop.f32.mrb[0].mxu0
      %v10011 = vadd.f32 %v9910, %v10010
      %v10012 = vpop.f32.mrb[0].mxu0
      %v10013 = vadd.f32 %v9912, %v10012
      %v10014 = vpop.f32.mrb[0].mxu0
      %v10015 = vpop.f32.mrb[0].mxu0
      %10016 = vdwg.mxu0
      %v10017 = vadd.f32 %v8742, %v9951
      %v10018 = vadd.f32 %v8744, %v9953
      %v10019 = vadd.f32 %v8746, %v9955
      %v10020 = vadd.f32 %v8748, %v9957
      %v10021 = vadd.f32 %v8752, %v9961
      %v10022 = vadd.f32 %v8754, %v9963
      %v10023 = vadd.f32 %v8756, %v9965
      %v10024 = vadd.f32 %v8758, %v9967
      %v10025 = vadd.f32 %v8762, %v9971
      %v10026 = vadd.f32 %v8764, %v9973
      %v10027 = vadd.f32 %v8766, %v9975
      %v10028 = vadd.f32 %v8768, %v9977
      %v10029 = vadd.f32 %v8772, %v9981
      %v10030 = vadd.f32 %v8774, %v9983
      %v10031 = vadd.f32 %v8776, %v9985
      %v10032 = vadd.f32 %v8778, %v9987
      %v10033 = vadd.f32 %v8782, %v9991
      %v10034 = vadd.f32 %v8784, %v9993
      %v10035 = vadd.f32 %v8786, %v9995
      %v10036 = vadd.f32 %v8788, %v9997
      %v10037 = vadd.f32 %v8792, %v10001
      %v10038 = vadd.f32 %v8794, %v10003
      %v10039 = vadd.f32 %v8796, %v10005
      %v10040 = vadd.f32 %v8798, %v10007
      %v10041 = vadd.f32 %v8802, %v10011
      %v10042 = vadd.f32 %v8804, %v10013
      %v10043 = vld [vmem:[%s5] sm:$0x3]
      %v10045 = vlaneseq
      %v10046 = vshrl.u32 %v10045, 7
      %v10047 = vsub.s32 0, %v10046
      %v10048 = vrot.slane %v10043, %v10047
      %v10049 = vlaneseq
      %v10050 = vshrl.u32 %v10049, 7
      %v10051 = vsub.s32 1, %v10050
      %v10052 = vrot.slane %v10043, %v10051
      %v10055 = vadd.f32 %v10017, %v10048
      %v10056 = vadd.f32 %v10018, %v10052
      %v10057 = vadd.f32 %v10019, %v10048
      %v10058 = vadd.f32 %v10020, %v10052
      %v10059 = vadd.f32 %v10021, %v10048
      %v10060 = vadd.f32 %v10022, %v10052
      %v10061 = vadd.f32 %v10023, %v10048
      %v10062 = vadd.f32 %v10024, %v10052
      %v10063 = vadd.f32 %v10025, %v10048
      %v10064 = vadd.f32 %v10026, %v10052
      %v10065 = vadd.f32 %v10027, %v10048
      %v10066 = vadd.f32 %v10028, %v10052
      %v10067 = vadd.f32 %v10029, %v10048
      %v10068 = vadd.f32 %v10030, %v10052
      %v10069 = vadd.f32 %v10031, %v10048
      %v10070 = vadd.f32 %v10032, %v10052
      %v10071 = vadd.f32 %v10033, %v10048
      %v10072 = vadd.f32 %v10034, %v10052
      %v10073 = vadd.f32 %v10035, %v10048
      %v10074 = vadd.f32 %v10036, %v10052
      %v10075 = vadd.f32 %v10037, %v10048
      %v10076 = vadd.f32 %v10038, %v10052
      %v10077 = vadd.f32 %v10039, %v10048
      %v10078 = vadd.f32 %v10040, %v10052
      %v10079 = vadd.f32 %v10041, %v10048
      %v10080 = vadd.f32 %v10042, %v10052
      %v10081 = vmax.f32 %v10055, 0.0
      %v10082 = vmax.f32 %v10056, 0.0
      %v10083 = vmax.f32 %v10057, 0.0
      %v10084 = vmax.f32 %v10058, 0.0
      %v10085 = vmax.f32 %v10059, 0.0
      %v10086 = vmax.f32 %v10060, 0.0
      %v10087 = vmax.f32 %v10061, 0.0
      %v10088 = vmax.f32 %v10062, 0.0
      %v10089 = vmax.f32 %v10063, 0.0
      %v10090 = vmax.f32 %v10064, 0.0
      %v10091 = vmax.f32 %v10065, 0.0
      %v10092 = vmax.f32 %v10066, 0.0
      %v10093 = vmax.f32 %v10067, 0.0
      %v10094 = vmax.f32 %v10068, 0.0
      %v10095 = vmax.f32 %v10069, 0.0
      %v10096 = vmax.f32 %v10070, 0.0
      %v10097 = vmax.f32 %v10071, 0.0
      %v10098 = vmax.f32 %v10072, 0.0
      %v10099 = vmax.f32 %v10073, 0.0
      %v10100 = vmax.f32 %v10074, 0.0
      %v10101 = vmax.f32 %v10075, 0.0
      %v10102 = vmax.f32 %v10076, 0.0
      %v10103 = vmax.f32 %v10077, 0.0
      %v10104 = vmax.f32 %v10078, 0.0
      %v10105 = vmax.f32 %v10079, 0.0
      %v10106 = vmax.f32 %v10080, 0.0
      %v10133 = vrot.slane %v10081, 1
      %v10134 = vrot.slane %v10083, 1
      %v10135 = vsel %vm4327, %v10133, %v10134
      %v10136 = vrot.slane %v10082, 1
      %v10137 = vrot.slane %v10084, 1
      %v10138 = vsel %vm4327, %v10136, %v10137
      %v10139 = vrot.slane %v10085, 1
      %v10140 = vsel %vm4327, %v10134, %v10139
      %v10141 = vrot.slane %v10086, 1
      %v10142 = vsel %vm4327, %v10137, %v10141
      %v10143 = vrot.slane %v10087, 1
      %v10144 = vsel %vm4327, %v10139, %v10143
      %v10145 = vrot.slane %v10088, 1
      %v10146 = vsel %vm4327, %v10141, %v10145
      %v10147 = vrot.slane %v10089, 1
      %v10148 = vsel %vm4327, %v10143, %v10147
      %v10149 = vrot.slane %v10090, 1
      %v10150 = vsel %vm4327, %v10145, %v10149
      %v10151 = vrot.slane %v10091, 1
      %v10152 = vsel %vm4327, %v10147, %v10151
      %v10153 = vrot.slane %v10092, 1
      %v10154 = vsel %vm4327, %v10149, %v10153
      %v10155 = vrot.slane %v10093, 1
      %v10156 = vsel %vm4327, %v10151, %v10155
      %v10157 = vrot.slane %v10094, 1
      %v10158 = vsel %vm4327, %v10153, %v10157
      %v10159 = vrot.slane %v10095, 1
      %v10160 = vsel %vm4327, %v10155, %v10159
      %v10161 = vrot.slane %v10096, 1
      %v10162 = vsel %vm4327, %v10157, %v10161
      %v10163 = vrot.slane %v10097, 1
      %v10164 = vsel %vm4327, %v10159, %v10163
      %v10165 = vrot.slane %v10098, 1
      %v10166 = vsel %vm4327, %v10161, %v10165
      %v10167 = vrot.slane %v10099, 1
      %v10168 = vsel %vm4327, %v10163, %v10167
      %v10169 = vrot.slane %v10100, 1
      %v10170 = vsel %vm4327, %v10165, %v10169
      %v10171 = vrot.slane %v10101, 1
      %v10172 = vsel %vm4327, %v10167, %v10171
      %v10173 = vrot.slane %v10102, 1
      %v10174 = vsel %vm4327, %v10169, %v10173
      %v10175 = vrot.slane %v10103, 1
      %v10176 = vsel %vm4327, %v10171, %v10175
      %v10177 = vrot.slane %v10104, 1
      %v10178 = vsel %vm4327, %v10173, %v10177
      %v10179 = vrot.slane %v10105, 1
      %v10180 = vsel %vm4327, %v10175, %v10179
      %v10181 = vrot.slane %v10106, 1
      %v10182 = vsel %vm4327, %v10177, %v10181
      %v10209 = vmax.f32 %v10081, %v10135
      %v10210 = vmax.f32 %v10082, %v10138
      %v10211 = vmax.f32 %v10083, %v10140
      %v10212 = vmax.f32 %v10084, %v10142
      %v10213 = vmax.f32 %v10085, %v10144
      %v10214 = vmax.f32 %v10086, %v10146
      %v10215 = vmax.f32 %v10087, %v10148
      %v10216 = vmax.f32 %v10088, %v10150
      %v10217 = vmax.f32 %v10089, %v10152
      %v10218 = vmax.f32 %v10090, %v10154
      %v10219 = vmax.f32 %v10091, %v10156
      %v10220 = vmax.f32 %v10092, %v10158
      %v10221 = vmax.f32 %v10093, %v10160
      %v10222 = vmax.f32 %v10094, %v10162
      %v10223 = vmax.f32 %v10095, %v10164
      %v10224 = vmax.f32 %v10096, %v10166
      %v10225 = vmax.f32 %v10097, %v10168
      %v10226 = vmax.f32 %v10098, %v10170
      %v10227 = vmax.f32 %v10099, %v10172
      %v10228 = vmax.f32 %v10100, %v10174
      %v10229 = vmax.f32 %v10101, %v10176
      %v10230 = vmax.f32 %v10102, %v10178
      %v10231 = vmax.f32 %v10103, %v10180
      %v10232 = vmax.f32 %v10104, %v10182
      %v10233 = vmax.f32 %v10105, %v10179
      %v10234 = vmax.f32 %v10106, %v10181
      %v10235 = vld [vmem:[%s6] sm:$0xff]
      %v10236 = vld [vmem:[%s6 + $0x8] sm:$0xff]
      %v10237 = vld [vmem:[%s6 + $0x10] sm:$0xff]
      %v10238 = vld [vmem:[%s6 + $0x18] sm:$0xff]
      %v10239 = vld [vmem:[%s6 + $0x20] sm:$0xff]
      %vm10240 = vcmask 826368
      %v10242 = vsel %vm10240, %v10235, 0
      %v10245 = vsel %vm10240, %v10236, 0
      %v10248 = vsel %vm10240, %v10237, 0
      %v10251 = vsel %vm10240, %v10238, 0
      %v10254 = vsel %vm10240, %v10239, 0
      %v10257 = vsel %vm5171, %v10233, 0
      %v10260 = vsel %vm5171, %v10234, 0
      %10262 = vmatprep.subr.mxu0 %v10210
      %10263 = vmatpush1.msra.mxu0 %v10209
      %10264 = vmatprep.subr.mxu0 %v10212
      %10265 = vmatpush1.msra.mxu0 %v10211
      %10266 = vmatprep.subr.mxu0 %v10214
      %10267 = vmatpush1.msra.mxu0 %v10213
      %10268 = vmatprep.subr.mxu0 %v10216
      %10269 = vmatpush1.msra.mxu0 %v10215
      %10270 = vmatprep.subr.mxu0 %v10218
      %10271 = vmatpush1.msra.mxu0 %v10217
      %10272 = vmatprep.subr.mxu0 %v10220
      %10273 = vmatpush1.msra.mxu0 %v10219
      %10274 = vmatprep.subr.mxu0 %v10222
      %10275 = vmatpush1.msra.mxu0 %v10221
      %10276 = vmatprep.subr.mxu0 %v10224
      %10277 = vmatpush1.msra.mxu0 %v10223
      %10278 = vmatprep.subr.mxu0 %v10226
      %10279 = vmatpush1.msra.mxu0 %v10225
      %10280 = vmatprep.subr.mxu0 %v10228
      %10281 = vmatpush1.msra.mxu0 %v10227
      %10282 = vmatprep.subr.mxu0 %v10230
      %10283 = vmatpush1.msra.mxu0 %v10229
      %10284 = vmatprep.subr.mxu0 %v10232
      %10285 = vmatpush1.msra.mxu0 %v10231
      %10286 = vmatprep.subr.mxu0 %v10260
      %10287 = vmatpush1.msra.mxu0 %v10257
      %10288 = vmatprep.subr.mxu0 0.0
      %10289 = vmatpush1.msra.mxu0 0.0
      %10290 = vmatprep.subr.mxu0 0.0
      %10291 = vmatpush1.msra.mxu0 0.0
      %10292 = vmatprep.subr.mxu0 0.0
      %10293 = vmatpush1.msra.mxu0 0.0
      %10294 = vmatprep.subr.mxu0 0.0
      %10295 = vmatpush1.msra.mxu0 0.0
      %10296 = vmatprep.subr.mxu0 0.0
      %10297 = vmatpush1.msra.mxu0 0.0
      %10298 = vmatprep.subr.mxu0 0.0
      %10299 = vmatpush1.msra.mxu0 0.0
      %10300 = vmatprep.subr.mxu0 0.0
      %10301 = vmatpush1.msra.mxu0 0.0
      %10302 = vmatprep.subr.mxu0 0.0
      %10303 = vmatpush1.msra.mxu0 0.0
      %10304 = vmatprep.subr.mxu0 0.0
      %10305 = vmatpush1.msra.mxu0 0.0
      %10306 = vmatprep.subr.mxu0 0.0
      %10307 = vmatpush1.msra.mxu0 0.0
      %10308 = vmatprep.subr.mxu0 0.0
      %10309 = vmatpush1.msra.mxu0 0.0
      %10310 = vmatprep.subr.mxu0 0.0
      %10311 = vmatpush1.msra.mxu0 0.0
      %10312 = vmatprep.subr.mxu0 0.0
      %10313 = vmatpush1.msra.mxu0 0.0
      %10314 = vmatprep.subr.mxu0 0.0
      %10315 = vmatpush1.msra.mxu0 0.0
      %10316 = vmatprep.subr.mxu0 0.0
      %10317 = vmatpush1.msra.mxu0 0.0
      %10318 = vmatprep.subr.mxu0 0.0
      %10319 = vmatpush1.msra.mxu0 0.0
      %10320 = vmatprep.subr.mxu0 0.0
      %10321 = vmatpush1.msra.mxu0 0.0
      %10322 = vmatprep.subr.mxu0 0.0
      %10323 = vmatpush1.msra.mxu0 0.0
      %10324 = vmatprep.subr.mxu0 0.0
      %10325 = vmatpush1.msra.mxu0 0.0
      %10326 = vmatprep.mubr.f32.mxu0 0.0
      %10327 = vmatmul.mubr.f32.gmra.mrb[0].mxu0 %v10242
      %v10328 = vpop.f32.mrb[0].mxu0
      %v10329 = vadd.f32 0.0, %v10328
      %v10330 = vpop.f32.mrb[0].mxu0
      %v10331 = vadd.f32 0.0, %v10330
      %10332 = vmatprep.mubr.f32.mxu0 0.0
      %10333 = vmatmul.mubr.f32.gmra.mrb[0].mxu0 %v10245
      %v10334 = vpop.f32.mrb[0].mxu0
      %v10335 = vadd.f32 0.0, %v10334
      %v10336 = vpop.f32.mrb[0].mxu0
      %v10337 = vadd.f32 0.0, %v10336
      %10338 = vmatprep.mubr.f32.mxu0 0.0
      %10339 = vmatmul.mubr.f32.gmra.mrb[0].mxu0 %v10248
      %v10340 = vpop.f32.mrb[0].mxu0
      %v10341 = vadd.f32 0.0, %v10340
      %v10342 = vpop.f32.mrb[0].mxu0
      %v10343 = vadd.f32 0.0, %v10342
      %10344 = vmatprep.mubr.f32.mxu0 0.0
      %10345 = vmatmul.mubr.f32.gmra.mrb[0].mxu0 %v10251
      %v10346 = vpop.f32.mrb[0].mxu0
      %v10347 = vadd.f32 0.0, %v10346
      %v10348 = vpop.f32.mrb[0].mxu0
      %v10349 = vadd.f32 0.0, %v10348
      %10350 = vmatprep.mubr.f32.mxu0 0.0
      %10351 = vmatmul.mubr.f32.gmra.mrb[0].mxu0 %v10254
      %v10352 = vpop.f32.mrb[0].mxu0
      %v10353 = vadd.f32 0.0, %v10352
      %v10354 = vpop.f32.mrb[0].mxu0
      %v10355 = vadd.f32 0.0, %v10354
      %10356 = vdwg.mxu0
      %10367 = vrot.lane.b32.xlu0 %v10329, 112
      %v10368 = vpop.permute.xlu0 %10367
      %10369 = vrot.lane.b32.xlu0 %v10331, 112
      %v10370 = vpop.permute.xlu0 %10369
      %10371 = vrot.lane.b32.xlu0 %v10335, 112
      %v10372 = vpop.permute.xlu0 %10371
      %10373 = vrot.lane.b32.xlu0 %v10337, 112
      %v10374 = vpop.permute.xlu0 %10373
      %10375 = vrot.lane.b32.xlu0 %v10341, 112
      %v10376 = vpop.permute.xlu0 %10375
      %10377 = vrot.lane.b32.xlu0 %v10343, 112
      %v10378 = vpop.permute.xlu0 %10377
      %10379 = vrot.lane.b32.xlu0 %v10347, 112
      %v10380 = vpop.permute.xlu0 %10379
      %10381 = vrot.lane.b32.xlu0 %v10349, 112
      %v10382 = vpop.permute.xlu0 %10381
      %10383 = vrot.lane.b32.xlu0 %v10353, 112
      %v10384 = vpop.permute.xlu0 %10383
      %10385 = vrot.lane.b32.xlu0 %v10355, 112
      %v10386 = vpop.permute.xlu0 %10385
      %vm10387 = vcmask 916480
      %v10388 = vsel %vm10387, %v10368, %v10370
      %v10389 = vsel %vm10387, %v10372, %v10374
      %v10390 = vsel %vm10387, %v10376, %v10378
      %v10391 = vsel %vm10387, %v10380, %v10382
      %v10392 = vsel %vm10387, %v10384, %v10386
      %v10403 = vmax.f32 %v10329, %v10388
      %v10404 = vmax.f32 %v10331, %v10370
      %v10405 = vmax.f32 %v10335, %v10389
      %v10406 = vmax.f32 %v10337, %v10374
      %v10407 = vmax.f32 %v10341, %v10390
      %v10408 = vmax.f32 %v10343, %v10378
      %v10409 = vmax.f32 %v10347, %v10391
      %v10410 = vmax.f32 %v10349, %v10382
      %v10411 = vmax.f32 %v10353, %v10392
      %v10412 = vmax.f32 %v10355, %v10386
      %v10413 = vld [vmem:[%s7] sm:$0xff]
      %v10414 = vld [vmem:[%s7 + $0x8] sm:$0xff]
      %v10415 = vld [vmem:[%s7 + $0x10] sm:$0xff]
      %v10416 = vld [vmem:[%s7 + $0x18] sm:$0xff]
      %v10417 = vld [vmem:[%s7 + $0x20] sm:$0xff]
      %v10418 = vld [vmem:[%s7 + $0x28] sm:$0xff]
      %v10419 = vld [vmem:[%s7 + $0x30] sm:$0xff]
      %v10420 = vld [vmem:[%s7 + $0x38] sm:$0xff]
      %v10421 = vld [vmem:[%s7 + $0x40] sm:$0xff]
      %v10422 = vld [vmem:[%s7 + $0x48] sm:$0xff]
      %v10423 = vld [vmem:[%s7 + $0x50] sm:$0xff]
      %v10424 = vld [vmem:[%s7 + $0x58] sm:$0xff]
      %v10425 = vld [vmem:[%s7 + $0x60] sm:$0xff]
      %v10426 = vld [vmem:[%s7 + $0x68] sm:$0xff]
      %v10427 = vld [vmem:[%s7 + $0x70] sm:$0xff]
      %v10428 = vld [vmem:[%s7 + $0x78] sm:$0xff]
      %v10429 = vld [vmem:[%s7 + $0x80] sm:$0xff]
      %v10430 = vld [vmem:[%s7 + $0x88] sm:$0xff]
      %v10431 = vld [vmem:[%s7 + $0x90] sm:$0xff]
      %v10432 = vld [vmem:[%s7 + $0x98] sm:$0xff]
      %v10434 = vsel %vm7464, %v10404, 0
      %v10437 = vsel %vm7464, %v10406, 0
      %v10440 = vsel %vm7464, %v10408, 0
      %v10443 = vsel %vm7464, %v10410, 0
      %v10446 = vsel %vm7464, %v10412, 0
      %10448 = vmatprep.subr.mxu0 0.0
      %10449 = vmatpush1.msra.mxu0 %v10413
      %10450 = vmatprep.subr.mxu0 0.0
      %10451 = vmatpush1.msra.mxu0 %v10414
      %10452 = vmatprep.subr.mxu0 0.0
      %10453 = vmatpush1.msra.mxu0 %v10415
      %10454 = vmatprep.subr.mxu0 0.0
      %10455 = vmatpush1.msra.mxu0 %v10416
      %10456 = vmatprep.subr.mxu0 0.0
      %10457 = vmatpush1.msra.mxu0 %v10417
      %10458 = vmatprep.subr.mxu0 0.0
      %10459 = vmatpush1.msra.mxu0 %v10418
      %10460 = vmatprep.subr.mxu0 0.0
      %10461 = vmatpush1.msra.mxu0 %v10419
      %10462 = vmatprep.subr.mxu0 0.0
      %10463 = vmatpush1.msra.mxu0 %v10420
      %10464 = vmatprep.subr.mxu0 0.0
      %10465 = vmatpush1.msra.mxu0 %v10421
      %10466 = vmatprep.subr.mxu0 0.0
      %10467 = vmatpush1.msra.mxu0 %v10422
      %10468 = vmatprep.subr.mxu0 0.0
      %10469 = vmatpush1.msra.mxu0 %v10423
      %10470 = vmatprep.subr.mxu0 0.0
      %10471 = vmatpush1.msra.mxu0 %v10424
      %10472 = vmatprep.subr.mxu0 0.0
      %10473 = vmatpush1.msra.mxu0 %v10425
      %10474 = vmatprep.subr.mxu0 0.0
      %10475 = vmatpush1.msra.mxu0 %v10426
      %10476 = vmatprep.subr.mxu0 0.0
      %10477 = vmatpush1.msra.mxu0 %v10427
      %10478 = vmatprep.subr.mxu0 0.0
      %10479 = vmatpush1.msra.mxu0 %v10428
      %10480 = vmatprep.subr.mxu0 0.0
      %10481 = vmatpush1.msra.mxu0 %v10429
      %10482 = vmatprep.subr.mxu0 0.0
      %10483 = vmatpush1.msra.mxu0 %v10430
      %10484 = vmatprep.subr.mxu0 0.0
      %10485 = vmatpush1.msra.mxu0 %v10431
      %10486 = vmatprep.subr.mxu0 0.0
      %10487 = vmatpush1.msra.mxu0 %v10432
      %10488 = vmatprep.subr.mxu0 0.0
      %10489 = vmatpush1.msra.mxu0 0.0
      %10490 = vmatprep.subr.mxu0 0.0
      %10491 = vmatpush1.msra.mxu0 0.0
      %10492 = vmatprep.subr.mxu0 0.0
      %10493 = vmatpush1.msra.mxu0 0.0
      %10494 = vmatprep.subr.mxu0 0.0
      %10495 = vmatpush1.msra.mxu0 0.0
      %10496 = vmatprep.subr.mxu0 0.0
      %10497 = vmatpush1.msra.mxu0 0.0
      %10498 = vmatprep.subr.mxu0 0.0
      %10499 = vmatpush1.msra.mxu0 0.0
      %10500 = vmatprep.subr.mxu0 0.0
      %10501 = vmatpush1.msra.mxu0 0.0
      %10502 = vmatprep.subr.mxu0 0.0
      %10503 = vmatpush1.msra.mxu0 0.0
      %10504 = vmatprep.subr.mxu0 0.0
      %10505 = vmatpush1.msra.mxu0 0.0
      %10506 = vmatprep.subr.mxu0 0.0
      %10507 = vmatpush1.msra.mxu0 0.0
      %10508 = vmatprep.subr.mxu0 0.0
      %10509 = vmatpush1.msra.mxu0 0.0
      %10510 = vmatprep.subr.mxu0 0.0
      %10511 = vmatpush1.msra.mxu0 0.0
      %10512 = vmatprep.mubr.f32.mxu0 %v10434
      %10513 = vmatmul.mubr.f32.gmra.mrb[0].mxu0 %v10403
      %v10514 = vpop.f32.mrb[0].mxu0
      %v10515 = vadd.f32 0.0, %v10514
      %v10516 = vpop.f32.mrb[0].mxu0
      %10517 = vmatprep.mubr.f32.mxu0 %v10437
      %10518 = vmatmul.mubr.f32.gmra.mrb[0].mxu0 %v10405
      %v10519 = vpop.f32.mrb[0].mxu0
      %v10520 = vadd.f32 0.0, %v10519
      %v10521 = vpop.f32.mrb[0].mxu0
      %10522 = vmatprep.mubr.f32.mxu0 %v10440
      %10523 = vmatmul.mubr.f32.gmra.mrb[0].mxu0 %v10407
      %v10524 = vpop.f32.mrb[0].mxu0
      %v10525 = vadd.f32 0.0, %v10524
      %v10526 = vpop.f32.mrb[0].mxu0
      %10527 = vmatprep.mubr.f32.mxu0 %v10443
      %10528 = vmatmul.mubr.f32.gmra.mrb[0].mxu0 %v10409
      %v10529 = vpop.f32.mrb[0].mxu0
      %v10530 = vadd.f32 0.0, %v10529
      %v10531 = vpop.f32.mrb[0].mxu0
      %10532 = vmatprep.mubr.f32.mxu0 %v10446
      %10533 = vmatmul.mubr.f32.gmra.mrb[0].mxu0 %v10411
      %v10534 = vpop.f32.mrb[0].mxu0
      %v10535 = vadd.f32 0.0, %v10534
      %v10536 = vpop.f32.mrb[0].mxu0
      %10537 = vdwg.mxu0
      %v10538 = vld [vmem:[%s8] sm:$0xff]
      %v10539 = vld [vmem:[%s8 + $0x8] sm:$0xff]
      %v10540 = vld [vmem:[%s8 + $0x10] sm:$0xff]
      %v10541 = vld [vmem:[%s8 + $0x18] sm:$0xff]
      %v10542 = vld [vmem:[%s8 + $0x20] sm:$0xff]
      %v10543 = vld [vmem:[%s8 + $0x28] sm:$0xff]
      %v10544 = vld [vmem:[%s8 + $0x30] sm:$0xff]
      %v10545 = vld [vmem:[%s8 + $0x38] sm:$0xff]
      %v10546 = vld [vmem:[%s8 + $0x40] sm:$0xff]
      %v10547 = vld [vmem:[%s8 + $0x48] sm:$0xff]
      %s10548 = scalar_lea.vmem %s8, 80
      %v10549 = vld [vmem:[%s10548] sm:$0xff]
      %v10550 = vld [vmem:[%s10548 + $0x8] sm:$0xff]
      %v10551 = vld [vmem:[%s10548 + $0x10] sm:$0xff]
      %v10552 = vld [vmem:[%s10548 + $0x18] sm:$0xff]
      %v10553 = vld [vmem:[%s10548 + $0x20] sm:$0xff]
      %v10554 = vld [vmem:[%s10548 + $0x28] sm:$0xff]
      %v10555 = vld [vmem:[%s10548 + $0x30] sm:$0xff]
      %v10556 = vld [vmem:[%s10548 + $0x38] sm:$0xff]
      %v10557 = vld [vmem:[%s10548 + $0x40] sm:$0xff]
      %v10558 = vld [vmem:[%s10548 + $0x48] sm:$0xff]
      %vm10559 = vcmask 654336
      %v10561 = vsel %vm10559, %v10520, 0
      %10563 = vmatprep.subr.mxu0 0.0
      %10564 = vmatpush1.msra.mxu0 %v10549
      %10565 = vmatprep.subr.mxu0 0.0
      %10566 = vmatpush1.msra.mxu0 %v10550
      %10567 = vmatprep.subr.mxu0 0.0
      %10568 = vmatpush1.msra.mxu0 %v10551
      %10569 = vmatprep.subr.mxu0 0.0
      %10570 = vmatpush1.msra.mxu0 %v10552
      %10571 = vmatprep.subr.mxu0 0.0
      %10572 = vmatpush1.msra.mxu0 %v10553
      %10573 = vmatprep.subr.mxu0 0.0
      %10574 = vmatpush1.msra.mxu0 %v10554
      %10575 = vmatprep.subr.mxu0 0.0
      %10576 = vmatpush1.msra.mxu0 %v10555
      %10577 = vmatprep.subr.mxu0 0.0
      %10578 = vmatpush1.msra.mxu0 %v10556
      %10579 = vmatprep.subr.mxu0 0.0
      %10580 = vmatpush1.msra.mxu0 %v10557
      %10581 = vmatprep.subr.mxu0 0.0
      %10582 = vmatpush1.msra.mxu0 %v10558
      %10583 = vmatprep.subr.mxu0 0.0
      %10584 = vmatpush1.msra.mxu0 0.0
      %10585 = vmatprep.subr.mxu0 0.0
      %10586 = vmatpush1.msra.mxu0 0.0
      %10587 = vmatprep.subr.mxu0 0.0
      %10588 = vmatpush1.msra.mxu0 0.0
      %10589 = vmatprep.subr.mxu0 0.0
      %10590 = vmatpush1.msra.mxu0 0.0
      %10591 = vmatprep.subr.mxu0 0.0
      %10592 = vmatpush1.msra.mxu0 0.0
      %10593 = vmatprep.subr.mxu0 0.0
      %10594 = vmatpush1.msra.mxu0 0.0
      %10595 = vmatprep.subr.mxu0 0.0
      %10596 = vmatpush1.msra.mxu0 0.0
      %10597 = vmatprep.subr.mxu0 0.0
      %10598 = vmatpush1.msra.mxu0 0.0
      %10599 = vmatprep.subr.mxu0 0.0
      %10600 = vmatpush1.msra.mxu0 0.0
      %10601 = vmatprep.subr.mxu0 0.0
      %10602 = vmatpush1.msra.mxu0 0.0
      %10603 = vmatprep.subr.mxu0 0.0
      %10604 = vmatpush1.msra.mxu0 0.0
      %10605 = vmatprep.subr.mxu0 0.0
      %10606 = vmatpush1.msra.mxu0 0.0
      %10607 = vmatprep.subr.mxu0 0.0
      %10608 = vmatpush1.msra.mxu0 0.0
      %10609 = vmatprep.subr.mxu0 0.0
      %10610 = vmatpush1.msra.mxu0 0.0
      %10611 = vmatprep.subr.mxu0 0.0
      %10612 = vmatpush1.msra.mxu0 0.0
      %10613 = vmatprep.subr.mxu0 0.0
      %10614 = vmatpush1.msra.mxu0 0.0
      %10615 = vmatprep.subr.mxu0 0.0
      %10616 = vmatpush1.msra.mxu0 0.0
      %10617 = vmatprep.subr.mxu0 0.0
      %10618 = vmatpush1.msra.mxu0 0.0
      %10619 = vmatprep.subr.mxu0 0.0
      %10620 = vmatpush1.msra.mxu0 0.0
      %10621 = vmatprep.subr.mxu0 0.0
      %10622 = vmatpush1.msra.mxu0 0.0
      %10623 = vmatprep.subr.mxu0 0.0
      %10624 = vmatpush1.msra.mxu0 0.0
      %10625 = vmatprep.subr.mxu0 0.0
      %10626 = vmatpush1.msra.mxu0 0.0
      %10627 = vmatprep.mubr.f32.mxu0 0.0
      %10628 = vmatmul.mubr.f32.gmra.mrb[0].mxu0 %v10561
      %v10629 = vpop.f32.mrb[0].mxu0
      %v10630 = vadd.f32 0.0, %v10629
      %v10631 = vpop.f32.mrb[0].mxu0
      %10632 = vdwg.mxu0
      %v10634 = vsel %vm10559, %v10515, 0
      %10636 = vmatprep.subr.mxu0 0.0
      %10637 = vmatpush1.msra.mxu0 %v10538
      %10638 = vmatprep.subr.mxu0 0.0
      %10639 = vmatpush1.msra.mxu0 %v10539
      %10640 = vmatprep.subr.mxu0 0.0
      %10641 = vmatpush1.msra.mxu0 %v10540
      %10642 = vmatprep.subr.mxu0 0.0
      %10643 = vmatpush1.msra.mxu0 %v10541
      %10644 = vmatprep.subr.mxu0 0.0
      %10645 = vmatpush1.msra.mxu0 %v10542
      %10646 = vmatprep.subr.mxu0 0.0
      %10647 = vmatpush1.msra.mxu0 %v10543
      %10648 = vmatprep.subr.mxu0 0.0
      %10649 = vmatpush1.msra.mxu0 %v10544
      %10650 = vmatprep.subr.mxu0 0.0
      %10651 = vmatpush1.msra.mxu0 %v10545
      %10652 = vmatprep.subr.mxu0 0.0
      %10653 = vmatpush1.msra.mxu0 %v10546
      %10654 = vmatprep.subr.mxu0 0.0
      %10655 = vmatpush1.msra.mxu0 %v10547
      %10656 = vmatprep.subr.mxu0 0.0
      %10657 = vmatpush1.msra.mxu0 0.0
      %10658 = vmatprep.subr.mxu0 0.0
      %10659 = vmatpush1.msra.mxu0 0.0
      %10660 = vmatprep.subr.mxu0 0.0
      %10661 = vmatpush1.msra.mxu0 0.0
      %10662 = vmatprep.subr.mxu0 0.0
      %10663 = vmatpush1.msra.mxu0 0.0
      %10664 = vmatprep.subr.mxu0 0.0
      %10665 = vmatpush1.msra.mxu0 0.0
      %10666 = vmatprep.subr.mxu0 0.0
      %10667 = vmatpush1.msra.mxu0 0.0
      %10668 = vmatprep.subr.mxu0 0.0
      %10669 = vmatpush1.msra.mxu0 0.0
      %10670 = vmatprep.subr.mxu0 0.0
      %10671 = vmatpush1.msra.mxu0 0.0
      %10672 = vmatprep.subr.mxu0 0.0
      %10673 = vmatpush1.msra.mxu0 0.0
      %10674 = vmatprep.subr.mxu0 0.0
      %10675 = vmatpush1.msra.mxu0 0.0
      %10676 = vmatprep.subr.mxu0 0.0
      %10677 = vmatpush1.msra.mxu0 0.0
      %10678 = vmatprep.subr.mxu0 0.0
      %10679 = vmatpush1.msra.mxu0 0.0
      %10680 = vmatprep.subr.mxu0 0.0
      %10681 = vmatpush1.msra.mxu0 0.0
      %10682 = vmatprep.subr.mxu0 0.0
      %10683 = vmatpush1.msra.mxu0 0.0
      %10684 = vmatprep.subr.mxu0 0.0
      %10685 = vmatpush1.msra.mxu0 0.0
      %10686 = vmatprep.subr.mxu0 0.0
      %10687 = vmatpush1.msra.mxu0 0.0
      %10688 = vmatprep.subr.mxu0 0.0
      %10689 = vmatpush1.msra.mxu0 0.0
      %10690 = vmatprep.subr.mxu0 0.0
      %10691 = vmatpush1.msra.mxu0 0.0
      %10692 = vmatprep.subr.mxu0 0.0
      %10693 = vmatpush1.msra.mxu0 0.0
      %10694 = vmatprep.subr.mxu0 0.0
      %10695 = vmatpush1.msra.mxu0 0.0
      %10696 = vmatprep.subr.mxu0 0.0
      %10697 = vmatpush1.msra.mxu0 0.0
      %10698 = vmatprep.subr.mxu0 0.0
      %10699 = vmatpush1.msra.mxu0 0.0
      %10700 = vmatprep.mubr.f32.mxu0 0.0
      %10701 = vmatmul.mubr.f32.gmra.mrb[0].mxu0 %v10634
      %v10702 = vpop.f32.mrb[0].mxu0
      %v10703 = vadd.f32 %v10630, %v10702
      %v10704 = vpop.f32.mrb[0].mxu0
      %10705 = vdwg.mxu0
      %s10706 = scalar_lea.vmem %s8, 160
      %v10707 = vld [vmem:[%s10706] sm:$0xff]
      %v10708 = vld [vmem:[%s10706 + $0x8] sm:$0xff]
      %v10709 = vld [vmem:[%s10706 + $0x10] sm:$0xff]
      %v10710 = vld [vmem:[%s10706 + $0x18] sm:$0xff]
      %v10711 = vld [vmem:[%s10706 + $0x20] sm:$0xff]
      %v10712 = vld [vmem:[%s10706 + $0x28] sm:$0xff]
      %v10713 = vld [vmem:[%s10706 + $0x30] sm:$0xff]
      %v10714 = vld [vmem:[%s10706 + $0x38] sm:$0xff]
      %v10715 = vld [vmem:[%s10706 + $0x40] sm:$0xff]
      %v10716 = vld [vmem:[%s10706 + $0x48] sm:$0xff]
      %v10718 = vsel %vm10559, %v10525, 0
      %10720 = vmatprep.subr.mxu0 0.0
      %10721 = vmatpush1.msra.mxu0 %v10707
      %10722 = vmatprep.subr.mxu0 0.0
      %10723 = vmatpush1.msra.mxu0 %v10708
      %10724 = vmatprep.subr.mxu0 0.0
      %10725 = vmatpush1.msra.mxu0 %v10709
      %10726 = vmatprep.subr.mxu0 0.0
      %10727 = vmatpush1.msra.mxu0 %v10710
      %10728 = vmatprep.subr.mxu0 0.0
      %10729 = vmatpush1.msra.mxu0 %v10711
      %10730 = vmatprep.subr.mxu0 0.0
      %10731 = vmatpush1.msra.mxu0 %v10712
      %10732 = vmatprep.subr.mxu0 0.0
      %10733 = vmatpush1.msra.mxu0 %v10713
      %10734 = vmatprep.subr.mxu0 0.0
      %10735 = vmatpush1.msra.mxu0 %v10714
      %10736 = vmatprep.subr.mxu0 0.0
      %10737 = vmatpush1.msra.mxu0 %v10715
      %10738 = vmatprep.subr.mxu0 0.0
      %10739 = vmatpush1.msra.mxu0 %v10716
      %10740 = vmatprep.subr.mxu0 0.0
      %10741 = vmatpush1.msra.mxu0 0.0
      %10742 = vmatprep.subr.mxu0 0.0
      %10743 = vmatpush1.msra.mxu0 0.0
      %10744 = vmatprep.subr.mxu0 0.0
      %10745 = vmatpush1.msra.mxu0 0.0
      %10746 = vmatprep.subr.mxu0 0.0
      %10747 = vmatpush1.msra.mxu0 0.0
      %10748 = vmatprep.subr.mxu0 0.0
      %10749 = vmatpush1.msra.mxu0 0.0
      %10750 = vmatprep.subr.mxu0 0.0
      %10751 = vmatpush1.msra.mxu0 0.0
      %10752 = vmatprep.subr.mxu0 0.0
      %10753 = vmatpush1.msra.mxu0 0.0
      %10754 = vmatprep.subr.mxu0 0.0
      %10755 = vmatpush1.msra.mxu0 0.0
      %10756 = vmatprep.subr.mxu0 0.0
      %10757 = vmatpush1.msra.mxu0 0.0
      %10758 = vmatprep.subr.mxu0 0.0
      %10759 = vmatpush1.msra.mxu0 0.0
      %10760 = vmatprep.subr.mxu0 0.0
      %10761 = vmatpush1.msra.mxu0 0.0
      %10762 = vmatprep.subr.mxu0 0.0
      %10763 = vmatpush1.msra.mxu0 0.0
      %10764 = vmatprep.subr.mxu0 0.0
      %10765 = vmatpush1.msra.mxu0 0.0
      %10766 = vmatprep.subr.mxu0 0.0
      %10767 = vmatpush1.msra.mxu0 0.0
      %10768 = vmatprep.subr.mxu0 0.0
      %10769 = vmatpush1.msra.mxu0 0.0
      %10770 = vmatprep.subr.mxu0 0.0
      %10771 = vmatpush1.msra.mxu0 0.0
      %10772 = vmatprep.subr.mxu0 0.0
      %10773 = vmatpush1.msra.mxu0 0.0
      %10774 = vmatprep.subr.mxu0 0.0
      %10775 = vmatpush1.msra.mxu0 0.0
      %10776 = vmatprep.subr.mxu0 0.0
      %10777 = vmatpush1.msra.mxu0 0.0
      %10778 = vmatprep.subr.mxu0 0.0
      %10779 = vmatpush1.msra.mxu0 0.0
      %10780 = vmatprep.subr.mxu0 0.0
      %10781 = vmatpush1.msra.mxu0 0.0
      %10782 = vmatprep.subr.mxu0 0.0
      %10783 = vmatpush1.msra.mxu0 0.0
      %10784 = vmatprep.mubr.f32.mxu0 0.0
      %10785 = vmatmul.mubr.f32.gmra.mrb[0].mxu0 %v10718
      %v10786 = vpop.f32.mrb[0].mxu0
      %v10787 = vadd.f32 0.0, %v10786
      %v10788 = vpop.f32.mrb[0].mxu0
      %10789 = vdwg.mxu0
      %v10790 = vadd.f32 %v10703, %v10787
      %s10791 = scalar_lea.vmem %s8, 240
      %v10792 = vld [vmem:[%s10791] sm:$0xff]
      %v10793 = vld [vmem:[%s10791 + $0x8] sm:$0xff]
      %v10794 = vld [vmem:[%s10791 + $0x10] sm:$0xff]
      %v10795 = vld [vmem:[%s10791 + $0x18] sm:$0xff]
      %v10796 = vld [vmem:[%s10791 + $0x20] sm:$0xff]
      %v10797 = vld [vmem:[%s10791 + $0x28] sm:$0xff]
      %v10798 = vld [vmem:[%s10791 + $0x30] sm:$0xff]
      %v10799 = vld [vmem:[%s10791 + $0x38] sm:$0xff]
      %v10800 = vld [vmem:[%s10791 + $0x40] sm:$0xff]
      %v10801 = vld [vmem:[%s10791 + $0x48] sm:$0xff]
      %v10803 = vsel %vm10559, %v10530, 0
      %10805 = vmatprep.subr.mxu0 0.0
      %10806 = vmatpush1.msra.mxu0 %v10792
      %10807 = vmatprep.subr.mxu0 0.0
      %10808 = vmatpush1.msra.mxu0 %v10793
      %10809 = vmatprep.subr.mxu0 0.0
      %10810 = vmatpush1.msra.mxu0 %v10794
      %10811 = vmatprep.subr.mxu0 0.0
      %10812 = vmatpush1.msra.mxu0 %v10795
      %10813 = vmatprep.subr.mxu0 0.0
      %10814 = vmatpush1.msra.mxu0 %v10796
      %10815 = vmatprep.subr.mxu0 0.0
      %10816 = vmatpush1.msra.mxu0 %v10797
      %10817 = vmatprep.subr.mxu0 0.0
      %10818 = vmatpush1.msra.mxu0 %v10798
      %10819 = vmatprep.subr.mxu0 0.0
      %10820 = vmatpush1.msra.mxu0 %v10799
      %10821 = vmatprep.subr.mxu0 0.0
      %10822 = vmatpush1.msra.mxu0 %v10800
      %10823 = vmatprep.subr.mxu0 0.0
      %10824 = vmatpush1.msra.mxu0 %v10801
      %10825 = vmatprep.subr.mxu0 0.0
      %10826 = vmatpush1.msra.mxu0 0.0
      %10827 = vmatprep.subr.mxu0 0.0
      %10828 = vmatpush1.msra.mxu0 0.0
      %10829 = vmatprep.subr.mxu0 0.0
      %10830 = vmatpush1.msra.mxu0 0.0
      %10831 = vmatprep.subr.mxu0 0.0
      %10832 = vmatpush1.msra.mxu0 0.0
      %10833 = vmatprep.subr.mxu0 0.0
      %10834 = vmatpush1.msra.mxu0 0.0
      %10835 = vmatprep.subr.mxu0 0.0
      %10836 = vmatpush1.msra.mxu0 0.0
      %10837 = vmatprep.subr.mxu0 0.0
      %10838 = vmatpush1.msra.mxu0 0.0
      %10839 = vmatprep.subr.mxu0 0.0
      %10840 = vmatpush1.msra.mxu0 0.0
      %10841 = vmatprep.subr.mxu0 0.0
      %10842 = vmatpush1.msra.mxu0 0.0
      %10843 = vmatprep.subr.mxu0 0.0
      %10844 = vmatpush1.msra.mxu0 0.0
      %10845 = vmatprep.subr.mxu0 0.0
      %10846 = vmatpush1.msra.mxu0 0.0
      %10847 = vmatprep.subr.mxu0 0.0
      %10848 = vmatpush1.msra.mxu0 0.0
      %10849 = vmatprep.subr.mxu0 0.0
      %10850 = vmatpush1.msra.mxu0 0.0
      %10851 = vmatprep.subr.mxu0 0.0
      %10852 = vmatpush1.msra.mxu0 0.0
      %10853 = vmatprep.subr.mxu0 0.0
      %10854 = vmatpush1.msra.mxu0 0.0
      %10855 = vmatprep.subr.mxu0 0.0
      %10856 = vmatpush1.msra.mxu0 0.0
      %10857 = vmatprep.subr.mxu0 0.0
      %10858 = vmatpush1.msra.mxu0 0.0
      %10859 = vmatprep.subr.mxu0 0.0
      %10860 = vmatpush1.msra.mxu0 0.0
      %10861 = vmatprep.subr.mxu0 0.0
      %10862 = vmatpush1.msra.mxu0 0.0
      %10863 = vmatprep.subr.mxu0 0.0
      %10864 = vmatpush1.msra.mxu0 0.0
      %10865 = vmatprep.subr.mxu0 0.0
      %10866 = vmatpush1.msra.mxu0 0.0
      %10867 = vmatprep.subr.mxu0 0.0
      %10868 = vmatpush1.msra.mxu0 0.0
      %10869 = vmatprep.mubr.f32.mxu0 0.0
      %10870 = vmatmul.mubr.f32.gmra.mrb[0].mxu0 %v10803
      %v10871 = vpop.f32.mrb[0].mxu0
      %v10872 = vadd.f32 0.0, %v10871
      %v10873 = vpop.f32.mrb[0].mxu0
      %10874 = vdwg.mxu0
      %v10875 = vadd.f32 %v10790, %v10872
      %s10876 = scalar_lea.vmem %s8, 320
      %v10877 = vld [vmem:[%s10876] sm:$0xff]
      %v10878 = vld [vmem:[%s10876 + $0x8] sm:$0xff]
      %v10879 = vld [vmem:[%s10876 + $0x10] sm:$0xff]
      %v10880 = vld [vmem:[%s10876 + $0x18] sm:$0xff]
      %v10881 = vld [vmem:[%s10876 + $0x20] sm:$0xff]
      %v10882 = vld [vmem:[%s10876 + $0x28] sm:$0xff]
      %v10883 = vld [vmem:[%s10876 + $0x30] sm:$0xff]
      %v10884 = vld [vmem:[%s10876 + $0x38] sm:$0xff]
      %v10885 = vld [vmem:[%s10876 + $0x40] sm:$0xff]
      %v10886 = vld [vmem:[%s10876 + $0x48] sm:$0xff]
      %v10888 = vsel %vm10559, %v10535, 0
      %10890 = vmatprep.subr.mxu0 0.0
      %10891 = vmatpush1.msra.mxu0 %v10877
      %10892 = vmatprep.subr.mxu0 0.0
      %10893 = vmatpush1.msra.mxu0 %v10878
      %10894 = vmatprep.subr.mxu0 0.0
      %10895 = vmatpush1.msra.mxu0 %v10879
      %10896 = vmatprep.subr.mxu0 0.0
      %10897 = vmatpush1.msra.mxu0 %v10880
      %10898 = vmatprep.subr.mxu0 0.0
      %10899 = vmatpush1.msra.mxu0 %v10881
      %10900 = vmatprep.subr.mxu0 0.0
      %10901 = vmatpush1.msra.mxu0 %v10882
      %10902 = vmatprep.subr.mxu0 0.0
      %10903 = vmatpush1.msra.mxu0 %v10883
      %10904 = vmatprep.subr.mxu0 0.0
      %10905 = vmatpush1.msra.mxu0 %v10884
      %10906 = vmatprep.subr.mxu0 0.0
      %10907 = vmatpush1.msra.mxu0 %v10885
      %10908 = vmatprep.subr.mxu0 0.0
      %10909 = vmatpush1.msra.mxu0 %v10886
      %10910 = vmatprep.subr.mxu0 0.0
      %10911 = vmatpush1.msra.mxu0 0.0
      %10912 = vmatprep.subr.mxu0 0.0
      %10913 = vmatpush1.msra.mxu0 0.0
      %10914 = vmatprep.subr.mxu0 0.0
      %10915 = vmatpush1.msra.mxu0 0.0
      %10916 = vmatprep.subr.mxu0 0.0
      %10917 = vmatpush1.msra.mxu0 0.0
      %10918 = vmatprep.subr.mxu0 0.0
      %10919 = vmatpush1.msra.mxu0 0.0
      %10920 = vmatprep.subr.mxu0 0.0
      %10921 = vmatpush1.msra.mxu0 0.0
      %10922 = vmatprep.subr.mxu0 0.0
      %10923 = vmatpush1.msra.mxu0 0.0
      %10924 = vmatprep.subr.mxu0 0.0
      %10925 = vmatpush1.msra.mxu0 0.0
      %10926 = vmatprep.subr.mxu0 0.0
      %10927 = vmatpush1.msra.mxu0 0.0
      %10928 = vmatprep.subr.mxu0 0.0
      %10929 = vmatpush1.msra.mxu0 0.0
      %10930 = vmatprep.subr.mxu0 0.0
      %10931 = vmatpush1.msra.mxu0 0.0
      %10932 = vmatprep.subr.mxu0 0.0
      %10933 = vmatpush1.msra.mxu0 0.0
      %10934 = vmatprep.subr.mxu0 0.0
      %10935 = vmatpush1.msra.mxu0 0.0
      %10936 = vmatprep.subr.mxu0 0.0
      %10937 = vmatpush1.msra.mxu0 0.0
      %10938 = vmatprep.subr.mxu0 0.0
      %10939 = vmatpush1.msra.mxu0 0.0
      %10940 = vmatprep.subr.mxu0 0.0
      %10941 = vmatpush1.msra.mxu0 0.0
      %10942 = vmatprep.subr.mxu0 0.0
      %10943 = vmatpush1.msra.mxu0 0.0
      %10944 = vmatprep.subr.mxu0 0.0
      %10945 = vmatpush1.msra.mxu0 0.0
      %10946 = vmatprep.subr.mxu0 0.0
      %10947 = vmatpush1.msra.mxu0 0.0
      %10948 = vmatprep.subr.mxu0 0.0
      %10949 = vmatpush1.msra.mxu0 0.0
      %10950 = vmatprep.subr.mxu0 0.0
      %10951 = vmatpush1.msra.mxu0 0.0
      %10952 = vmatprep.subr.mxu0 0.0
      %10953 = vmatpush1.msra.mxu0 0.0
      %10954 = vmatprep.mubr.f32.mxu0 0.0
      %10955 = vmatmul.mubr.f32.gmra.mrb[0].mxu0 %v10888
      %v10956 = vpop.f32.mrb[0].mxu0
      %v10957 = vadd.f32 0.0, %v10956
      %v10958 = vpop.f32.mrb[0].mxu0
      %10959 = vdwg.mxu0
      %v10960 = vadd.f32 %v10875, %v10957
      %v10961 = vld [vmem:[%s9] sm:$0x1]
      %v10963 = vlaneseq
      %v10964 = vshrl.u32 %v10963, 7
      %v10965 = vsub.s32 0, %v10964
      %v10966 = vrot.slane %v10961, %v10965
      %v10968 = vadd.f32 %v10960, %v10966
      %v10969 = vmax.f32 %v10968, 0.0
      %v10970 = vld [vmem:[%s10] sm:$0xff]
      %v10971 = vld [vmem:[%s10 + $0x8] sm:$0xff]
      %v10972 = vld [vmem:[%s10 + $0x10] sm:$0xff]
      %v10973 = vld [vmem:[%s10 + $0x18] sm:$0xff]
      %v10974 = vld [vmem:[%s10 + $0x20] sm:$0xff]
      %v10975 = vld [vmem:[%s10 + $0x28] sm:$0xff]
      %v10976 = vld [vmem:[%s10 + $0x30] sm:$0xff]
      %v10977 = vld [vmem:[%s10 + $0x38] sm:$0xff]
      %v10978 = vld [vmem:[%s10 + $0x40] sm:$0xff]
      %v10979 = vld [vmem:[%s10 + $0x48] sm:$0xff]
      %v10980 = vld [vmem:[%s10 + $0x50] sm:$0xff]
      %v10981 = vld [vmem:[%s10 + $0x58] sm:$0xff]
      %v10982 = vld [vmem:[%s10 + $0x60] sm:$0xff]
      %v10983 = vld [vmem:[%s10 + $0x68] sm:$0xff]
      %v10984 = vld [vmem:[%s10 + $0x70] sm:$0xff]
      %v10985 = vld [vmem:[%s11] sm:$0x1]
      %v10987 = vlaneseq
      %v10988 = vshrl.u32 %v10987, 7
      %v10989 = vsub.s32 0, %v10988
      %v10990 = vrot.slane %v10985, %v10989
      %vm10992 = vcmask 982016
      %v10994 = vsel %vm10992, %v10969, 0
      %10996 = vmatprep.subr.mxu0 0.0
      %10997 = vmatpush1.msra.mxu0 %v10970
      %10998 = vmatprep.subr.mxu0 0.0
      %10999 = vmatpush1.msra.mxu0 %v10971
      %11000 = vmatprep.subr.mxu0 0.0
      %11001 = vmatpush1.msra.mxu0 %v10972
      %11002 = vmatprep.subr.mxu0 0.0
      %11003 = vmatpush1.msra.mxu0 %v10973
      %11004 = vmatprep.subr.mxu0 0.0
      %11005 = vmatpush1.msra.mxu0 %v10974
      %11006 = vmatprep.subr.mxu0 0.0
      %11007 = vmatpush1.msra.mxu0 %v10975
      %11008 = vmatprep.subr.mxu0 0.0
      %11009 = vmatpush1.msra.mxu0 %v10976
      %11010 = vmatprep.subr.mxu0 0.0
      %11011 = vmatpush1.msra.mxu0 %v10977
      %11012 = vmatprep.subr.mxu0 0.0
      %11013 = vmatpush1.msra.mxu0 %v10978
      %11014 = vmatprep.subr.mxu0 0.0
      %11015 = vmatpush1.msra.mxu0 %v10979
      %11016 = vmatprep.subr.mxu0 0.0
      %11017 = vmatpush1.msra.mxu0 %v10980
      %11018 = vmatprep.subr.mxu0 0.0
      %11019 = vmatpush1.msra.mxu0 %v10981
      %11020 = vmatprep.subr.mxu0 0.0
      %11021 = vmatpush1.msra.mxu0 %v10982
      %11022 = vmatprep.subr.mxu0 0.0
      %11023 = vmatpush1.msra.mxu0 %v10983
      %11024 = vmatprep.subr.mxu0 0.0
      %11025 = vmatpush1.msra.mxu0 %v10984
      %11026 = vmatprep.subr.mxu0 0.0
      %11027 = vmatpush1.msra.mxu0 0.0
      %11028 = vmatprep.subr.mxu0 0.0
      %11029 = vmatpush1.msra.mxu0 0.0
      %11030 = vmatprep.subr.mxu0 0.0
      %11031 = vmatpush1.msra.mxu0 0.0
      %11032 = vmatprep.subr.mxu0 0.0
      %11033 = vmatpush1.msra.mxu0 0.0
      %11034 = vmatprep.subr.mxu0 0.0
      %11035 = vmatpush1.msra.mxu0 0.0
      %11036 = vmatprep.subr.mxu0 0.0
      %11037 = vmatpush1.msra.mxu0 0.0
      %11038 = vmatprep.subr.mxu0 0.0
      %11039 = vmatpush1.msra.mxu0 0.0
      %11040 = vmatprep.subr.mxu0 0.0
      %11041 = vmatpush1.msra.mxu0 0.0
      %11042 = vmatprep.subr.mxu0 0.0
      %11043 = vmatpush1.msra.mxu0 0.0
      %11044 = vmatprep.subr.mxu0 0.0
      %11045 = vmatpush1.msra.mxu0 0.0
      %11046 = vmatprep.subr.mxu0 0.0
      %11047 = vmatpush1.msra.mxu0 0.0
      %11048 = vmatprep.subr.mxu0 0.0
      %11049 = vmatpush1.msra.mxu0 0.0
      %11050 = vmatprep.subr.mxu0 0.0
      %11051 = vmatpush1.msra.mxu0 0.0
      %11052 = vmatprep.subr.mxu0 0.0
      %11053 = vmatpush1.msra.mxu0 0.0
      %11054 = vmatprep.subr.mxu0 0.0
      %11055 = vmatpush1.msra.mxu0 0.0
      %11056 = vmatprep.subr.mxu0 0.0
      %11057 = vmatpush1.msra.mxu0 0.0
      %11058 = vmatprep.subr.mxu0 0.0
      %11059 = vmatpush1.msra.mxu0 0.0
      %11060 = vmatprep.mubr.f32.mxu0 0.0
      %11061 = vmatmul.mubr.f32.gmra.mrb[0].mxu0 %v10994
      %v11062 = vpop.f32.mrb[0].mxu0
      %v11063 = vadd.f32 %v10990, %v11062
      %v11064 = vpop.f32.mrb[0].mxu0
      %11065 = vdwg.mxu0
      %v11066 = vmax.f32 %v11063, 0.0
      %v11067 = vld [vmem:[%s12] sm:$0xff]
      %v11068 = vld [vmem:[%s12 + $0x8] sm:$0xff]
      %v11069 = vld [vmem:[%s12 + $0x10] sm:$0xff]
      %v11070 = vld [vmem:[%s12 + $0x18] sm:$0xff]
      %v11071 = vld [vmem:[%s12 + $0x20] sm:$0xff]
      %v11072 = vld [vmem:[%s12 + $0x28] sm:$0xff]
      %v11073 = vld [vmem:[%s12 + $0x30] sm:$0xff]
      %v11074 = vld [vmem:[%s12 + $0x38] sm:$0xff]
      %v11075 = vld [vmem:[%s12 + $0x40] sm:$0xff]
      %v11076 = vld [vmem:[%s12 + $0x48] sm:$0xff]
      %v11077 = vld [vmem:[%s12 + $0x50] sm:$0xf]
      %v11078 = vld [vmem:[%s13] sm:$0x1]
      %v11080 = vlaneseq
      %v11081 = vshrl.u32 %v11080, 7
      %v11082 = vsub.s32 0, %v11081
      %v11083 = vrot.slane %v11078, %v11082
      %v11086 = vsel %vm840, %v11066, 0
      %vm11088 = vcmask 1043456
      %v11090 = vsel %vm11088, %v11077, 0
      %11092 = vmatprep.subr.mxu0 0.0
      %11093 = vmatpush1.msra.mxu0 %v11067
      %11094 = vmatprep.subr.mxu0 0.0
      %11095 = vmatpush1.msra.mxu0 %v11068
      %11096 = vmatprep.subr.mxu0 0.0
      %11097 = vmatpush1.msra.mxu0 %v11069
      %11098 = vmatprep.subr.mxu0 0.0
      %11099 = vmatpush1.msra.mxu0 %v11070
      %11100 = vmatprep.subr.mxu0 0.0
      %11101 = vmatpush1.msra.mxu0 %v11071
      %11102 = vmatprep.subr.mxu0 0.0
      %11103 = vmatpush1.msra.mxu0 %v11072
      %11104 = vmatprep.subr.mxu0 0.0
      %11105 = vmatpush1.msra.mxu0 %v11073
      %11106 = vmatprep.subr.mxu0 0.0
      %11107 = vmatpush1.msra.mxu0 %v11074
      %11108 = vmatprep.subr.mxu0 0.0
      %11109 = vmatpush1.msra.mxu0 %v11075
      %11110 = vmatprep.subr.mxu0 0.0
      %11111 = vmatpush1.msra.mxu0 %v11076
      %11112 = vmatprep.subr.mxu0 0.0
      %11113 = vmatpush1.msra.mxu0 %v11090
      %11114 = vmatprep.subr.mxu0 0.0
      %11115 = vmatpush1.msra.mxu0 0.0
      %11116 = vmatprep.subr.mxu0 0.0
      %11117 = vmatpush1.msra.mxu0 0.0
      %11118 = vmatprep.subr.mxu0 0.0
      %11119 = vmatpush1.msra.mxu0 0.0
      %11120 = vmatprep.subr.mxu0 0.0
      %11121 = vmatpush1.msra.mxu0 0.0
      %11122 = vmatprep.subr.mxu0 0.0
      %11123 = vmatpush1.msra.mxu0 0.0
      %11124 = vmatprep.subr.mxu0 0.0
      %11125 = vmatpush1.msra.mxu0 0.0
      %11126 = vmatprep.subr.mxu0 0.0
      %11127 = vmatpush1.msra.mxu0 0.0
      %11128 = vmatprep.subr.mxu0 0.0
      %11129 = vmatpush1.msra.mxu0 0.0
      %11130 = vmatprep.subr.mxu0 0.0
      %11131 = vmatpush1.msra.mxu0 0.0
      %11132 = vmatprep.subr.mxu0 0.0
      %11133 = vmatpush1.msra.mxu0 0.0
      %11134 = vmatprep.subr.mxu0 0.0
      %11135 = vmatpush1.msra.mxu0 0.0
      %11136 = vmatprep.subr.mxu0 0.0
      %11137 = vmatpush1.msra.mxu0 0.0
      %11138 = vmatprep.subr.mxu0 0.0
      %11139 = vmatpush1.msra.mxu0 0.0
      %11140 = vmatprep.subr.mxu0 0.0
      %11141 = vmatpush1.msra.mxu0 0.0
      %11142 = vmatprep.subr.mxu0 0.0
      %11143 = vmatpush1.msra.mxu0 0.0
      %11144 = vmatprep.subr.mxu0 0.0
      %11145 = vmatpush1.msra.mxu0 0.0
      %11146 = vmatprep.subr.mxu0 0.0
      %11147 = vmatpush1.msra.mxu0 0.0
      %11148 = vmatprep.subr.mxu0 0.0
      %11149 = vmatpush1.msra.mxu0 0.0
      %11150 = vmatprep.subr.mxu0 0.0
      %11151 = vmatpush1.msra.mxu0 0.0
      %11152 = vmatprep.subr.mxu0 0.0
      %11153 = vmatpush1.msra.mxu0 0.0
      %11154 = vmatprep.subr.mxu0 0.0
      %11155 = vmatpush1.msra.mxu0 0.0
      %11156 = vmatprep.mubr.f32.mxu0 0.0
      %11157 = vmatmul.mubr.f32.gmra.mrb[0].mxu0 %v11086
      %v11158 = vpop.f32.mrb[0].mxu0
      %v11159 = vadd.f32 %v11083, %v11158
      %v11160 = vpop.f32.mrb[0].mxu0
      %11161 = vdwg.mxu0
      %11162 = vst [vmem:[%s467] sm:$0xff] %v11159
      %p11163 = scmp.lt.s32.totalorder %s25, 1
      %s11164 = scalar_select %p11163, %s25, 1
      %s11165 = smul.addr %s11164, 8
      %s11166 = scalar_lea.vmem %s14, %s11165
      // Predicated region
      $region77: #{cdnet_forward.1} parent=75 // pred_check
        %p11167 = pneg %p342
      $region78: #{cdnet_forward.1} parent=75 // pred_check_branch
        %11169 = sbr.rel (%p11167) target = $region80
      $region79: #{cdnet_forward.1} parent=75 // pred_region
        _
      $region80: #{cdnet_forward.1} parent=75 // pred_fallthru
        _
    $region76: #{cdnet_forward.1} parent=5 // pred_fallthru
      _
    %p11170 = scmp.le.s32.totalorder 2, %s20
    // Predicated region
    $region81: #{cdnet_forward.1} parent=5 // pred_check
      %p11171 = pneg %p11170
    $region82: #{cdnet_forward.1} parent=5 // pred_check_branch
      %11173 = sbr.rel (%p11171) target = $region84
    $region83: #{cdnet_forward.1} parent=5 // pred_region
      %s11174 = ssub.s32 %s20, 2
      // Predicated region
      $region85: #{cdnet_forward.1} parent=83 // pred_check
        %p11175 = pneg %p348
      $region86: #{cdnet_forward.1} parent=83 // pred_check_branch
        %11177 = sbr.rel (%p11175) target = $region88
      $region87: #{cdnet_forward.1} parent=83 // pred_region
        %p11178 = scmp.lt.s32.totalorder %s26, 1
        %s11179 = scalar_select %p11178, %s26, 1
        %s11180 = smul.addr %s11179, 8
        %s11181 = scalar_lea.vmem %s14, %s11180
      $region88: #{cdnet_forward.1} parent=83 // pred_fallthru
        _
    $region84: #{cdnet_forward.1} parent=5 // pred_fallthru
      _
  $region6: #{cdnet_forward.1} parent=0 // loop_footer
    %s24 = sadd.s32 1, %s20
  $region7: #{cdnet_forward.1} parent=0 // loop_footer_branch
    %19 = sbr.rel target = $region3
  $region8: #{cdnet_forward.1} parent=0 // loop_exit
    _

</llo_original>
